<compile_context>
chip_gen: v6e
topology: v6e:2x2x1
jax: 0.10.0
libtpu: 0.0.40
codegen_flags: <defaults>
</compile_context>

<pallas_src>
import numpy as np
import jax
import jax.numpy as jnp
from jax.experimental import pallas as pl
from jax.experimental.pallas import tpu as pltpu

SEQ_LEN = 47  # fixed by the module (pos_emb has 47 positions / expand(..., 47))


def position_encoding(seq_len, d_model):
    pos = np.arange(seq_len, dtype=np.float32)[:, None]
    i = np.arange(d_model, dtype=np.float32)[None, :]
    angle = pos / np.power(10000.0, (2.0 * np.floor(i / 2.0)) / d_model)
    pe = np.zeros((seq_len, d_model), dtype=np.float32)
    pe[:, 0::2] = np.sin(angle[:, 0::2])
    pe[:, 1::2] = np.cos(angle[:, 1::2])
    return jnp.asarray(pe)


def make_rnnpe_kernel(seq_len, num_layers):
    """Kernel refs: x(seq, TB, D), per-layer [W_fused(in+H, H), bias(1, H)],
    fc1_w, fc1_b, fc2_w_row(1, H2), fc2_b, out(TB, 1)."""

    def kernel(*refs):
        x_ref = refs[0]
        idx = 1
        layer_refs = []
        for _ in range(num_layers):
            layer_refs.append((refs[idx], refs[idx + 1]))
            idx += 2
        fc1_w, fc1_b, fc2_w, fc2_b = refs[idx:idx + 4]
        out_ref = refs[idx + 4]

        tb = x_ref.shape[1]
        hidden = layer_refs[0][0].shape[1]

        # Hoist weight/bias loads out of the hot loop (read once into vregs).
        Ws = [w[...] for (w, _) in layer_refs]
        Bs = [b[...] for (_, b) in layer_refs]

        def step(t, hs):
            inp = x_ref[t]  # (TB, D)
            new_hs = []
            for l in range(num_layers):
                # Fused matmul: [x_t, h_{t-1}] @ [W_ih^T ; W_hh^T]  (single MXU op)
                fused = jnp.concatenate([inp, hs[l]], axis=-1)
                h = jnp.maximum(
                    jnp.dot(fused, Ws[l], preferred_element_type=jnp.float32)
                    + Bs[l],
                    0.0)
                new_hs.append(h)
                inp = h
            # TODO(synk): inter-layer RNN dropout skipped (eval / inference mode).
            return tuple(new_hs)

        hs0 = tuple(jnp.zeros((tb, hidden), jnp.float32)
                    for _ in range(num_layers))
        hs = jax.lax.fori_loop(0, seq_len, step, hs0, unroll=True)

        # prediction = fc(out[-1]);  out[-1] == h_T of the last layer
        z = jnp.maximum(
            jnp.dot(hs[-1], fc1_w[...], preferred_element_type=jnp.float32)
            + fc1_b[...],
            0.0)
        # (H2 -> 1) projection on the VPU/XLU: elementwise mul + lane reduce.
        out_ref[...] = (jnp.sum(z * fc2_w[...], axis=-1, keepdims=True)
                        + fc2_b[...])

    return kernel


def rnnpe_forward(enc_input, params):
    """enc_input: (B, 2, 47); channel 0 = token ids (0..4), channel 1 = segment."""
    B = enc_input.shape[0]
    num_layers = len(params["rnn"])
    d_model = params["emb"].shape[1]

    tokens = enc_input[:, 0, :].astype(jnp.int32)             # (B, 47)
    seg = enc_input[:, 1, :].astype(jnp.float32)              # (B, 47)

    # glue (XLA): embedding gather + pos/seg pre-sum + time-major transpose
    x = (jnp.take(params["emb"], tokens, axis=0)
         + params["pos"][None]
         + seg[:, :, None]).astype(jnp.float32)               # (B, 47, D)
    x = jnp.transpose(x, (1, 0, 2))                           # (47, B, D)

    # Pad batch to a sublane-aligned tile; tile the batch axis over the grid.
    b8 = ((B + 7) // 8) * 8
    TB = min(b8, 128)
    B_pad = ((b8 + TB - 1) // TB) * TB
    if B_pad != B:
        x = jnp.pad(x, ((0, 0), (0, B_pad - B), (0, 0)))

    def full_spec(a):
        zeros = (0,) * a.ndim
        return pl.BlockSpec(a.shape, lambda b: zeros)

    args = [x]
    specs = [pl.BlockSpec((SEQ_LEN, TB, d_model), lambda b: (0, b, 0))]

    for (w_ih, w_hh, b_ih, b_hh) in params["rnn"]:
        w_fused = jnp.concatenate([w_ih, w_hh], axis=0)        # (in+H, H)
        bias = b_ih + b_hh                                     # (1, H)
        args += [w_fused, bias]
        specs += [full_spec(w_fused), full_spec(bias)]

    fc2_w_row = params["fc2_w"].T                              # (1, H2)
    tail = [params["fc1_w"], params["fc1_b"], fc2_w_row, params["fc2_b"]]
    args += tail
    specs += [full_spec(a) for a in tail]

    kernel = make_rnnpe_kernel(SEQ_LEN, num_layers)
    out = pl.pallas_call(
        kernel,
        out_shape=jax.ShapeDtypeStruct((B_pad, 1), jnp.float32),
        grid=(B_pad // TB,),
        in_specs=specs,
        out_specs=pl.BlockSpec((TB, 1), lambda b: (b, 0)),
        compiler_params=pltpu.CompilerParams(
            dimension_semantics=("parallel",)),
    )(*args)
    return out[:B]


def rnnpe_reference(enc_input, params):
    """Pure-JAX reference mirroring the PyTorch forward (eval mode)."""
    tokens = enc_input[:, 0, :].astype(jnp.int32)
    seg = enc_input[:, 1, :].astype(jnp.float32)
    x = (jnp.take(params["emb"], tokens, axis=0)
         + params["pos"][None]
         + seg[:, :, None])                                    # (B, 47, D)
    x = jnp.transpose(x, (1, 0, 2)).astype(jnp.float32)        # (47, B, D)
    B = x.shape[1]
    hs = [jnp.zeros((B, p[1].shape[0]), jnp.float32) for p in params["rnn"]]
    for t in range(SEQ_LEN):
        inp = x[t]
        for l, (w_ih, w_hh, b_ih, b_hh) in enumerate(params["rnn"]):
            hs[l] = jax.nn.relu(inp @ w_ih + hs[l] @ w_hh + b_ih + b_hh)
            inp = hs[l]
    z = jax.nn.relu(hs[-1] @ params["fc1_w"] + params["fc1_b"])
    return z @ params["fc2_w"] + params["fc2_b"]


def init_params(key, d_model, hidden_dim, num_layers, hidden_dim2):
    keys = iter(jax.random.split(key, 1 + 4 * num_layers + 4))

    def u(k, shape, scale):
        return jax.random.uniform(k, shape, jnp.float32, -scale, scale)

    params = {
        "emb": jax.random.normal(next(keys), (5, d_model), jnp.float32),
        "pos": position_encoding(SEQ_LEN, d_model),
    }
    rnn = []
    for l in range(num_layers):
        in_dim = d_model if l == 0 else hidden_dim
        s = 1.0 / np.sqrt(hidden_dim)
        rnn.append((
            u(next(keys), (in_dim, hidden_dim), s),      # W_ih^T
            u(next(keys), (hidden_dim, hidden_dim), s),  # W_hh^T
            u(next(keys), (1, hidden_dim), s),           # b_ih
            u(next(keys), (1, hidden_dim), s),           # b_hh
        ))
    params["rnn"] = rnn
    s1 = 1.0 / np.sqrt(hidden_dim)
    params["fc1_w"] = u(next(keys), (hidden_dim, hidden_dim2), s1)
    params["fc1_b"] = u(next(keys), (1, hidden_dim2), s1)
    s2 = 1.0 / np.sqrt(hidden_dim2)
    params["fc2_w"] = u(next(keys), (hidden_dim2, 1), s2)
    params["fc2_b"] = u(next(keys), (1, 1), s2)
    return params


if __name__ == "__main__":
    d_model, hidden_dim, num_layers, hidden_dim2 = 32, 32, 2, 32
    batch = 2

    key = jax.random.PRNGKey(0)
    k_tok, k_seg, k_par = jax.random.split(key, 3)

    tokens = jax.random.randint(k_tok, (batch, SEQ_LEN), 0, 5)
    seg = jax.random.uniform(k_seg, (batch, SEQ_LEN), jnp.float32)
    # enc_input: (B, 2, 47), channel 0 = token ids (cast back to int inside), 1 = segment
    enc_input = jnp.stack([tokens.astype(jnp.float32), seg], axis=1)

    params = init_params(k_par, d_model, hidden_dim, num_layers, hidden_dim2)

    out = rnnpe_forward(enc_input, params)
    out = jax.block_until_ready(out)

    ref = rnnpe_reference(enc_input, params)
    assert out.shape == (batch, 1), out.shape
    np.testing.assert_allclose(np.asarray(out), np.asarray(ref), rtol=1e-4, atol=1e-4)
    print("KERNEL_OK")
</pallas_src>

<mosaic_0001>
module attributes {stable_mosaic.version = 11 : i64} {
  func.func @kernel(%arg0: i32, %arg1: memref<47x8x32xf32, #tpu.memory_space<vmem>>, %arg2: memref<64x32xf32, #tpu.memory_space<vmem>>, %arg3: memref<1x32xf32, #tpu.memory_space<vmem>>, %arg4: memref<64x32xf32, #tpu.memory_space<vmem>>, %arg5: memref<1x32xf32, #tpu.memory_space<vmem>>, %arg6: memref<32x32xf32, #tpu.memory_space<vmem>>, %arg7: memref<1x32xf32, #tpu.memory_space<vmem>>, %arg8: memref<1x32xf32, #tpu.memory_space<vmem>>, %arg9: memref<1x1xf32, #tpu.memory_space<vmem>>, %arg10: memref<8x1xf32, #tpu.memory_space<vmem>>) attributes {dimension_semantics = [#tpu.dimension_semantics<parallel>], iteration_bounds = array<i64: 1>, scalar_prefetch = 0 : i64, scratch_operands = 0 : i64, tpu.core_type = #tpu.core_type<tc>, window_params = [{transform_indices = @transform_0, window_bounds = array<i64: 47, 8, 32>}, {pipeline_mode = #tpu.pipeline_mode<synchronous>, transform_indices = @transform_1, window_bounds = array<i64: 64, 32>}, {pipeline_mode = #tpu.pipeline_mode<synchronous>, transform_indices = @transform_2, window_bounds = array<i64: 1, 32>}, {pipeline_mode = #tpu.pipeline_mode<synchronous>, transform_indices = @transform_3, window_bounds = array<i64: 64, 32>}, {pipeline_mode = #tpu.pipeline_mode<synchronous>, transform_indices = @transform_4, window_bounds = array<i64: 1, 32>}, {pipeline_mode = #tpu.pipeline_mode<synchronous>, transform_indices = @transform_5, window_bounds = array<i64: 32, 32>}, {pipeline_mode = #tpu.pipeline_mode<synchronous>, transform_indices = @transform_6, window_bounds = array<i64: 1, 32>}, {pipeline_mode = #tpu.pipeline_mode<synchronous>, transform_indices = @transform_7, window_bounds = array<i64: 1, 32>}, {pipeline_mode = #tpu.pipeline_mode<synchronous>, transform_indices = @transform_8, window_bounds = array<i64: 1, 1>}, {transform_indices = @transform_9, window_bounds = array<i64: 8, 1>}]} {
    %c0 = arith.constant 0 : index
    %c0_0 = arith.constant 0 : index
    %0 = vector.load %arg2[%c0, %c0_0] : memref<64x32xf32, #tpu.memory_space<vmem>>, vector<64x32xf32>
    %c0_1 = arith.constant 0 : index
    %c0_2 = arith.constant 0 : index
    %1 = vector.load %arg4[%c0_1, %c0_2] : memref<64x32xf32, #tpu.memory_space<vmem>>, vector<64x32xf32>
    %c0_3 = arith.constant 0 : index
    %c0_4 = arith.constant 0 : index
    %2 = vector.load %arg3[%c0_3, %c0_4] : memref<1x32xf32, #tpu.memory_space<vmem>>, vector<1x32xf32>
    %c0_5 = arith.constant 0 : index
    %c0_6 = arith.constant 0 : index
    %3 = vector.load %arg5[%c0_5, %c0_6] : memref<1x32xf32, #tpu.memory_space<vmem>>, vector<1x32xf32>
    %cst = arith.constant 0.000000e+00 : f32
    %4 = vector.broadcast %cst : f32 to vector<8x32xf32>
    %cst_7 = arith.constant 0.000000e+00 : f32
    %5 = vector.broadcast %cst_7 : f32 to vector<8x32xf32>
    %c0_i32 = arith.constant 0 : i32
    %6 = arith.index_cast %c0_i32 : i32 to index
    %c0_8 = arith.constant 0 : index
    %c0_9 = arith.constant 0 : index
    %7 = vector.load %arg1[%6, %c0_8, %c0_9] : memref<47x8x32xf32, #tpu.memory_space<vmem>>, vector<1x8x32xf32>
    %8 = vector.shape_cast %7 : vector<1x8x32xf32> to vector<8x32xf32>
    %9 = tpu.concatenate %8, %4 in 1 : vector<8x32xf32>, vector<8x32xf32> -> vector<8x64xf32>
    %cst_10 = arith.constant dense<0.000000e+00> : vector<8x32xf32>
    %10 = tpu.matmul %9, %0, %cst_10 {dimension_numbers = #tpu.dot_dimension_numbers<[1], [0], [0], [1], [0, 0, 1, 1], [], []>} : vector<8x64xf32>, vector<64x32xf32>, vector<8x32xf32> -> vector<8x32xf32>
    %11 = vector.broadcast %2 : vector<1x32xf32> to vector<8x32xf32>
    %12 = arith.addf %10, %11 : vector<8x32xf32>
    %cst_11 = arith.constant 0.000000e+00 : f32
    %13 = vector.broadcast %cst_11 : f32 to vector<8x32xf32>
    %14 = arith.maximumf %12, %13 : vector<8x32xf32>
    %15 = tpu.concatenate %14, %5 in 1 : vector<8x32xf32>, vector<8x32xf32> -> vector<8x64xf32>
    %cst_12 = arith.constant dense<0.000000e+00> : vector<8x32xf32>
    %16 = tpu.matmul %15, %1, %cst_12 {dimension_numbers = #tpu.dot_dimension_numbers<[1], [0], [0], [1], [0, 0, 1, 1], [], []>} : vector<8x64xf32>, vector<64x32xf32>, vector<8x32xf32> -> vector<8x32xf32>
    %17 = vector.broadcast %3 : vector<1x32xf32> to vector<8x32xf32>
    %18 = arith.addf %16, %17 : vector<8x32xf32>
    %cst_13 = arith.constant 0.000000e+00 : f32
    %19 = vector.broadcast %cst_13 : f32 to vector<8x32xf32>
    %20 = arith.maximumf %18, %19 : vector<8x32xf32>
    %c1_i32 = arith.constant 1 : i32
    %21 = arith.index_cast %c1_i32 : i32 to index
    %c0_14 = arith.constant 0 : index
    %c0_15 = arith.constant 0 : index
    %22 = vector.load %arg1[%21, %c0_14, %c0_15] : memref<47x8x32xf32, #tpu.memory_space<vmem>>, vector<1x8x32xf32>
    %23 = vector.shape_cast %22 : vector<1x8x32xf32> to vector<8x32xf32>
    %24 = tpu.concatenate %23, %14 in 1 : vector<8x32xf32>, vector<8x32xf32> -> vector<8x64xf32>
    %cst_16 = arith.constant dense<0.000000e+00> : vector<8x32xf32>
    %25 = tpu.matmul %24, %0, %cst_16 {dimension_numbers = #tpu.dot_dimension_numbers<[1], [0], [0], [1], [0, 0, 1, 1], [], []>} : vector<8x64xf32>, vector<64x32xf32>, vector<8x32xf32> -> vector<8x32xf32>
    %26 = vector.broadcast %2 : vector<1x32xf32> to vector<8x32xf32>
    %27 = arith.addf %25, %26 : vector<8x32xf32>
    %cst_17 = arith.constant 0.000000e+00 : f32
    %28 = vector.broadcast %cst_17 : f32 to vector<8x32xf32>
    %29 = arith.maximumf %27, %28 : vector<8x32xf32>
    %30 = tpu.concatenate %29, %20 in 1 : vector<8x32xf32>, vector<8x32xf32> -> vector<8x64xf32>
    %cst_18 = arith.constant dense<0.000000e+00> : vector<8x32xf32>
    %31 = tpu.matmul %30, %1, %cst_18 {dimension_numbers = #tpu.dot_dimension_numbers<[1], [0], [0], [1], [0, 0, 1, 1], [], []>} : vector<8x64xf32>, vector<64x32xf32>, vector<8x32xf32> -> vector<8x32xf32>
    %32 = vector.broadcast %3 : vector<1x32xf32> to vector<8x32xf32>
    %33 = arith.addf %31, %32 : vector<8x32xf32>
    %cst_19 = arith.constant 0.000000e+00 : f32
    %34 = vector.broadcast %cst_19 : f32 to vector<8x32xf32>
    %35 = arith.maximumf %33, %34 : vector<8x32xf32>
    %c2_i32 = arith.constant 2 : i32
    %36 = arith.index_cast %c2_i32 : i32 to index
    %c0_20 = arith.constant 0 : index
    %c0_21 = arith.constant 0 : index
    %37 = vector.load %arg1[%36, %c0_20, %c0_21] : memref<47x8x32xf32, #tpu.memory_space<vmem>>, vector<1x8x32xf32>
    %38 = vector.shape_cast %37 : vector<1x8x32xf32> to vector<8x32xf32>
    %39 = tpu.concatenate %38, %29 in 1 : vector<8x32xf32>, vector<8x32xf32> -> vector<8x64xf32>
    %cst_22 = arith.constant dense<0.000000e+00> : vector<8x32xf32>
    %40 = tpu.matmul %39, %0, %cst_22 {dimension_numbers = #tpu.dot_dimension_numbers<[1], [0], [0], [1], [0, 0, 1, 1], [], []>} : vector<8x64xf32>, vector<64x32xf32>, vector<8x32xf32> -> vector<8x32xf32>
    %41 = vector.broadcast %2 : vector<1x32xf32> to vector<8x32xf32>
    %42 = arith.addf %40, %41 : vector<8x32xf32>
    %cst_23 = arith.constant 0.000000e+00 : f32
    %43 = vector.broadcast %cst_23 : f32 to vector<8x32xf32>
    %44 = arith.maximumf %42, %43 : vector<8x32xf32>
    %45 = tpu.concatenate %44, %35 in 1 : vector<8x32xf32>, vector<8x32xf32> -> vector<8x64xf32>
    %cst_24 = arith.constant dense<0.000000e+00> : vector<8x32xf32>
    %46 = tpu.matmul %45, %1, %cst_24 {dimension_numbers = #tpu.dot_dimension_numbers<[1], [0], [0], [1], [0, 0, 1, 1], [], []>} : vector<8x64xf32>, vector<64x32xf32>, vector<8x32xf32> -> vector<8x32xf32>
    %47 = vector.broadcast %3 : vector<1x32xf32> to vector<8x32xf32>
    %48 = arith.addf %46, %47 : vector<8x32xf32>
    %cst_25 = arith.constant 0.000000e+00 : f32
    %49 = vector.broadcast %cst_25 : f32 to vector<8x32xf32>
    %50 = arith.maximumf %48, %49 : vector<8x32xf32>
    %c3_i32 = arith.constant 3 : i32
    %51 = arith.index_cast %c3_i32 : i32 to index
    %c0_26 = arith.constant 0 : index
    %c0_27 = arith.constant 0 : index
    %52 = vector.load %arg1[%51, %c0_26, %c0_27] : memref<47x8x32xf32, #tpu.memory_space<vmem>>, vector<1x8x32xf32>
    %53 = vector.shape_cast %52 : vector<1x8x32xf32> to vector<8x32xf32>
    %54 = tpu.concatenate %53, %44 in 1 : vector<8x32xf32>, vector<8x32xf32> -> vector<8x64xf32>
    %cst_28 = arith.constant dense<0.000000e+00> : vector<8x32xf32>
    %55 = tpu.matmul %54, %0, %cst_28 {dimension_numbers = #tpu.dot_dimension_numbers<[1], [0], [0], [1], [0, 0, 1, 1], [], []>} : vector<8x64xf32>, vector<64x32xf32>, vector<8x32xf32> -> vector<8x32xf32>
    %56 = vector.broadcast %2 : vector<1x32xf32> to vector<8x32xf32>
    %57 = arith.addf %55, %56 : vector<8x32xf32>
    %cst_29 = arith.constant 0.000000e+00 : f32
    %58 = vector.broadcast %cst_29 : f32 to vector<8x32xf32>
    %59 = arith.maximumf %57, %58 : vector<8x32xf32>
    %60 = tpu.concatenate %59, %50 in 1 : vector<8x32xf32>, vector<8x32xf32> -> vector<8x64xf32>
    %cst_30 = arith.constant dense<0.000000e+00> : vector<8x32xf32>
    %61 = tpu.matmul %60, %1, %cst_30 {dimension_numbers = #tpu.dot_dimension_numbers<[1], [0], [0], [1], [0, 0, 1, 1], [], []>} : vector<8x64xf32>, vector<64x32xf32>, vector<8x32xf32> -> vector<8x32xf32>
    %62 = vector.broadcast %3 : vector<1x32xf32> to vector<8x32xf32>
    %63 = arith.addf %61, %62 : vector<8x32xf32>
    %cst_31 = arith.constant 0.000000e+00 : f32
    %64 = vector.broadcast %cst_31 : f32 to vector<8x32xf32>
    %65 = arith.maximumf %63, %64 : vector<8x32xf32>
    %c4_i32 = arith.constant 4 : i32
    %66 = arith.index_cast %c4_i32 : i32 to index
    %c0_32 = arith.constant 0 : index
    %c0_33 = arith.constant 0 : index
    %67 = vector.load %arg1[%66, %c0_32, %c0_33] : memref<47x8x32xf32, #tpu.memory_space<vmem>>, vector<1x8x32xf32>
    %68 = vector.shape_cast %67 : vector<1x8x32xf32> to vector<8x32xf32>
    %69 = tpu.concatenate %68, %59 in 1 : vector<8x32xf32>, vector<8x32xf32> -> vector<8x64xf32>
    %cst_34 = arith.constant dense<0.000000e+00> : vector<8x32xf32>
    %70 = tpu.matmul %69, %0, %cst_34 {dimension_numbers = #tpu.dot_dimension_numbers<[1], [0], [0], [1], [0, 0, 1, 1], [], []>} : vector<8x64xf32>, vector<64x32xf32>, vector<8x32xf32> -> vector<8x32xf32>
    %71 = vector.broadcast %2 : vector<1x32xf32> to vector<8x32xf32>
    %72 = arith.addf %70, %71 : vector<8x32xf32>
    %cst_35 = arith.constant 0.000000e+00 : f32
    %73 = vector.broadcast %cst_35 : f32 to vector<8x32xf32>
    %74 = arith.maximumf %72, %73 : vector<8x32xf32>
    %75 = tpu.concatenate %74, %65 in 1 : vector<8x32xf32>, vector<8x32xf32> -> vector<8x64xf32>
    %cst_36 = arith.constant dense<0.000000e+00> : vector<8x32xf32>
    %76 = tpu.matmul %75, %1, %cst_36 {dimension_numbers = #tpu.dot_dimension_numbers<[1], [0], [0], [1], [0, 0, 1, 1], [], []>} : vector<8x64xf32>, vector<64x32xf32>, vector<8x32xf32> -> vector<8x32xf32>
    %77 = vector.broadcast %3 : vector<1x32xf32> to vector<8x32xf32>
    %78 = arith.addf %76, %77 : vector<8x32xf32>
    %cst_37 = arith.constant 0.000000e+00 : f32
    %79 = vector.broadcast %cst_37 : f32 to vector<8x32xf32>
    %80 = arith.maximumf %78, %79 : vector<8x32xf32>
    %c5_i32 = arith.constant 5 : i32
    %81 = arith.index_cast %c5_i32 : i32 to index
    %c0_38 = arith.constant 0 : index
    %c0_39 = arith.constant 0 : index
    %82 = vector.load %arg1[%81, %c0_38, %c0_39] : memref<47x8x32xf32, #tpu.memory_space<vmem>>, vector<1x8x32xf32>
    %83 = vector.shape_cast %82 : vector<1x8x32xf32> to vector<8x32xf32>
    %84 = tpu.concatenate %83, %74 in 1 : vector<8x32xf32>, vector<8x32xf32> -> vector<8x64xf32>
    %cst_40 = arith.constant dense<0.000000e+00> : vector<8x32xf32>
    %85 = tpu.matmul %84, %0, %cst_40 {dimension_numbers = #tpu.dot_dimension_numbers<[1], [0], [0], [1], [0, 0, 1, 1], [], []>} : vector<8x64xf32>, vector<64x32xf32>, vector<8x32xf32> -> vector<8x32xf32>
    %86 = vector.broadcast %2 : vector<1x32xf32> to vector<8x32xf32>
    %87 = arith.addf %85, %86 : vector<8x32xf32>
    %cst_41 = arith.constant 0.000000e+00 : f32
    %88 = vector.broadcast %cst_41 : f32 to vector<8x32xf32>
    %89 = arith.maximumf %87, %88 : vector<8x32xf32>
    %90 = tpu.concatenate %89, %80 in 1 : vector<8x32xf32>, vector<8x32xf32> -> vector<8x64xf32>
    %cst_42 = arith.constant dense<0.000000e+00> : vector<8x32xf32>
    %91 = tpu.matmul %90, %1, %cst_42 {dimension_numbers = #tpu.dot_dimension_numbers<[1], [0], [0], [1], [0, 0, 1, 1], [], []>} : vector<8x64xf32>, vector<64x32xf32>, vector<8x32xf32> -> vector<8x32xf32>
    %92 = vector.broadcast %3 : vector<1x32xf32> to vector<8x32xf32>
    %93 = arith.addf %91, %92 : vector<8x32xf32>
    %cst_43 = arith.constant 0.000000e+00 : f32
    %94 = vector.broadcast %cst_43 : f32 to vector<8x32xf32>
    %95 = arith.maximumf %93, %94 : vector<8x32xf32>
    %c6_i32 = arith.constant 6 : i32
    %96 = arith.index_cast %c6_i32 : i32 to index
    %c0_44 = arith.constant 0 : index
    %c0_45 = arith.constant 0 : index
    %97 = vector.load %arg1[%96, %c0_44, %c0_45] : memref<47x8x32xf32, #tpu.memory_space<vmem>>, vector<1x8x32xf32>
    %98 = vector.shape_cast %97 : vector<1x8x32xf32> to vector<8x32xf32>
    %99 = tpu.concatenate %98, %89 in 1 : vector<8x32xf32>, vector<8x32xf32> -> vector<8x64xf32>
    %cst_46 = arith.constant dense<0.000000e+00> : vector<8x32xf32>
    %100 = tpu.matmul %99, %0, %cst_46 {dimension_numbers = #tpu.dot_dimension_numbers<[1], [0], [0], [1], [0, 0, 1, 1], [], []>} : vector<8x64xf32>, vector<64x32xf32>, vector<8x32xf32> -> vector<8x32xf32>
    %101 = vector.broadcast %2 : vector<1x32xf32> to vector<8x32xf32>
    %102 = arith.addf %100, %101 : vector<8x32xf32>
    %cst_47 = arith.constant 0.000000e+00 : f32
    %103 = vector.broadcast %cst_47 : f32 to vector<8x32xf32>
    %104 = arith.maximumf %102, %103 : vector<8x32xf32>
    %105 = tpu.concatenate %104, %95 in 1 : vector<8x32xf32>, vector<8x32xf32> -> vector<8x64xf32>
    %cst_48 = arith.constant dense<0.000000e+00> : vector<8x32xf32>
    %106 = tpu.matmul %105, %1, %cst_48 {dimension_numbers = #tpu.dot_dimension_numbers<[1], [0], [0], [1], [0, 0, 1, 1], [], []>} : vector<8x64xf32>, vector<64x32xf32>, vector<8x32xf32> -> vector<8x32xf32>
    %107 = vector.broadcast %3 : vector<1x32xf32> to vector<8x32xf32>
    %108 = arith.addf %106, %107 : vector<8x32xf32>
    %cst_49 = arith.constant 0.000000e+00 : f32
    %109 = vector.broadcast %cst_49 : f32 to vector<8x32xf32>
    %110 = arith.maximumf %108, %109 : vector<8x32xf32>
    %c7_i32 = arith.constant 7 : i32
    %111 = arith.index_cast %c7_i32 : i32 to index
    %c0_50 = arith.constant 0 : index
    %c0_51 = arith.constant 0 : index
    %112 = vector.load %arg1[%111, %c0_50, %c0_51] : memref<47x8x32xf32, #tpu.memory_space<vmem>>, vector<1x8x32xf32>
    %113 = vector.shape_cast %112 : vector<1x8x32xf32> to vector<8x32xf32>
    %114 = tpu.concatenate %113, %104 in 1 : vector<8x32xf32>, vector<8x32xf32> -> vector<8x64xf32>
    %cst_52 = arith.constant dense<0.000000e+00> : vector<8x32xf32>
    %115 = tpu.matmul %114, %0, %cst_52 {dimension_numbers = #tpu.dot_dimension_numbers<[1], [0], [0], [1], [0, 0, 1, 1], [], []>} : vector<8x64xf32>, vector<64x32xf32>, vector<8x32xf32> -> vector<8x32xf32>
    %116 = vector.broadcast %2 : vector<1x32xf32> to vector<8x32xf32>
    %117 = arith.addf %115, %116 : vector<8x32xf32>
    %cst_53 = arith.constant 0.000000e+00 : f32
    %118 = vector.broadcast %cst_53 : f32 to vector<8x32xf32>
    %119 = arith.maximumf %117, %118 : vector<8x32xf32>
    %120 = tpu.concatenate %119, %110 in 1 : vector<8x32xf32>, vector<8x32xf32> -> vector<8x64xf32>
    %cst_54 = arith.constant dense<0.000000e+00> : vector<8x32xf32>
    %121 = tpu.matmul %120, %1, %cst_54 {dimension_numbers = #tpu.dot_dimension_numbers<[1], [0], [0], [1], [0, 0, 1, 1], [], []>} : vector<8x64xf32>, vector<64x32xf32>, vector<8x32xf32> -> vector<8x32xf32>
    %122 = vector.broadcast %3 : vector<1x32xf32> to vector<8x32xf32>
    %123 = arith.addf %121, %122 : vector<8x32xf32>
    %cst_55 = arith.constant 0.000000e+00 : f32
    %124 = vector.broadcast %cst_55 : f32 to vector<8x32xf32>
    %125 = arith.maximumf %123, %124 : vector<8x32xf32>
    %c8_i32 = arith.constant 8 : i32
    %126 = arith.index_cast %c8_i32 : i32 to index
    %c0_56 = arith.constant 0 : index
    %c0_57 = arith.constant 0 : index
    %127 = vector.load %arg1[%126, %c0_56, %c0_57] : memref<47x8x32xf32, #tpu.memory_space<vmem>>, vector<1x8x32xf32>
    %128 = vector.shape_cast %127 : vector<1x8x32xf32> to vector<8x32xf32>
    %129 = tpu.concatenate %128, %119 in 1 : vector<8x32xf32>, vector<8x32xf32> -> vector<8x64xf32>
    %cst_58 = arith.constant dense<0.000000e+00> : vector<8x32xf32>
    %130 = tpu.matmul %129, %0, %cst_58 {dimension_numbers = #tpu.dot_dimension_numbers<[1], [0], [0], [1], [0, 0, 1, 1], [], []>} : vector<8x64xf32>, vector<64x32xf32>, vector<8x32xf32> -> vector<8x32xf32>
    %131 = vector.broadcast %2 : vector<1x32xf32> to vector<8x32xf32>
    %132 = arith.addf %130, %131 : vector<8x32xf32>
    %cst_59 = arith.constant 0.000000e+00 : f32
    %133 = vector.broadcast %cst_59 : f32 to vector<8x32xf32>
    %134 = arith.maximumf %132, %133 : vector<8x32xf32>
    %135 = tpu.concatenate %134, %125 in 1 : vector<8x32xf32>, vector<8x32xf32> -> vector<8x64xf32>
    %cst_60 = arith.constant dense<0.000000e+00> : vector<8x32xf32>
    %136 = tpu.matmul %135, %1, %cst_60 {dimension_numbers = #tpu.dot_dimension_numbers<[1], [0], [0], [1], [0, 0, 1, 1], [], []>} : vector<8x64xf32>, vector<64x32xf32>, vector<8x32xf32> -> vector<8x32xf32>
    %137 = vector.broadcast %3 : vector<1x32xf32> to vector<8x32xf32>
    %138 = arith.addf %136, %137 : vector<8x32xf32>
    %cst_61 = arith.constant 0.000000e+00 : f32
    %139 = vector.broadcast %cst_61 : f32 to vector<8x32xf32>
    %140 = arith.maximumf %138, %139 : vector<8x32xf32>
    %c9_i32 = arith.constant 9 : i32
    %141 = arith.index_cast %c9_i32 : i32 to index
    %c0_62 = arith.constant 0 : index
    %c0_63 = arith.constant 0 : index
    %142 = vector.load %arg1[%141, %c0_62, %c0_63] : memref<47x8x32xf32, #tpu.memory_space<vmem>>, vector<1x8x32xf32>
    %143 = vector.shape_cast %142 : vector<1x8x32xf32> to vector<8x32xf32>
    %144 = tpu.concatenate %143, %134 in 1 : vector<8x32xf32>, vector<8x32xf32> -> vector<8x64xf32>
    %cst_64 = arith.constant dense<0.000000e+00> : vector<8x32xf32>
    %145 = tpu.matmul %144, %0, %cst_64 {dimension_numbers = #tpu.dot_dimension_numbers<[1], [0], [0], [1], [0, 0, 1, 1], [], []>} : vector<8x64xf32>, vector<64x32xf32>, vector<8x32xf32> -> vector<8x32xf32>
    %146 = vector.broadcast %2 : vector<1x32xf32> to vector<8x32xf32>
    %147 = arith.addf %145, %146 : vector<8x32xf32>
    %cst_65 = arith.constant 0.000000e+00 : f32
    %148 = vector.broadcast %cst_65 : f32 to vector<8x32xf32>
    %149 = arith.maximumf %147, %148 : vector<8x32xf32>
    %150 = tpu.concatenate %149, %140 in 1 : vector<8x32xf32>, vector<8x32xf32> -> vector<8x64xf32>
    %cst_66 = arith.constant dense<0.000000e+00> : vector<8x32xf32>
    %151 = tpu.matmul %150, %1, %cst_66 {dimension_numbers = #tpu.dot_dimension_numbers<[1], [0], [0], [1], [0, 0, 1, 1], [], []>} : vector<8x64xf32>, vector<64x32xf32>, vector<8x32xf32> -> vector<8x32xf32>
    %152 = vector.broadcast %3 : vector<1x32xf32> to vector<8x32xf32>
    %153 = arith.addf %151, %152 : vector<8x32xf32>
    %cst_67 = arith.constant 0.000000e+00 : f32
    %154 = vector.broadcast %cst_67 : f32 to vector<8x32xf32>
    %155 = arith.maximumf %153, %154 : vector<8x32xf32>
    %c10_i32 = arith.constant 10 : i32
    %156 = arith.index_cast %c10_i32 : i32 to index
    %c0_68 = arith.constant 0 : index
    %c0_69 = arith.constant 0 : index
    %157 = vector.load %arg1[%156, %c0_68, %c0_69] : memref<47x8x32xf32, #tpu.memory_space<vmem>>, vector<1x8x32xf32>
    %158 = vector.shape_cast %157 : vector<1x8x32xf32> to vector<8x32xf32>
    %159 = tpu.concatenate %158, %149 in 1 : vector<8x32xf32>, vector<8x32xf32> -> vector<8x64xf32>
    %cst_70 = arith.constant dense<0.000000e+00> : vector<8x32xf32>
    %160 = tpu.matmul %159, %0, %cst_70 {dimension_numbers = #tpu.dot_dimension_numbers<[1], [0], [0], [1], [0, 0, 1, 1], [], []>} : vector<8x64xf32>, vector<64x32xf32>, vector<8x32xf32> -> vector<8x32xf32>
    %161 = vector.broadcast %2 : vector<1x32xf32> to vector<8x32xf32>
    %162 = arith.addf %160, %161 : vector<8x32xf32>
    %cst_71 = arith.constant 0.000000e+00 : f32
    %163 = vector.broadcast %cst_71 : f32 to vector<8x32xf32>
    %164 = arith.maximumf %162, %163 : vector<8x32xf32>
    %165 = tpu.concatenate %164, %155 in 1 : vector<8x32xf32>, vector<8x32xf32> -> vector<8x64xf32>
    %cst_72 = arith.constant dense<0.000000e+00> : vector<8x32xf32>
    %166 = tpu.matmul %165, %1, %cst_72 {dimension_numbers = #tpu.dot_dimension_numbers<[1], [0], [0], [1], [0, 0, 1, 1], [], []>} : vector<8x64xf32>, vector<64x32xf32>, vector<8x32xf32> -> vector<8x32xf32>
    %167 = vector.broadcast %3 : vector<1x32xf32> to vector<8x32xf32>
    %168 = arith.addf %166, %167 : vector<8x32xf32>
    %cst_73 = arith.constant 0.000000e+00 : f32
    %169 = vector.broadcast %cst_73 : f32 to vector<8x32xf32>
    %170 = arith.maximumf %168, %169 : vector<8x32xf32>
    %c11_i32 = arith.constant 11 : i32
    %171 = arith.index_cast %c11_i32 : i32 to index
    %c0_74 = arith.constant 0 : index
    %c0_75 = arith.constant 0 : index
    %172 = vector.load %arg1[%171, %c0_74, %c0_75] : memref<47x8x32xf32, #tpu.memory_space<vmem>>, vector<1x8x32xf32>
    %173 = vector.shape_cast %172 : vector<1x8x32xf32> to vector<8x32xf32>
    %174 = tpu.concatenate %173, %164 in 1 : vector<8x32xf32>, vector<8x32xf32> -> vector<8x64xf32>
    %cst_76 = arith.constant dense<0.000000e+00> : vector<8x32xf32>
    %175 = tpu.matmul %174, %0, %cst_76 {dimension_numbers = #tpu.dot_dimension_numbers<[1], [0], [0], [1], [0, 0, 1, 1], [], []>} : vector<8x64xf32>, vector<64x32xf32>, vector<8x32xf32> -> vector<8x32xf32>
    %176 = vector.broadcast %2 : vector<1x32xf32> to vector<8x32xf32>
    %177 = arith.addf %175, %176 : vector<8x32xf32>
    %cst_77 = arith.constant 0.000000e+00 : f32
    %178 = vector.broadcast %cst_77 : f32 to vector<8x32xf32>
    %179 = arith.maximumf %177, %178 : vector<8x32xf32>
    %180 = tpu.concatenate %179, %170 in 1 : vector<8x32xf32>, vector<8x32xf32> -> vector<8x64xf32>
    %cst_78 = arith.constant dense<0.000000e+00> : vector<8x32xf32>
    %181 = tpu.matmul %180, %1, %cst_78 {dimension_numbers = #tpu.dot_dimension_numbers<[1], [0], [0], [1], [0, 0, 1, 1], [], []>} : vector<8x64xf32>, vector<64x32xf32>, vector<8x32xf32> -> vector<8x32xf32>
    %182 = vector.broadcast %3 : vector<1x32xf32> to vector<8x32xf32>
    %183 = arith.addf %181, %182 : vector<8x32xf32>
    %cst_79 = arith.constant 0.000000e+00 : f32
    %184 = vector.broadcast %cst_79 : f32 to vector<8x32xf32>
    %185 = arith.maximumf %183, %184 : vector<8x32xf32>
    %c12_i32 = arith.constant 12 : i32
    %186 = arith.index_cast %c12_i32 : i32 to index
    %c0_80 = arith.constant 0 : index
    %c0_81 = arith.constant 0 : index
    %187 = vector.load %arg1[%186, %c0_80, %c0_81] : memref<47x8x32xf32, #tpu.memory_space<vmem>>, vector<1x8x32xf32>
    %188 = vector.shape_cast %187 : vector<1x8x32xf32> to vector<8x32xf32>
    %189 = tpu.concatenate %188, %179 in 1 : vector<8x32xf32>, vector<8x32xf32> -> vector<8x64xf32>
    %cst_82 = arith.constant dense<0.000000e+00> : vector<8x32xf32>
    %190 = tpu.matmul %189, %0, %cst_82 {dimension_numbers = #tpu.dot_dimension_numbers<[1], [0], [0], [1], [0, 0, 1, 1], [], []>} : vector<8x64xf32>, vector<64x32xf32>, vector<8x32xf32> -> vector<8x32xf32>
    %191 = vector.broadcast %2 : vector<1x32xf32> to vector<8x32xf32>
    %192 = arith.addf %190, %191 : vector<8x32xf32>
    %cst_83 = arith.constant 0.000000e+00 : f32
    %193 = vector.broadcast %cst_83 : f32 to vector<8x32xf32>
    %194 = arith.maximumf %192, %193 : vector<8x32xf32>
    %195 = tpu.concatenate %194, %185 in 1 : vector<8x32xf32>, vector<8x32xf32> -> vector<8x64xf32>
    %cst_84 = arith.constant dense<0.000000e+00> : vector<8x32xf32>
    %196 = tpu.matmul %195, %1, %cst_84 {dimension_numbers = #tpu.dot_dimension_numbers<[1], [0], [0], [1], [0, 0, 1, 1], [], []>} : vector<8x64xf32>, vector<64x32xf32>, vector<8x32xf32> -> vector<8x32xf32>
    %197 = vector.broadcast %3 : vector<1x32xf32> to vector<8x32xf32>
    %198 = arith.addf %196, %197 : vector<8x32xf32>
    %cst_85 = arith.constant 0.000000e+00 : f32
    %199 = vector.broadcast %cst_85 : f32 to vector<8x32xf32>
    %200 = arith.maximumf %198, %199 : vector<8x32xf32>
    %c13_i32 = arith.constant 13 : i32
    %201 = arith.index_cast %c13_i32 : i32 to index
    %c0_86 = arith.constant 0 : index
    %c0_87 = arith.constant 0 : index
    %202 = vector.load %arg1[%201, %c0_86, %c0_87] : memref<47x8x32xf32, #tpu.memory_space<vmem>>, vector<1x8x32xf32>
    %203 = vector.shape_cast %202 : vector<1x8x32xf32> to vector<8x32xf32>
    %204 = tpu.concatenate %203, %194 in 1 : vector<8x32xf32>, vector<8x32xf32> -> vector<8x64xf32>
    %cst_88 = arith.constant dense<0.000000e+00> : vector<8x32xf32>
    %205 = tpu.matmul %204, %0, %cst_88 {dimension_numbers = #tpu.dot_dimension_numbers<[1], [0], [0], [1], [0, 0, 1, 1], [], []>} : vector<8x64xf32>, vector<64x32xf32>, vector<8x32xf32> -> vector<8x32xf32>
    %206 = vector.broadcast %2 : vector<1x32xf32> to vector<8x32xf32>
    %207 = arith.addf %205, %206 : vector<8x32xf32>
    %cst_89 = arith.constant 0.000000e+00 : f32
    %208 = vector.broadcast %cst_89 : f32 to vector<8x32xf32>
    %209 = arith.maximumf %207, %208 : vector<8x32xf32>
    %210 = tpu.concatenate %209, %200 in 1 : vector<8x32xf32>, vector<8x32xf32> -> vector<8x64xf32>
    %cst_90 = arith.constant dense<0.000000e+00> : vector<8x32xf32>
    %211 = tpu.matmul %210, %1, %cst_90 {dimension_numbers = #tpu.dot_dimension_numbers<[1], [0], [0], [1], [0, 0, 1, 1], [], []>} : vector<8x64xf32>, vector<64x32xf32>, vector<8x32xf32> -> vector<8x32xf32>
    %212 = vector.broadcast %3 : vector<1x32xf32> to vector<8x32xf32>
    %213 = arith.addf %211, %212 : vector<8x32xf32>
    %cst_91 = arith.constant 0.000000e+00 : f32
    %214 = vector.broadcast %cst_91 : f32 to vector<8x32xf32>
    %215 = arith.maximumf %213, %214 : vector<8x32xf32>
    %c14_i32 = arith.constant 14 : i32
    %216 = arith.index_cast %c14_i32 : i32 to index
    %c0_92 = arith.constant 0 : index
    %c0_93 = arith.constant 0 : index
    %217 = vector.load %arg1[%216, %c0_92, %c0_93] : memref<47x8x32xf32, #tpu.memory_space<vmem>>, vector<1x8x32xf32>
    %218 = vector.shape_cast %217 : vector<1x8x32xf32> to vector<8x32xf32>
    %219 = tpu.concatenate %218, %209 in 1 : vector<8x32xf32>, vector<8x32xf32> -> vector<8x64xf32>
    %cst_94 = arith.constant dense<0.000000e+00> : vector<8x32xf32>
    %220 = tpu.matmul %219, %0, %cst_94 {dimension_numbers = #tpu.dot_dimension_numbers<[1], [0], [0], [1], [0, 0, 1, 1], [], []>} : vector<8x64xf32>, vector<64x32xf32>, vector<8x32xf32> -> vector<8x32xf32>
    %221 = vector.broadcast %2 : vector<1x32xf32> to vector<8x32xf32>
    %222 = arith.addf %220, %221 : vector<8x32xf32>
    %cst_95 = arith.constant 0.000000e+00 : f32
    %223 = vector.broadcast %cst_95 : f32 to vector<8x32xf32>
    %224 = arith.maximumf %222, %223 : vector<8x32xf32>
    %225 = tpu.concatenate %224, %215 in 1 : vector<8x32xf32>, vector<8x32xf32> -> vector<8x64xf32>
    %cst_96 = arith.constant dense<0.000000e+00> : vector<8x32xf32>
    %226 = tpu.matmul %225, %1, %cst_96 {dimension_numbers = #tpu.dot_dimension_numbers<[1], [0], [0], [1], [0, 0, 1, 1], [], []>} : vector<8x64xf32>, vector<64x32xf32>, vector<8x32xf32> -> vector<8x32xf32>
    %227 = vector.broadcast %3 : vector<1x32xf32> to vector<8x32xf32>
    %228 = arith.addf %226, %227 : vector<8x32xf32>
    %cst_97 = arith.constant 0.000000e+00 : f32
    %229 = vector.broadcast %cst_97 : f32 to vector<8x32xf32>
    %230 = arith.maximumf %228, %229 : vector<8x32xf32>
    %c15_i32 = arith.constant 15 : i32
    %231 = arith.index_cast %c15_i32 : i32 to index
    %c0_98 = arith.constant 0 : index
    %c0_99 = arith.constant 0 : index
    %232 = vector.load %arg1[%231, %c0_98, %c0_99] : memref<47x8x32xf32, #tpu.memory_space<vmem>>, vector<1x8x32xf32>
    %233 = vector.shape_cast %232 : vector<1x8x32xf32> to vector<8x32xf32>
    %234 = tpu.concatenate %233, %224 in 1 : vector<8x32xf32>, vector<8x32xf32> -> vector<8x64xf32>
    %cst_100 = arith.constant dense<0.000000e+00> : vector<8x32xf32>
    %235 = tpu.matmul %234, %0, %cst_100 {dimension_numbers = #tpu.dot_dimension_numbers<[1], [0], [0], [1], [0, 0, 1, 1], [], []>} : vector<8x64xf32>, vector<64x32xf32>, vector<8x32xf32> -> vector<8x32xf32>
    %236 = vector.broadcast %2 : vector<1x32xf32> to vector<8x32xf32>
    %237 = arith.addf %235, %236 : vector<8x32xf32>
    %cst_101 = arith.constant 0.000000e+00 : f32
    %238 = vector.broadcast %cst_101 : f32 to vector<8x32xf32>
    %239 = arith.maximumf %237, %238 : vector<8x32xf32>
    %240 = tpu.concatenate %239, %230 in 1 : vector<8x32xf32>, vector<8x32xf32> -> vector<8x64xf32>
    %cst_102 = arith.constant dense<0.000000e+00> : vector<8x32xf32>
    %241 = tpu.matmul %240, %1, %cst_102 {dimension_numbers = #tpu.dot_dimension_numbers<[1], [0], [0], [1], [0, 0, 1, 1], [], []>} : vector<8x64xf32>, vector<64x32xf32>, vector<8x32xf32> -> vector<8x32xf32>
    %242 = vector.broadcast %3 : vector<1x32xf32> to vector<8x32xf32>
    %243 = arith.addf %241, %242 : vector<8x32xf32>
    %cst_103 = arith.constant 0.000000e+00 : f32
    %244 = vector.broadcast %cst_103 : f32 to vector<8x32xf32>
    %245 = arith.maximumf %243, %244 : vector<8x32xf32>
    %c16_i32 = arith.constant 16 : i32
    %246 = arith.index_cast %c16_i32 : i32 to index
    %c0_104 = arith.constant 0 : index
    %c0_105 = arith.constant 0 : index
    %247 = vector.load %arg1[%246, %c0_104, %c0_105] : memref<47x8x32xf32, #tpu.memory_space<vmem>>, vector<1x8x32xf32>
    %248 = vector.shape_cast %247 : vector<1x8x32xf32> to vector<8x32xf32>
    %249 = tpu.concatenate %248, %239 in 1 : vector<8x32xf32>, vector<8x32xf32> -> vector<8x64xf32>
    %cst_106 = arith.constant dense<0.000000e+00> : vector<8x32xf32>
    %250 = tpu.matmul %249, %0, %cst_106 {dimension_numbers = #tpu.dot_dimension_numbers<[1], [0], [0], [1], [0, 0, 1, 1], [], []>} : vector<8x64xf32>, vector<64x32xf32>, vector<8x32xf32> -> vector<8x32xf32>
    %251 = vector.broadcast %2 : vector<1x32xf32> to vector<8x32xf32>
    %252 = arith.addf %250, %251 : vector<8x32xf32>
    %cst_107 = arith.constant 0.000000e+00 : f32
    %253 = vector.broadcast %cst_107 : f32 to vector<8x32xf32>
    %254 = arith.maximumf %252, %253 : vector<8x32xf32>
    %255 = tpu.concatenate %254, %245 in 1 : vector<8x32xf32>, vector<8x32xf32> -> vector<8x64xf32>
    %cst_108 = arith.constant dense<0.000000e+00> : vector<8x32xf32>
    %256 = tpu.matmul %255, %1, %cst_108 {dimension_numbers = #tpu.dot_dimension_numbers<[1], [0], [0], [1], [0, 0, 1, 1], [], []>} : vector<8x64xf32>, vector<64x32xf32>, vector<8x32xf32> -> vector<8x32xf32>
    %257 = vector.broadcast %3 : vector<1x32xf32> to vector<8x32xf32>
    %258 = arith.addf %256, %257 : vector<8x32xf32>
    %cst_109 = arith.constant 0.000000e+00 : f32
    %259 = vector.broadcast %cst_109 : f32 to vector<8x32xf32>
    %260 = arith.maximumf %258, %259 : vector<8x32xf32>
    %c17_i32 = arith.constant 17 : i32
    %261 = arith.index_cast %c17_i32 : i32 to index
    %c0_110 = arith.constant 0 : index
    %c0_111 = arith.constant 0 : index
    %262 = vector.load %arg1[%261, %c0_110, %c0_111] : memref<47x8x32xf32, #tpu.memory_space<vmem>>, vector<1x8x32xf32>
    %263 = vector.shape_cast %262 : vector<1x8x32xf32> to vector<8x32xf32>
    %264 = tpu.concatenate %263, %254 in 1 : vector<8x32xf32>, vector<8x32xf32> -> vector<8x64xf32>
    %cst_112 = arith.constant dense<0.000000e+00> : vector<8x32xf32>
    %265 = tpu.matmul %264, %0, %cst_112 {dimension_numbers = #tpu.dot_dimension_numbers<[1], [0], [0], [1], [0, 0, 1, 1], [], []>} : vector<8x64xf32>, vector<64x32xf32>, vector<8x32xf32> -> vector<8x32xf32>
    %266 = vector.broadcast %2 : vector<1x32xf32> to vector<8x32xf32>
    %267 = arith.addf %265, %266 : vector<8x32xf32>
    %cst_113 = arith.constant 0.000000e+00 : f32
    %268 = vector.broadcast %cst_113 : f32 to vector<8x32xf32>
    %269 = arith.maximumf %267, %268 : vector<8x32xf32>
    %270 = tpu.concatenate %269, %260 in 1 : vector<8x32xf32>, vector<8x32xf32> -> vector<8x64xf32>
    %cst_114 = arith.constant dense<0.000000e+00> : vector<8x32xf32>
    %271 = tpu.matmul %270, %1, %cst_114 {dimension_numbers = #tpu.dot_dimension_numbers<[1], [0], [0], [1], [0, 0, 1, 1], [], []>} : vector<8x64xf32>, vector<64x32xf32>, vector<8x32xf32> -> vector<8x32xf32>
    %272 = vector.broadcast %3 : vector<1x32xf32> to vector<8x32xf32>
    %273 = arith.addf %271, %272 : vector<8x32xf32>
    %cst_115 = arith.constant 0.000000e+00 : f32
    %274 = vector.broadcast %cst_115 : f32 to vector<8x32xf32>
    %275 = arith.maximumf %273, %274 : vector<8x32xf32>
    %c18_i32 = arith.constant 18 : i32
    %276 = arith.index_cast %c18_i32 : i32 to index
    %c0_116 = arith.constant 0 : index
    %c0_117 = arith.constant 0 : index
    %277 = vector.load %arg1[%276, %c0_116, %c0_117] : memref<47x8x32xf32, #tpu.memory_space<vmem>>, vector<1x8x32xf32>
    %278 = vector.shape_cast %277 : vector<1x8x32xf32> to vector<8x32xf32>
    %279 = tpu.concatenate %278, %269 in 1 : vector<8x32xf32>, vector<8x32xf32> -> vector<8x64xf32>
    %cst_118 = arith.constant dense<0.000000e+00> : vector<8x32xf32>
    %280 = tpu.matmul %279, %0, %cst_118 {dimension_numbers = #tpu.dot_dimension_numbers<[1], [0], [0], [1], [0, 0, 1, 1], [], []>} : vector<8x64xf32>, vector<64x32xf32>, vector<8x32xf32> -> vector<8x32xf32>
    %281 = vector.broadcast %2 : vector<1x32xf32> to vector<8x32xf32>
    %282 = arith.addf %280, %281 : vector<8x32xf32>
    %cst_119 = arith.constant 0.000000e+00 : f32
    %283 = vector.broadcast %cst_119 : f32 to vector<8x32xf32>
    %284 = arith.maximumf %282, %283 : vector<8x32xf32>
    %285 = tpu.concatenate %284, %275 in 1 : vector<8x32xf32>, vector<8x32xf32> -> vector<8x64xf32>
    %cst_120 = arith.constant dense<0.000000e+00> : vector<8x32xf32>
    %286 = tpu.matmul %285, %1, %cst_120 {dimension_numbers = #tpu.dot_dimension_numbers<[1], [0], [0], [1], [0, 0, 1, 1], [], []>} : vector<8x64xf32>, vector<64x32xf32>, vector<8x32xf32> -> vector<8x32xf32>
    %287 = vector.broadcast %3 : vector<1x32xf32> to vector<8x32xf32>
    %288 = arith.addf %286, %287 : vector<8x32xf32>
    %cst_121 = arith.constant 0.000000e+00 : f32
    %289 = vector.broadcast %cst_121 : f32 to vector<8x32xf32>
    %290 = arith.maximumf %288, %289 : vector<8x32xf32>
    %c19_i32 = arith.constant 19 : i32
    %291 = arith.index_cast %c19_i32 : i32 to index
    %c0_122 = arith.constant 0 : index
    %c0_123 = arith.constant 0 : index
    %292 = vector.load %arg1[%291, %c0_122, %c0_123] : memref<47x8x32xf32, #tpu.memory_space<vmem>>, vector<1x8x32xf32>
    %293 = vector.shape_cast %292 : vector<1x8x32xf32> to vector<8x32xf32>
    %294 = tpu.concatenate %293, %284 in 1 : vector<8x32xf32>, vector<8x32xf32> -> vector<8x64xf32>
    %cst_124 = arith.constant dense<0.000000e+00> : vector<8x32xf32>
    %295 = tpu.matmul %294, %0, %cst_124 {dimension_numbers = #tpu.dot_dimension_numbers<[1], [0], [0], [1], [0, 0, 1, 1], [], []>} : vector<8x64xf32>, vector<64x32xf32>, vector<8x32xf32> -> vector<8x32xf32>
    %296 = vector.broadcast %2 : vector<1x32xf32> to vector<8x32xf32>
    %297 = arith.addf %295, %296 : vector<8x32xf32>
    %cst_125 = arith.constant 0.000000e+00 : f32
    %298 = vector.broadcast %cst_125 : f32 to vector<8x32xf32>
    %299 = arith.maximumf %297, %298 : vector<8x32xf32>
    %300 = tpu.concatenate %299, %290 in 1 : vector<8x32xf32>, vector<8x32xf32> -> vector<8x64xf32>
    %cst_126 = arith.constant dense<0.000000e+00> : vector<8x32xf32>
    %301 = tpu.matmul %300, %1, %cst_126 {dimension_numbers = #tpu.dot_dimension_numbers<[1], [0], [0], [1], [0, 0, 1, 1], [], []>} : vector<8x64xf32>, vector<64x32xf32>, vector<8x32xf32> -> vector<8x32xf32>
    %302 = vector.broadcast %3 : vector<1x32xf32> to vector<8x32xf32>
    %303 = arith.addf %301, %302 : vector<8x32xf32>
    %cst_127 = arith.constant 0.000000e+00 : f32
    %304 = vector.broadcast %cst_127 : f32 to vector<8x32xf32>
    %305 = arith.maximumf %303, %304 : vector<8x32xf32>
    %c20_i32 = arith.constant 20 : i32
    %306 = arith.index_cast %c20_i32 : i32 to index
    %c0_128 = arith.constant 0 : index
    %c0_129 = arith.constant 0 : index
    %307 = vector.load %arg1[%306, %c0_128, %c0_129] : memref<47x8x32xf32, #tpu.memory_space<vmem>>, vector<1x8x32xf32>
    %308 = vector.shape_cast %307 : vector<1x8x32xf32> to vector<8x32xf32>
    %309 = tpu.concatenate %308, %299 in 1 : vector<8x32xf32>, vector<8x32xf32> -> vector<8x64xf32>
    %cst_130 = arith.constant dense<0.000000e+00> : vector<8x32xf32>
    %310 = tpu.matmul %309, %0, %cst_130 {dimension_numbers = #tpu.dot_dimension_numbers<[1], [0], [0], [1], [0, 0, 1, 1], [], []>} : vector<8x64xf32>, vector<64x32xf32>, vector<8x32xf32> -> vector<8x32xf32>
    %311 = vector.broadcast %2 : vector<1x32xf32> to vector<8x32xf32>
    %312 = arith.addf %310, %311 : vector<8x32xf32>
    %cst_131 = arith.constant 0.000000e+00 : f32
    %313 = vector.broadcast %cst_131 : f32 to vector<8x32xf32>
    %314 = arith.maximumf %312, %313 : vector<8x32xf32>
    %315 = tpu.concatenate %314, %305 in 1 : vector<8x32xf32>, vector<8x32xf32> -> vector<8x64xf32>
    %cst_132 = arith.constant dense<0.000000e+00> : vector<8x32xf32>
    %316 = tpu.matmul %315, %1, %cst_132 {dimension_numbers = #tpu.dot_dimension_numbers<[1], [0], [0], [1], [0, 0, 1, 1], [], []>} : vector<8x64xf32>, vector<64x32xf32>, vector<8x32xf32> -> vector<8x32xf32>
    %317 = vector.broadcast %3 : vector<1x32xf32> to vector<8x32xf32>
    %318 = arith.addf %316, %317 : vector<8x32xf32>
    %cst_133 = arith.constant 0.000000e+00 : f32
    %319 = vector.broadcast %cst_133 : f32 to vector<8x32xf32>
    %320 = arith.maximumf %318, %319 : vector<8x32xf32>
    %c21_i32 = arith.constant 21 : i32
    %321 = arith.index_cast %c21_i32 : i32 to index
    %c0_134 = arith.constant 0 : index
    %c0_135 = arith.constant 0 : index
    %322 = vector.load %arg1[%321, %c0_134, %c0_135] : memref<47x8x32xf32, #tpu.memory_space<vmem>>, vector<1x8x32xf32>
    %323 = vector.shape_cast %322 : vector<1x8x32xf32> to vector<8x32xf32>
    %324 = tpu.concatenate %323, %314 in 1 : vector<8x32xf32>, vector<8x32xf32> -> vector<8x64xf32>
    %cst_136 = arith.constant dense<0.000000e+00> : vector<8x32xf32>
    %325 = tpu.matmul %324, %0, %cst_136 {dimension_numbers = #tpu.dot_dimension_numbers<[1], [0], [0], [1], [0, 0, 1, 1], [], []>} : vector<8x64xf32>, vector<64x32xf32>, vector<8x32xf32> -> vector<8x32xf32>
    %326 = vector.broadcast %2 : vector<1x32xf32> to vector<8x32xf32>
    %327 = arith.addf %325, %326 : vector<8x32xf32>
    %cst_137 = arith.constant 0.000000e+00 : f32
    %328 = vector.broadcast %cst_137 : f32 to vector<8x32xf32>
    %329 = arith.maximumf %327, %328 : vector<8x32xf32>
    %330 = tpu.concatenate %329, %320 in 1 : vector<8x32xf32>, vector<8x32xf32> -> vector<8x64xf32>
    %cst_138 = arith.constant dense<0.000000e+00> : vector<8x32xf32>
    %331 = tpu.matmul %330, %1, %cst_138 {dimension_numbers = #tpu.dot_dimension_numbers<[1], [0], [0], [1], [0, 0, 1, 1], [], []>} : vector<8x64xf32>, vector<64x32xf32>, vector<8x32xf32> -> vector<8x32xf32>
    %332 = vector.broadcast %3 : vector<1x32xf32> to vector<8x32xf32>
    %333 = arith.addf %331, %332 : vector<8x32xf32>
    %cst_139 = arith.constant 0.000000e+00 : f32
    %334 = vector.broadcast %cst_139 : f32 to vector<8x32xf32>
    %335 = arith.maximumf %333, %334 : vector<8x32xf32>
    %c22_i32 = arith.constant 22 : i32
    %336 = arith.index_cast %c22_i32 : i32 to index
    %c0_140 = arith.constant 0 : index
    %c0_141 = arith.constant 0 : index
    %337 = vector.load %arg1[%336, %c0_140, %c0_141] : memref<47x8x32xf32, #tpu.memory_space<vmem>>, vector<1x8x32xf32>
    %338 = vector.shape_cast %337 : vector<1x8x32xf32> to vector<8x32xf32>
    %339 = tpu.concatenate %338, %329 in 1 : vector<8x32xf32>, vector<8x32xf32> -> vector<8x64xf32>
    %cst_142 = arith.constant dense<0.000000e+00> : vector<8x32xf32>
    %340 = tpu.matmul %339, %0, %cst_142 {dimension_numbers = #tpu.dot_dimension_numbers<[1], [0], [0], [1], [0, 0, 1, 1], [], []>} : vector<8x64xf32>, vector<64x32xf32>, vector<8x32xf32> -> vector<8x32xf32>
    %341 = vector.broadcast %2 : vector<1x32xf32> to vector<8x32xf32>
    %342 = arith.addf %340, %341 : vector<8x32xf32>
    %cst_143 = arith.constant 0.000000e+00 : f32
    %343 = vector.broadcast %cst_143 : f32 to vector<8x32xf32>
    %344 = arith.maximumf %342, %343 : vector<8x32xf32>
    %345 = tpu.concatenate %344, %335 in 1 : vector<8x32xf32>, vector<8x32xf32> -> vector<8x64xf32>
    %cst_144 = arith.constant dense<0.000000e+00> : vector<8x32xf32>
    %346 = tpu.matmul %345, %1, %cst_144 {dimension_numbers = #tpu.dot_dimension_numbers<[1], [0], [0], [1], [0, 0, 1, 1], [], []>} : vector<8x64xf32>, vector<64x32xf32>, vector<8x32xf32> -> vector<8x32xf32>
    %347 = vector.broadcast %3 : vector<1x32xf32> to vector<8x32xf32>
    %348 = arith.addf %346, %347 : vector<8x32xf32>
    %cst_145 = arith.constant 0.000000e+00 : f32
    %349 = vector.broadcast %cst_145 : f32 to vector<8x32xf32>
    %350 = arith.maximumf %348, %349 : vector<8x32xf32>
    %c23_i32 = arith.constant 23 : i32
    %351 = arith.index_cast %c23_i32 : i32 to index
    %c0_146 = arith.constant 0 : index
    %c0_147 = arith.constant 0 : index
    %352 = vector.load %arg1[%351, %c0_146, %c0_147] : memref<47x8x32xf32, #tpu.memory_space<vmem>>, vector<1x8x32xf32>
    %353 = vector.shape_cast %352 : vector<1x8x32xf32> to vector<8x32xf32>
    %354 = tpu.concatenate %353, %344 in 1 : vector<8x32xf32>, vector<8x32xf32> -> vector<8x64xf32>
    %cst_148 = arith.constant dense<0.000000e+00> : vector<8x32xf32>
    %355 = tpu.matmul %354, %0, %cst_148 {dimension_numbers = #tpu.dot_dimension_numbers<[1], [0], [0], [1], [0, 0, 1, 1], [], []>} : vector<8x64xf32>, vector<64x32xf32>, vector<8x32xf32> -> vector<8x32xf32>
    %356 = vector.broadcast %2 : vector<1x32xf32> to vector<8x32xf32>
    %357 = arith.addf %355, %356 : vector<8x32xf32>
    %cst_149 = arith.constant 0.000000e+00 : f32
    %358 = vector.broadcast %cst_149 : f32 to vector<8x32xf32>
    %359 = arith.maximumf %357, %358 : vector<8x32xf32>
    %360 = tpu.concatenate %359, %350 in 1 : vector<8x32xf32>, vector<8x32xf32> -> vector<8x64xf32>
    %cst_150 = arith.constant dense<0.000000e+00> : vector<8x32xf32>
    %361 = tpu.matmul %360, %1, %cst_150 {dimension_numbers = #tpu.dot_dimension_numbers<[1], [0], [0], [1], [0, 0, 1, 1], [], []>} : vector<8x64xf32>, vector<64x32xf32>, vector<8x32xf32> -> vector<8x32xf32>
    %362 = vector.broadcast %3 : vector<1x32xf32> to vector<8x32xf32>
    %363 = arith.addf %361, %362 : vector<8x32xf32>
    %cst_151 = arith.constant 0.000000e+00 : f32
    %364 = vector.broadcast %cst_151 : f32 to vector<8x32xf32>
    %365 = arith.maximumf %363, %364 : vector<8x32xf32>
    %c24_i32 = arith.constant 24 : i32
    %366 = arith.index_cast %c24_i32 : i32 to index
    %c0_152 = arith.constant 0 : index
    %c0_153 = arith.constant 0 : index
    %367 = vector.load %arg1[%366, %c0_152, %c0_153] : memref<47x8x32xf32, #tpu.memory_space<vmem>>, vector<1x8x32xf32>
    %368 = vector.shape_cast %367 : vector<1x8x32xf32> to vector<8x32xf32>
    %369 = tpu.concatenate %368, %359 in 1 : vector<8x32xf32>, vector<8x32xf32> -> vector<8x64xf32>
    %cst_154 = arith.constant dense<0.000000e+00> : vector<8x32xf32>
    %370 = tpu.matmul %369, %0, %cst_154 {dimension_numbers = #tpu.dot_dimension_numbers<[1], [0], [0], [1], [0, 0, 1, 1], [], []>} : vector<8x64xf32>, vector<64x32xf32>, vector<8x32xf32> -> vector<8x32xf32>
    %371 = vector.broadcast %2 : vector<1x32xf32> to vector<8x32xf32>
    %372 = arith.addf %370, %371 : vector<8x32xf32>
    %cst_155 = arith.constant 0.000000e+00 : f32
    %373 = vector.broadcast %cst_155 : f32 to vector<8x32xf32>
    %374 = arith.maximumf %372, %373 : vector<8x32xf32>
    %375 = tpu.concatenate %374, %365 in 1 : vector<8x32xf32>, vector<8x32xf32> -> vector<8x64xf32>
    %cst_156 = arith.constant dense<0.000000e+00> : vector<8x32xf32>
    %376 = tpu.matmul %375, %1, %cst_156 {dimension_numbers = #tpu.dot_dimension_numbers<[1], [0], [0], [1], [0, 0, 1, 1], [], []>} : vector<8x64xf32>, vector<64x32xf32>, vector<8x32xf32> -> vector<8x32xf32>
    %377 = vector.broadcast %3 : vector<1x32xf32> to vector<8x32xf32>
    %378 = arith.addf %376, %377 : vector<8x32xf32>
    %cst_157 = arith.constant 0.000000e+00 : f32
    %379 = vector.broadcast %cst_157 : f32 to vector<8x32xf32>
    %380 = arith.maximumf %378, %379 : vector<8x32xf32>
    %c25_i32 = arith.constant 25 : i32
    %381 = arith.index_cast %c25_i32 : i32 to index
    %c0_158 = arith.constant 0 : index
    %c0_159 = arith.constant 0 : index
    %382 = vector.load %arg1[%381, %c0_158, %c0_159] : memref<47x8x32xf32, #tpu.memory_space<vmem>>, vector<1x8x32xf32>
    %383 = vector.shape_cast %382 : vector<1x8x32xf32> to vector<8x32xf32>
    %384 = tpu.concatenate %383, %374 in 1 : vector<8x32xf32>, vector<8x32xf32> -> vector<8x64xf32>
    %cst_160 = arith.constant dense<0.000000e+00> : vector<8x32xf32>
    %385 = tpu.matmul %384, %0, %cst_160 {dimension_numbers = #tpu.dot_dimension_numbers<[1], [0], [0], [1], [0, 0, 1, 1], [], []>} : vector<8x64xf32>, vector<64x32xf32>, vector<8x32xf32> -> vector<8x32xf32>
    %386 = vector.broadcast %2 : vector<1x32xf32> to vector<8x32xf32>
    %387 = arith.addf %385, %386 : vector<8x32xf32>
    %cst_161 = arith.constant 0.000000e+00 : f32
    %388 = vector.broadcast %cst_161 : f32 to vector<8x32xf32>
    %389 = arith.maximumf %387, %388 : vector<8x32xf32>
    %390 = tpu.concatenate %389, %380 in 1 : vector<8x32xf32>, vector<8x32xf32> -> vector<8x64xf32>
    %cst_162 = arith.constant dense<0.000000e+00> : vector<8x32xf32>
    %391 = tpu.matmul %390, %1, %cst_162 {dimension_numbers = #tpu.dot_dimension_numbers<[1], [0], [0], [1], [0, 0, 1, 1], [], []>} : vector<8x64xf32>, vector<64x32xf32>, vector<8x32xf32> -> vector<8x32xf32>
    %392 = vector.broadcast %3 : vector<1x32xf32> to vector<8x32xf32>
    %393 = arith.addf %391, %392 : vector<8x32xf32>
    %cst_163 = arith.constant 0.000000e+00 : f32
    %394 = vector.broadcast %cst_163 : f32 to vector<8x32xf32>
    %395 = arith.maximumf %393, %394 : vector<8x32xf32>
    %c26_i32 = arith.constant 26 : i32
    %396 = arith.index_cast %c26_i32 : i32 to index
    %c0_164 = arith.constant 0 : index
    %c0_165 = arith.constant 0 : index
    %397 = vector.load %arg1[%396, %c0_164, %c0_165] : memref<47x8x32xf32, #tpu.memory_space<vmem>>, vector<1x8x32xf32>
    %398 = vector.shape_cast %397 : vector<1x8x32xf32> to vector<8x32xf32>
    %399 = tpu.concatenate %398, %389 in 1 : vector<8x32xf32>, vector<8x32xf32> -> vector<8x64xf32>
    %cst_166 = arith.constant dense<0.000000e+00> : vector<8x32xf32>
    %400 = tpu.matmul %399, %0, %cst_166 {dimension_numbers = #tpu.dot_dimension_numbers<[1], [0], [0], [1], [0, 0, 1, 1], [], []>} : vector<8x64xf32>, vector<64x32xf32>, vector<8x32xf32> -> vector<8x32xf32>
    %401 = vector.broadcast %2 : vector<1x32xf32> to vector<8x32xf32>
    %402 = arith.addf %400, %401 : vector<8x32xf32>
    %cst_167 = arith.constant 0.000000e+00 : f32
    %403 = vector.broadcast %cst_167 : f32 to vector<8x32xf32>
    %404 = arith.maximumf %402, %403 : vector<8x32xf32>
    %405 = tpu.concatenate %404, %395 in 1 : vector<8x32xf32>, vector<8x32xf32> -> vector<8x64xf32>
    %cst_168 = arith.constant dense<0.000000e+00> : vector<8x32xf32>
    %406 = tpu.matmul %405, %1, %cst_168 {dimension_numbers = #tpu.dot_dimension_numbers<[1], [0], [0], [1], [0, 0, 1, 1], [], []>} : vector<8x64xf32>, vector<64x32xf32>, vector<8x32xf32> -> vector<8x32xf32>
    %407 = vector.broadcast %3 : vector<1x32xf32> to vector<8x32xf32>
    %408 = arith.addf %406, %407 : vector<8x32xf32>
    %cst_169 = arith.constant 0.000000e+00 : f32
    %409 = vector.broadcast %cst_169 : f32 to vector<8x32xf32>
    %410 = arith.maximumf %408, %409 : vector<8x32xf32>
    %c27_i32 = arith.constant 27 : i32
    %411 = arith.index_cast %c27_i32 : i32 to index
    %c0_170 = arith.constant 0 : index
    %c0_171 = arith.constant 0 : index
    %412 = vector.load %arg1[%411, %c0_170, %c0_171] : memref<47x8x32xf32, #tpu.memory_space<vmem>>, vector<1x8x32xf32>
    %413 = vector.shape_cast %412 : vector<1x8x32xf32> to vector<8x32xf32>
    %414 = tpu.concatenate %413, %404 in 1 : vector<8x32xf32>, vector<8x32xf32> -> vector<8x64xf32>
    %cst_172 = arith.constant dense<0.000000e+00> : vector<8x32xf32>
    %415 = tpu.matmul %414, %0, %cst_172 {dimension_numbers = #tpu.dot_dimension_numbers<[1], [0], [0], [1], [0, 0, 1, 1], [], []>} : vector<8x64xf32>, vector<64x32xf32>, vector<8x32xf32> -> vector<8x32xf32>
    %416 = vector.broadcast %2 : vector<1x32xf32> to vector<8x32xf32>
    %417 = arith.addf %415, %416 : vector<8x32xf32>
    %cst_173 = arith.constant 0.000000e+00 : f32
    %418 = vector.broadcast %cst_173 : f32 to vector<8x32xf32>
    %419 = arith.maximumf %417, %418 : vector<8x32xf32>
    %420 = tpu.concatenate %419, %410 in 1 : vector<8x32xf32>, vector<8x32xf32> -> vector<8x64xf32>
    %cst_174 = arith.constant dense<0.000000e+00> : vector<8x32xf32>
    %421 = tpu.matmul %420, %1, %cst_174 {dimension_numbers = #tpu.dot_dimension_numbers<[1], [0], [0], [1], [0, 0, 1, 1], [], []>} : vector<8x64xf32>, vector<64x32xf32>, vector<8x32xf32> -> vector<8x32xf32>
    %422 = vector.broadcast %3 : vector<1x32xf32> to vector<8x32xf32>
    %423 = arith.addf %421, %422 : vector<8x32xf32>
    %cst_175 = arith.constant 0.000000e+00 : f32
    %424 = vector.broadcast %cst_175 : f32 to vector<8x32xf32>
    %425 = arith.maximumf %423, %424 : vector<8x32xf32>
    %c28_i32 = arith.constant 28 : i32
    %426 = arith.index_cast %c28_i32 : i32 to index
    %c0_176 = arith.constant 0 : index
    %c0_177 = arith.constant 0 : index
    %427 = vector.load %arg1[%426, %c0_176, %c0_177] : memref<47x8x32xf32, #tpu.memory_space<vmem>>, vector<1x8x32xf32>
    %428 = vector.shape_cast %427 : vector<1x8x32xf32> to vector<8x32xf32>
    %429 = tpu.concatenate %428, %419 in 1 : vector<8x32xf32>, vector<8x32xf32> -> vector<8x64xf32>
    %cst_178 = arith.constant dense<0.000000e+00> : vector<8x32xf32>
    %430 = tpu.matmul %429, %0, %cst_178 {dimension_numbers = #tpu.dot_dimension_numbers<[1], [0], [0], [1], [0, 0, 1, 1], [], []>} : vector<8x64xf32>, vector<64x32xf32>, vector<8x32xf32> -> vector<8x32xf32>
    %431 = vector.broadcast %2 : vector<1x32xf32> to vector<8x32xf32>
    %432 = arith.addf %430, %431 : vector<8x32xf32>
    %cst_179 = arith.constant 0.000000e+00 : f32
    %433 = vector.broadcast %cst_179 : f32 to vector<8x32xf32>
    %434 = arith.maximumf %432, %433 : vector<8x32xf32>
    %435 = tpu.concatenate %434, %425 in 1 : vector<8x32xf32>, vector<8x32xf32> -> vector<8x64xf32>
    %cst_180 = arith.constant dense<0.000000e+00> : vector<8x32xf32>
    %436 = tpu.matmul %435, %1, %cst_180 {dimension_numbers = #tpu.dot_dimension_numbers<[1], [0], [0], [1], [0, 0, 1, 1], [], []>} : vector<8x64xf32>, vector<64x32xf32>, vector<8x32xf32> -> vector<8x32xf32>
    %437 = vector.broadcast %3 : vector<1x32xf32> to vector<8x32xf32>
    %438 = arith.addf %436, %437 : vector<8x32xf32>
    %cst_181 = arith.constant 0.000000e+00 : f32
    %439 = vector.broadcast %cst_181 : f32 to vector<8x32xf32>
    %440 = arith.maximumf %438, %439 : vector<8x32xf32>
    %c29_i32 = arith.constant 29 : i32
    %441 = arith.index_cast %c29_i32 : i32 to index
    %c0_182 = arith.constant 0 : index
    %c0_183 = arith.constant 0 : index
    %442 = vector.load %arg1[%441, %c0_182, %c0_183] : memref<47x8x32xf32, #tpu.memory_space<vmem>>, vector<1x8x32xf32>
    %443 = vector.shape_cast %442 : vector<1x8x32xf32> to vector<8x32xf32>
    %444 = tpu.concatenate %443, %434 in 1 : vector<8x32xf32>, vector<8x32xf32> -> vector<8x64xf32>
    %cst_184 = arith.constant dense<0.000000e+00> : vector<8x32xf32>
    %445 = tpu.matmul %444, %0, %cst_184 {dimension_numbers = #tpu.dot_dimension_numbers<[1], [0], [0], [1], [0, 0, 1, 1], [], []>} : vector<8x64xf32>, vector<64x32xf32>, vector<8x32xf32> -> vector<8x32xf32>
    %446 = vector.broadcast %2 : vector<1x32xf32> to vector<8x32xf32>
    %447 = arith.addf %445, %446 : vector<8x32xf32>
    %cst_185 = arith.constant 0.000000e+00 : f32
    %448 = vector.broadcast %cst_185 : f32 to vector<8x32xf32>
    %449 = arith.maximumf %447, %448 : vector<8x32xf32>
    %450 = tpu.concatenate %449, %440 in 1 : vector<8x32xf32>, vector<8x32xf32> -> vector<8x64xf32>
    %cst_186 = arith.constant dense<0.000000e+00> : vector<8x32xf32>
    %451 = tpu.matmul %450, %1, %cst_186 {dimension_numbers = #tpu.dot_dimension_numbers<[1], [0], [0], [1], [0, 0, 1, 1], [], []>} : vector<8x64xf32>, vector<64x32xf32>, vector<8x32xf32> -> vector<8x32xf32>
    %452 = vector.broadcast %3 : vector<1x32xf32> to vector<8x32xf32>
    %453 = arith.addf %451, %452 : vector<8x32xf32>
    %cst_187 = arith.constant 0.000000e+00 : f32
    %454 = vector.broadcast %cst_187 : f32 to vector<8x32xf32>
    %455 = arith.maximumf %453, %454 : vector<8x32xf32>
    %c30_i32 = arith.constant 30 : i32
    %456 = arith.index_cast %c30_i32 : i32 to index
    %c0_188 = arith.constant 0 : index
    %c0_189 = arith.constant 0 : index
    %457 = vector.load %arg1[%456, %c0_188, %c0_189] : memref<47x8x32xf32, #tpu.memory_space<vmem>>, vector<1x8x32xf32>
    %458 = vector.shape_cast %457 : vector<1x8x32xf32> to vector<8x32xf32>
    %459 = tpu.concatenate %458, %449 in 1 : vector<8x32xf32>, vector<8x32xf32> -> vector<8x64xf32>
    %cst_190 = arith.constant dense<0.000000e+00> : vector<8x32xf32>
    %460 = tpu.matmul %459, %0, %cst_190 {dimension_numbers = #tpu.dot_dimension_numbers<[1], [0], [0], [1], [0, 0, 1, 1], [], []>} : vector<8x64xf32>, vector<64x32xf32>, vector<8x32xf32> -> vector<8x32xf32>
    %461 = vector.broadcast %2 : vector<1x32xf32> to vector<8x32xf32>
    %462 = arith.addf %460, %461 : vector<8x32xf32>
    %cst_191 = arith.constant 0.000000e+00 : f32
    %463 = vector.broadcast %cst_191 : f32 to vector<8x32xf32>
    %464 = arith.maximumf %462, %463 : vector<8x32xf32>
    %465 = tpu.concatenate %464, %455 in 1 : vector<8x32xf32>, vector<8x32xf32> -> vector<8x64xf32>
    %cst_192 = arith.constant dense<0.000000e+00> : vector<8x32xf32>
    %466 = tpu.matmul %465, %1, %cst_192 {dimension_numbers = #tpu.dot_dimension_numbers<[1], [0], [0], [1], [0, 0, 1, 1], [], []>} : vector<8x64xf32>, vector<64x32xf32>, vector<8x32xf32> -> vector<8x32xf32>
    %467 = vector.broadcast %3 : vector<1x32xf32> to vector<8x32xf32>
    %468 = arith.addf %466, %467 : vector<8x32xf32>
    %cst_193 = arith.constant 0.000000e+00 : f32
    %469 = vector.broadcast %cst_193 : f32 to vector<8x32xf32>
    %470 = arith.maximumf %468, %469 : vector<8x32xf32>
    %c31_i32 = arith.constant 31 : i32
    %471 = arith.index_cast %c31_i32 : i32 to index
    %c0_194 = arith.constant 0 : index
    %c0_195 = arith.constant 0 : index
    %472 = vector.load %arg1[%471, %c0_194, %c0_195] : memref<47x8x32xf32, #tpu.memory_space<vmem>>, vector<1x8x32xf32>
    %473 = vector.shape_cast %472 : vector<1x8x32xf32> to vector<8x32xf32>
    %474 = tpu.concatenate %473, %464 in 1 : vector<8x32xf32>, vector<8x32xf32> -> vector<8x64xf32>
    %cst_196 = arith.constant dense<0.000000e+00> : vector<8x32xf32>
    %475 = tpu.matmul %474, %0, %cst_196 {dimension_numbers = #tpu.dot_dimension_numbers<[1], [0], [0], [1], [0, 0, 1, 1], [], []>} : vector<8x64xf32>, vector<64x32xf32>, vector<8x32xf32> -> vector<8x32xf32>
    %476 = vector.broadcast %2 : vector<1x32xf32> to vector<8x32xf32>
    %477 = arith.addf %475, %476 : vector<8x32xf32>
    %cst_197 = arith.constant 0.000000e+00 : f32
    %478 = vector.broadcast %cst_197 : f32 to vector<8x32xf32>
    %479 = arith.maximumf %477, %478 : vector<8x32xf32>
    %480 = tpu.concatenate %479, %470 in 1 : vector<8x32xf32>, vector<8x32xf32> -> vector<8x64xf32>
    %cst_198 = arith.constant dense<0.000000e+00> : vector<8x32xf32>
    %481 = tpu.matmul %480, %1, %cst_198 {dimension_numbers = #tpu.dot_dimension_numbers<[1], [0], [0], [1], [0, 0, 1, 1], [], []>} : vector<8x64xf32>, vector<64x32xf32>, vector<8x32xf32> -> vector<8x32xf32>
    %482 = vector.broadcast %3 : vector<1x32xf32> to vector<8x32xf32>
    %483 = arith.addf %481, %482 : vector<8x32xf32>
    %cst_199 = arith.constant 0.000000e+00 : f32
    %484 = vector.broadcast %cst_199 : f32 to vector<8x32xf32>
    %485 = arith.maximumf %483, %484 : vector<8x32xf32>
    %c32_i32 = arith.constant 32 : i32
    %486 = arith.index_cast %c32_i32 : i32 to index
    %c0_200 = arith.constant 0 : index
    %c0_201 = arith.constant 0 : index
    %487 = vector.load %arg1[%486, %c0_200, %c0_201] : memref<47x8x32xf32, #tpu.memory_space<vmem>>, vector<1x8x32xf32>
    %488 = vector.shape_cast %487 : vector<1x8x32xf32> to vector<8x32xf32>
    %489 = tpu.concatenate %488, %479 in 1 : vector<8x32xf32>, vector<8x32xf32> -> vector<8x64xf32>
    %cst_202 = arith.constant dense<0.000000e+00> : vector<8x32xf32>
    %490 = tpu.matmul %489, %0, %cst_202 {dimension_numbers = #tpu.dot_dimension_numbers<[1], [0], [0], [1], [0, 0, 1, 1], [], []>} : vector<8x64xf32>, vector<64x32xf32>, vector<8x32xf32> -> vector<8x32xf32>
    %491 = vector.broadcast %2 : vector<1x32xf32> to vector<8x32xf32>
    %492 = arith.addf %490, %491 : vector<8x32xf32>
    %cst_203 = arith.constant 0.000000e+00 : f32
    %493 = vector.broadcast %cst_203 : f32 to vector<8x32xf32>
    %494 = arith.maximumf %492, %493 : vector<8x32xf32>
    %495 = tpu.concatenate %494, %485 in 1 : vector<8x32xf32>, vector<8x32xf32> -> vector<8x64xf32>
    %cst_204 = arith.constant dense<0.000000e+00> : vector<8x32xf32>
    %496 = tpu.matmul %495, %1, %cst_204 {dimension_numbers = #tpu.dot_dimension_numbers<[1], [0], [0], [1], [0, 0, 1, 1], [], []>} : vector<8x64xf32>, vector<64x32xf32>, vector<8x32xf32> -> vector<8x32xf32>
    %497 = vector.broadcast %3 : vector<1x32xf32> to vector<8x32xf32>
    %498 = arith.addf %496, %497 : vector<8x32xf32>
    %cst_205 = arith.constant 0.000000e+00 : f32
    %499 = vector.broadcast %cst_205 : f32 to vector<8x32xf32>
    %500 = arith.maximumf %498, %499 : vector<8x32xf32>
    %c33_i32 = arith.constant 33 : i32
    %501 = arith.index_cast %c33_i32 : i32 to index
    %c0_206 = arith.constant 0 : index
    %c0_207 = arith.constant 0 : index
    %502 = vector.load %arg1[%501, %c0_206, %c0_207] : memref<47x8x32xf32, #tpu.memory_space<vmem>>, vector<1x8x32xf32>
    %503 = vector.shape_cast %502 : vector<1x8x32xf32> to vector<8x32xf32>
    %504 = tpu.concatenate %503, %494 in 1 : vector<8x32xf32>, vector<8x32xf32> -> vector<8x64xf32>
    %cst_208 = arith.constant dense<0.000000e+00> : vector<8x32xf32>
    %505 = tpu.matmul %504, %0, %cst_208 {dimension_numbers = #tpu.dot_dimension_numbers<[1], [0], [0], [1], [0, 0, 1, 1], [], []>} : vector<8x64xf32>, vector<64x32xf32>, vector<8x32xf32> -> vector<8x32xf32>
    %506 = vector.broadcast %2 : vector<1x32xf32> to vector<8x32xf32>
    %507 = arith.addf %505, %506 : vector<8x32xf32>
    %cst_209 = arith.constant 0.000000e+00 : f32
    %508 = vector.broadcast %cst_209 : f32 to vector<8x32xf32>
    %509 = arith.maximumf %507, %508 : vector<8x32xf32>
    %510 = tpu.concatenate %509, %500 in 1 : vector<8x32xf32>, vector<8x32xf32> -> vector<8x64xf32>
    %cst_210 = arith.constant dense<0.000000e+00> : vector<8x32xf32>
    %511 = tpu.matmul %510, %1, %cst_210 {dimension_numbers = #tpu.dot_dimension_numbers<[1], [0], [0], [1], [0, 0, 1, 1], [], []>} : vector<8x64xf32>, vector<64x32xf32>, vector<8x32xf32> -> vector<8x32xf32>
    %512 = vector.broadcast %3 : vector<1x32xf32> to vector<8x32xf32>
    %513 = arith.addf %511, %512 : vector<8x32xf32>
    %cst_211 = arith.constant 0.000000e+00 : f32
    %514 = vector.broadcast %cst_211 : f32 to vector<8x32xf32>
    %515 = arith.maximumf %513, %514 : vector<8x32xf32>
    %c34_i32 = arith.constant 34 : i32
    %516 = arith.index_cast %c34_i32 : i32 to index
    %c0_212 = arith.constant 0 : index
    %c0_213 = arith.constant 0 : index
    %517 = vector.load %arg1[%516, %c0_212, %c0_213] : memref<47x8x32xf32, #tpu.memory_space<vmem>>, vector<1x8x32xf32>
    %518 = vector.shape_cast %517 : vector<1x8x32xf32> to vector<8x32xf32>
    %519 = tpu.concatenate %518, %509 in 1 : vector<8x32xf32>, vector<8x32xf32> -> vector<8x64xf32>
    %cst_214 = arith.constant dense<0.000000e+00> : vector<8x32xf32>
    %520 = tpu.matmul %519, %0, %cst_214 {dimension_numbers = #tpu.dot_dimension_numbers<[1], [0], [0], [1], [0, 0, 1, 1], [], []>} : vector<8x64xf32>, vector<64x32xf32>, vector<8x32xf32> -> vector<8x32xf32>
    %521 = vector.broadcast %2 : vector<1x32xf32> to vector<8x32xf32>
    %522 = arith.addf %520, %521 : vector<8x32xf32>
    %cst_215 = arith.constant 0.000000e+00 : f32
    %523 = vector.broadcast %cst_215 : f32 to vector<8x32xf32>
    %524 = arith.maximumf %522, %523 : vector<8x32xf32>
    %525 = tpu.concatenate %524, %515 in 1 : vector<8x32xf32>, vector<8x32xf32> -> vector<8x64xf32>
    %cst_216 = arith.constant dense<0.000000e+00> : vector<8x32xf32>
    %526 = tpu.matmul %525, %1, %cst_216 {dimension_numbers = #tpu.dot_dimension_numbers<[1], [0], [0], [1], [0, 0, 1, 1], [], []>} : vector<8x64xf32>, vector<64x32xf32>, vector<8x32xf32> -> vector<8x32xf32>
    %527 = vector.broadcast %3 : vector<1x32xf32> to vector<8x32xf32>
    %528 = arith.addf %526, %527 : vector<8x32xf32>
    %cst_217 = arith.constant 0.000000e+00 : f32
    %529 = vector.broadcast %cst_217 : f32 to vector<8x32xf32>
    %530 = arith.maximumf %528, %529 : vector<8x32xf32>
    %c35_i32 = arith.constant 35 : i32
    %531 = arith.index_cast %c35_i32 : i32 to index
    %c0_218 = arith.constant 0 : index
    %c0_219 = arith.constant 0 : index
    %532 = vector.load %arg1[%531, %c0_218, %c0_219] : memref<47x8x32xf32, #tpu.memory_space<vmem>>, vector<1x8x32xf32>
    %533 = vector.shape_cast %532 : vector<1x8x32xf32> to vector<8x32xf32>
    %534 = tpu.concatenate %533, %524 in 1 : vector<8x32xf32>, vector<8x32xf32> -> vector<8x64xf32>
    %cst_220 = arith.constant dense<0.000000e+00> : vector<8x32xf32>
    %535 = tpu.matmul %534, %0, %cst_220 {dimension_numbers = #tpu.dot_dimension_numbers<[1], [0], [0], [1], [0, 0, 1, 1], [], []>} : vector<8x64xf32>, vector<64x32xf32>, vector<8x32xf32> -> vector<8x32xf32>
    %536 = vector.broadcast %2 : vector<1x32xf32> to vector<8x32xf32>
    %537 = arith.addf %535, %536 : vector<8x32xf32>
    %cst_221 = arith.constant 0.000000e+00 : f32
    %538 = vector.broadcast %cst_221 : f32 to vector<8x32xf32>
    %539 = arith.maximumf %537, %538 : vector<8x32xf32>
    %540 = tpu.concatenate %539, %530 in 1 : vector<8x32xf32>, vector<8x32xf32> -> vector<8x64xf32>
    %cst_222 = arith.constant dense<0.000000e+00> : vector<8x32xf32>
    %541 = tpu.matmul %540, %1, %cst_222 {dimension_numbers = #tpu.dot_dimension_numbers<[1], [0], [0], [1], [0, 0, 1, 1], [], []>} : vector<8x64xf32>, vector<64x32xf32>, vector<8x32xf32> -> vector<8x32xf32>
    %542 = vector.broadcast %3 : vector<1x32xf32> to vector<8x32xf32>
    %543 = arith.addf %541, %542 : vector<8x32xf32>
    %cst_223 = arith.constant 0.000000e+00 : f32
    %544 = vector.broadcast %cst_223 : f32 to vector<8x32xf32>
    %545 = arith.maximumf %543, %544 : vector<8x32xf32>
    %c36_i32 = arith.constant 36 : i32
    %546 = arith.index_cast %c36_i32 : i32 to index
    %c0_224 = arith.constant 0 : index
    %c0_225 = arith.constant 0 : index
    %547 = vector.load %arg1[%546, %c0_224, %c0_225] : memref<47x8x32xf32, #tpu.memory_space<vmem>>, vector<1x8x32xf32>
    %548 = vector.shape_cast %547 : vector<1x8x32xf32> to vector<8x32xf32>
    %549 = tpu.concatenate %548, %539 in 1 : vector<8x32xf32>, vector<8x32xf32> -> vector<8x64xf32>
    %cst_226 = arith.constant dense<0.000000e+00> : vector<8x32xf32>
    %550 = tpu.matmul %549, %0, %cst_226 {dimension_numbers = #tpu.dot_dimension_numbers<[1], [0], [0], [1], [0, 0, 1, 1], [], []>} : vector<8x64xf32>, vector<64x32xf32>, vector<8x32xf32> -> vector<8x32xf32>
    %551 = vector.broadcast %2 : vector<1x32xf32> to vector<8x32xf32>
    %552 = arith.addf %550, %551 : vector<8x32xf32>
    %cst_227 = arith.constant 0.000000e+00 : f32
    %553 = vector.broadcast %cst_227 : f32 to vector<8x32xf32>
    %554 = arith.maximumf %552, %553 : vector<8x32xf32>
    %555 = tpu.concatenate %554, %545 in 1 : vector<8x32xf32>, vector<8x32xf32> -> vector<8x64xf32>
    %cst_228 = arith.constant dense<0.000000e+00> : vector<8x32xf32>
    %556 = tpu.matmul %555, %1, %cst_228 {dimension_numbers = #tpu.dot_dimension_numbers<[1], [0], [0], [1], [0, 0, 1, 1], [], []>} : vector<8x64xf32>, vector<64x32xf32>, vector<8x32xf32> -> vector<8x32xf32>
    %557 = vector.broadcast %3 : vector<1x32xf32> to vector<8x32xf32>
    %558 = arith.addf %556, %557 : vector<8x32xf32>
    %cst_229 = arith.constant 0.000000e+00 : f32
    %559 = vector.broadcast %cst_229 : f32 to vector<8x32xf32>
    %560 = arith.maximumf %558, %559 : vector<8x32xf32>
    %c37_i32 = arith.constant 37 : i32
    %561 = arith.index_cast %c37_i32 : i32 to index
    %c0_230 = arith.constant 0 : index
    %c0_231 = arith.constant 0 : index
    %562 = vector.load %arg1[%561, %c0_230, %c0_231] : memref<47x8x32xf32, #tpu.memory_space<vmem>>, vector<1x8x32xf32>
    %563 = vector.shape_cast %562 : vector<1x8x32xf32> to vector<8x32xf32>
    %564 = tpu.concatenate %563, %554 in 1 : vector<8x32xf32>, vector<8x32xf32> -> vector<8x64xf32>
    %cst_232 = arith.constant dense<0.000000e+00> : vector<8x32xf32>
    %565 = tpu.matmul %564, %0, %cst_232 {dimension_numbers = #tpu.dot_dimension_numbers<[1], [0], [0], [1], [0, 0, 1, 1], [], []>} : vector<8x64xf32>, vector<64x32xf32>, vector<8x32xf32> -> vector<8x32xf32>
    %566 = vector.broadcast %2 : vector<1x32xf32> to vector<8x32xf32>
    %567 = arith.addf %565, %566 : vector<8x32xf32>
    %cst_233 = arith.constant 0.000000e+00 : f32
    %568 = vector.broadcast %cst_233 : f32 to vector<8x32xf32>
    %569 = arith.maximumf %567, %568 : vector<8x32xf32>
    %570 = tpu.concatenate %569, %560 in 1 : vector<8x32xf32>, vector<8x32xf32> -> vector<8x64xf32>
    %cst_234 = arith.constant dense<0.000000e+00> : vector<8x32xf32>
    %571 = tpu.matmul %570, %1, %cst_234 {dimension_numbers = #tpu.dot_dimension_numbers<[1], [0], [0], [1], [0, 0, 1, 1], [], []>} : vector<8x64xf32>, vector<64x32xf32>, vector<8x32xf32> -> vector<8x32xf32>
    %572 = vector.broadcast %3 : vector<1x32xf32> to vector<8x32xf32>
    %573 = arith.addf %571, %572 : vector<8x32xf32>
    %cst_235 = arith.constant 0.000000e+00 : f32
    %574 = vector.broadcast %cst_235 : f32 to vector<8x32xf32>
    %575 = arith.maximumf %573, %574 : vector<8x32xf32>
    %c38_i32 = arith.constant 38 : i32
    %576 = arith.index_cast %c38_i32 : i32 to index
    %c0_236 = arith.constant 0 : index
    %c0_237 = arith.constant 0 : index
    %577 = vector.load %arg1[%576, %c0_236, %c0_237] : memref<47x8x32xf32, #tpu.memory_space<vmem>>, vector<1x8x32xf32>
    %578 = vector.shape_cast %577 : vector<1x8x32xf32> to vector<8x32xf32>
    %579 = tpu.concatenate %578, %569 in 1 : vector<8x32xf32>, vector<8x32xf32> -> vector<8x64xf32>
    %cst_238 = arith.constant dense<0.000000e+00> : vector<8x32xf32>
    %580 = tpu.matmul %579, %0, %cst_238 {dimension_numbers = #tpu.dot_dimension_numbers<[1], [0], [0], [1], [0, 0, 1, 1], [], []>} : vector<8x64xf32>, vector<64x32xf32>, vector<8x32xf32> -> vector<8x32xf32>
    %581 = vector.broadcast %2 : vector<1x32xf32> to vector<8x32xf32>
    %582 = arith.addf %580, %581 : vector<8x32xf32>
    %cst_239 = arith.constant 0.000000e+00 : f32
    %583 = vector.broadcast %cst_239 : f32 to vector<8x32xf32>
    %584 = arith.maximumf %582, %583 : vector<8x32xf32>
    %585 = tpu.concatenate %584, %575 in 1 : vector<8x32xf32>, vector<8x32xf32> -> vector<8x64xf32>
    %cst_240 = arith.constant dense<0.000000e+00> : vector<8x32xf32>
    %586 = tpu.matmul %585, %1, %cst_240 {dimension_numbers = #tpu.dot_dimension_numbers<[1], [0], [0], [1], [0, 0, 1, 1], [], []>} : vector<8x64xf32>, vector<64x32xf32>, vector<8x32xf32> -> vector<8x32xf32>
    %587 = vector.broadcast %3 : vector<1x32xf32> to vector<8x32xf32>
    %588 = arith.addf %586, %587 : vector<8x32xf32>
    %cst_241 = arith.constant 0.000000e+00 : f32
    %589 = vector.broadcast %cst_241 : f32 to vector<8x32xf32>
    %590 = arith.maximumf %588, %589 : vector<8x32xf32>
    %c39_i32 = arith.constant 39 : i32
    %591 = arith.index_cast %c39_i32 : i32 to index
    %c0_242 = arith.constant 0 : index
    %c0_243 = arith.constant 0 : index
    %592 = vector.load %arg1[%591, %c0_242, %c0_243] : memref<47x8x32xf32, #tpu.memory_space<vmem>>, vector<1x8x32xf32>
    %593 = vector.shape_cast %592 : vector<1x8x32xf32> to vector<8x32xf32>
    %594 = tpu.concatenate %593, %584 in 1 : vector<8x32xf32>, vector<8x32xf32> -> vector<8x64xf32>
    %cst_244 = arith.constant dense<0.000000e+00> : vector<8x32xf32>
    %595 = tpu.matmul %594, %0, %cst_244 {dimension_numbers = #tpu.dot_dimension_numbers<[1], [0], [0], [1], [0, 0, 1, 1], [], []>} : vector<8x64xf32>, vector<64x32xf32>, vector<8x32xf32> -> vector<8x32xf32>
    %596 = vector.broadcast %2 : vector<1x32xf32> to vector<8x32xf32>
    %597 = arith.addf %595, %596 : vector<8x32xf32>
    %cst_245 = arith.constant 0.000000e+00 : f32
    %598 = vector.broadcast %cst_245 : f32 to vector<8x32xf32>
    %599 = arith.maximumf %597, %598 : vector<8x32xf32>
    %600 = tpu.concatenate %599, %590 in 1 : vector<8x32xf32>, vector<8x32xf32> -> vector<8x64xf32>
    %cst_246 = arith.constant dense<0.000000e+00> : vector<8x32xf32>
    %601 = tpu.matmul %600, %1, %cst_246 {dimension_numbers = #tpu.dot_dimension_numbers<[1], [0], [0], [1], [0, 0, 1, 1], [], []>} : vector<8x64xf32>, vector<64x32xf32>, vector<8x32xf32> -> vector<8x32xf32>
    %602 = vector.broadcast %3 : vector<1x32xf32> to vector<8x32xf32>
    %603 = arith.addf %601, %602 : vector<8x32xf32>
    %cst_247 = arith.constant 0.000000e+00 : f32
    %604 = vector.broadcast %cst_247 : f32 to vector<8x32xf32>
    %605 = arith.maximumf %603, %604 : vector<8x32xf32>
    %c40_i32 = arith.constant 40 : i32
    %606 = arith.index_cast %c40_i32 : i32 to index
    %c0_248 = arith.constant 0 : index
    %c0_249 = arith.constant 0 : index
    %607 = vector.load %arg1[%606, %c0_248, %c0_249] : memref<47x8x32xf32, #tpu.memory_space<vmem>>, vector<1x8x32xf32>
    %608 = vector.shape_cast %607 : vector<1x8x32xf32> to vector<8x32xf32>
    %609 = tpu.concatenate %608, %599 in 1 : vector<8x32xf32>, vector<8x32xf32> -> vector<8x64xf32>
    %cst_250 = arith.constant dense<0.000000e+00> : vector<8x32xf32>
    %610 = tpu.matmul %609, %0, %cst_250 {dimension_numbers = #tpu.dot_dimension_numbers<[1], [0], [0], [1], [0, 0, 1, 1], [], []>} : vector<8x64xf32>, vector<64x32xf32>, vector<8x32xf32> -> vector<8x32xf32>
    %611 = vector.broadcast %2 : vector<1x32xf32> to vector<8x32xf32>
    %612 = arith.addf %610, %611 : vector<8x32xf32>
    %cst_251 = arith.constant 0.000000e+00 : f32
    %613 = vector.broadcast %cst_251 : f32 to vector<8x32xf32>
    %614 = arith.maximumf %612, %613 : vector<8x32xf32>
    %615 = tpu.concatenate %614, %605 in 1 : vector<8x32xf32>, vector<8x32xf32> -> vector<8x64xf32>
    %cst_252 = arith.constant dense<0.000000e+00> : vector<8x32xf32>
    %616 = tpu.matmul %615, %1, %cst_252 {dimension_numbers = #tpu.dot_dimension_numbers<[1], [0], [0], [1], [0, 0, 1, 1], [], []>} : vector<8x64xf32>, vector<64x32xf32>, vector<8x32xf32> -> vector<8x32xf32>
    %617 = vector.broadcast %3 : vector<1x32xf32> to vector<8x32xf32>
    %618 = arith.addf %616, %617 : vector<8x32xf32>
    %cst_253 = arith.constant 0.000000e+00 : f32
    %619 = vector.broadcast %cst_253 : f32 to vector<8x32xf32>
    %620 = arith.maximumf %618, %619 : vector<8x32xf32>
    %c41_i32 = arith.constant 41 : i32
    %621 = arith.index_cast %c41_i32 : i32 to index
    %c0_254 = arith.constant 0 : index
    %c0_255 = arith.constant 0 : index
    %622 = vector.load %arg1[%621, %c0_254, %c0_255] : memref<47x8x32xf32, #tpu.memory_space<vmem>>, vector<1x8x32xf32>
    %623 = vector.shape_cast %622 : vector<1x8x32xf32> to vector<8x32xf32>
    %624 = tpu.concatenate %623, %614 in 1 : vector<8x32xf32>, vector<8x32xf32> -> vector<8x64xf32>
    %cst_256 = arith.constant dense<0.000000e+00> : vector<8x32xf32>
    %625 = tpu.matmul %624, %0, %cst_256 {dimension_numbers = #tpu.dot_dimension_numbers<[1], [0], [0], [1], [0, 0, 1, 1], [], []>} : vector<8x64xf32>, vector<64x32xf32>, vector<8x32xf32> -> vector<8x32xf32>
    %626 = vector.broadcast %2 : vector<1x32xf32> to vector<8x32xf32>
    %627 = arith.addf %625, %626 : vector<8x32xf32>
    %cst_257 = arith.constant 0.000000e+00 : f32
    %628 = vector.broadcast %cst_257 : f32 to vector<8x32xf32>
    %629 = arith.maximumf %627, %628 : vector<8x32xf32>
    %630 = tpu.concatenate %629, %620 in 1 : vector<8x32xf32>, vector<8x32xf32> -> vector<8x64xf32>
    %cst_258 = arith.constant dense<0.000000e+00> : vector<8x32xf32>
    %631 = tpu.matmul %630, %1, %cst_258 {dimension_numbers = #tpu.dot_dimension_numbers<[1], [0], [0], [1], [0, 0, 1, 1], [], []>} : vector<8x64xf32>, vector<64x32xf32>, vector<8x32xf32> -> vector<8x32xf32>
    %632 = vector.broadcast %3 : vector<1x32xf32> to vector<8x32xf32>
    %633 = arith.addf %631, %632 : vector<8x32xf32>
    %cst_259 = arith.constant 0.000000e+00 : f32
    %634 = vector.broadcast %cst_259 : f32 to vector<8x32xf32>
    %635 = arith.maximumf %633, %634 : vector<8x32xf32>
    %c42_i32 = arith.constant 42 : i32
    %636 = arith.index_cast %c42_i32 : i32 to index
    %c0_260 = arith.constant 0 : index
    %c0_261 = arith.constant 0 : index
    %637 = vector.load %arg1[%636, %c0_260, %c0_261] : memref<47x8x32xf32, #tpu.memory_space<vmem>>, vector<1x8x32xf32>
    %638 = vector.shape_cast %637 : vector<1x8x32xf32> to vector<8x32xf32>
    %639 = tpu.concatenate %638, %629 in 1 : vector<8x32xf32>, vector<8x32xf32> -> vector<8x64xf32>
    %cst_262 = arith.constant dense<0.000000e+00> : vector<8x32xf32>
    %640 = tpu.matmul %639, %0, %cst_262 {dimension_numbers = #tpu.dot_dimension_numbers<[1], [0], [0], [1], [0, 0, 1, 1], [], []>} : vector<8x64xf32>, vector<64x32xf32>, vector<8x32xf32> -> vector<8x32xf32>
    %641 = vector.broadcast %2 : vector<1x32xf32> to vector<8x32xf32>
    %642 = arith.addf %640, %641 : vector<8x32xf32>
    %cst_263 = arith.constant 0.000000e+00 : f32
    %643 = vector.broadcast %cst_263 : f32 to vector<8x32xf32>
    %644 = arith.maximumf %642, %643 : vector<8x32xf32>
    %645 = tpu.concatenate %644, %635 in 1 : vector<8x32xf32>, vector<8x32xf32> -> vector<8x64xf32>
    %cst_264 = arith.constant dense<0.000000e+00> : vector<8x32xf32>
    %646 = tpu.matmul %645, %1, %cst_264 {dimension_numbers = #tpu.dot_dimension_numbers<[1], [0], [0], [1], [0, 0, 1, 1], [], []>} : vector<8x64xf32>, vector<64x32xf32>, vector<8x32xf32> -> vector<8x32xf32>
    %647 = vector.broadcast %3 : vector<1x32xf32> to vector<8x32xf32>
    %648 = arith.addf %646, %647 : vector<8x32xf32>
    %cst_265 = arith.constant 0.000000e+00 : f32
    %649 = vector.broadcast %cst_265 : f32 to vector<8x32xf32>
    %650 = arith.maximumf %648, %649 : vector<8x32xf32>
    %c43_i32 = arith.constant 43 : i32
    %651 = arith.index_cast %c43_i32 : i32 to index
    %c0_266 = arith.constant 0 : index
    %c0_267 = arith.constant 0 : index
    %652 = vector.load %arg1[%651, %c0_266, %c0_267] : memref<47x8x32xf32, #tpu.memory_space<vmem>>, vector<1x8x32xf32>
    %653 = vector.shape_cast %652 : vector<1x8x32xf32> to vector<8x32xf32>
    %654 = tpu.concatenate %653, %644 in 1 : vector<8x32xf32>, vector<8x32xf32> -> vector<8x64xf32>
    %cst_268 = arith.constant dense<0.000000e+00> : vector<8x32xf32>
    %655 = tpu.matmul %654, %0, %cst_268 {dimension_numbers = #tpu.dot_dimension_numbers<[1], [0], [0], [1], [0, 0, 1, 1], [], []>} : vector<8x64xf32>, vector<64x32xf32>, vector<8x32xf32> -> vector<8x32xf32>
    %656 = vector.broadcast %2 : vector<1x32xf32> to vector<8x32xf32>
    %657 = arith.addf %655, %656 : vector<8x32xf32>
    %cst_269 = arith.constant 0.000000e+00 : f32
    %658 = vector.broadcast %cst_269 : f32 to vector<8x32xf32>
    %659 = arith.maximumf %657, %658 : vector<8x32xf32>
    %660 = tpu.concatenate %659, %650 in 1 : vector<8x32xf32>, vector<8x32xf32> -> vector<8x64xf32>
    %cst_270 = arith.constant dense<0.000000e+00> : vector<8x32xf32>
    %661 = tpu.matmul %660, %1, %cst_270 {dimension_numbers = #tpu.dot_dimension_numbers<[1], [0], [0], [1], [0, 0, 1, 1], [], []>} : vector<8x64xf32>, vector<64x32xf32>, vector<8x32xf32> -> vector<8x32xf32>
    %662 = vector.broadcast %3 : vector<1x32xf32> to vector<8x32xf32>
    %663 = arith.addf %661, %662 : vector<8x32xf32>
    %cst_271 = arith.constant 0.000000e+00 : f32
    %664 = vector.broadcast %cst_271 : f32 to vector<8x32xf32>
    %665 = arith.maximumf %663, %664 : vector<8x32xf32>
    %c44_i32 = arith.constant 44 : i32
    %666 = arith.index_cast %c44_i32 : i32 to index
    %c0_272 = arith.constant 0 : index
    %c0_273 = arith.constant 0 : index
    %667 = vector.load %arg1[%666, %c0_272, %c0_273] : memref<47x8x32xf32, #tpu.memory_space<vmem>>, vector<1x8x32xf32>
    %668 = vector.shape_cast %667 : vector<1x8x32xf32> to vector<8x32xf32>
    %669 = tpu.concatenate %668, %659 in 1 : vector<8x32xf32>, vector<8x32xf32> -> vector<8x64xf32>
    %cst_274 = arith.constant dense<0.000000e+00> : vector<8x32xf32>
    %670 = tpu.matmul %669, %0, %cst_274 {dimension_numbers = #tpu.dot_dimension_numbers<[1], [0], [0], [1], [0, 0, 1, 1], [], []>} : vector<8x64xf32>, vector<64x32xf32>, vector<8x32xf32> -> vector<8x32xf32>
    %671 = vector.broadcast %2 : vector<1x32xf32> to vector<8x32xf32>
    %672 = arith.addf %670, %671 : vector<8x32xf32>
    %cst_275 = arith.constant 0.000000e+00 : f32
    %673 = vector.broadcast %cst_275 : f32 to vector<8x32xf32>
    %674 = arith.maximumf %672, %673 : vector<8x32xf32>
    %675 = tpu.concatenate %674, %665 in 1 : vector<8x32xf32>, vector<8x32xf32> -> vector<8x64xf32>
    %cst_276 = arith.constant dense<0.000000e+00> : vector<8x32xf32>
    %676 = tpu.matmul %675, %1, %cst_276 {dimension_numbers = #tpu.dot_dimension_numbers<[1], [0], [0], [1], [0, 0, 1, 1], [], []>} : vector<8x64xf32>, vector<64x32xf32>, vector<8x32xf32> -> vector<8x32xf32>
    %677 = vector.broadcast %3 : vector<1x32xf32> to vector<8x32xf32>
    %678 = arith.addf %676, %677 : vector<8x32xf32>
    %cst_277 = arith.constant 0.000000e+00 : f32
    %679 = vector.broadcast %cst_277 : f32 to vector<8x32xf32>
    %680 = arith.maximumf %678, %679 : vector<8x32xf32>
    %c45_i32 = arith.constant 45 : i32
    %681 = arith.index_cast %c45_i32 : i32 to index
    %c0_278 = arith.constant 0 : index
    %c0_279 = arith.constant 0 : index
    %682 = vector.load %arg1[%681, %c0_278, %c0_279] : memref<47x8x32xf32, #tpu.memory_space<vmem>>, vector<1x8x32xf32>
    %683 = vector.shape_cast %682 : vector<1x8x32xf32> to vector<8x32xf32>
    %684 = tpu.concatenate %683, %674 in 1 : vector<8x32xf32>, vector<8x32xf32> -> vector<8x64xf32>
    %cst_280 = arith.constant dense<0.000000e+00> : vector<8x32xf32>
    %685 = tpu.matmul %684, %0, %cst_280 {dimension_numbers = #tpu.dot_dimension_numbers<[1], [0], [0], [1], [0, 0, 1, 1], [], []>} : vector<8x64xf32>, vector<64x32xf32>, vector<8x32xf32> -> vector<8x32xf32>
    %686 = vector.broadcast %2 : vector<1x32xf32> to vector<8x32xf32>
    %687 = arith.addf %685, %686 : vector<8x32xf32>
    %cst_281 = arith.constant 0.000000e+00 : f32
    %688 = vector.broadcast %cst_281 : f32 to vector<8x32xf32>
    %689 = arith.maximumf %687, %688 : vector<8x32xf32>
    %690 = tpu.concatenate %689, %680 in 1 : vector<8x32xf32>, vector<8x32xf32> -> vector<8x64xf32>
    %cst_282 = arith.constant dense<0.000000e+00> : vector<8x32xf32>
    %691 = tpu.matmul %690, %1, %cst_282 {dimension_numbers = #tpu.dot_dimension_numbers<[1], [0], [0], [1], [0, 0, 1, 1], [], []>} : vector<8x64xf32>, vector<64x32xf32>, vector<8x32xf32> -> vector<8x32xf32>
    %692 = vector.broadcast %3 : vector<1x32xf32> to vector<8x32xf32>
    %693 = arith.addf %691, %692 : vector<8x32xf32>
    %cst_283 = arith.constant 0.000000e+00 : f32
    %694 = vector.broadcast %cst_283 : f32 to vector<8x32xf32>
    %695 = arith.maximumf %693, %694 : vector<8x32xf32>
    %c46_i32 = arith.constant 46 : i32
    %696 = arith.index_cast %c46_i32 : i32 to index
    %c0_284 = arith.constant 0 : index
    %c0_285 = arith.constant 0 : index
    %697 = vector.load %arg1[%696, %c0_284, %c0_285] : memref<47x8x32xf32, #tpu.memory_space<vmem>>, vector<1x8x32xf32>
    %698 = vector.shape_cast %697 : vector<1x8x32xf32> to vector<8x32xf32>
    %699 = tpu.concatenate %698, %689 in 1 : vector<8x32xf32>, vector<8x32xf32> -> vector<8x64xf32>
    %cst_286 = arith.constant dense<0.000000e+00> : vector<8x32xf32>
    %700 = tpu.matmul %699, %0, %cst_286 {dimension_numbers = #tpu.dot_dimension_numbers<[1], [0], [0], [1], [0, 0, 1, 1], [], []>} : vector<8x64xf32>, vector<64x32xf32>, vector<8x32xf32> -> vector<8x32xf32>
    %701 = vector.broadcast %2 : vector<1x32xf32> to vector<8x32xf32>
    %702 = arith.addf %700, %701 : vector<8x32xf32>
    %cst_287 = arith.constant 0.000000e+00 : f32
    %703 = vector.broadcast %cst_287 : f32 to vector<8x32xf32>
    %704 = arith.maximumf %702, %703 : vector<8x32xf32>
    %705 = tpu.concatenate %704, %695 in 1 : vector<8x32xf32>, vector<8x32xf32> -> vector<8x64xf32>
    %cst_288 = arith.constant dense<0.000000e+00> : vector<8x32xf32>
    %706 = tpu.matmul %705, %1, %cst_288 {dimension_numbers = #tpu.dot_dimension_numbers<[1], [0], [0], [1], [0, 0, 1, 1], [], []>} : vector<8x64xf32>, vector<64x32xf32>, vector<8x32xf32> -> vector<8x32xf32>
    %707 = vector.broadcast %3 : vector<1x32xf32> to vector<8x32xf32>
    %708 = arith.addf %706, %707 : vector<8x32xf32>
    %cst_289 = arith.constant 0.000000e+00 : f32
    %709 = vector.broadcast %cst_289 : f32 to vector<8x32xf32>
    %710 = arith.maximumf %708, %709 : vector<8x32xf32>
    %c47_i32 = arith.constant 47 : i32
    %c0_290 = arith.constant 0 : index
    %c0_291 = arith.constant 0 : index
    %711 = vector.load %arg6[%c0_290, %c0_291] : memref<32x32xf32, #tpu.memory_space<vmem>>, vector<32x32xf32>
    %cst_292 = arith.constant dense<0.000000e+00> : vector<8x32xf32>
    %712 = tpu.matmul %710, %711, %cst_292 {dimension_numbers = #tpu.dot_dimension_numbers<[1], [0], [0], [1], [0, 0, 1, 1], [], []>} : vector<8x32xf32>, vector<32x32xf32>, vector<8x32xf32> -> vector<8x32xf32>
    %c0_293 = arith.constant 0 : index
    %c0_294 = arith.constant 0 : index
    %713 = vector.load %arg7[%c0_293, %c0_294] : memref<1x32xf32, #tpu.memory_space<vmem>>, vector<1x32xf32>
    %714 = vector.broadcast %713 : vector<1x32xf32> to vector<8x32xf32>
    %715 = arith.addf %712, %714 : vector<8x32xf32>
    %cst_295 = arith.constant 0.000000e+00 : f32
    %716 = vector.broadcast %cst_295 : f32 to vector<8x32xf32>
    %717 = arith.maximumf %715, %716 : vector<8x32xf32>
    %c0_296 = arith.constant 0 : index
    %c0_297 = arith.constant 0 : index
    %718 = vector.load %arg8[%c0_296, %c0_297] : memref<1x32xf32, #tpu.memory_space<vmem>>, vector<1x32xf32>
    %719 = vector.broadcast %718 : vector<1x32xf32> to vector<8x32xf32>
    %720 = arith.mulf %717, %719 : vector<8x32xf32>
    %cst_298 = arith.constant dense<0.000000e+00> : vector<8xf32>
    %721 = vector.multi_reduction <add>, %720, %cst_298 [1] : vector<8x32xf32> to vector<8xf32>
    %722 = vector.shape_cast %721 : vector<8xf32> to vector<8x1xf32>
    %c0_299 = arith.constant 0 : index
    %c0_300 = arith.constant 0 : index
    %723 = vector.load %arg9[%c0_299, %c0_300] : memref<1x1xf32, #tpu.memory_space<vmem>>, vector<1x1xf32>
    %724 = vector.broadcast %723 : vector<1x1xf32> to vector<8x1xf32>
    %725 = arith.addf %722, %724 : vector<8x1xf32>
    %c0_301 = arith.constant 0 : index
    %c0_302 = arith.constant 0 : index
    %726 = vector.load %arg10[%c0_301, %c0_302] : memref<8x1xf32, #tpu.memory_space<vmem>>, vector<8x1xf32>
    tpu.vector_store %arg10[%c0_301, %c0_302], %725 {strides = array<i32>} : memref<8x1xf32, #tpu.memory_space<vmem>>, vector<8x1xf32>,
    return
  }
  func.func @transform_0(%arg0: i32) -> (i32, i32, i32) {
    %c0_i32 = arith.constant 0 : i32
    %c0_i32_0 = arith.constant 0 : i32
    %c0_i32_1 = arith.constant 0 : i32
    return %c0_i32, %arg0, %c0_i32_0 : i32, i32, i32
  }
  func.func @transform_1(%arg0: i32) -> (i32, i32) {
    %c0_i32 = arith.constant 0 : i32
    %c0_i32_0 = arith.constant 0 : i32
    %c0_i32_1 = arith.constant 0 : i32
    return %c0_i32, %c0_i32_0 : i32, i32
  }
  func.func @transform_2(%arg0: i32) -> (i32, i32) {
    %c0_i32 = arith.constant 0 : i32
    %c0_i32_0 = arith.constant 0 : i32
    %c0_i32_1 = arith.constant 0 : i32
    return %c0_i32, %c0_i32_0 : i32, i32
  }
  func.func @transform_3(%arg0: i32) -> (i32, i32) {
    %c0_i32 = arith.constant 0 : i32
    %c0_i32_0 = arith.constant 0 : i32
    %c0_i32_1 = arith.constant 0 : i32
    return %c0_i32, %c0_i32_0 : i32, i32
  }
  func.func @transform_4(%arg0: i32) -> (i32, i32) {
    %c0_i32 = arith.constant 0 : i32
    %c0_i32_0 = arith.constant 0 : i32
    %c0_i32_1 = arith.constant 0 : i32
    return %c0_i32, %c0_i32_0 : i32, i32
  }
  func.func @transform_5(%arg0: i32) -> (i32, i32) {
    %c0_i32 = arith.constant 0 : i32
    %c0_i32_0 = arith.constant 0 : i32
    %c0_i32_1 = arith.constant 0 : i32
    return %c0_i32, %c0_i32_0 : i32, i32
  }
  func.func @transform_6(%arg0: i32) -> (i32, i32) {
    %c0_i32 = arith.constant 0 : i32
    %c0_i32_0 = arith.constant 0 : i32
    %c0_i32_1 = arith.constant 0 : i32
    return %c0_i32, %c0_i32_0 : i32, i32
  }
  func.func @transform_7(%arg0: i32) -> (i32, i32) {
    %c0_i32 = arith.constant 0 : i32
    %c0_i32_0 = arith.constant 0 : i32
    %c0_i32_1 = arith.constant 0 : i32
    return %c0_i32, %c0_i32_0 : i32, i32
  }
  func.func @transform_8(%arg0: i32) -> (i32, i32) {
    %c0_i32 = arith.constant 0 : i32
    %c0_i32_0 = arith.constant 0 : i32
    %c0_i32_1 = arith.constant 0 : i32
    return %c0_i32, %c0_i32_0 : i32, i32
  }
  func.func @transform_9(%arg0: i32) -> (i32, i32) {
    %c0_i32 = arith.constant 0 : i32
    %c0_i32_0 = arith.constant 0 : i32
    return %arg0, %c0_i32 : i32, i32
  }
}

</mosaic_0001>

<llo_original>
// kernel: tpu_custom_call.1
$region0: #{tpu_custom_call.1}
  #allocation0 [shape = 'u32[]', space=smem, size = 0x4, offset = 0x4, fixed_abs, tag = 'smem constant byte address 0x4 - core index']
  #allocation1 [shape = 'u32[144,128]{1,0:T(1,128)}', space=vmem, size = 0x12000, scoped, tag = 'internal scratch']
  #allocation2 [shape = 'f32[1,1]{1,0:T(1,128)S(1)}', space=vmem, size = 0x200, scoped, tag = 'scoped memory for tpu_custom_call.1']
  %s0 = inlined_call_operand.vmem [shape: f32[47,8,32], index: 0, kind: input, shape index: {}]
  %s1 = inlined_call_operand.vmem [shape: f32[64,32], index: 1, kind: input, shape index: {}]
  %s2 = inlined_call_operand.vmem [shape: f32[1,32], index: 2, kind: input, shape index: {}]
  %s3 = inlined_call_operand.vmem [shape: f32[64,32], index: 3, kind: input, shape index: {}]
  %s4 = inlined_call_operand.vmem [shape: f32[1,32], index: 4, kind: input, shape index: {}]
  %s5 = inlined_call_operand.vmem [shape: f32[32,32], index: 5, kind: input, shape index: {}]
  %s6 = inlined_call_operand.vmem [shape: f32[1,32], index: 6, kind: input, shape index: {}]
  %s7 = inlined_call_operand.vmem [shape: f32[1,32], index: 7, kind: input, shape index: {}]
  %s8 = inlined_call_operand.<no memory space> [shape: f32[1,1], index: 8, kind: input, shape index: {}]
  %s9 = inlined_call_operand.vmem [shape: f32[8,1], index: 9, kind: output, shape index: {}]
  %s10 = sld [smem:[#allocation0]]
  $region46: #{tpu_custom_call.1} parent=0
    _
  %s12 = ssub.s32 1, %s10
  %s13 = scalar_select 0, %s12, %s10
  %v14 = vstv %s8
  %15 = vst [vmem:[#allocation2] sm:$0x1] %v14
  // Predicated region
  $region2: #{tpu_custom_call.1} parent=0 // pred_check
    _
  $region3: #{tpu_custom_call.1} parent=0 // pred_check_branch
    %17 = sbr.rel (0) target = $region5
  $region4: #{tpu_custom_call.1} parent=0 // pred_region
    _
  $region5: #{tpu_custom_call.1} parent=0 // pred_fallthru
    _
  // Predicated region
  $region6: #{tpu_custom_call.1} parent=0 // pred_check
    _
  $region7: #{tpu_custom_call.1} parent=0 // pred_check_branch
    %19 = sbr.rel (0) target = $region9
  $region8: #{tpu_custom_call.1} parent=0 // pred_region
    _
  $region9: #{tpu_custom_call.1} parent=0 // pred_fallthru
    _
  // Predicated region
  $region10: #{tpu_custom_call.1} parent=0 // pred_check
    _
  $region11: #{tpu_custom_call.1} parent=0 // pred_check_branch
    %21 = sbr.rel (0) target = $region13
  $region12: #{tpu_custom_call.1} parent=0 // pred_region
    _
  $region13: #{tpu_custom_call.1} parent=0 // pred_fallthru
    _
  // Predicated region
  $region14: #{tpu_custom_call.1} parent=0 // pred_check
    _
  $region15: #{tpu_custom_call.1} parent=0 // pred_check_branch
    %23 = sbr.rel (0) target = $region17
  $region16: #{tpu_custom_call.1} parent=0 // pred_region
    _
  $region17: #{tpu_custom_call.1} parent=0 // pred_fallthru
    _
  // Predicated region
  $region18: #{tpu_custom_call.1} parent=0 // pred_check
    _
  $region19: #{tpu_custom_call.1} parent=0 // pred_check_branch
    %25 = sbr.rel (0) target = $region21
  $region20: #{tpu_custom_call.1} parent=0 // pred_region
    _
  $region21: #{tpu_custom_call.1} parent=0 // pred_fallthru
    _
  // Predicated region
  $region22: #{tpu_custom_call.1} parent=0 // pred_check
    _
  $region23: #{tpu_custom_call.1} parent=0 // pred_check_branch
    %27 = sbr.rel (0) target = $region25
  $region24: #{tpu_custom_call.1} parent=0 // pred_region
    _
  $region25: #{tpu_custom_call.1} parent=0 // pred_fallthru
    _
  // Predicated region
  $region26: #{tpu_custom_call.1} parent=0 // pred_check
    _
  $region27: #{tpu_custom_call.1} parent=0 // pred_check_branch
    %29 = sbr.rel (0) target = $region29
  $region28: #{tpu_custom_call.1} parent=0 // pred_region
    _
  $region29: #{tpu_custom_call.1} parent=0 // pred_fallthru
    _
  // Predicated region
  $region30: #{tpu_custom_call.1} parent=0 // pred_check
    _
  $region31: #{tpu_custom_call.1} parent=0 // pred_check_branch
    %31 = sbr.rel (0) target = $region33
  $region32: #{tpu_custom_call.1} parent=0 // pred_region
    _
  $region33: #{tpu_custom_call.1} parent=0 // pred_fallthru
    _
  // Predicated region
  $region34: #{tpu_custom_call.1} parent=0 // pred_check
    _
  $region35: #{tpu_custom_call.1} parent=0 // pred_check_branch
    %33 = sbr.rel (0) target = $region37
  $region36: #{tpu_custom_call.1} parent=0 // pred_region
    _
  $region37: #{tpu_custom_call.1} parent=0 // pred_fallthru
    _
  %v34 = vld [vmem:[%s1] sm:$0xff]
  %v35 = vld [vmem:[%s1 + $0x8] sm:$0xff]
  %v36 = vld [vmem:[%s1 + $0x10] sm:$0xff]
  %v37 = vld [vmem:[%s1 + $0x18] sm:$0xff]
  %v38 = vld [vmem:[%s1 + $0x20] sm:$0xff]
  %v39 = vld [vmem:[%s1 + $0x28] sm:$0xff]
  %v40 = vld [vmem:[%s1 + $0x30] sm:$0xff]
  %v41 = vld [vmem:[%s1 + $0x38] sm:$0xff]
  %v42 = vld [vmem:[%s3] sm:$0xff]
  %v43 = vld [vmem:[%s3 + $0x8] sm:$0xff]
  %v44 = vld [vmem:[%s3 + $0x10] sm:$0xff]
  %v45 = vld [vmem:[%s3 + $0x18] sm:$0xff]
  %v46 = vld [vmem:[%s3 + $0x20] sm:$0xff]
  %v47 = vld [vmem:[%s3 + $0x28] sm:$0xff]
  %v48 = vld [vmem:[%s3 + $0x30] sm:$0xff]
  %v49 = vld [vmem:[%s3 + $0x38] sm:$0xff]
  %v50 = vld [vmem:[%s2] sm:$0x1]
  %v51 = vld [vmem:[%s4] sm:$0x1]
  %v52 = vld [vmem:[%s0] sm:$0xff]
  %vm53 = vcmask 261120
  %v54 = vsel %vm53, %v52, 0.0
  %v56 = vlaneseq
  %v57 = vshrl.u32 %v56, 7
  %v58 = vsub.s32 0, %v57
  %v59 = vrot.slane %v50, %v58
  %vm61 = vcmask 523264
  %v63 = vsel %vm61, %v54, 0
  %65 = vmatprep.subr.mxu0 0.0
  %66 = vmatpush1.msra.mxu0 0.0
  %67 = vmatprep.subr.mxu0 0.0
  %68 = vmatpush1.msra.mxu0 0.0
  %69 = vmatprep.subr.mxu0 0.0
  %70 = vmatpush1.msra.mxu0 0.0
  %71 = vmatprep.subr.mxu0 0.0
  %72 = vmatpush1.msra.mxu0 0.0
  %73 = vmatprep.subr.mxu0 0.0
  %74 = vmatpush1.msra.mxu0 0.0
  %75 = vmatprep.subr.mxu0 0.0
  %76 = vmatpush1.msra.mxu0 0.0
  %77 = vmatprep.subr.mxu0 0.0
  %78 = vmatpush1.msra.mxu0 0.0
  %79 = vmatprep.subr.mxu0 0.0
  %80 = vmatpush1.msra.mxu0 0.0
  %81 = vmatprep.subr.mxu0 0.0
  %82 = vmatpush1.msra.mxu0 %v41
  %83 = vmatprep.subr.mxu0 0.0
  %84 = vmatpush1.msra.mxu0 %v40
  %85 = vmatprep.subr.mxu0 0.0
  %86 = vmatpush1.msra.mxu0 %v39
  %87 = vmatprep.subr.mxu0 0.0
  %88 = vmatpush1.msra.mxu0 %v38
  %89 = vmatprep.subr.mxu0 0.0
  %90 = vmatpush1.msra.mxu0 %v37
  %91 = vmatprep.subr.mxu0 0.0
  %92 = vmatpush1.msra.mxu0 %v36
  %93 = vmatprep.subr.mxu0 0.0
  %94 = vmatpush1.msra.mxu0 %v35
  %95 = vmatprep.subr.mxu0 0.0
  %96 = vmatpush1.msra.mxu0 %v34
  %97 = vmatprep.subr.mxu0 0.0
  %98 = vmatpush2.msra.mxu0 0.0
  %99 = vmatprep.subr.mxu0 0.0
  %100 = vmatpush2.msra.mxu0 0.0
  %101 = vmatprep.subr.mxu0 0.0
  %102 = vmatpush2.msra.mxu0 0.0
  %103 = vmatprep.subr.mxu0 0.0
  %104 = vmatpush2.msra.mxu0 0.0
  %105 = vmatprep.subr.mxu0 0.0
  %106 = vmatpush2.msra.mxu0 0.0
  %107 = vmatprep.subr.mxu0 0.0
  %108 = vmatpush2.msra.mxu0 0.0
  %109 = vmatprep.subr.mxu0 0.0
  %110 = vmatpush2.msra.mxu0 0.0
  %111 = vmatprep.subr.mxu0 0.0
  %112 = vmatpush2.msra.mxu0 0.0
  %113 = vmatprep.subr.mxu0 0.0
  %114 = vmatpush2.msra.mxu0 0.0
  %115 = vmatprep.subr.mxu0 0.0
  %116 = vmatpush2.msra.mxu0 0.0
  %117 = vmatprep.subr.mxu0 0.0
  %118 = vmatpush2.msra.mxu0 0.0
  %119 = vmatprep.subr.mxu0 0.0
  %120 = vmatpush2.msra.mxu0 0.0
  %121 = vmatprep.subr.mxu0 0.0
  %122 = vmatpush2.msra.mxu0 0.0
  %123 = vmatprep.subr.mxu0 0.0
  %124 = vmatpush2.msra.mxu0 0.0
  %125 = vmatprep.subr.mxu0 0.0
  %126 = vmatpush2.msra.mxu0 0.0
  %127 = vmatprep.subr.mxu0 0.0
  %128 = vmatpush2.msra.mxu0 0.0
  %129 = vmatprep.mubr.f32.mxu0 0.0
  %130 = vmatmul.mubr.f32.gmra.mxu0 %v63
  %v131 = vpop.f32.mrf.mxu0
  %v132 = vadd.f32 %v59, %v131
  %v133 = vpop.f32.mrf.mxu0
  %134 = vdwg.mxu0
  %v135 = vmax.f32 %v132, 0.0
  %v136 = vsel %vm53, %v135, 0.0
  %v138 = vlaneseq
  %v139 = vshrl.u32 %v138, 7
  %v140 = vsub.s32 0, %v139
  %v141 = vrot.slane %v51, %v140
  %v144 = vsel %vm61, %v136, 0
  %146 = vmatprep.subr.mxu0 0.0
  %147 = vmatpush1.msra.mxu0 0.0
  %148 = vmatprep.subr.mxu0 0.0
  %149 = vmatpush1.msra.mxu0 0.0
  %150 = vmatprep.subr.mxu0 0.0
  %151 = vmatpush1.msra.mxu0 0.0
  %152 = vmatprep.subr.mxu0 0.0
  %153 = vmatpush1.msra.mxu0 0.0
  %154 = vmatprep.subr.mxu0 0.0
  %155 = vmatpush1.msra.mxu0 0.0
  %156 = vmatprep.subr.mxu0 0.0
  %157 = vmatpush1.msra.mxu0 0.0
  %158 = vmatprep.subr.mxu0 0.0
  %159 = vmatpush1.msra.mxu0 0.0
  %160 = vmatprep.subr.mxu0 0.0
  %161 = vmatpush1.msra.mxu0 0.0
  %162 = vmatprep.subr.mxu0 0.0
  %163 = vmatpush1.msra.mxu0 %v49
  %164 = vmatprep.subr.mxu0 0.0
  %165 = vmatpush1.msra.mxu0 %v48
  %166 = vmatprep.subr.mxu0 0.0
  %167 = vmatpush1.msra.mxu0 %v47
  %168 = vmatprep.subr.mxu0 0.0
  %169 = vmatpush1.msra.mxu0 %v46
  %170 = vmatprep.subr.mxu0 0.0
  %171 = vmatpush1.msra.mxu0 %v45
  %172 = vmatprep.subr.mxu0 0.0
  %173 = vmatpush1.msra.mxu0 %v44
  %174 = vmatprep.subr.mxu0 0.0
  %175 = vmatpush1.msra.mxu0 %v43
  %176 = vmatprep.subr.mxu0 0.0
  %177 = vmatpush1.msra.mxu0 %v42
  %178 = vmatprep.subr.mxu0 0.0
  %179 = vmatpush2.msra.mxu0 0.0
  %180 = vmatprep.subr.mxu0 0.0
  %181 = vmatpush2.msra.mxu0 0.0
  %182 = vmatprep.subr.mxu0 0.0
  %183 = vmatpush2.msra.mxu0 0.0
  %184 = vmatprep.subr.mxu0 0.0
  %185 = vmatpush2.msra.mxu0 0.0
  %186 = vmatprep.subr.mxu0 0.0
  %187 = vmatpush2.msra.mxu0 0.0
  %188 = vmatprep.subr.mxu0 0.0
  %189 = vmatpush2.msra.mxu0 0.0
  %190 = vmatprep.subr.mxu0 0.0
  %191 = vmatpush2.msra.mxu0 0.0
  %192 = vmatprep.subr.mxu0 0.0
  %193 = vmatpush2.msra.mxu0 0.0
  %194 = vmatprep.subr.mxu0 0.0
  %195 = vmatpush2.msra.mxu0 0.0
  %196 = vmatprep.subr.mxu0 0.0
  %197 = vmatpush2.msra.mxu0 0.0
  %198 = vmatprep.subr.mxu0 0.0
  %199 = vmatpush2.msra.mxu0 0.0
  %200 = vmatprep.subr.mxu0 0.0
  %201 = vmatpush2.msra.mxu0 0.0
  %202 = vmatprep.subr.mxu0 0.0
  %203 = vmatpush2.msra.mxu0 0.0
  %204 = vmatprep.subr.mxu0 0.0
  %205 = vmatpush2.msra.mxu0 0.0
  %206 = vmatprep.subr.mxu0 0.0
  %207 = vmatpush2.msra.mxu0 0.0
  %208 = vmatprep.subr.mxu0 0.0
  %209 = vmatpush2.msra.mxu0 0.0
  %210 = vmatprep.mubr.f32.mxu0 0.0
  %211 = vmatmul.mubr.f32.gmra.mxu0 %v144
  %v212 = vpop.f32.mrf.mxu0
  %v213 = vadd.f32 %v141, %v212
  %v214 = vpop.f32.mrf.mxu0
  %215 = vdwg.mxu0
  %v216 = vmax.f32 %v213, 0.0
  %s217 = scalar_lea.vmem %s0, 8
  %v218 = vld [vmem:[%s217] sm:$0xff]
  %220 = vrot.lane.b32.xlu0 %v135, 32
  %v221 = vpop.permute.xlu0 %220
  %v223 = vsel %vm53, %v218, %v221
  %v225 = vsel %vm61, %v223, 0
  %227 = vmatprep.subr.mxu0 0.0
  %228 = vmatpush1.msra.mxu0 0.0
  %229 = vmatprep.subr.mxu0 0.0
  %230 = vmatpush1.msra.mxu0 0.0
  %231 = vmatprep.subr.mxu0 0.0
  %232 = vmatpush1.msra.mxu0 0.0
  %233 = vmatprep.subr.mxu0 0.0
  %234 = vmatpush1.msra.mxu0 0.0
  %235 = vmatprep.subr.mxu0 0.0
  %236 = vmatpush1.msra.mxu0 0.0
  %237 = vmatprep.subr.mxu0 0.0
  %238 = vmatpush1.msra.mxu0 0.0
  %239 = vmatprep.subr.mxu0 0.0
  %240 = vmatpush1.msra.mxu0 0.0
  %241 = vmatprep.subr.mxu0 0.0
  %242 = vmatpush1.msra.mxu0 0.0
  %243 = vmatprep.subr.mxu0 0.0
  %244 = vmatpush1.msra.mxu0 %v41
  %245 = vmatprep.subr.mxu0 0.0
  %246 = vmatpush1.msra.mxu0 %v40
  %247 = vmatprep.subr.mxu0 0.0
  %248 = vmatpush1.msra.mxu0 %v39
  %249 = vmatprep.subr.mxu0 0.0
  %250 = vmatpush1.msra.mxu0 %v38
  %251 = vmatprep.subr.mxu0 0.0
  %252 = vmatpush1.msra.mxu0 %v37
  %253 = vmatprep.subr.mxu0 0.0
  %254 = vmatpush1.msra.mxu0 %v36
  %255 = vmatprep.subr.mxu0 0.0
  %256 = vmatpush1.msra.mxu0 %v35
  %257 = vmatprep.subr.mxu0 0.0
  %258 = vmatpush1.msra.mxu0 %v34
  %259 = vmatprep.subr.mxu0 0.0
  %260 = vmatpush2.msra.mxu0 0.0
  %261 = vmatprep.subr.mxu0 0.0
  %262 = vmatpush2.msra.mxu0 0.0
  %263 = vmatprep.subr.mxu0 0.0
  %264 = vmatpush2.msra.mxu0 0.0
  %265 = vmatprep.subr.mxu0 0.0
  %266 = vmatpush2.msra.mxu0 0.0
  %267 = vmatprep.subr.mxu0 0.0
  %268 = vmatpush2.msra.mxu0 0.0
  %269 = vmatprep.subr.mxu0 0.0
  %270 = vmatpush2.msra.mxu0 0.0
  %271 = vmatprep.subr.mxu0 0.0
  %272 = vmatpush2.msra.mxu0 0.0
  %273 = vmatprep.subr.mxu0 0.0
  %274 = vmatpush2.msra.mxu0 0.0
  %275 = vmatprep.subr.mxu0 0.0
  %276 = vmatpush2.msra.mxu0 0.0
  %277 = vmatprep.subr.mxu0 0.0
  %278 = vmatpush2.msra.mxu0 0.0
  %279 = vmatprep.subr.mxu0 0.0
  %280 = vmatpush2.msra.mxu0 0.0
  %281 = vmatprep.subr.mxu0 0.0
  %282 = vmatpush2.msra.mxu0 0.0
  %283 = vmatprep.subr.mxu0 0.0
  %284 = vmatpush2.msra.mxu0 0.0
  %285 = vmatprep.subr.mxu0 0.0
  %286 = vmatpush2.msra.mxu0 0.0
  %287 = vmatprep.subr.mxu0 0.0
  %288 = vmatpush2.msra.mxu0 0.0
  %289 = vmatprep.subr.mxu0 0.0
  %290 = vmatpush2.msra.mxu0 0.0
  %291 = vmatprep.mubr.f32.mxu0 0.0
  %292 = vmatmul.mubr.f32.gmra.mxu0 %v225
  %v293 = vpop.f32.mrf.mxu0
  %v294 = vadd.f32 %v59, %v293
  %v295 = vpop.f32.mrf.mxu0
  %296 = vdwg.mxu0
  %v297 = vmax.f32 %v294, 0.0
  %299 = vrot.lane.b32.xlu0 %v216, 32
  %v300 = vpop.permute.xlu0 %299
  %v302 = vsel %vm53, %v297, %v300
  %v304 = vsel %vm61, %v302, 0
  %306 = vmatprep.subr.mxu0 0.0
  %307 = vmatpush1.msra.mxu0 0.0
  %308 = vmatprep.subr.mxu0 0.0
  %309 = vmatpush1.msra.mxu0 0.0
  %310 = vmatprep.subr.mxu0 0.0
  %311 = vmatpush1.msra.mxu0 0.0
  %312 = vmatprep.subr.mxu0 0.0
  %313 = vmatpush1.msra.mxu0 0.0
  %314 = vmatprep.subr.mxu0 0.0
  %315 = vmatpush1.msra.mxu0 0.0
  %316 = vmatprep.subr.mxu0 0.0
  %317 = vmatpush1.msra.mxu0 0.0
  %318 = vmatprep.subr.mxu0 0.0
  %319 = vmatpush1.msra.mxu0 0.0
  %320 = vmatprep.subr.mxu0 0.0
  %321 = vmatpush1.msra.mxu0 0.0
  %322 = vmatprep.subr.mxu0 0.0
  %323 = vmatpush1.msra.mxu0 %v49
  %324 = vmatprep.subr.mxu0 0.0
  %325 = vmatpush1.msra.mxu0 %v48
  %326 = vmatprep.subr.mxu0 0.0
  %327 = vmatpush1.msra.mxu0 %v47
  %328 = vmatprep.subr.mxu0 0.0
  %329 = vmatpush1.msra.mxu0 %v46
  %330 = vmatprep.subr.mxu0 0.0
  %331 = vmatpush1.msra.mxu0 %v45
  %332 = vmatprep.subr.mxu0 0.0
  %333 = vmatpush1.msra.mxu0 %v44
  %334 = vmatprep.subr.mxu0 0.0
  %335 = vmatpush1.msra.mxu0 %v43
  %336 = vmatprep.subr.mxu0 0.0
  %337 = vmatpush1.msra.mxu0 %v42
  %338 = vmatprep.subr.mxu0 0.0
  %339 = vmatpush2.msra.mxu0 0.0
  %340 = vmatprep.subr.mxu0 0.0
  %341 = vmatpush2.msra.mxu0 0.0
  %342 = vmatprep.subr.mxu0 0.0
  %343 = vmatpush2.msra.mxu0 0.0
  %344 = vmatprep.subr.mxu0 0.0
  %345 = vmatpush2.msra.mxu0 0.0
  %346 = vmatprep.subr.mxu0 0.0
  %347 = vmatpush2.msra.mxu0 0.0
  %348 = vmatprep.subr.mxu0 0.0
  %349 = vmatpush2.msra.mxu0 0.0
  %350 = vmatprep.subr.mxu0 0.0
  %351 = vmatpush2.msra.mxu0 0.0
  %352 = vmatprep.subr.mxu0 0.0
  %353 = vmatpush2.msra.mxu0 0.0
  %354 = vmatprep.subr.mxu0 0.0
  %355 = vmatpush2.msra.mxu0 0.0
  %356 = vmatprep.subr.mxu0 0.0
  %357 = vmatpush2.msra.mxu0 0.0
  %358 = vmatprep.subr.mxu0 0.0
  %359 = vmatpush2.msra.mxu0 0.0
  %360 = vmatprep.subr.mxu0 0.0
  %361 = vmatpush2.msra.mxu0 0.0
  %362 = vmatprep.subr.mxu0 0.0
  %363 = vmatpush2.msra.mxu0 0.0
  %364 = vmatprep.subr.mxu0 0.0
  %365 = vmatpush2.msra.mxu0 0.0
  %366 = vmatprep.subr.mxu0 0.0
  %367 = vmatpush2.msra.mxu0 0.0
  %368 = vmatprep.subr.mxu0 0.0
  %369 = vmatpush2.msra.mxu0 0.0
  %370 = vmatprep.mubr.f32.mxu0 0.0
  %371 = vmatmul.mubr.f32.gmra.mxu0 %v304
  %v372 = vpop.f32.mrf.mxu0
  %v373 = vadd.f32 %v141, %v372
  %v374 = vpop.f32.mrf.mxu0
  %375 = vdwg.mxu0
  %v376 = vmax.f32 %v373, 0.0
  %s377 = scalar_lea.vmem %s0, 16
  %v378 = vld [vmem:[%s377] sm:$0xff]
  %380 = vrot.lane.b32.xlu0 %v297, 32
  %v381 = vpop.permute.xlu0 %380
  %v383 = vsel %vm53, %v378, %v381
  %v385 = vsel %vm61, %v383, 0
  %387 = vmatprep.subr.mxu0 0.0
  %388 = vmatpush1.msra.mxu0 0.0
  %389 = vmatprep.subr.mxu0 0.0
  %390 = vmatpush1.msra.mxu0 0.0
  %391 = vmatprep.subr.mxu0 0.0
  %392 = vmatpush1.msra.mxu0 0.0
  %393 = vmatprep.subr.mxu0 0.0
  %394 = vmatpush1.msra.mxu0 0.0
  %395 = vmatprep.subr.mxu0 0.0
  %396 = vmatpush1.msra.mxu0 0.0
  %397 = vmatprep.subr.mxu0 0.0
  %398 = vmatpush1.msra.mxu0 0.0
  %399 = vmatprep.subr.mxu0 0.0
  %400 = vmatpush1.msra.mxu0 0.0
  %401 = vmatprep.subr.mxu0 0.0
  %402 = vmatpush1.msra.mxu0 0.0
  %403 = vmatprep.subr.mxu0 0.0
  %404 = vmatpush1.msra.mxu0 %v41
  %405 = vmatprep.subr.mxu0 0.0
  %406 = vmatpush1.msra.mxu0 %v40
  %407 = vmatprep.subr.mxu0 0.0
  %408 = vmatpush1.msra.mxu0 %v39
  %409 = vmatprep.subr.mxu0 0.0
  %410 = vmatpush1.msra.mxu0 %v38
  %411 = vmatprep.subr.mxu0 0.0
  %412 = vmatpush1.msra.mxu0 %v37
  %413 = vmatprep.subr.mxu0 0.0
  %414 = vmatpush1.msra.mxu0 %v36
  %415 = vmatprep.subr.mxu0 0.0
  %416 = vmatpush1.msra.mxu0 %v35
  %417 = vmatprep.subr.mxu0 0.0
  %418 = vmatpush1.msra.mxu0 %v34
  %419 = vmatprep.subr.mxu0 0.0
  %420 = vmatpush2.msra.mxu0 0.0
  %421 = vmatprep.subr.mxu0 0.0
  %422 = vmatpush2.msra.mxu0 0.0
  %423 = vmatprep.subr.mxu0 0.0
  %424 = vmatpush2.msra.mxu0 0.0
  %425 = vmatprep.subr.mxu0 0.0
  %426 = vmatpush2.msra.mxu0 0.0
  %427 = vmatprep.subr.mxu0 0.0
  %428 = vmatpush2.msra.mxu0 0.0
  %429 = vmatprep.subr.mxu0 0.0
  %430 = vmatpush2.msra.mxu0 0.0
  %431 = vmatprep.subr.mxu0 0.0
  %432 = vmatpush2.msra.mxu0 0.0
  %433 = vmatprep.subr.mxu0 0.0
  %434 = vmatpush2.msra.mxu0 0.0
  %435 = vmatprep.subr.mxu0 0.0
  %436 = vmatpush2.msra.mxu0 0.0
  %437 = vmatprep.subr.mxu0 0.0
  %438 = vmatpush2.msra.mxu0 0.0
  %439 = vmatprep.subr.mxu0 0.0
  %440 = vmatpush2.msra.mxu0 0.0
  %441 = vmatprep.subr.mxu0 0.0
  %442 = vmatpush2.msra.mxu0 0.0
  %443 = vmatprep.subr.mxu0 0.0
  %444 = vmatpush2.msra.mxu0 0.0
  %445 = vmatprep.subr.mxu0 0.0
  %446 = vmatpush2.msra.mxu0 0.0
  %447 = vmatprep.subr.mxu0 0.0
  %448 = vmatpush2.msra.mxu0 0.0
  %449 = vmatprep.subr.mxu0 0.0
  %450 = vmatpush2.msra.mxu0 0.0
  %451 = vmatprep.mubr.f32.mxu0 0.0
  %452 = vmatmul.mubr.f32.gmra.mxu0 %v385
  %v453 = vpop.f32.mrf.mxu0
  %v454 = vadd.f32 %v59, %v453
  %v455 = vpop.f32.mrf.mxu0
  %456 = vdwg.mxu0
  %v457 = vmax.f32 %v454, 0.0
  %459 = vrot.lane.b32.xlu0 %v376, 32
  %v460 = vpop.permute.xlu0 %459
  %v462 = vsel %vm53, %v457, %v460
  %v464 = vsel %vm61, %v462, 0
  %466 = vmatprep.subr.mxu0 0.0
  %467 = vmatpush1.msra.mxu0 0.0
  %468 = vmatprep.subr.mxu0 0.0
  %469 = vmatpush1.msra.mxu0 0.0
  %470 = vmatprep.subr.mxu0 0.0
  %471 = vmatpush1.msra.mxu0 0.0
  %472 = vmatprep.subr.mxu0 0.0
  %473 = vmatpush1.msra.mxu0 0.0
  %474 = vmatprep.subr.mxu0 0.0
  %475 = vmatpush1.msra.mxu0 0.0
  %476 = vmatprep.subr.mxu0 0.0
  %477 = vmatpush1.msra.mxu0 0.0
  %478 = vmatprep.subr.mxu0 0.0
  %479 = vmatpush1.msra.mxu0 0.0
  %480 = vmatprep.subr.mxu0 0.0
  %481 = vmatpush1.msra.mxu0 0.0
  %482 = vmatprep.subr.mxu0 0.0
  %483 = vmatpush1.msra.mxu0 %v49
  %484 = vmatprep.subr.mxu0 0.0
  %485 = vmatpush1.msra.mxu0 %v48
  %486 = vmatprep.subr.mxu0 0.0
  %487 = vmatpush1.msra.mxu0 %v47
  %488 = vmatprep.subr.mxu0 0.0
  %489 = vmatpush1.msra.mxu0 %v46
  %490 = vmatprep.subr.mxu0 0.0
  %491 = vmatpush1.msra.mxu0 %v45
  %492 = vmatprep.subr.mxu0 0.0
  %493 = vmatpush1.msra.mxu0 %v44
  %494 = vmatprep.subr.mxu0 0.0
  %495 = vmatpush1.msra.mxu0 %v43
  %496 = vmatprep.subr.mxu0 0.0
  %497 = vmatpush1.msra.mxu0 %v42
  %498 = vmatprep.subr.mxu0 0.0
  %499 = vmatpush2.msra.mxu0 0.0
  %500 = vmatprep.subr.mxu0 0.0
  %501 = vmatpush2.msra.mxu0 0.0
  %502 = vmatprep.subr.mxu0 0.0
  %503 = vmatpush2.msra.mxu0 0.0
  %504 = vmatprep.subr.mxu0 0.0
  %505 = vmatpush2.msra.mxu0 0.0
  %506 = vmatprep.subr.mxu0 0.0
  %507 = vmatpush2.msra.mxu0 0.0
  %508 = vmatprep.subr.mxu0 0.0
  %509 = vmatpush2.msra.mxu0 0.0
  %510 = vmatprep.subr.mxu0 0.0
  %511 = vmatpush2.msra.mxu0 0.0
  %512 = vmatprep.subr.mxu0 0.0
  %513 = vmatpush2.msra.mxu0 0.0
  %514 = vmatprep.subr.mxu0 0.0
  %515 = vmatpush2.msra.mxu0 0.0
  %516 = vmatprep.subr.mxu0 0.0
  %517 = vmatpush2.msra.mxu0 0.0
  %518 = vmatprep.subr.mxu0 0.0
  %519 = vmatpush2.msra.mxu0 0.0
  %520 = vmatprep.subr.mxu0 0.0
  %521 = vmatpush2.msra.mxu0 0.0
  %522 = vmatprep.subr.mxu0 0.0
  %523 = vmatpush2.msra.mxu0 0.0
  %524 = vmatprep.subr.mxu0 0.0
  %525 = vmatpush2.msra.mxu0 0.0
  %526 = vmatprep.subr.mxu0 0.0
  %527 = vmatpush2.msra.mxu0 0.0
  %528 = vmatprep.subr.mxu0 0.0
  %529 = vmatpush2.msra.mxu0 0.0
  %530 = vmatprep.mubr.f32.mxu0 0.0
  %531 = vmatmul.mubr.f32.gmra.mxu0 %v464
  %v532 = vpop.f32.mrf.mxu0
  %v533 = vadd.f32 %v141, %v532
  %v534 = vpop.f32.mrf.mxu0
  %535 = vdwg.mxu0
  %v536 = vmax.f32 %v533, 0.0
  %s537 = scalar_lea.vmem %s0, 24
  %v538 = vld [vmem:[%s537] sm:$0xff]
  %540 = vrot.lane.b32.xlu0 %v457, 32
  %v541 = vpop.permute.xlu0 %540
  %v543 = vsel %vm53, %v538, %v541
  %v545 = vsel %vm61, %v543, 0
  %547 = vmatprep.subr.mxu0 0.0
  %548 = vmatpush1.msra.mxu0 0.0
  %549 = vmatprep.subr.mxu0 0.0
  %550 = vmatpush1.msra.mxu0 0.0
  %551 = vmatprep.subr.mxu0 0.0
  %552 = vmatpush1.msra.mxu0 0.0
  %553 = vmatprep.subr.mxu0 0.0
  %554 = vmatpush1.msra.mxu0 0.0
  %555 = vmatprep.subr.mxu0 0.0
  %556 = vmatpush1.msra.mxu0 0.0
  %557 = vmatprep.subr.mxu0 0.0
  %558 = vmatpush1.msra.mxu0 0.0
  %559 = vmatprep.subr.mxu0 0.0
  %560 = vmatpush1.msra.mxu0 0.0
  %561 = vmatprep.subr.mxu0 0.0
  %562 = vmatpush1.msra.mxu0 0.0
  %563 = vmatprep.subr.mxu0 0.0
  %564 = vmatpush1.msra.mxu0 %v41
  %565 = vmatprep.subr.mxu0 0.0
  %566 = vmatpush1.msra.mxu0 %v40
  %567 = vmatprep.subr.mxu0 0.0
  %568 = vmatpush1.msra.mxu0 %v39
  %569 = vmatprep.subr.mxu0 0.0
  %570 = vmatpush1.msra.mxu0 %v38
  %571 = vmatprep.subr.mxu0 0.0
  %572 = vmatpush1.msra.mxu0 %v37
  %573 = vmatprep.subr.mxu0 0.0
  %574 = vmatpush1.msra.mxu0 %v36
  %575 = vmatprep.subr.mxu0 0.0
  %576 = vmatpush1.msra.mxu0 %v35
  %577 = vmatprep.subr.mxu0 0.0
  %578 = vmatpush1.msra.mxu0 %v34
  %579 = vmatprep.subr.mxu0 0.0
  %580 = vmatpush2.msra.mxu0 0.0
  %581 = vmatprep.subr.mxu0 0.0
  %582 = vmatpush2.msra.mxu0 0.0
  %583 = vmatprep.subr.mxu0 0.0
  %584 = vmatpush2.msra.mxu0 0.0
  %585 = vmatprep.subr.mxu0 0.0
  %586 = vmatpush2.msra.mxu0 0.0
  %587 = vmatprep.subr.mxu0 0.0
  %588 = vmatpush2.msra.mxu0 0.0
  %589 = vmatprep.subr.mxu0 0.0
  %590 = vmatpush2.msra.mxu0 0.0
  %591 = vmatprep.subr.mxu0 0.0
  %592 = vmatpush2.msra.mxu0 0.0
  %593 = vmatprep.subr.mxu0 0.0
  %594 = vmatpush2.msra.mxu0 0.0
  %595 = vmatprep.subr.mxu0 0.0
  %596 = vmatpush2.msra.mxu0 0.0
  %597 = vmatprep.subr.mxu0 0.0
  %598 = vmatpush2.msra.mxu0 0.0
  %599 = vmatprep.subr.mxu0 0.0
  %600 = vmatpush2.msra.mxu0 0.0
  %601 = vmatprep.subr.mxu0 0.0
  %602 = vmatpush2.msra.mxu0 0.0
  %603 = vmatprep.subr.mxu0 0.0
  %604 = vmatpush2.msra.mxu0 0.0
  %605 = vmatprep.subr.mxu0 0.0
  %606 = vmatpush2.msra.mxu0 0.0
  %607 = vmatprep.subr.mxu0 0.0
  %608 = vmatpush2.msra.mxu0 0.0
  %609 = vmatprep.subr.mxu0 0.0
  %610 = vmatpush2.msra.mxu0 0.0
  %611 = vmatprep.mubr.f32.mxu0 0.0
  %612 = vmatmul.mubr.f32.gmra.mxu0 %v545
  %v613 = vpop.f32.mrf.mxu0
  %v614 = vadd.f32 %v59, %v613
  %v615 = vpop.f32.mrf.mxu0
  %616 = vdwg.mxu0
  %v617 = vmax.f32 %v614, 0.0
  %619 = vrot.lane.b32.xlu0 %v536, 32
  %v620 = vpop.permute.xlu0 %619
  %v622 = vsel %vm53, %v617, %v620
  %v624 = vsel %vm61, %v622, 0
  %626 = vmatprep.subr.mxu0 0.0
  %627 = vmatpush1.msra.mxu0 0.0
  %628 = vmatprep.subr.mxu0 0.0
  %629 = vmatpush1.msra.mxu0 0.0
  %630 = vmatprep.subr.mxu0 0.0
  %631 = vmatpush1.msra.mxu0 0.0
  %632 = vmatprep.subr.mxu0 0.0
  %633 = vmatpush1.msra.mxu0 0.0
  %634 = vmatprep.subr.mxu0 0.0
  %635 = vmatpush1.msra.mxu0 0.0
  %636 = vmatprep.subr.mxu0 0.0
  %637 = vmatpush1.msra.mxu0 0.0
  %638 = vmatprep.subr.mxu0 0.0
  %639 = vmatpush1.msra.mxu0 0.0
  %640 = vmatprep.subr.mxu0 0.0
  %641 = vmatpush1.msra.mxu0 0.0
  %642 = vmatprep.subr.mxu0 0.0
  %643 = vmatpush1.msra.mxu0 %v49
  %644 = vmatprep.subr.mxu0 0.0
  %645 = vmatpush1.msra.mxu0 %v48
  %646 = vmatprep.subr.mxu0 0.0
  %647 = vmatpush1.msra.mxu0 %v47
  %648 = vmatprep.subr.mxu0 0.0
  %649 = vmatpush1.msra.mxu0 %v46
  %650 = vmatprep.subr.mxu0 0.0
  %651 = vmatpush1.msra.mxu0 %v45
  %652 = vmatprep.subr.mxu0 0.0
  %653 = vmatpush1.msra.mxu0 %v44
  %654 = vmatprep.subr.mxu0 0.0
  %655 = vmatpush1.msra.mxu0 %v43
  %656 = vmatprep.subr.mxu0 0.0
  %657 = vmatpush1.msra.mxu0 %v42
  %658 = vmatprep.subr.mxu0 0.0
  %659 = vmatpush2.msra.mxu0 0.0
  %660 = vmatprep.subr.mxu0 0.0
  %661 = vmatpush2.msra.mxu0 0.0
  %662 = vmatprep.subr.mxu0 0.0
  %663 = vmatpush2.msra.mxu0 0.0
  %664 = vmatprep.subr.mxu0 0.0
  %665 = vmatpush2.msra.mxu0 0.0
  %666 = vmatprep.subr.mxu0 0.0
  %667 = vmatpush2.msra.mxu0 0.0
  %668 = vmatprep.subr.mxu0 0.0
  %669 = vmatpush2.msra.mxu0 0.0
  %670 = vmatprep.subr.mxu0 0.0
  %671 = vmatpush2.msra.mxu0 0.0
  %672 = vmatprep.subr.mxu0 0.0
  %673 = vmatpush2.msra.mxu0 0.0
  %674 = vmatprep.subr.mxu0 0.0
  %675 = vmatpush2.msra.mxu0 0.0
  %676 = vmatprep.subr.mxu0 0.0
  %677 = vmatpush2.msra.mxu0 0.0
  %678 = vmatprep.subr.mxu0 0.0
  %679 = vmatpush2.msra.mxu0 0.0
  %680 = vmatprep.subr.mxu0 0.0
  %681 = vmatpush2.msra.mxu0 0.0
  %682 = vmatprep.subr.mxu0 0.0
  %683 = vmatpush2.msra.mxu0 0.0
  %684 = vmatprep.subr.mxu0 0.0
  %685 = vmatpush2.msra.mxu0 0.0
  %686 = vmatprep.subr.mxu0 0.0
  %687 = vmatpush2.msra.mxu0 0.0
  %688 = vmatprep.subr.mxu0 0.0
  %689 = vmatpush2.msra.mxu0 0.0
  %690 = vmatprep.mubr.f32.mxu0 0.0
  %691 = vmatmul.mubr.f32.gmra.mxu0 %v624
  %v692 = vpop.f32.mrf.mxu0
  %v693 = vadd.f32 %v141, %v692
  %v694 = vpop.f32.mrf.mxu0
  %695 = vdwg.mxu0
  %v696 = vmax.f32 %v693, 0.0
  %s697 = scalar_lea.vmem %s0, 32
  %v698 = vld [vmem:[%s697] sm:$0xff]
  %700 = vrot.lane.b32.xlu0 %v617, 32
  %v701 = vpop.permute.xlu0 %700
  %v703 = vsel %vm53, %v698, %v701
  %v705 = vsel %vm61, %v703, 0
  %707 = vmatprep.subr.mxu0 0.0
  %708 = vmatpush1.msra.mxu0 0.0
  %709 = vmatprep.subr.mxu0 0.0
  %710 = vmatpush1.msra.mxu0 0.0
  %711 = vmatprep.subr.mxu0 0.0
  %712 = vmatpush1.msra.mxu0 0.0
  %713 = vmatprep.subr.mxu0 0.0
  %714 = vmatpush1.msra.mxu0 0.0
  %715 = vmatprep.subr.mxu0 0.0
  %716 = vmatpush1.msra.mxu0 0.0
  %717 = vmatprep.subr.mxu0 0.0
  %718 = vmatpush1.msra.mxu0 0.0
  %719 = vmatprep.subr.mxu0 0.0
  %720 = vmatpush1.msra.mxu0 0.0
  %721 = vmatprep.subr.mxu0 0.0
  %722 = vmatpush1.msra.mxu0 0.0
  %723 = vmatprep.subr.mxu0 0.0
  %724 = vmatpush1.msra.mxu0 %v41
  %725 = vmatprep.subr.mxu0 0.0
  %726 = vmatpush1.msra.mxu0 %v40
  %727 = vmatprep.subr.mxu0 0.0
  %728 = vmatpush1.msra.mxu0 %v39
  %729 = vmatprep.subr.mxu0 0.0
  %730 = vmatpush1.msra.mxu0 %v38
  %731 = vmatprep.subr.mxu0 0.0
  %732 = vmatpush1.msra.mxu0 %v37
  %733 = vmatprep.subr.mxu0 0.0
  %734 = vmatpush1.msra.mxu0 %v36
  %735 = vmatprep.subr.mxu0 0.0
  %736 = vmatpush1.msra.mxu0 %v35
  %737 = vmatprep.subr.mxu0 0.0
  %738 = vmatpush1.msra.mxu0 %v34
  %739 = vmatprep.subr.mxu0 0.0
  %740 = vmatpush2.msra.mxu0 0.0
  %741 = vmatprep.subr.mxu0 0.0
  %742 = vmatpush2.msra.mxu0 0.0
  %743 = vmatprep.subr.mxu0 0.0
  %744 = vmatpush2.msra.mxu0 0.0
  %745 = vmatprep.subr.mxu0 0.0
  %746 = vmatpush2.msra.mxu0 0.0
  %747 = vmatprep.subr.mxu0 0.0
  %748 = vmatpush2.msra.mxu0 0.0
  %749 = vmatprep.subr.mxu0 0.0
  %750 = vmatpush2.msra.mxu0 0.0
  %751 = vmatprep.subr.mxu0 0.0
  %752 = vmatpush2.msra.mxu0 0.0
  %753 = vmatprep.subr.mxu0 0.0
  %754 = vmatpush2.msra.mxu0 0.0
  %755 = vmatprep.subr.mxu0 0.0
  %756 = vmatpush2.msra.mxu0 0.0
  %757 = vmatprep.subr.mxu0 0.0
  %758 = vmatpush2.msra.mxu0 0.0
  %759 = vmatprep.subr.mxu0 0.0
  %760 = vmatpush2.msra.mxu0 0.0
  %761 = vmatprep.subr.mxu0 0.0
  %762 = vmatpush2.msra.mxu0 0.0
  %763 = vmatprep.subr.mxu0 0.0
  %764 = vmatpush2.msra.mxu0 0.0
  %765 = vmatprep.subr.mxu0 0.0
  %766 = vmatpush2.msra.mxu0 0.0
  %767 = vmatprep.subr.mxu0 0.0
  %768 = vmatpush2.msra.mxu0 0.0
  %769 = vmatprep.subr.mxu0 0.0
  %770 = vmatpush2.msra.mxu0 0.0
  %771 = vmatprep.mubr.f32.mxu0 0.0
  %772 = vmatmul.mubr.f32.gmra.mxu0 %v705
  %v773 = vpop.f32.mrf.mxu0
  %v774 = vadd.f32 %v59, %v773
  %v775 = vpop.f32.mrf.mxu0
  %776 = vdwg.mxu0
  %v777 = vmax.f32 %v774, 0.0
  %779 = vrot.lane.b32.xlu0 %v696, 32
  %v780 = vpop.permute.xlu0 %779
  %v782 = vsel %vm53, %v777, %v780
  %v784 = vsel %vm61, %v782, 0
  %786 = vmatprep.subr.mxu0 0.0
  %787 = vmatpush1.msra.mxu0 0.0
  %788 = vmatprep.subr.mxu0 0.0
  %789 = vmatpush1.msra.mxu0 0.0
  %790 = vmatprep.subr.mxu0 0.0
  %791 = vmatpush1.msra.mxu0 0.0
  %792 = vmatprep.subr.mxu0 0.0
  %793 = vmatpush1.msra.mxu0 0.0
  %794 = vmatprep.subr.mxu0 0.0
  %795 = vmatpush1.msra.mxu0 0.0
  %796 = vmatprep.subr.mxu0 0.0
  %797 = vmatpush1.msra.mxu0 0.0
  %798 = vmatprep.subr.mxu0 0.0
  %799 = vmatpush1.msra.mxu0 0.0
  %800 = vmatprep.subr.mxu0 0.0
  %801 = vmatpush1.msra.mxu0 0.0
  %802 = vmatprep.subr.mxu0 0.0
  %803 = vmatpush1.msra.mxu0 %v49
  %804 = vmatprep.subr.mxu0 0.0
  %805 = vmatpush1.msra.mxu0 %v48
  %806 = vmatprep.subr.mxu0 0.0
  %807 = vmatpush1.msra.mxu0 %v47
  %808 = vmatprep.subr.mxu0 0.0
  %809 = vmatpush1.msra.mxu0 %v46
  %810 = vmatprep.subr.mxu0 0.0
  %811 = vmatpush1.msra.mxu0 %v45
  %812 = vmatprep.subr.mxu0 0.0
  %813 = vmatpush1.msra.mxu0 %v44
  %814 = vmatprep.subr.mxu0 0.0
  %815 = vmatpush1.msra.mxu0 %v43
  %816 = vmatprep.subr.mxu0 0.0
  %817 = vmatpush1.msra.mxu0 %v42
  %818 = vmatprep.subr.mxu0 0.0
  %819 = vmatpush2.msra.mxu0 0.0
  %820 = vmatprep.subr.mxu0 0.0
  %821 = vmatpush2.msra.mxu0 0.0
  %822 = vmatprep.subr.mxu0 0.0
  %823 = vmatpush2.msra.mxu0 0.0
  %824 = vmatprep.subr.mxu0 0.0
  %825 = vmatpush2.msra.mxu0 0.0
  %826 = vmatprep.subr.mxu0 0.0
  %827 = vmatpush2.msra.mxu0 0.0
  %828 = vmatprep.subr.mxu0 0.0
  %829 = vmatpush2.msra.mxu0 0.0
  %830 = vmatprep.subr.mxu0 0.0
  %831 = vmatpush2.msra.mxu0 0.0
  %832 = vmatprep.subr.mxu0 0.0
  %833 = vmatpush2.msra.mxu0 0.0
  %834 = vmatprep.subr.mxu0 0.0
  %835 = vmatpush2.msra.mxu0 0.0
  %836 = vmatprep.subr.mxu0 0.0
  %837 = vmatpush2.msra.mxu0 0.0
  %838 = vmatprep.subr.mxu0 0.0
  %839 = vmatpush2.msra.mxu0 0.0
  %840 = vmatprep.subr.mxu0 0.0
  %841 = vmatpush2.msra.mxu0 0.0
  %842 = vmatprep.subr.mxu0 0.0
  %843 = vmatpush2.msra.mxu0 0.0
  %844 = vmatprep.subr.mxu0 0.0
  %845 = vmatpush2.msra.mxu0 0.0
  %846 = vmatprep.subr.mxu0 0.0
  %847 = vmatpush2.msra.mxu0 0.0
  %848 = vmatprep.subr.mxu0 0.0
  %849 = vmatpush2.msra.mxu0 0.0
  %850 = vmatprep.mubr.f32.mxu0 0.0
  %851 = vmatmul.mubr.f32.gmra.mxu0 %v784
  %v852 = vpop.f32.mrf.mxu0
  %v853 = vadd.f32 %v141, %v852
  %v854 = vpop.f32.mrf.mxu0
  %855 = vdwg.mxu0
  %v856 = vmax.f32 %v853, 0.0
  %s857 = scalar_lea.vmem %s0, 40
  %v858 = vld [vmem:[%s857] sm:$0xff]
  %860 = vrot.lane.b32.xlu0 %v777, 32
  %v861 = vpop.permute.xlu0 %860
  %v863 = vsel %vm53, %v858, %v861
  %v865 = vsel %vm61, %v863, 0
  %867 = vmatprep.subr.mxu0 0.0
  %868 = vmatpush1.msra.mxu0 0.0
  %869 = vmatprep.subr.mxu0 0.0
  %870 = vmatpush1.msra.mxu0 0.0
  %871 = vmatprep.subr.mxu0 0.0
  %872 = vmatpush1.msra.mxu0 0.0
  %873 = vmatprep.subr.mxu0 0.0
  %874 = vmatpush1.msra.mxu0 0.0
  %875 = vmatprep.subr.mxu0 0.0
  %876 = vmatpush1.msra.mxu0 0.0
  %877 = vmatprep.subr.mxu0 0.0
  %878 = vmatpush1.msra.mxu0 0.0
  %879 = vmatprep.subr.mxu0 0.0
  %880 = vmatpush1.msra.mxu0 0.0
  %881 = vmatprep.subr.mxu0 0.0
  %882 = vmatpush1.msra.mxu0 0.0
  %883 = vmatprep.subr.mxu0 0.0
  %884 = vmatpush1.msra.mxu0 %v41
  %885 = vmatprep.subr.mxu0 0.0
  %886 = vmatpush1.msra.mxu0 %v40
  %887 = vmatprep.subr.mxu0 0.0
  %888 = vmatpush1.msra.mxu0 %v39
  %889 = vmatprep.subr.mxu0 0.0
  %890 = vmatpush1.msra.mxu0 %v38
  %891 = vmatprep.subr.mxu0 0.0
  %892 = vmatpush1.msra.mxu0 %v37
  %893 = vmatprep.subr.mxu0 0.0
  %894 = vmatpush1.msra.mxu0 %v36
  %895 = vmatprep.subr.mxu0 0.0
  %896 = vmatpush1.msra.mxu0 %v35
  %897 = vmatprep.subr.mxu0 0.0
  %898 = vmatpush1.msra.mxu0 %v34
  %899 = vmatprep.subr.mxu0 0.0
  %900 = vmatpush2.msra.mxu0 0.0
  %901 = vmatprep.subr.mxu0 0.0
  %902 = vmatpush2.msra.mxu0 0.0
  %903 = vmatprep.subr.mxu0 0.0
  %904 = vmatpush2.msra.mxu0 0.0
  %905 = vmatprep.subr.mxu0 0.0
  %906 = vmatpush2.msra.mxu0 0.0
  %907 = vmatprep.subr.mxu0 0.0
  %908 = vmatpush2.msra.mxu0 0.0
  %909 = vmatprep.subr.mxu0 0.0
  %910 = vmatpush2.msra.mxu0 0.0
  %911 = vmatprep.subr.mxu0 0.0
  %912 = vmatpush2.msra.mxu0 0.0
  %913 = vmatprep.subr.mxu0 0.0
  %914 = vmatpush2.msra.mxu0 0.0
  %915 = vmatprep.subr.mxu0 0.0
  %916 = vmatpush2.msra.mxu0 0.0
  %917 = vmatprep.subr.mxu0 0.0
  %918 = vmatpush2.msra.mxu0 0.0
  %919 = vmatprep.subr.mxu0 0.0
  %920 = vmatpush2.msra.mxu0 0.0
  %921 = vmatprep.subr.mxu0 0.0
  %922 = vmatpush2.msra.mxu0 0.0
  %923 = vmatprep.subr.mxu0 0.0
  %924 = vmatpush2.msra.mxu0 0.0
  %925 = vmatprep.subr.mxu0 0.0
  %926 = vmatpush2.msra.mxu0 0.0
  %927 = vmatprep.subr.mxu0 0.0
  %928 = vmatpush2.msra.mxu0 0.0
  %929 = vmatprep.subr.mxu0 0.0
  %930 = vmatpush2.msra.mxu0 0.0
  %931 = vmatprep.mubr.f32.mxu0 0.0
  %932 = vmatmul.mubr.f32.gmra.mxu0 %v865
  %v933 = vpop.f32.mrf.mxu0
  %v934 = vadd.f32 %v59, %v933
  %v935 = vpop.f32.mrf.mxu0
  %936 = vdwg.mxu0
  %v937 = vmax.f32 %v934, 0.0
  %939 = vrot.lane.b32.xlu0 %v856, 32
  %v940 = vpop.permute.xlu0 %939
  %v942 = vsel %vm53, %v937, %v940
  %v944 = vsel %vm61, %v942, 0
  %946 = vmatprep.subr.mxu0 0.0
  %947 = vmatpush1.msra.mxu0 0.0
  %948 = vmatprep.subr.mxu0 0.0
  %949 = vmatpush1.msra.mxu0 0.0
  %950 = vmatprep.subr.mxu0 0.0
  %951 = vmatpush1.msra.mxu0 0.0
  %952 = vmatprep.subr.mxu0 0.0
  %953 = vmatpush1.msra.mxu0 0.0
  %954 = vmatprep.subr.mxu0 0.0
  %955 = vmatpush1.msra.mxu0 0.0
  %956 = vmatprep.subr.mxu0 0.0
  %957 = vmatpush1.msra.mxu0 0.0
  %958 = vmatprep.subr.mxu0 0.0
  %959 = vmatpush1.msra.mxu0 0.0
  %960 = vmatprep.subr.mxu0 0.0
  %961 = vmatpush1.msra.mxu0 0.0
  %962 = vmatprep.subr.mxu0 0.0
  %963 = vmatpush1.msra.mxu0 %v49
  %964 = vmatprep.subr.mxu0 0.0
  %965 = vmatpush1.msra.mxu0 %v48
  %966 = vmatprep.subr.mxu0 0.0
  %967 = vmatpush1.msra.mxu0 %v47
  %968 = vmatprep.subr.mxu0 0.0
  %969 = vmatpush1.msra.mxu0 %v46
  %970 = vmatprep.subr.mxu0 0.0
  %971 = vmatpush1.msra.mxu0 %v45
  %972 = vmatprep.subr.mxu0 0.0
  %973 = vmatpush1.msra.mxu0 %v44
  %974 = vmatprep.subr.mxu0 0.0
  %975 = vmatpush1.msra.mxu0 %v43
  %976 = vmatprep.subr.mxu0 0.0
  %977 = vmatpush1.msra.mxu0 %v42
  %978 = vmatprep.subr.mxu0 0.0
  %979 = vmatpush2.msra.mxu0 0.0
  %980 = vmatprep.subr.mxu0 0.0
  %981 = vmatpush2.msra.mxu0 0.0
  %982 = vmatprep.subr.mxu0 0.0
  %983 = vmatpush2.msra.mxu0 0.0
  %984 = vmatprep.subr.mxu0 0.0
  %985 = vmatpush2.msra.mxu0 0.0
  %986 = vmatprep.subr.mxu0 0.0
  %987 = vmatpush2.msra.mxu0 0.0
  %988 = vmatprep.subr.mxu0 0.0
  %989 = vmatpush2.msra.mxu0 0.0
  %990 = vmatprep.subr.mxu0 0.0
  %991 = vmatpush2.msra.mxu0 0.0
  %992 = vmatprep.subr.mxu0 0.0
  %993 = vmatpush2.msra.mxu0 0.0
  %994 = vmatprep.subr.mxu0 0.0
  %995 = vmatpush2.msra.mxu0 0.0
  %996 = vmatprep.subr.mxu0 0.0
  %997 = vmatpush2.msra.mxu0 0.0
  %998 = vmatprep.subr.mxu0 0.0
  %999 = vmatpush2.msra.mxu0 0.0
  %1000 = vmatprep.subr.mxu0 0.0
  %1001 = vmatpush2.msra.mxu0 0.0
  %1002 = vmatprep.subr.mxu0 0.0
  %1003 = vmatpush2.msra.mxu0 0.0
  %1004 = vmatprep.subr.mxu0 0.0
  %1005 = vmatpush2.msra.mxu0 0.0
  %1006 = vmatprep.subr.mxu0 0.0
  %1007 = vmatpush2.msra.mxu0 0.0
  %1008 = vmatprep.subr.mxu0 0.0
  %1009 = vmatpush2.msra.mxu0 0.0
  %1010 = vmatprep.mubr.f32.mxu0 0.0
  %1011 = vmatmul.mubr.f32.gmra.mxu0 %v944
  %v1012 = vpop.f32.mrf.mxu0
  %v1013 = vadd.f32 %v141, %v1012
  %v1014 = vpop.f32.mrf.mxu0
  %1015 = vdwg.mxu0
  %v1016 = vmax.f32 %v1013, 0.0
  %s1017 = scalar_lea.vmem %s0, 48
  %v1018 = vld [vmem:[%s1017] sm:$0xff]
  %1020 = vrot.lane.b32.xlu0 %v937, 32
  %v1021 = vpop.permute.xlu0 %1020
  %v1023 = vsel %vm53, %v1018, %v1021
  %v1025 = vsel %vm61, %v1023, 0
  %1027 = vmatprep.subr.mxu0 0.0
  %1028 = vmatpush1.msra.mxu0 0.0
  %1029 = vmatprep.subr.mxu0 0.0
  %1030 = vmatpush1.msra.mxu0 0.0
  %1031 = vmatprep.subr.mxu0 0.0
  %1032 = vmatpush1.msra.mxu0 0.0
  %1033 = vmatprep.subr.mxu0 0.0
  %1034 = vmatpush1.msra.mxu0 0.0
  %1035 = vmatprep.subr.mxu0 0.0
  %1036 = vmatpush1.msra.mxu0 0.0
  %1037 = vmatprep.subr.mxu0 0.0
  %1038 = vmatpush1.msra.mxu0 0.0
  %1039 = vmatprep.subr.mxu0 0.0
  %1040 = vmatpush1.msra.mxu0 0.0
  %1041 = vmatprep.subr.mxu0 0.0
  %1042 = vmatpush1.msra.mxu0 0.0
  %1043 = vmatprep.subr.mxu0 0.0
  %1044 = vmatpush1.msra.mxu0 %v41
  %1045 = vmatprep.subr.mxu0 0.0
  %1046 = vmatpush1.msra.mxu0 %v40
  %1047 = vmatprep.subr.mxu0 0.0
  %1048 = vmatpush1.msra.mxu0 %v39
  %1049 = vmatprep.subr.mxu0 0.0
  %1050 = vmatpush1.msra.mxu0 %v38
  %1051 = vmatprep.subr.mxu0 0.0
  %1052 = vmatpush1.msra.mxu0 %v37
  %1053 = vmatprep.subr.mxu0 0.0
  %1054 = vmatpush1.msra.mxu0 %v36
  %1055 = vmatprep.subr.mxu0 0.0
  %1056 = vmatpush1.msra.mxu0 %v35
  %1057 = vmatprep.subr.mxu0 0.0
  %1058 = vmatpush1.msra.mxu0 %v34
  %1059 = vmatprep.subr.mxu0 0.0
  %1060 = vmatpush2.msra.mxu0 0.0
  %1061 = vmatprep.subr.mxu0 0.0
  %1062 = vmatpush2.msra.mxu0 0.0
  %1063 = vmatprep.subr.mxu0 0.0
  %1064 = vmatpush2.msra.mxu0 0.0
  %1065 = vmatprep.subr.mxu0 0.0
  %1066 = vmatpush2.msra.mxu0 0.0
  %1067 = vmatprep.subr.mxu0 0.0
  %1068 = vmatpush2.msra.mxu0 0.0
  %1069 = vmatprep.subr.mxu0 0.0
  %1070 = vmatpush2.msra.mxu0 0.0
  %1071 = vmatprep.subr.mxu0 0.0
  %1072 = vmatpush2.msra.mxu0 0.0
  %1073 = vmatprep.subr.mxu0 0.0
  %1074 = vmatpush2.msra.mxu0 0.0
  %1075 = vmatprep.subr.mxu0 0.0
  %1076 = vmatpush2.msra.mxu0 0.0
  %1077 = vmatprep.subr.mxu0 0.0
  %1078 = vmatpush2.msra.mxu0 0.0
  %1079 = vmatprep.subr.mxu0 0.0
  %1080 = vmatpush2.msra.mxu0 0.0
  %1081 = vmatprep.subr.mxu0 0.0
  %1082 = vmatpush2.msra.mxu0 0.0
  %1083 = vmatprep.subr.mxu0 0.0
  %1084 = vmatpush2.msra.mxu0 0.0
  %1085 = vmatprep.subr.mxu0 0.0
  %1086 = vmatpush2.msra.mxu0 0.0
  %1087 = vmatprep.subr.mxu0 0.0
  %1088 = vmatpush2.msra.mxu0 0.0
  %1089 = vmatprep.subr.mxu0 0.0
  %1090 = vmatpush2.msra.mxu0 0.0
  %1091 = vmatprep.mubr.f32.mxu0 0.0
  %1092 = vmatmul.mubr.f32.gmra.mxu0 %v1025
  %v1093 = vpop.f32.mrf.mxu0
  %v1094 = vadd.f32 %v59, %v1093
  %v1095 = vpop.f32.mrf.mxu0
  %1096 = vdwg.mxu0
  %v1097 = vmax.f32 %v1094, 0.0
  %1099 = vrot.lane.b32.xlu0 %v1016, 32
  %v1100 = vpop.permute.xlu0 %1099
  %v1102 = vsel %vm53, %v1097, %v1100
  %v1104 = vsel %vm61, %v1102, 0
  %1106 = vmatprep.subr.mxu0 0.0
  %1107 = vmatpush1.msra.mxu0 0.0
  %1108 = vmatprep.subr.mxu0 0.0
  %1109 = vmatpush1.msra.mxu0 0.0
  %1110 = vmatprep.subr.mxu0 0.0
  %1111 = vmatpush1.msra.mxu0 0.0
  %1112 = vmatprep.subr.mxu0 0.0
  %1113 = vmatpush1.msra.mxu0 0.0
  %1114 = vmatprep.subr.mxu0 0.0
  %1115 = vmatpush1.msra.mxu0 0.0
  %1116 = vmatprep.subr.mxu0 0.0
  %1117 = vmatpush1.msra.mxu0 0.0
  %1118 = vmatprep.subr.mxu0 0.0
  %1119 = vmatpush1.msra.mxu0 0.0
  %1120 = vmatprep.subr.mxu0 0.0
  %1121 = vmatpush1.msra.mxu0 0.0
  %1122 = vmatprep.subr.mxu0 0.0
  %1123 = vmatpush1.msra.mxu0 %v49
  %1124 = vmatprep.subr.mxu0 0.0
  %1125 = vmatpush1.msra.mxu0 %v48
  %1126 = vmatprep.subr.mxu0 0.0
  %1127 = vmatpush1.msra.mxu0 %v47
  %1128 = vmatprep.subr.mxu0 0.0
  %1129 = vmatpush1.msra.mxu0 %v46
  %1130 = vmatprep.subr.mxu0 0.0
  %1131 = vmatpush1.msra.mxu0 %v45
  %1132 = vmatprep.subr.mxu0 0.0
  %1133 = vmatpush1.msra.mxu0 %v44
  %1134 = vmatprep.subr.mxu0 0.0
  %1135 = vmatpush1.msra.mxu0 %v43
  %1136 = vmatprep.subr.mxu0 0.0
  %1137 = vmatpush1.msra.mxu0 %v42
  %1138 = vmatprep.subr.mxu0 0.0
  %1139 = vmatpush2.msra.mxu0 0.0
  %1140 = vmatprep.subr.mxu0 0.0
  %1141 = vmatpush2.msra.mxu0 0.0
  %1142 = vmatprep.subr.mxu0 0.0
  %1143 = vmatpush2.msra.mxu0 0.0
  %1144 = vmatprep.subr.mxu0 0.0
  %1145 = vmatpush2.msra.mxu0 0.0
  %1146 = vmatprep.subr.mxu0 0.0
  %1147 = vmatpush2.msra.mxu0 0.0
  %1148 = vmatprep.subr.mxu0 0.0
  %1149 = vmatpush2.msra.mxu0 0.0
  %1150 = vmatprep.subr.mxu0 0.0
  %1151 = vmatpush2.msra.mxu0 0.0
  %1152 = vmatprep.subr.mxu0 0.0
  %1153 = vmatpush2.msra.mxu0 0.0
  %1154 = vmatprep.subr.mxu0 0.0
  %1155 = vmatpush2.msra.mxu0 0.0
  %1156 = vmatprep.subr.mxu0 0.0
  %1157 = vmatpush2.msra.mxu0 0.0
  %1158 = vmatprep.subr.mxu0 0.0
  %1159 = vmatpush2.msra.mxu0 0.0
  %1160 = vmatprep.subr.mxu0 0.0
  %1161 = vmatpush2.msra.mxu0 0.0
  %1162 = vmatprep.subr.mxu0 0.0
  %1163 = vmatpush2.msra.mxu0 0.0
  %1164 = vmatprep.subr.mxu0 0.0
  %1165 = vmatpush2.msra.mxu0 0.0
  %1166 = vmatprep.subr.mxu0 0.0
  %1167 = vmatpush2.msra.mxu0 0.0
  %1168 = vmatprep.subr.mxu0 0.0
  %1169 = vmatpush2.msra.mxu0 0.0
  %1170 = vmatprep.mubr.f32.mxu0 0.0
  %1171 = vmatmul.mubr.f32.gmra.mxu0 %v1104
  %v1172 = vpop.f32.mrf.mxu0
  %v1173 = vadd.f32 %v141, %v1172
  %v1174 = vpop.f32.mrf.mxu0
  %1175 = vdwg.mxu0
  %v1176 = vmax.f32 %v1173, 0.0
  %s1177 = scalar_lea.vmem %s0, 56
  %v1178 = vld [vmem:[%s1177] sm:$0xff]
  %1180 = vrot.lane.b32.xlu0 %v1097, 32
  %v1181 = vpop.permute.xlu0 %1180
  %v1183 = vsel %vm53, %v1178, %v1181
  %v1185 = vsel %vm61, %v1183, 0
  %1187 = vmatprep.subr.mxu0 0.0
  %1188 = vmatpush1.msra.mxu0 0.0
  %1189 = vmatprep.subr.mxu0 0.0
  %1190 = vmatpush1.msra.mxu0 0.0
  %1191 = vmatprep.subr.mxu0 0.0
  %1192 = vmatpush1.msra.mxu0 0.0
  %1193 = vmatprep.subr.mxu0 0.0
  %1194 = vmatpush1.msra.mxu0 0.0
  %1195 = vmatprep.subr.mxu0 0.0
  %1196 = vmatpush1.msra.mxu0 0.0
  %1197 = vmatprep.subr.mxu0 0.0
  %1198 = vmatpush1.msra.mxu0 0.0
  %1199 = vmatprep.subr.mxu0 0.0
  %1200 = vmatpush1.msra.mxu0 0.0
  %1201 = vmatprep.subr.mxu0 0.0
  %1202 = vmatpush1.msra.mxu0 0.0
  %1203 = vmatprep.subr.mxu0 0.0
  %1204 = vmatpush1.msra.mxu0 %v41
  %1205 = vmatprep.subr.mxu0 0.0
  %1206 = vmatpush1.msra.mxu0 %v40
  %1207 = vmatprep.subr.mxu0 0.0
  %1208 = vmatpush1.msra.mxu0 %v39
  %1209 = vmatprep.subr.mxu0 0.0
  %1210 = vmatpush1.msra.mxu0 %v38
  %1211 = vmatprep.subr.mxu0 0.0
  %1212 = vmatpush1.msra.mxu0 %v37
  %1213 = vmatprep.subr.mxu0 0.0
  %1214 = vmatpush1.msra.mxu0 %v36
  %1215 = vmatprep.subr.mxu0 0.0
  %1216 = vmatpush1.msra.mxu0 %v35
  %1217 = vmatprep.subr.mxu0 0.0
  %1218 = vmatpush1.msra.mxu0 %v34
  %1219 = vmatprep.subr.mxu0 0.0
  %1220 = vmatpush2.msra.mxu0 0.0
  %1221 = vmatprep.subr.mxu0 0.0
  %1222 = vmatpush2.msra.mxu0 0.0
  %1223 = vmatprep.subr.mxu0 0.0
  %1224 = vmatpush2.msra.mxu0 0.0
  %1225 = vmatprep.subr.mxu0 0.0
  %1226 = vmatpush2.msra.mxu0 0.0
  %1227 = vmatprep.subr.mxu0 0.0
  %1228 = vmatpush2.msra.mxu0 0.0
  %1229 = vmatprep.subr.mxu0 0.0
  %1230 = vmatpush2.msra.mxu0 0.0
  %1231 = vmatprep.subr.mxu0 0.0
  %1232 = vmatpush2.msra.mxu0 0.0
  %1233 = vmatprep.subr.mxu0 0.0
  %1234 = vmatpush2.msra.mxu0 0.0
  %1235 = vmatprep.subr.mxu0 0.0
  %1236 = vmatpush2.msra.mxu0 0.0
  %1237 = vmatprep.subr.mxu0 0.0
  %1238 = vmatpush2.msra.mxu0 0.0
  %1239 = vmatprep.subr.mxu0 0.0
  %1240 = vmatpush2.msra.mxu0 0.0
  %1241 = vmatprep.subr.mxu0 0.0
  %1242 = vmatpush2.msra.mxu0 0.0
  %1243 = vmatprep.subr.mxu0 0.0
  %1244 = vmatpush2.msra.mxu0 0.0
  %1245 = vmatprep.subr.mxu0 0.0
  %1246 = vmatpush2.msra.mxu0 0.0
  %1247 = vmatprep.subr.mxu0 0.0
  %1248 = vmatpush2.msra.mxu0 0.0
  %1249 = vmatprep.subr.mxu0 0.0
  %1250 = vmatpush2.msra.mxu0 0.0
  %1251 = vmatprep.mubr.f32.mxu0 0.0
  %1252 = vmatmul.mubr.f32.gmra.mxu0 %v1185
  %v1253 = vpop.f32.mrf.mxu0
  %v1254 = vadd.f32 %v59, %v1253
  %v1255 = vpop.f32.mrf.mxu0
  %1256 = vdwg.mxu0
  %v1257 = vmax.f32 %v1254, 0.0
  %1259 = vrot.lane.b32.xlu0 %v1176, 32
  %v1260 = vpop.permute.xlu0 %1259
  %v1262 = vsel %vm53, %v1257, %v1260
  %v1264 = vsel %vm61, %v1262, 0
  %1266 = vmatprep.subr.mxu0 0.0
  %1267 = vmatpush1.msra.mxu0 0.0
  %1268 = vmatprep.subr.mxu0 0.0
  %1269 = vmatpush1.msra.mxu0 0.0
  %1270 = vmatprep.subr.mxu0 0.0
  %1271 = vmatpush1.msra.mxu0 0.0
  %1272 = vmatprep.subr.mxu0 0.0
  %1273 = vmatpush1.msra.mxu0 0.0
  %1274 = vmatprep.subr.mxu0 0.0
  %1275 = vmatpush1.msra.mxu0 0.0
  %1276 = vmatprep.subr.mxu0 0.0
  %1277 = vmatpush1.msra.mxu0 0.0
  %1278 = vmatprep.subr.mxu0 0.0
  %1279 = vmatpush1.msra.mxu0 0.0
  %1280 = vmatprep.subr.mxu0 0.0
  %1281 = vmatpush1.msra.mxu0 0.0
  %1282 = vmatprep.subr.mxu0 0.0
  %1283 = vmatpush1.msra.mxu0 %v49
  %1284 = vmatprep.subr.mxu0 0.0
  %1285 = vmatpush1.msra.mxu0 %v48
  %1286 = vmatprep.subr.mxu0 0.0
  %1287 = vmatpush1.msra.mxu0 %v47
  %1288 = vmatprep.subr.mxu0 0.0
  %1289 = vmatpush1.msra.mxu0 %v46
  %1290 = vmatprep.subr.mxu0 0.0
  %1291 = vmatpush1.msra.mxu0 %v45
  %1292 = vmatprep.subr.mxu0 0.0
  %1293 = vmatpush1.msra.mxu0 %v44
  %1294 = vmatprep.subr.mxu0 0.0
  %1295 = vmatpush1.msra.mxu0 %v43
  %1296 = vmatprep.subr.mxu0 0.0
  %1297 = vmatpush1.msra.mxu0 %v42
  %1298 = vmatprep.subr.mxu0 0.0
  %1299 = vmatpush2.msra.mxu0 0.0
  %1300 = vmatprep.subr.mxu0 0.0
  %1301 = vmatpush2.msra.mxu0 0.0
  %1302 = vmatprep.subr.mxu0 0.0
  %1303 = vmatpush2.msra.mxu0 0.0
  %1304 = vmatprep.subr.mxu0 0.0
  %1305 = vmatpush2.msra.mxu0 0.0
  %1306 = vmatprep.subr.mxu0 0.0
  %1307 = vmatpush2.msra.mxu0 0.0
  %1308 = vmatprep.subr.mxu0 0.0
  %1309 = vmatpush2.msra.mxu0 0.0
  %1310 = vmatprep.subr.mxu0 0.0
  %1311 = vmatpush2.msra.mxu0 0.0
  %1312 = vmatprep.subr.mxu0 0.0
  %1313 = vmatpush2.msra.mxu0 0.0
  %1314 = vmatprep.subr.mxu0 0.0
  %1315 = vmatpush2.msra.mxu0 0.0
  %1316 = vmatprep.subr.mxu0 0.0
  %1317 = vmatpush2.msra.mxu0 0.0
  %1318 = vmatprep.subr.mxu0 0.0
  %1319 = vmatpush2.msra.mxu0 0.0
  %1320 = vmatprep.subr.mxu0 0.0
  %1321 = vmatpush2.msra.mxu0 0.0
  %1322 = vmatprep.subr.mxu0 0.0
  %1323 = vmatpush2.msra.mxu0 0.0
  %1324 = vmatprep.subr.mxu0 0.0
  %1325 = vmatpush2.msra.mxu0 0.0
  %1326 = vmatprep.subr.mxu0 0.0
  %1327 = vmatpush2.msra.mxu0 0.0
  %1328 = vmatprep.subr.mxu0 0.0
  %1329 = vmatpush2.msra.mxu0 0.0
  %1330 = vmatprep.mubr.f32.mxu0 0.0
  %1331 = vmatmul.mubr.f32.gmra.mxu0 %v1264
  %v1332 = vpop.f32.mrf.mxu0
  %v1333 = vadd.f32 %v141, %v1332
  %v1334 = vpop.f32.mrf.mxu0
  %1335 = vdwg.mxu0
  %v1336 = vmax.f32 %v1333, 0.0
  %s1337 = scalar_lea.vmem %s0, 64
  %v1338 = vld [vmem:[%s1337] sm:$0xff]
  %1340 = vrot.lane.b32.xlu0 %v1257, 32
  %v1341 = vpop.permute.xlu0 %1340
  %v1343 = vsel %vm53, %v1338, %v1341
  %v1345 = vsel %vm61, %v1343, 0
  %1347 = vmatprep.subr.mxu0 0.0
  %1348 = vmatpush1.msra.mxu0 0.0
  %1349 = vmatprep.subr.mxu0 0.0
  %1350 = vmatpush1.msra.mxu0 0.0
  %1351 = vmatprep.subr.mxu0 0.0
  %1352 = vmatpush1.msra.mxu0 0.0
  %1353 = vmatprep.subr.mxu0 0.0
  %1354 = vmatpush1.msra.mxu0 0.0
  %1355 = vmatprep.subr.mxu0 0.0
  %1356 = vmatpush1.msra.mxu0 0.0
  %1357 = vmatprep.subr.mxu0 0.0
  %1358 = vmatpush1.msra.mxu0 0.0
  %1359 = vmatprep.subr.mxu0 0.0
  %1360 = vmatpush1.msra.mxu0 0.0
  %1361 = vmatprep.subr.mxu0 0.0
  %1362 = vmatpush1.msra.mxu0 0.0
  %1363 = vmatprep.subr.mxu0 0.0
  %1364 = vmatpush1.msra.mxu0 %v41
  %1365 = vmatprep.subr.mxu0 0.0
  %1366 = vmatpush1.msra.mxu0 %v40
  %1367 = vmatprep.subr.mxu0 0.0
  %1368 = vmatpush1.msra.mxu0 %v39
  %1369 = vmatprep.subr.mxu0 0.0
  %1370 = vmatpush1.msra.mxu0 %v38
  %1371 = vmatprep.subr.mxu0 0.0
  %1372 = vmatpush1.msra.mxu0 %v37
  %1373 = vmatprep.subr.mxu0 0.0
  %1374 = vmatpush1.msra.mxu0 %v36
  %1375 = vmatprep.subr.mxu0 0.0
  %1376 = vmatpush1.msra.mxu0 %v35
  %1377 = vmatprep.subr.mxu0 0.0
  %1378 = vmatpush1.msra.mxu0 %v34
  %1379 = vmatprep.subr.mxu0 0.0
  %1380 = vmatpush2.msra.mxu0 0.0
  %1381 = vmatprep.subr.mxu0 0.0
  %1382 = vmatpush2.msra.mxu0 0.0
  %1383 = vmatprep.subr.mxu0 0.0
  %1384 = vmatpush2.msra.mxu0 0.0
  %1385 = vmatprep.subr.mxu0 0.0
  %1386 = vmatpush2.msra.mxu0 0.0
  %1387 = vmatprep.subr.mxu0 0.0
  %1388 = vmatpush2.msra.mxu0 0.0
  %1389 = vmatprep.subr.mxu0 0.0
  %1390 = vmatpush2.msra.mxu0 0.0
  %1391 = vmatprep.subr.mxu0 0.0
  %1392 = vmatpush2.msra.mxu0 0.0
  %1393 = vmatprep.subr.mxu0 0.0
  %1394 = vmatpush2.msra.mxu0 0.0
  %1395 = vmatprep.subr.mxu0 0.0
  %1396 = vmatpush2.msra.mxu0 0.0
  %1397 = vmatprep.subr.mxu0 0.0
  %1398 = vmatpush2.msra.mxu0 0.0
  %1399 = vmatprep.subr.mxu0 0.0
  %1400 = vmatpush2.msra.mxu0 0.0
  %1401 = vmatprep.subr.mxu0 0.0
  %1402 = vmatpush2.msra.mxu0 0.0
  %1403 = vmatprep.subr.mxu0 0.0
  %1404 = vmatpush2.msra.mxu0 0.0
  %1405 = vmatprep.subr.mxu0 0.0
  %1406 = vmatpush2.msra.mxu0 0.0
  %1407 = vmatprep.subr.mxu0 0.0
  %1408 = vmatpush2.msra.mxu0 0.0
  %1409 = vmatprep.subr.mxu0 0.0
  %1410 = vmatpush2.msra.mxu0 0.0
  %1411 = vmatprep.mubr.f32.mxu0 0.0
  %1412 = vmatmul.mubr.f32.gmra.mxu0 %v1345
  %v1413 = vpop.f32.mrf.mxu0
  %v1414 = vadd.f32 %v59, %v1413
  %v1415 = vpop.f32.mrf.mxu0
  %1416 = vdwg.mxu0
  %v1417 = vmax.f32 %v1414, 0.0
  %1419 = vrot.lane.b32.xlu0 %v1336, 32
  %v1420 = vpop.permute.xlu0 %1419
  %v1422 = vsel %vm53, %v1417, %v1420
  %v1424 = vsel %vm61, %v1422, 0
  %1426 = vmatprep.subr.mxu0 0.0
  %1427 = vmatpush1.msra.mxu0 0.0
  %1428 = vmatprep.subr.mxu0 0.0
  %1429 = vmatpush1.msra.mxu0 0.0
  %1430 = vmatprep.subr.mxu0 0.0
  %1431 = vmatpush1.msra.mxu0 0.0
  %1432 = vmatprep.subr.mxu0 0.0
  %1433 = vmatpush1.msra.mxu0 0.0
  %1434 = vmatprep.subr.mxu0 0.0
  %1435 = vmatpush1.msra.mxu0 0.0
  %1436 = vmatprep.subr.mxu0 0.0
  %1437 = vmatpush1.msra.mxu0 0.0
  %1438 = vmatprep.subr.mxu0 0.0
  %1439 = vmatpush1.msra.mxu0 0.0
  %1440 = vmatprep.subr.mxu0 0.0
  %1441 = vmatpush1.msra.mxu0 0.0
  %1442 = vmatprep.subr.mxu0 0.0
  %1443 = vmatpush1.msra.mxu0 %v49
  %1444 = vmatprep.subr.mxu0 0.0
  %1445 = vmatpush1.msra.mxu0 %v48
  %1446 = vmatprep.subr.mxu0 0.0
  %1447 = vmatpush1.msra.mxu0 %v47
  %1448 = vmatprep.subr.mxu0 0.0
  %1449 = vmatpush1.msra.mxu0 %v46
  %1450 = vmatprep.subr.mxu0 0.0
  %1451 = vmatpush1.msra.mxu0 %v45
  %1452 = vmatprep.subr.mxu0 0.0
  %1453 = vmatpush1.msra.mxu0 %v44
  %1454 = vmatprep.subr.mxu0 0.0
  %1455 = vmatpush1.msra.mxu0 %v43
  %1456 = vmatprep.subr.mxu0 0.0
  %1457 = vmatpush1.msra.mxu0 %v42
  %1458 = vmatprep.subr.mxu0 0.0
  %1459 = vmatpush2.msra.mxu0 0.0
  %1460 = vmatprep.subr.mxu0 0.0
  %1461 = vmatpush2.msra.mxu0 0.0
  %1462 = vmatprep.subr.mxu0 0.0
  %1463 = vmatpush2.msra.mxu0 0.0
  %1464 = vmatprep.subr.mxu0 0.0
  %1465 = vmatpush2.msra.mxu0 0.0
  %1466 = vmatprep.subr.mxu0 0.0
  %1467 = vmatpush2.msra.mxu0 0.0
  %1468 = vmatprep.subr.mxu0 0.0
  %1469 = vmatpush2.msra.mxu0 0.0
  %1470 = vmatprep.subr.mxu0 0.0
  %1471 = vmatpush2.msra.mxu0 0.0
  %1472 = vmatprep.subr.mxu0 0.0
  %1473 = vmatpush2.msra.mxu0 0.0
  %1474 = vmatprep.subr.mxu0 0.0
  %1475 = vmatpush2.msra.mxu0 0.0
  %1476 = vmatprep.subr.mxu0 0.0
  %1477 = vmatpush2.msra.mxu0 0.0
  %1478 = vmatprep.subr.mxu0 0.0
  %1479 = vmatpush2.msra.mxu0 0.0
  %1480 = vmatprep.subr.mxu0 0.0
  %1481 = vmatpush2.msra.mxu0 0.0
  %1482 = vmatprep.subr.mxu0 0.0
  %1483 = vmatpush2.msra.mxu0 0.0
  %1484 = vmatprep.subr.mxu0 0.0
  %1485 = vmatpush2.msra.mxu0 0.0
  %1486 = vmatprep.subr.mxu0 0.0
  %1487 = vmatpush2.msra.mxu0 0.0
  %1488 = vmatprep.subr.mxu0 0.0
  %1489 = vmatpush2.msra.mxu0 0.0
  %1490 = vmatprep.mubr.f32.mxu0 0.0
  %1491 = vmatmul.mubr.f32.gmra.mxu0 %v1424
  %v1492 = vpop.f32.mrf.mxu0
  %v1493 = vadd.f32 %v141, %v1492
  %v1494 = vpop.f32.mrf.mxu0
  %1495 = vdwg.mxu0
  %v1496 = vmax.f32 %v1493, 0.0
  %s1497 = scalar_lea.vmem %s0, 72
  %v1498 = vld [vmem:[%s1497] sm:$0xff]
  %1500 = vrot.lane.b32.xlu0 %v1417, 32
  %v1501 = vpop.permute.xlu0 %1500
  %v1503 = vsel %vm53, %v1498, %v1501
  %v1505 = vsel %vm61, %v1503, 0
  %1507 = vmatprep.subr.mxu0 0.0
  %1508 = vmatpush1.msra.mxu0 0.0
  %1509 = vmatprep.subr.mxu0 0.0
  %1510 = vmatpush1.msra.mxu0 0.0
  %1511 = vmatprep.subr.mxu0 0.0
  %1512 = vmatpush1.msra.mxu0 0.0
  %1513 = vmatprep.subr.mxu0 0.0
  %1514 = vmatpush1.msra.mxu0 0.0
  %1515 = vmatprep.subr.mxu0 0.0
  %1516 = vmatpush1.msra.mxu0 0.0
  %1517 = vmatprep.subr.mxu0 0.0
  %1518 = vmatpush1.msra.mxu0 0.0
  %1519 = vmatprep.subr.mxu0 0.0
  %1520 = vmatpush1.msra.mxu0 0.0
  %1521 = vmatprep.subr.mxu0 0.0
  %1522 = vmatpush1.msra.mxu0 0.0
  %1523 = vmatprep.subr.mxu0 0.0
  %1524 = vmatpush1.msra.mxu0 %v41
  %1525 = vmatprep.subr.mxu0 0.0
  %1526 = vmatpush1.msra.mxu0 %v40
  %1527 = vmatprep.subr.mxu0 0.0
  %1528 = vmatpush1.msra.mxu0 %v39
  %1529 = vmatprep.subr.mxu0 0.0
  %1530 = vmatpush1.msra.mxu0 %v38
  %1531 = vmatprep.subr.mxu0 0.0
  %1532 = vmatpush1.msra.mxu0 %v37
  %1533 = vmatprep.subr.mxu0 0.0
  %1534 = vmatpush1.msra.mxu0 %v36
  %1535 = vmatprep.subr.mxu0 0.0
  %1536 = vmatpush1.msra.mxu0 %v35
  %1537 = vmatprep.subr.mxu0 0.0
  %1538 = vmatpush1.msra.mxu0 %v34
  %1539 = vmatprep.subr.mxu0 0.0
  %1540 = vmatpush2.msra.mxu0 0.0
  %1541 = vmatprep.subr.mxu0 0.0
  %1542 = vmatpush2.msra.mxu0 0.0
  %1543 = vmatprep.subr.mxu0 0.0
  %1544 = vmatpush2.msra.mxu0 0.0
  %1545 = vmatprep.subr.mxu0 0.0
  %1546 = vmatpush2.msra.mxu0 0.0
  %1547 = vmatprep.subr.mxu0 0.0
  %1548 = vmatpush2.msra.mxu0 0.0
  %1549 = vmatprep.subr.mxu0 0.0
  %1550 = vmatpush2.msra.mxu0 0.0
  %1551 = vmatprep.subr.mxu0 0.0
  %1552 = vmatpush2.msra.mxu0 0.0
  %1553 = vmatprep.subr.mxu0 0.0
  %1554 = vmatpush2.msra.mxu0 0.0
  %1555 = vmatprep.subr.mxu0 0.0
  %1556 = vmatpush2.msra.mxu0 0.0
  %1557 = vmatprep.subr.mxu0 0.0
  %1558 = vmatpush2.msra.mxu0 0.0
  %1559 = vmatprep.subr.mxu0 0.0
  %1560 = vmatpush2.msra.mxu0 0.0
  %1561 = vmatprep.subr.mxu0 0.0
  %1562 = vmatpush2.msra.mxu0 0.0
  %1563 = vmatprep.subr.mxu0 0.0
  %1564 = vmatpush2.msra.mxu0 0.0
  %1565 = vmatprep.subr.mxu0 0.0
  %1566 = vmatpush2.msra.mxu0 0.0
  %1567 = vmatprep.subr.mxu0 0.0
  %1568 = vmatpush2.msra.mxu0 0.0
  %1569 = vmatprep.subr.mxu0 0.0
  %1570 = vmatpush2.msra.mxu0 0.0
  %1571 = vmatprep.mubr.f32.mxu0 0.0
  %1572 = vmatmul.mubr.f32.gmra.mxu0 %v1505
  %v1573 = vpop.f32.mrf.mxu0
  %v1574 = vadd.f32 %v59, %v1573
  %v1575 = vpop.f32.mrf.mxu0
  %1576 = vdwg.mxu0
  %v1577 = vmax.f32 %v1574, 0.0
  %1579 = vrot.lane.b32.xlu0 %v1496, 32
  %v1580 = vpop.permute.xlu0 %1579
  %v1582 = vsel %vm53, %v1577, %v1580
  %v1584 = vsel %vm61, %v1582, 0
  %1586 = vmatprep.subr.mxu0 0.0
  %1587 = vmatpush1.msra.mxu0 0.0
  %1588 = vmatprep.subr.mxu0 0.0
  %1589 = vmatpush1.msra.mxu0 0.0
  %1590 = vmatprep.subr.mxu0 0.0
  %1591 = vmatpush1.msra.mxu0 0.0
  %1592 = vmatprep.subr.mxu0 0.0
  %1593 = vmatpush1.msra.mxu0 0.0
  %1594 = vmatprep.subr.mxu0 0.0
  %1595 = vmatpush1.msra.mxu0 0.0
  %1596 = vmatprep.subr.mxu0 0.0
  %1597 = vmatpush1.msra.mxu0 0.0
  %1598 = vmatprep.subr.mxu0 0.0
  %1599 = vmatpush1.msra.mxu0 0.0
  %1600 = vmatprep.subr.mxu0 0.0
  %1601 = vmatpush1.msra.mxu0 0.0
  %1602 = vmatprep.subr.mxu0 0.0
  %1603 = vmatpush1.msra.mxu0 %v49
  %1604 = vmatprep.subr.mxu0 0.0
  %1605 = vmatpush1.msra.mxu0 %v48
  %1606 = vmatprep.subr.mxu0 0.0
  %1607 = vmatpush1.msra.mxu0 %v47
  %1608 = vmatprep.subr.mxu0 0.0
  %1609 = vmatpush1.msra.mxu0 %v46
  %1610 = vmatprep.subr.mxu0 0.0
  %1611 = vmatpush1.msra.mxu0 %v45
  %1612 = vmatprep.subr.mxu0 0.0
  %1613 = vmatpush1.msra.mxu0 %v44
  %1614 = vmatprep.subr.mxu0 0.0
  %1615 = vmatpush1.msra.mxu0 %v43
  %1616 = vmatprep.subr.mxu0 0.0
  %1617 = vmatpush1.msra.mxu0 %v42
  %1618 = vmatprep.subr.mxu0 0.0
  %1619 = vmatpush2.msra.mxu0 0.0
  %1620 = vmatprep.subr.mxu0 0.0
  %1621 = vmatpush2.msra.mxu0 0.0
  %1622 = vmatprep.subr.mxu0 0.0
  %1623 = vmatpush2.msra.mxu0 0.0
  %1624 = vmatprep.subr.mxu0 0.0
  %1625 = vmatpush2.msra.mxu0 0.0
  %1626 = vmatprep.subr.mxu0 0.0
  %1627 = vmatpush2.msra.mxu0 0.0
  %1628 = vmatprep.subr.mxu0 0.0
  %1629 = vmatpush2.msra.mxu0 0.0
  %1630 = vmatprep.subr.mxu0 0.0
  %1631 = vmatpush2.msra.mxu0 0.0
  %1632 = vmatprep.subr.mxu0 0.0
  %1633 = vmatpush2.msra.mxu0 0.0
  %1634 = vmatprep.subr.mxu0 0.0
  %1635 = vmatpush2.msra.mxu0 0.0
  %1636 = vmatprep.subr.mxu0 0.0
  %1637 = vmatpush2.msra.mxu0 0.0
  %1638 = vmatprep.subr.mxu0 0.0
  %1639 = vmatpush2.msra.mxu0 0.0
  %1640 = vmatprep.subr.mxu0 0.0
  %1641 = vmatpush2.msra.mxu0 0.0
  %1642 = vmatprep.subr.mxu0 0.0
  %1643 = vmatpush2.msra.mxu0 0.0
  %1644 = vmatprep.subr.mxu0 0.0
  %1645 = vmatpush2.msra.mxu0 0.0
  %1646 = vmatprep.subr.mxu0 0.0
  %1647 = vmatpush2.msra.mxu0 0.0
  %1648 = vmatprep.subr.mxu0 0.0
  %1649 = vmatpush2.msra.mxu0 0.0
  %1650 = vmatprep.mubr.f32.mxu0 0.0
  %1651 = vmatmul.mubr.f32.gmra.mxu0 %v1584
  %v1652 = vpop.f32.mrf.mxu0
  %v1653 = vadd.f32 %v141, %v1652
  %v1654 = vpop.f32.mrf.mxu0
  %1655 = vdwg.mxu0
  %v1656 = vmax.f32 %v1653, 0.0
  %s1657 = scalar_lea.vmem %s0, 80
  %v1658 = vld [vmem:[%s1657] sm:$0xff]
  %1660 = vrot.lane.b32.xlu0 %v1577, 32
  %v1661 = vpop.permute.xlu0 %1660
  %v1663 = vsel %vm53, %v1658, %v1661
  %v1665 = vsel %vm61, %v1663, 0
  %1667 = vmatprep.subr.mxu0 0.0
  %1668 = vmatpush1.msra.mxu0 0.0
  %1669 = vmatprep.subr.mxu0 0.0
  %1670 = vmatpush1.msra.mxu0 0.0
  %1671 = vmatprep.subr.mxu0 0.0
  %1672 = vmatpush1.msra.mxu0 0.0
  %1673 = vmatprep.subr.mxu0 0.0
  %1674 = vmatpush1.msra.mxu0 0.0
  %1675 = vmatprep.subr.mxu0 0.0
  %1676 = vmatpush1.msra.mxu0 0.0
  %1677 = vmatprep.subr.mxu0 0.0
  %1678 = vmatpush1.msra.mxu0 0.0
  %1679 = vmatprep.subr.mxu0 0.0
  %1680 = vmatpush1.msra.mxu0 0.0
  %1681 = vmatprep.subr.mxu0 0.0
  %1682 = vmatpush1.msra.mxu0 0.0
  %1683 = vmatprep.subr.mxu0 0.0
  %1684 = vmatpush1.msra.mxu0 %v41
  %1685 = vmatprep.subr.mxu0 0.0
  %1686 = vmatpush1.msra.mxu0 %v40
  %1687 = vmatprep.subr.mxu0 0.0
  %1688 = vmatpush1.msra.mxu0 %v39
  %1689 = vmatprep.subr.mxu0 0.0
  %1690 = vmatpush1.msra.mxu0 %v38
  %1691 = vmatprep.subr.mxu0 0.0
  %1692 = vmatpush1.msra.mxu0 %v37
  %1693 = vmatprep.subr.mxu0 0.0
  %1694 = vmatpush1.msra.mxu0 %v36
  %1695 = vmatprep.subr.mxu0 0.0
  %1696 = vmatpush1.msra.mxu0 %v35
  %1697 = vmatprep.subr.mxu0 0.0
  %1698 = vmatpush1.msra.mxu0 %v34
  %1699 = vmatprep.subr.mxu0 0.0
  %1700 = vmatpush2.msra.mxu0 0.0
  %1701 = vmatprep.subr.mxu0 0.0
  %1702 = vmatpush2.msra.mxu0 0.0
  %1703 = vmatprep.subr.mxu0 0.0
  %1704 = vmatpush2.msra.mxu0 0.0
  %1705 = vmatprep.subr.mxu0 0.0
  %1706 = vmatpush2.msra.mxu0 0.0
  %1707 = vmatprep.subr.mxu0 0.0
  %1708 = vmatpush2.msra.mxu0 0.0
  %1709 = vmatprep.subr.mxu0 0.0
  %1710 = vmatpush2.msra.mxu0 0.0
  %1711 = vmatprep.subr.mxu0 0.0
  %1712 = vmatpush2.msra.mxu0 0.0
  %1713 = vmatprep.subr.mxu0 0.0
  %1714 = vmatpush2.msra.mxu0 0.0
  %1715 = vmatprep.subr.mxu0 0.0
  %1716 = vmatpush2.msra.mxu0 0.0
  %1717 = vmatprep.subr.mxu0 0.0
  %1718 = vmatpush2.msra.mxu0 0.0
  %1719 = vmatprep.subr.mxu0 0.0
  %1720 = vmatpush2.msra.mxu0 0.0
  %1721 = vmatprep.subr.mxu0 0.0
  %1722 = vmatpush2.msra.mxu0 0.0
  %1723 = vmatprep.subr.mxu0 0.0
  %1724 = vmatpush2.msra.mxu0 0.0
  %1725 = vmatprep.subr.mxu0 0.0
  %1726 = vmatpush2.msra.mxu0 0.0
  %1727 = vmatprep.subr.mxu0 0.0
  %1728 = vmatpush2.msra.mxu0 0.0
  %1729 = vmatprep.subr.mxu0 0.0
  %1730 = vmatpush2.msra.mxu0 0.0
  %1731 = vmatprep.mubr.f32.mxu0 0.0
  %1732 = vmatmul.mubr.f32.gmra.mxu0 %v1665
  %v1733 = vpop.f32.mrf.mxu0
  %v1734 = vadd.f32 %v59, %v1733
  %v1735 = vpop.f32.mrf.mxu0
  %1736 = vdwg.mxu0
  %v1737 = vmax.f32 %v1734, 0.0
  %1739 = vrot.lane.b32.xlu0 %v1656, 32
  %v1740 = vpop.permute.xlu0 %1739
  %v1742 = vsel %vm53, %v1737, %v1740
  %v1744 = vsel %vm61, %v1742, 0
  %1746 = vmatprep.subr.mxu0 0.0
  %1747 = vmatpush1.msra.mxu0 0.0
  %1748 = vmatprep.subr.mxu0 0.0
  %1749 = vmatpush1.msra.mxu0 0.0
  %1750 = vmatprep.subr.mxu0 0.0
  %1751 = vmatpush1.msra.mxu0 0.0
  %1752 = vmatprep.subr.mxu0 0.0
  %1753 = vmatpush1.msra.mxu0 0.0
  %1754 = vmatprep.subr.mxu0 0.0
  %1755 = vmatpush1.msra.mxu0 0.0
  %1756 = vmatprep.subr.mxu0 0.0
  %1757 = vmatpush1.msra.mxu0 0.0
  %1758 = vmatprep.subr.mxu0 0.0
  %1759 = vmatpush1.msra.mxu0 0.0
  %1760 = vmatprep.subr.mxu0 0.0
  %1761 = vmatpush1.msra.mxu0 0.0
  %1762 = vmatprep.subr.mxu0 0.0
  %1763 = vmatpush1.msra.mxu0 %v49
  %1764 = vmatprep.subr.mxu0 0.0
  %1765 = vmatpush1.msra.mxu0 %v48
  %1766 = vmatprep.subr.mxu0 0.0
  %1767 = vmatpush1.msra.mxu0 %v47
  %1768 = vmatprep.subr.mxu0 0.0
  %1769 = vmatpush1.msra.mxu0 %v46
  %1770 = vmatprep.subr.mxu0 0.0
  %1771 = vmatpush1.msra.mxu0 %v45
  %1772 = vmatprep.subr.mxu0 0.0
  %1773 = vmatpush1.msra.mxu0 %v44
  %1774 = vmatprep.subr.mxu0 0.0
  %1775 = vmatpush1.msra.mxu0 %v43
  %1776 = vmatprep.subr.mxu0 0.0
  %1777 = vmatpush1.msra.mxu0 %v42
  %1778 = vmatprep.subr.mxu0 0.0
  %1779 = vmatpush2.msra.mxu0 0.0
  %1780 = vmatprep.subr.mxu0 0.0
  %1781 = vmatpush2.msra.mxu0 0.0
  %1782 = vmatprep.subr.mxu0 0.0
  %1783 = vmatpush2.msra.mxu0 0.0
  %1784 = vmatprep.subr.mxu0 0.0
  %1785 = vmatpush2.msra.mxu0 0.0
  %1786 = vmatprep.subr.mxu0 0.0
  %1787 = vmatpush2.msra.mxu0 0.0
  %1788 = vmatprep.subr.mxu0 0.0
  %1789 = vmatpush2.msra.mxu0 0.0
  %1790 = vmatprep.subr.mxu0 0.0
  %1791 = vmatpush2.msra.mxu0 0.0
  %1792 = vmatprep.subr.mxu0 0.0
  %1793 = vmatpush2.msra.mxu0 0.0
  %1794 = vmatprep.subr.mxu0 0.0
  %1795 = vmatpush2.msra.mxu0 0.0
  %1796 = vmatprep.subr.mxu0 0.0
  %1797 = vmatpush2.msra.mxu0 0.0
  %1798 = vmatprep.subr.mxu0 0.0
  %1799 = vmatpush2.msra.mxu0 0.0
  %1800 = vmatprep.subr.mxu0 0.0
  %1801 = vmatpush2.msra.mxu0 0.0
  %1802 = vmatprep.subr.mxu0 0.0
  %1803 = vmatpush2.msra.mxu0 0.0
  %1804 = vmatprep.subr.mxu0 0.0
  %1805 = vmatpush2.msra.mxu0 0.0
  %1806 = vmatprep.subr.mxu0 0.0
  %1807 = vmatpush2.msra.mxu0 0.0
  %1808 = vmatprep.subr.mxu0 0.0
  %1809 = vmatpush2.msra.mxu0 0.0
  %1810 = vmatprep.mubr.f32.mxu0 0.0
  %1811 = vmatmul.mubr.f32.gmra.mxu0 %v1744
  %v1812 = vpop.f32.mrf.mxu0
  %v1813 = vadd.f32 %v141, %v1812
  %v1814 = vpop.f32.mrf.mxu0
  %1815 = vdwg.mxu0
  %v1816 = vmax.f32 %v1813, 0.0
  %s1817 = scalar_lea.vmem %s0, 88
  %v1818 = vld [vmem:[%s1817] sm:$0xff]
  %1820 = vrot.lane.b32.xlu0 %v1737, 32
  %v1821 = vpop.permute.xlu0 %1820
  %v1823 = vsel %vm53, %v1818, %v1821
  %v1825 = vsel %vm61, %v1823, 0
  %1827 = vmatprep.subr.mxu0 0.0
  %1828 = vmatpush1.msra.mxu0 0.0
  %1829 = vmatprep.subr.mxu0 0.0
  %1830 = vmatpush1.msra.mxu0 0.0
  %1831 = vmatprep.subr.mxu0 0.0
  %1832 = vmatpush1.msra.mxu0 0.0
  %1833 = vmatprep.subr.mxu0 0.0
  %1834 = vmatpush1.msra.mxu0 0.0
  %1835 = vmatprep.subr.mxu0 0.0
  %1836 = vmatpush1.msra.mxu0 0.0
  %1837 = vmatprep.subr.mxu0 0.0
  %1838 = vmatpush1.msra.mxu0 0.0
  %1839 = vmatprep.subr.mxu0 0.0
  %1840 = vmatpush1.msra.mxu0 0.0
  %1841 = vmatprep.subr.mxu0 0.0
  %1842 = vmatpush1.msra.mxu0 0.0
  %1843 = vmatprep.subr.mxu0 0.0
  %1844 = vmatpush1.msra.mxu0 %v41
  %1845 = vmatprep.subr.mxu0 0.0
  %1846 = vmatpush1.msra.mxu0 %v40
  %1847 = vmatprep.subr.mxu0 0.0
  %1848 = vmatpush1.msra.mxu0 %v39
  %1849 = vmatprep.subr.mxu0 0.0
  %1850 = vmatpush1.msra.mxu0 %v38
  %1851 = vmatprep.subr.mxu0 0.0
  %1852 = vmatpush1.msra.mxu0 %v37
  %1853 = vmatprep.subr.mxu0 0.0
  %1854 = vmatpush1.msra.mxu0 %v36
  %1855 = vmatprep.subr.mxu0 0.0
  %1856 = vmatpush1.msra.mxu0 %v35
  %1857 = vmatprep.subr.mxu0 0.0
  %1858 = vmatpush1.msra.mxu0 %v34
  %1859 = vmatprep.subr.mxu0 0.0
  %1860 = vmatpush2.msra.mxu0 0.0
  %1861 = vmatprep.subr.mxu0 0.0
  %1862 = vmatpush2.msra.mxu0 0.0
  %1863 = vmatprep.subr.mxu0 0.0
  %1864 = vmatpush2.msra.mxu0 0.0
  %1865 = vmatprep.subr.mxu0 0.0
  %1866 = vmatpush2.msra.mxu0 0.0
  %1867 = vmatprep.subr.mxu0 0.0
  %1868 = vmatpush2.msra.mxu0 0.0
  %1869 = vmatprep.subr.mxu0 0.0
  %1870 = vmatpush2.msra.mxu0 0.0
  %1871 = vmatprep.subr.mxu0 0.0
  %1872 = vmatpush2.msra.mxu0 0.0
  %1873 = vmatprep.subr.mxu0 0.0
  %1874 = vmatpush2.msra.mxu0 0.0
  %1875 = vmatprep.subr.mxu0 0.0
  %1876 = vmatpush2.msra.mxu0 0.0
  %1877 = vmatprep.subr.mxu0 0.0
  %1878 = vmatpush2.msra.mxu0 0.0
  %1879 = vmatprep.subr.mxu0 0.0
  %1880 = vmatpush2.msra.mxu0 0.0
  %1881 = vmatprep.subr.mxu0 0.0
  %1882 = vmatpush2.msra.mxu0 0.0
  %1883 = vmatprep.subr.mxu0 0.0
  %1884 = vmatpush2.msra.mxu0 0.0
  %1885 = vmatprep.subr.mxu0 0.0
  %1886 = vmatpush2.msra.mxu0 0.0
  %1887 = vmatprep.subr.mxu0 0.0
  %1888 = vmatpush2.msra.mxu0 0.0
  %1889 = vmatprep.subr.mxu0 0.0
  %1890 = vmatpush2.msra.mxu0 0.0
  %1891 = vmatprep.mubr.f32.mxu0 0.0
  %1892 = vmatmul.mubr.f32.gmra.mxu0 %v1825
  %v1893 = vpop.f32.mrf.mxu0
  %v1894 = vadd.f32 %v59, %v1893
  %v1895 = vpop.f32.mrf.mxu0
  %1896 = vdwg.mxu0
  %v1897 = vmax.f32 %v1894, 0.0
  %1899 = vrot.lane.b32.xlu0 %v1816, 32
  %v1900 = vpop.permute.xlu0 %1899
  %v1902 = vsel %vm53, %v1897, %v1900
  %v1904 = vsel %vm61, %v1902, 0
  %1906 = vmatprep.subr.mxu0 0.0
  %1907 = vmatpush1.msra.mxu0 0.0
  %1908 = vmatprep.subr.mxu0 0.0
  %1909 = vmatpush1.msra.mxu0 0.0
  %1910 = vmatprep.subr.mxu0 0.0
  %1911 = vmatpush1.msra.mxu0 0.0
  %1912 = vmatprep.subr.mxu0 0.0
  %1913 = vmatpush1.msra.mxu0 0.0
  %1914 = vmatprep.subr.mxu0 0.0
  %1915 = vmatpush1.msra.mxu0 0.0
  %1916 = vmatprep.subr.mxu0 0.0
  %1917 = vmatpush1.msra.mxu0 0.0
  %1918 = vmatprep.subr.mxu0 0.0
  %1919 = vmatpush1.msra.mxu0 0.0
  %1920 = vmatprep.subr.mxu0 0.0
  %1921 = vmatpush1.msra.mxu0 0.0
  %1922 = vmatprep.subr.mxu0 0.0
  %1923 = vmatpush1.msra.mxu0 %v49
  %1924 = vmatprep.subr.mxu0 0.0
  %1925 = vmatpush1.msra.mxu0 %v48
  %1926 = vmatprep.subr.mxu0 0.0
  %1927 = vmatpush1.msra.mxu0 %v47
  %1928 = vmatprep.subr.mxu0 0.0
  %1929 = vmatpush1.msra.mxu0 %v46
  %1930 = vmatprep.subr.mxu0 0.0
  %1931 = vmatpush1.msra.mxu0 %v45
  %1932 = vmatprep.subr.mxu0 0.0
  %1933 = vmatpush1.msra.mxu0 %v44
  %1934 = vmatprep.subr.mxu0 0.0
  %1935 = vmatpush1.msra.mxu0 %v43
  %1936 = vmatprep.subr.mxu0 0.0
  %1937 = vmatpush1.msra.mxu0 %v42
  %1938 = vmatprep.subr.mxu0 0.0
  %1939 = vmatpush2.msra.mxu0 0.0
  %1940 = vmatprep.subr.mxu0 0.0
  %1941 = vmatpush2.msra.mxu0 0.0
  %1942 = vmatprep.subr.mxu0 0.0
  %1943 = vmatpush2.msra.mxu0 0.0
  %1944 = vmatprep.subr.mxu0 0.0
  %1945 = vmatpush2.msra.mxu0 0.0
  %1946 = vmatprep.subr.mxu0 0.0
  %1947 = vmatpush2.msra.mxu0 0.0
  %1948 = vmatprep.subr.mxu0 0.0
  %1949 = vmatpush2.msra.mxu0 0.0
  %1950 = vmatprep.subr.mxu0 0.0
  %1951 = vmatpush2.msra.mxu0 0.0
  %1952 = vmatprep.subr.mxu0 0.0
  %1953 = vmatpush2.msra.mxu0 0.0
  %1954 = vmatprep.subr.mxu0 0.0
  %1955 = vmatpush2.msra.mxu0 0.0
  %1956 = vmatprep.subr.mxu0 0.0
  %1957 = vmatpush2.msra.mxu0 0.0
  %1958 = vmatprep.subr.mxu0 0.0
  %1959 = vmatpush2.msra.mxu0 0.0
  %1960 = vmatprep.subr.mxu0 0.0
  %1961 = vmatpush2.msra.mxu0 0.0
  %1962 = vmatprep.subr.mxu0 0.0
  %1963 = vmatpush2.msra.mxu0 0.0
  %1964 = vmatprep.subr.mxu0 0.0
  %1965 = vmatpush2.msra.mxu0 0.0
  %1966 = vmatprep.subr.mxu0 0.0
  %1967 = vmatpush2.msra.mxu0 0.0
  %1968 = vmatprep.subr.mxu0 0.0
  %1969 = vmatpush2.msra.mxu0 0.0
  %1970 = vmatprep.mubr.f32.mxu0 0.0
  %1971 = vmatmul.mubr.f32.gmra.mxu0 %v1904
  %v1972 = vpop.f32.mrf.mxu0
  %v1973 = vadd.f32 %v141, %v1972
  %v1974 = vpop.f32.mrf.mxu0
  %1975 = vdwg.mxu0
  %v1976 = vmax.f32 %v1973, 0.0
  %s1977 = scalar_lea.vmem %s0, 96
  %v1978 = vld [vmem:[%s1977] sm:$0xff]
  %1980 = vrot.lane.b32.xlu0 %v1897, 32
  %v1981 = vpop.permute.xlu0 %1980
  %v1983 = vsel %vm53, %v1978, %v1981
  %v1985 = vsel %vm61, %v1983, 0
  %1987 = vmatprep.subr.mxu0 0.0
  %1988 = vmatpush1.msra.mxu0 0.0
  %1989 = vmatprep.subr.mxu0 0.0
  %1990 = vmatpush1.msra.mxu0 0.0
  %1991 = vmatprep.subr.mxu0 0.0
  %1992 = vmatpush1.msra.mxu0 0.0
  %1993 = vmatprep.subr.mxu0 0.0
  %1994 = vmatpush1.msra.mxu0 0.0
  %1995 = vmatprep.subr.mxu0 0.0
  %1996 = vmatpush1.msra.mxu0 0.0
  %1997 = vmatprep.subr.mxu0 0.0
  %1998 = vmatpush1.msra.mxu0 0.0
  %1999 = vmatprep.subr.mxu0 0.0
  %2000 = vmatpush1.msra.mxu0 0.0
  %2001 = vmatprep.subr.mxu0 0.0
  %2002 = vmatpush1.msra.mxu0 0.0
  %2003 = vmatprep.subr.mxu0 0.0
  %2004 = vmatpush1.msra.mxu0 %v41
  %2005 = vmatprep.subr.mxu0 0.0
  %2006 = vmatpush1.msra.mxu0 %v40
  %2007 = vmatprep.subr.mxu0 0.0
  %2008 = vmatpush1.msra.mxu0 %v39
  %2009 = vmatprep.subr.mxu0 0.0
  %2010 = vmatpush1.msra.mxu0 %v38
  %2011 = vmatprep.subr.mxu0 0.0
  %2012 = vmatpush1.msra.mxu0 %v37
  %2013 = vmatprep.subr.mxu0 0.0
  %2014 = vmatpush1.msra.mxu0 %v36
  %2015 = vmatprep.subr.mxu0 0.0
  %2016 = vmatpush1.msra.mxu0 %v35
  %2017 = vmatprep.subr.mxu0 0.0
  %2018 = vmatpush1.msra.mxu0 %v34
  %2019 = vmatprep.subr.mxu0 0.0
  %2020 = vmatpush2.msra.mxu0 0.0
  %2021 = vmatprep.subr.mxu0 0.0
  %2022 = vmatpush2.msra.mxu0 0.0
  %2023 = vmatprep.subr.mxu0 0.0
  %2024 = vmatpush2.msra.mxu0 0.0
  %2025 = vmatprep.subr.mxu0 0.0
  %2026 = vmatpush2.msra.mxu0 0.0
  %2027 = vmatprep.subr.mxu0 0.0
  %2028 = vmatpush2.msra.mxu0 0.0
  %2029 = vmatprep.subr.mxu0 0.0
  %2030 = vmatpush2.msra.mxu0 0.0
  %2031 = vmatprep.subr.mxu0 0.0
  %2032 = vmatpush2.msra.mxu0 0.0
  %2033 = vmatprep.subr.mxu0 0.0
  %2034 = vmatpush2.msra.mxu0 0.0
  %2035 = vmatprep.subr.mxu0 0.0
  %2036 = vmatpush2.msra.mxu0 0.0
  %2037 = vmatprep.subr.mxu0 0.0
  %2038 = vmatpush2.msra.mxu0 0.0
  %2039 = vmatprep.subr.mxu0 0.0
  %2040 = vmatpush2.msra.mxu0 0.0
  %2041 = vmatprep.subr.mxu0 0.0
  %2042 = vmatpush2.msra.mxu0 0.0
  %2043 = vmatprep.subr.mxu0 0.0
  %2044 = vmatpush2.msra.mxu0 0.0
  %2045 = vmatprep.subr.mxu0 0.0
  %2046 = vmatpush2.msra.mxu0 0.0
  %2047 = vmatprep.subr.mxu0 0.0
  %2048 = vmatpush2.msra.mxu0 0.0
  %2049 = vmatprep.subr.mxu0 0.0
  %2050 = vmatpush2.msra.mxu0 0.0
  %2051 = vmatprep.mubr.f32.mxu0 0.0
  %2052 = vmatmul.mubr.f32.gmra.mxu0 %v1985
  %v2053 = vpop.f32.mrf.mxu0
  %v2054 = vadd.f32 %v59, %v2053
  %v2055 = vpop.f32.mrf.mxu0
  %2056 = vdwg.mxu0
  %v2057 = vmax.f32 %v2054, 0.0
  %2059 = vrot.lane.b32.xlu0 %v1976, 32
  %v2060 = vpop.permute.xlu0 %2059
  %v2062 = vsel %vm53, %v2057, %v2060
  %v2064 = vsel %vm61, %v2062, 0
  %2066 = vmatprep.subr.mxu0 0.0
  %2067 = vmatpush1.msra.mxu0 0.0
  %2068 = vmatprep.subr.mxu0 0.0
  %2069 = vmatpush1.msra.mxu0 0.0
  %2070 = vmatprep.subr.mxu0 0.0
  %2071 = vmatpush1.msra.mxu0 0.0
  %2072 = vmatprep.subr.mxu0 0.0
  %2073 = vmatpush1.msra.mxu0 0.0
  %2074 = vmatprep.subr.mxu0 0.0
  %2075 = vmatpush1.msra.mxu0 0.0
  %2076 = vmatprep.subr.mxu0 0.0
  %2077 = vmatpush1.msra.mxu0 0.0
  %2078 = vmatprep.subr.mxu0 0.0
  %2079 = vmatpush1.msra.mxu0 0.0
  %2080 = vmatprep.subr.mxu0 0.0
  %2081 = vmatpush1.msra.mxu0 0.0
  %2082 = vmatprep.subr.mxu0 0.0
  %2083 = vmatpush1.msra.mxu0 %v49
  %2084 = vmatprep.subr.mxu0 0.0
  %2085 = vmatpush1.msra.mxu0 %v48
  %2086 = vmatprep.subr.mxu0 0.0
  %2087 = vmatpush1.msra.mxu0 %v47
  %2088 = vmatprep.subr.mxu0 0.0
  %2089 = vmatpush1.msra.mxu0 %v46
  %2090 = vmatprep.subr.mxu0 0.0
  %2091 = vmatpush1.msra.mxu0 %v45
  %2092 = vmatprep.subr.mxu0 0.0
  %2093 = vmatpush1.msra.mxu0 %v44
  %2094 = vmatprep.subr.mxu0 0.0
  %2095 = vmatpush1.msra.mxu0 %v43
  %2096 = vmatprep.subr.mxu0 0.0
  %2097 = vmatpush1.msra.mxu0 %v42
  %2098 = vmatprep.subr.mxu0 0.0
  %2099 = vmatpush2.msra.mxu0 0.0
  %2100 = vmatprep.subr.mxu0 0.0
  %2101 = vmatpush2.msra.mxu0 0.0
  %2102 = vmatprep.subr.mxu0 0.0
  %2103 = vmatpush2.msra.mxu0 0.0
  %2104 = vmatprep.subr.mxu0 0.0
  %2105 = vmatpush2.msra.mxu0 0.0
  %2106 = vmatprep.subr.mxu0 0.0
  %2107 = vmatpush2.msra.mxu0 0.0
  %2108 = vmatprep.subr.mxu0 0.0
  %2109 = vmatpush2.msra.mxu0 0.0
  %2110 = vmatprep.subr.mxu0 0.0
  %2111 = vmatpush2.msra.mxu0 0.0
  %2112 = vmatprep.subr.mxu0 0.0
  %2113 = vmatpush2.msra.mxu0 0.0
  %2114 = vmatprep.subr.mxu0 0.0
  %2115 = vmatpush2.msra.mxu0 0.0
  %2116 = vmatprep.subr.mxu0 0.0
  %2117 = vmatpush2.msra.mxu0 0.0
  %2118 = vmatprep.subr.mxu0 0.0
  %2119 = vmatpush2.msra.mxu0 0.0
  %2120 = vmatprep.subr.mxu0 0.0
  %2121 = vmatpush2.msra.mxu0 0.0
  %2122 = vmatprep.subr.mxu0 0.0
  %2123 = vmatpush2.msra.mxu0 0.0
  %2124 = vmatprep.subr.mxu0 0.0
  %2125 = vmatpush2.msra.mxu0 0.0
  %2126 = vmatprep.subr.mxu0 0.0
  %2127 = vmatpush2.msra.mxu0 0.0
  %2128 = vmatprep.subr.mxu0 0.0
  %2129 = vmatpush2.msra.mxu0 0.0
  %2130 = vmatprep.mubr.f32.mxu0 0.0
  %2131 = vmatmul.mubr.f32.gmra.mxu0 %v2064
  %v2132 = vpop.f32.mrf.mxu0
  %v2133 = vadd.f32 %v141, %v2132
  %v2134 = vpop.f32.mrf.mxu0
  %2135 = vdwg.mxu0
  %v2136 = vmax.f32 %v2133, 0.0
  %s2137 = scalar_lea.vmem %s0, 104
  %v2138 = vld [vmem:[%s2137] sm:$0xff]
  %2140 = vrot.lane.b32.xlu0 %v2057, 32
  %v2141 = vpop.permute.xlu0 %2140
  %v2143 = vsel %vm53, %v2138, %v2141
  %v2145 = vsel %vm61, %v2143, 0
  %2147 = vmatprep.subr.mxu0 0.0
  %2148 = vmatpush1.msra.mxu0 0.0
  %2149 = vmatprep.subr.mxu0 0.0
  %2150 = vmatpush1.msra.mxu0 0.0
  %2151 = vmatprep.subr.mxu0 0.0
  %2152 = vmatpush1.msra.mxu0 0.0
  %2153 = vmatprep.subr.mxu0 0.0
  %2154 = vmatpush1.msra.mxu0 0.0
  %2155 = vmatprep.subr.mxu0 0.0
  %2156 = vmatpush1.msra.mxu0 0.0
  %2157 = vmatprep.subr.mxu0 0.0
  %2158 = vmatpush1.msra.mxu0 0.0
  %2159 = vmatprep.subr.mxu0 0.0
  %2160 = vmatpush1.msra.mxu0 0.0
  %2161 = vmatprep.subr.mxu0 0.0
  %2162 = vmatpush1.msra.mxu0 0.0
  %2163 = vmatprep.subr.mxu0 0.0
  %2164 = vmatpush1.msra.mxu0 %v41
  %2165 = vmatprep.subr.mxu0 0.0
  %2166 = vmatpush1.msra.mxu0 %v40
  %2167 = vmatprep.subr.mxu0 0.0
  %2168 = vmatpush1.msra.mxu0 %v39
  %2169 = vmatprep.subr.mxu0 0.0
  %2170 = vmatpush1.msra.mxu0 %v38
  %2171 = vmatprep.subr.mxu0 0.0
  %2172 = vmatpush1.msra.mxu0 %v37
  %2173 = vmatprep.subr.mxu0 0.0
  %2174 = vmatpush1.msra.mxu0 %v36
  %2175 = vmatprep.subr.mxu0 0.0
  %2176 = vmatpush1.msra.mxu0 %v35
  %2177 = vmatprep.subr.mxu0 0.0
  %2178 = vmatpush1.msra.mxu0 %v34
  %2179 = vmatprep.subr.mxu0 0.0
  %2180 = vmatpush2.msra.mxu0 0.0
  %2181 = vmatprep.subr.mxu0 0.0
  %2182 = vmatpush2.msra.mxu0 0.0
  %2183 = vmatprep.subr.mxu0 0.0
  %2184 = vmatpush2.msra.mxu0 0.0
  %2185 = vmatprep.subr.mxu0 0.0
  %2186 = vmatpush2.msra.mxu0 0.0
  %2187 = vmatprep.subr.mxu0 0.0
  %2188 = vmatpush2.msra.mxu0 0.0
  %2189 = vmatprep.subr.mxu0 0.0
  %2190 = vmatpush2.msra.mxu0 0.0
  %2191 = vmatprep.subr.mxu0 0.0
  %2192 = vmatpush2.msra.mxu0 0.0
  %2193 = vmatprep.subr.mxu0 0.0
  %2194 = vmatpush2.msra.mxu0 0.0
  %2195 = vmatprep.subr.mxu0 0.0
  %2196 = vmatpush2.msra.mxu0 0.0
  %2197 = vmatprep.subr.mxu0 0.0
  %2198 = vmatpush2.msra.mxu0 0.0
  %2199 = vmatprep.subr.mxu0 0.0
  %2200 = vmatpush2.msra.mxu0 0.0
  %2201 = vmatprep.subr.mxu0 0.0
  %2202 = vmatpush2.msra.mxu0 0.0
  %2203 = vmatprep.subr.mxu0 0.0
  %2204 = vmatpush2.msra.mxu0 0.0
  %2205 = vmatprep.subr.mxu0 0.0
  %2206 = vmatpush2.msra.mxu0 0.0
  %2207 = vmatprep.subr.mxu0 0.0
  %2208 = vmatpush2.msra.mxu0 0.0
  %2209 = vmatprep.subr.mxu0 0.0
  %2210 = vmatpush2.msra.mxu0 0.0
  %2211 = vmatprep.mubr.f32.mxu0 0.0
  %2212 = vmatmul.mubr.f32.gmra.mxu0 %v2145
  %v2213 = vpop.f32.mrf.mxu0
  %v2214 = vadd.f32 %v59, %v2213
  %v2215 = vpop.f32.mrf.mxu0
  %2216 = vdwg.mxu0
  %v2217 = vmax.f32 %v2214, 0.0
  %2219 = vrot.lane.b32.xlu0 %v2136, 32
  %v2220 = vpop.permute.xlu0 %2219
  %v2222 = vsel %vm53, %v2217, %v2220
  %v2224 = vsel %vm61, %v2222, 0
  %2226 = vmatprep.subr.mxu0 0.0
  %2227 = vmatpush1.msra.mxu0 0.0
  %2228 = vmatprep.subr.mxu0 0.0
  %2229 = vmatpush1.msra.mxu0 0.0
  %2230 = vmatprep.subr.mxu0 0.0
  %2231 = vmatpush1.msra.mxu0 0.0
  %2232 = vmatprep.subr.mxu0 0.0
  %2233 = vmatpush1.msra.mxu0 0.0
  %2234 = vmatprep.subr.mxu0 0.0
  %2235 = vmatpush1.msra.mxu0 0.0
  %2236 = vmatprep.subr.mxu0 0.0
  %2237 = vmatpush1.msra.mxu0 0.0
  %2238 = vmatprep.subr.mxu0 0.0
  %2239 = vmatpush1.msra.mxu0 0.0
  %2240 = vmatprep.subr.mxu0 0.0
  %2241 = vmatpush1.msra.mxu0 0.0
  %2242 = vmatprep.subr.mxu0 0.0
  %2243 = vmatpush1.msra.mxu0 %v49
  %2244 = vmatprep.subr.mxu0 0.0
  %2245 = vmatpush1.msra.mxu0 %v48
  %2246 = vmatprep.subr.mxu0 0.0
  %2247 = vmatpush1.msra.mxu0 %v47
  %2248 = vmatprep.subr.mxu0 0.0
  %2249 = vmatpush1.msra.mxu0 %v46
  %2250 = vmatprep.subr.mxu0 0.0
  %2251 = vmatpush1.msra.mxu0 %v45
  %2252 = vmatprep.subr.mxu0 0.0
  %2253 = vmatpush1.msra.mxu0 %v44
  %2254 = vmatprep.subr.mxu0 0.0
  %2255 = vmatpush1.msra.mxu0 %v43
  %2256 = vmatprep.subr.mxu0 0.0
  %2257 = vmatpush1.msra.mxu0 %v42
  %2258 = vmatprep.subr.mxu0 0.0
  %2259 = vmatpush2.msra.mxu0 0.0
  %2260 = vmatprep.subr.mxu0 0.0
  %2261 = vmatpush2.msra.mxu0 0.0
  %2262 = vmatprep.subr.mxu0 0.0
  %2263 = vmatpush2.msra.mxu0 0.0
  %2264 = vmatprep.subr.mxu0 0.0
  %2265 = vmatpush2.msra.mxu0 0.0
  %2266 = vmatprep.subr.mxu0 0.0
  %2267 = vmatpush2.msra.mxu0 0.0
  %2268 = vmatprep.subr.mxu0 0.0
  %2269 = vmatpush2.msra.mxu0 0.0
  %2270 = vmatprep.subr.mxu0 0.0
  %2271 = vmatpush2.msra.mxu0 0.0
  %2272 = vmatprep.subr.mxu0 0.0
  %2273 = vmatpush2.msra.mxu0 0.0
  %2274 = vmatprep.subr.mxu0 0.0
  %2275 = vmatpush2.msra.mxu0 0.0
  %2276 = vmatprep.subr.mxu0 0.0
  %2277 = vmatpush2.msra.mxu0 0.0
  %2278 = vmatprep.subr.mxu0 0.0
  %2279 = vmatpush2.msra.mxu0 0.0
  %2280 = vmatprep.subr.mxu0 0.0
  %2281 = vmatpush2.msra.mxu0 0.0
  %2282 = vmatprep.subr.mxu0 0.0
  %2283 = vmatpush2.msra.mxu0 0.0
  %2284 = vmatprep.subr.mxu0 0.0
  %2285 = vmatpush2.msra.mxu0 0.0
  %2286 = vmatprep.subr.mxu0 0.0
  %2287 = vmatpush2.msra.mxu0 0.0
  %2288 = vmatprep.subr.mxu0 0.0
  %2289 = vmatpush2.msra.mxu0 0.0
  %2290 = vmatprep.mubr.f32.mxu0 0.0
  %2291 = vmatmul.mubr.f32.gmra.mxu0 %v2224
  %v2292 = vpop.f32.mrf.mxu0
  %v2293 = vadd.f32 %v141, %v2292
  %v2294 = vpop.f32.mrf.mxu0
  %2295 = vdwg.mxu0
  %v2296 = vmax.f32 %v2293, 0.0
  %s2297 = scalar_lea.vmem %s0, 112
  %v2298 = vld [vmem:[%s2297] sm:$0xff]
  %2300 = vrot.lane.b32.xlu0 %v2217, 32
  %v2301 = vpop.permute.xlu0 %2300
  %v2303 = vsel %vm53, %v2298, %v2301
  %v2305 = vsel %vm61, %v2303, 0
  %2307 = vmatprep.subr.mxu0 0.0
  %2308 = vmatpush1.msra.mxu0 0.0
  %2309 = vmatprep.subr.mxu0 0.0
  %2310 = vmatpush1.msra.mxu0 0.0
  %2311 = vmatprep.subr.mxu0 0.0
  %2312 = vmatpush1.msra.mxu0 0.0
  %2313 = vmatprep.subr.mxu0 0.0
  %2314 = vmatpush1.msra.mxu0 0.0
  %2315 = vmatprep.subr.mxu0 0.0
  %2316 = vmatpush1.msra.mxu0 0.0
  %2317 = vmatprep.subr.mxu0 0.0
  %2318 = vmatpush1.msra.mxu0 0.0
  %2319 = vmatprep.subr.mxu0 0.0
  %2320 = vmatpush1.msra.mxu0 0.0
  %2321 = vmatprep.subr.mxu0 0.0
  %2322 = vmatpush1.msra.mxu0 0.0
  %2323 = vmatprep.subr.mxu0 0.0
  %2324 = vmatpush1.msra.mxu0 %v41
  %2325 = vmatprep.subr.mxu0 0.0
  %2326 = vmatpush1.msra.mxu0 %v40
  %2327 = vmatprep.subr.mxu0 0.0
  %2328 = vmatpush1.msra.mxu0 %v39
  %2329 = vmatprep.subr.mxu0 0.0
  %2330 = vmatpush1.msra.mxu0 %v38
  %2331 = vmatprep.subr.mxu0 0.0
  %2332 = vmatpush1.msra.mxu0 %v37
  %2333 = vmatprep.subr.mxu0 0.0
  %2334 = vmatpush1.msra.mxu0 %v36
  %2335 = vmatprep.subr.mxu0 0.0
  %2336 = vmatpush1.msra.mxu0 %v35
  %2337 = vmatprep.subr.mxu0 0.0
  %2338 = vmatpush1.msra.mxu0 %v34
  %2339 = vmatprep.subr.mxu0 0.0
  %2340 = vmatpush2.msra.mxu0 0.0
  %2341 = vmatprep.subr.mxu0 0.0
  %2342 = vmatpush2.msra.mxu0 0.0
  %2343 = vmatprep.subr.mxu0 0.0
  %2344 = vmatpush2.msra.mxu0 0.0
  %2345 = vmatprep.subr.mxu0 0.0
  %2346 = vmatpush2.msra.mxu0 0.0
  %2347 = vmatprep.subr.mxu0 0.0
  %2348 = vmatpush2.msra.mxu0 0.0
  %2349 = vmatprep.subr.mxu0 0.0
  %2350 = vmatpush2.msra.mxu0 0.0
  %2351 = vmatprep.subr.mxu0 0.0
  %2352 = vmatpush2.msra.mxu0 0.0
  %2353 = vmatprep.subr.mxu0 0.0
  %2354 = vmatpush2.msra.mxu0 0.0
  %2355 = vmatprep.subr.mxu0 0.0
  %2356 = vmatpush2.msra.mxu0 0.0
  %2357 = vmatprep.subr.mxu0 0.0
  %2358 = vmatpush2.msra.mxu0 0.0
  %2359 = vmatprep.subr.mxu0 0.0
  %2360 = vmatpush2.msra.mxu0 0.0
  %2361 = vmatprep.subr.mxu0 0.0
  %2362 = vmatpush2.msra.mxu0 0.0
  %2363 = vmatprep.subr.mxu0 0.0
  %2364 = vmatpush2.msra.mxu0 0.0
  %2365 = vmatprep.subr.mxu0 0.0
  %2366 = vmatpush2.msra.mxu0 0.0
  %2367 = vmatprep.subr.mxu0 0.0
  %2368 = vmatpush2.msra.mxu0 0.0
  %2369 = vmatprep.subr.mxu0 0.0
  %2370 = vmatpush2.msra.mxu0 0.0
  %2371 = vmatprep.mubr.f32.mxu0 0.0
  %2372 = vmatmul.mubr.f32.gmra.mxu0 %v2305
  %v2373 = vpop.f32.mrf.mxu0
  %v2374 = vadd.f32 %v59, %v2373
  %v2375 = vpop.f32.mrf.mxu0
  %2376 = vdwg.mxu0
  %v2377 = vmax.f32 %v2374, 0.0
  %2379 = vrot.lane.b32.xlu0 %v2296, 32
  %v2380 = vpop.permute.xlu0 %2379
  %v2382 = vsel %vm53, %v2377, %v2380
  %v2384 = vsel %vm61, %v2382, 0
  %2386 = vmatprep.subr.mxu0 0.0
  %2387 = vmatpush1.msra.mxu0 0.0
  %2388 = vmatprep.subr.mxu0 0.0
  %2389 = vmatpush1.msra.mxu0 0.0
  %2390 = vmatprep.subr.mxu0 0.0
  %2391 = vmatpush1.msra.mxu0 0.0
  %2392 = vmatprep.subr.mxu0 0.0
  %2393 = vmatpush1.msra.mxu0 0.0
  %2394 = vmatprep.subr.mxu0 0.0
  %2395 = vmatpush1.msra.mxu0 0.0
  %2396 = vmatprep.subr.mxu0 0.0
  %2397 = vmatpush1.msra.mxu0 0.0
  %2398 = vmatprep.subr.mxu0 0.0
  %2399 = vmatpush1.msra.mxu0 0.0
  %2400 = vmatprep.subr.mxu0 0.0
  %2401 = vmatpush1.msra.mxu0 0.0
  %2402 = vmatprep.subr.mxu0 0.0
  %2403 = vmatpush1.msra.mxu0 %v49
  %2404 = vmatprep.subr.mxu0 0.0
  %2405 = vmatpush1.msra.mxu0 %v48
  %2406 = vmatprep.subr.mxu0 0.0
  %2407 = vmatpush1.msra.mxu0 %v47
  %2408 = vmatprep.subr.mxu0 0.0
  %2409 = vmatpush1.msra.mxu0 %v46
  %2410 = vmatprep.subr.mxu0 0.0
  %2411 = vmatpush1.msra.mxu0 %v45
  %2412 = vmatprep.subr.mxu0 0.0
  %2413 = vmatpush1.msra.mxu0 %v44
  %2414 = vmatprep.subr.mxu0 0.0
  %2415 = vmatpush1.msra.mxu0 %v43
  %2416 = vmatprep.subr.mxu0 0.0
  %2417 = vmatpush1.msra.mxu0 %v42
  %2418 = vmatprep.subr.mxu0 0.0
  %2419 = vmatpush2.msra.mxu0 0.0
  %2420 = vmatprep.subr.mxu0 0.0
  %2421 = vmatpush2.msra.mxu0 0.0
  %2422 = vmatprep.subr.mxu0 0.0
  %2423 = vmatpush2.msra.mxu0 0.0
  %2424 = vmatprep.subr.mxu0 0.0
  %2425 = vmatpush2.msra.mxu0 0.0
  %2426 = vmatprep.subr.mxu0 0.0
  %2427 = vmatpush2.msra.mxu0 0.0
  %2428 = vmatprep.subr.mxu0 0.0
  %2429 = vmatpush2.msra.mxu0 0.0
  %2430 = vmatprep.subr.mxu0 0.0
  %2431 = vmatpush2.msra.mxu0 0.0
  %2432 = vmatprep.subr.mxu0 0.0
  %2433 = vmatpush2.msra.mxu0 0.0
  %2434 = vmatprep.subr.mxu0 0.0
  %2435 = vmatpush2.msra.mxu0 0.0
  %2436 = vmatprep.subr.mxu0 0.0
  %2437 = vmatpush2.msra.mxu0 0.0
  %2438 = vmatprep.subr.mxu0 0.0
  %2439 = vmatpush2.msra.mxu0 0.0
  %2440 = vmatprep.subr.mxu0 0.0
  %2441 = vmatpush2.msra.mxu0 0.0
  %2442 = vmatprep.subr.mxu0 0.0
  %2443 = vmatpush2.msra.mxu0 0.0
  %2444 = vmatprep.subr.mxu0 0.0
  %2445 = vmatpush2.msra.mxu0 0.0
  %2446 = vmatprep.subr.mxu0 0.0
  %2447 = vmatpush2.msra.mxu0 0.0
  %2448 = vmatprep.subr.mxu0 0.0
  %2449 = vmatpush2.msra.mxu0 0.0
  %2450 = vmatprep.mubr.f32.mxu0 0.0
  %2451 = vmatmul.mubr.f32.gmra.mxu0 %v2384
  %v2452 = vpop.f32.mrf.mxu0
  %v2453 = vadd.f32 %v141, %v2452
  %v2454 = vpop.f32.mrf.mxu0
  %2455 = vdwg.mxu0
  %v2456 = vmax.f32 %v2453, 0.0
  %s2457 = scalar_lea.vmem %s0, 120
  %v2458 = vld [vmem:[%s2457] sm:$0xff]
  %2460 = vrot.lane.b32.xlu0 %v2377, 32
  %v2461 = vpop.permute.xlu0 %2460
  %v2463 = vsel %vm53, %v2458, %v2461
  %v2465 = vsel %vm61, %v2463, 0
  %2467 = vmatprep.subr.mxu0 0.0
  %2468 = vmatpush1.msra.mxu0 0.0
  %2469 = vmatprep.subr.mxu0 0.0
  %2470 = vmatpush1.msra.mxu0 0.0
  %2471 = vmatprep.subr.mxu0 0.0
  %2472 = vmatpush1.msra.mxu0 0.0
  %2473 = vmatprep.subr.mxu0 0.0
  %2474 = vmatpush1.msra.mxu0 0.0
  %2475 = vmatprep.subr.mxu0 0.0
  %2476 = vmatpush1.msra.mxu0 0.0
  %2477 = vmatprep.subr.mxu0 0.0
  %2478 = vmatpush1.msra.mxu0 0.0
  %2479 = vmatprep.subr.mxu0 0.0
  %2480 = vmatpush1.msra.mxu0 0.0
  %2481 = vmatprep.subr.mxu0 0.0
  %2482 = vmatpush1.msra.mxu0 0.0
  %2483 = vmatprep.subr.mxu0 0.0
  %2484 = vmatpush1.msra.mxu0 %v41
  %2485 = vmatprep.subr.mxu0 0.0
  %2486 = vmatpush1.msra.mxu0 %v40
  %2487 = vmatprep.subr.mxu0 0.0
  %2488 = vmatpush1.msra.mxu0 %v39
  %2489 = vmatprep.subr.mxu0 0.0
  %2490 = vmatpush1.msra.mxu0 %v38
  %2491 = vmatprep.subr.mxu0 0.0
  %2492 = vmatpush1.msra.mxu0 %v37
  %2493 = vmatprep.subr.mxu0 0.0
  %2494 = vmatpush1.msra.mxu0 %v36
  %2495 = vmatprep.subr.mxu0 0.0
  %2496 = vmatpush1.msra.mxu0 %v35
  %2497 = vmatprep.subr.mxu0 0.0
  %2498 = vmatpush1.msra.mxu0 %v34
  %2499 = vmatprep.subr.mxu0 0.0
  %2500 = vmatpush2.msra.mxu0 0.0
  %2501 = vmatprep.subr.mxu0 0.0
  %2502 = vmatpush2.msra.mxu0 0.0
  %2503 = vmatprep.subr.mxu0 0.0
  %2504 = vmatpush2.msra.mxu0 0.0
  %2505 = vmatprep.subr.mxu0 0.0
  %2506 = vmatpush2.msra.mxu0 0.0
  %2507 = vmatprep.subr.mxu0 0.0
  %2508 = vmatpush2.msra.mxu0 0.0
  %2509 = vmatprep.subr.mxu0 0.0
  %2510 = vmatpush2.msra.mxu0 0.0
  %2511 = vmatprep.subr.mxu0 0.0
  %2512 = vmatpush2.msra.mxu0 0.0
  %2513 = vmatprep.subr.mxu0 0.0
  %2514 = vmatpush2.msra.mxu0 0.0
  %2515 = vmatprep.subr.mxu0 0.0
  %2516 = vmatpush2.msra.mxu0 0.0
  %2517 = vmatprep.subr.mxu0 0.0
  %2518 = vmatpush2.msra.mxu0 0.0
  %2519 = vmatprep.subr.mxu0 0.0
  %2520 = vmatpush2.msra.mxu0 0.0
  %2521 = vmatprep.subr.mxu0 0.0
  %2522 = vmatpush2.msra.mxu0 0.0
  %2523 = vmatprep.subr.mxu0 0.0
  %2524 = vmatpush2.msra.mxu0 0.0
  %2525 = vmatprep.subr.mxu0 0.0
  %2526 = vmatpush2.msra.mxu0 0.0
  %2527 = vmatprep.subr.mxu0 0.0
  %2528 = vmatpush2.msra.mxu0 0.0
  %2529 = vmatprep.subr.mxu0 0.0
  %2530 = vmatpush2.msra.mxu0 0.0
  %2531 = vmatprep.mubr.f32.mxu0 0.0
  %2532 = vmatmul.mubr.f32.gmra.mxu0 %v2465
  %v2533 = vpop.f32.mrf.mxu0
  %v2534 = vadd.f32 %v59, %v2533
  %v2535 = vpop.f32.mrf.mxu0
  %2536 = vdwg.mxu0
  %v2537 = vmax.f32 %v2534, 0.0
  %2539 = vrot.lane.b32.xlu0 %v2456, 32
  %v2540 = vpop.permute.xlu0 %2539
  %v2542 = vsel %vm53, %v2537, %v2540
  %v2544 = vsel %vm61, %v2542, 0
  %2546 = vmatprep.subr.mxu0 0.0
  %2547 = vmatpush1.msra.mxu0 0.0
  %2548 = vmatprep.subr.mxu0 0.0
  %2549 = vmatpush1.msra.mxu0 0.0
  %2550 = vmatprep.subr.mxu0 0.0
  %2551 = vmatpush1.msra.mxu0 0.0
  %2552 = vmatprep.subr.mxu0 0.0
  %2553 = vmatpush1.msra.mxu0 0.0
  %2554 = vmatprep.subr.mxu0 0.0
  %2555 = vmatpush1.msra.mxu0 0.0
  %2556 = vmatprep.subr.mxu0 0.0
  %2557 = vmatpush1.msra.mxu0 0.0
  %2558 = vmatprep.subr.mxu0 0.0
  %2559 = vmatpush1.msra.mxu0 0.0
  %2560 = vmatprep.subr.mxu0 0.0
  %2561 = vmatpush1.msra.mxu0 0.0
  %2562 = vmatprep.subr.mxu0 0.0
  %2563 = vmatpush1.msra.mxu0 %v49
  %2564 = vmatprep.subr.mxu0 0.0
  %2565 = vmatpush1.msra.mxu0 %v48
  %2566 = vmatprep.subr.mxu0 0.0
  %2567 = vmatpush1.msra.mxu0 %v47
  %2568 = vmatprep.subr.mxu0 0.0
  %2569 = vmatpush1.msra.mxu0 %v46
  %2570 = vmatprep.subr.mxu0 0.0
  %2571 = vmatpush1.msra.mxu0 %v45
  %2572 = vmatprep.subr.mxu0 0.0
  %2573 = vmatpush1.msra.mxu0 %v44
  %2574 = vmatprep.subr.mxu0 0.0
  %2575 = vmatpush1.msra.mxu0 %v43
  %2576 = vmatprep.subr.mxu0 0.0
  %2577 = vmatpush1.msra.mxu0 %v42
  %2578 = vmatprep.subr.mxu0 0.0
  %2579 = vmatpush2.msra.mxu0 0.0
  %2580 = vmatprep.subr.mxu0 0.0
  %2581 = vmatpush2.msra.mxu0 0.0
  %2582 = vmatprep.subr.mxu0 0.0
  %2583 = vmatpush2.msra.mxu0 0.0
  %2584 = vmatprep.subr.mxu0 0.0
  %2585 = vmatpush2.msra.mxu0 0.0
  %2586 = vmatprep.subr.mxu0 0.0
  %2587 = vmatpush2.msra.mxu0 0.0
  %2588 = vmatprep.subr.mxu0 0.0
  %2589 = vmatpush2.msra.mxu0 0.0
  %2590 = vmatprep.subr.mxu0 0.0
  %2591 = vmatpush2.msra.mxu0 0.0
  %2592 = vmatprep.subr.mxu0 0.0
  %2593 = vmatpush2.msra.mxu0 0.0
  %2594 = vmatprep.subr.mxu0 0.0
  %2595 = vmatpush2.msra.mxu0 0.0
  %2596 = vmatprep.subr.mxu0 0.0
  %2597 = vmatpush2.msra.mxu0 0.0
  %2598 = vmatprep.subr.mxu0 0.0
  %2599 = vmatpush2.msra.mxu0 0.0
  %2600 = vmatprep.subr.mxu0 0.0
  %2601 = vmatpush2.msra.mxu0 0.0
  %2602 = vmatprep.subr.mxu0 0.0
  %2603 = vmatpush2.msra.mxu0 0.0
  %2604 = vmatprep.subr.mxu0 0.0
  %2605 = vmatpush2.msra.mxu0 0.0
  %2606 = vmatprep.subr.mxu0 0.0
  %2607 = vmatpush2.msra.mxu0 0.0
  %2608 = vmatprep.subr.mxu0 0.0
  %2609 = vmatpush2.msra.mxu0 0.0
  %2610 = vmatprep.mubr.f32.mxu0 0.0
  %2611 = vmatmul.mubr.f32.gmra.mxu0 %v2544
  %v2612 = vpop.f32.mrf.mxu0
  %v2613 = vadd.f32 %v141, %v2612
  %v2614 = vpop.f32.mrf.mxu0
  %2615 = vdwg.mxu0
  %v2616 = vmax.f32 %v2613, 0.0
  %s2617 = scalar_lea.vmem %s0, 128
  %v2618 = vld [vmem:[%s2617] sm:$0xff]
  %2620 = vrot.lane.b32.xlu0 %v2537, 32
  %v2621 = vpop.permute.xlu0 %2620
  %v2623 = vsel %vm53, %v2618, %v2621
  %v2625 = vsel %vm61, %v2623, 0
  %2627 = vmatprep.subr.mxu0 0.0
  %2628 = vmatpush1.msra.mxu0 0.0
  %2629 = vmatprep.subr.mxu0 0.0
  %2630 = vmatpush1.msra.mxu0 0.0
  %2631 = vmatprep.subr.mxu0 0.0
  %2632 = vmatpush1.msra.mxu0 0.0
  %2633 = vmatprep.subr.mxu0 0.0
  %2634 = vmatpush1.msra.mxu0 0.0
  %2635 = vmatprep.subr.mxu0 0.0
  %2636 = vmatpush1.msra.mxu0 0.0
  %2637 = vmatprep.subr.mxu0 0.0
  %2638 = vmatpush1.msra.mxu0 0.0
  %2639 = vmatprep.subr.mxu0 0.0
  %2640 = vmatpush1.msra.mxu0 0.0
  %2641 = vmatprep.subr.mxu0 0.0
  %2642 = vmatpush1.msra.mxu0 0.0
  %2643 = vmatprep.subr.mxu0 0.0
  %2644 = vmatpush1.msra.mxu0 %v41
  %2645 = vmatprep.subr.mxu0 0.0
  %2646 = vmatpush1.msra.mxu0 %v40
  %2647 = vmatprep.subr.mxu0 0.0
  %2648 = vmatpush1.msra.mxu0 %v39
  %2649 = vmatprep.subr.mxu0 0.0
  %2650 = vmatpush1.msra.mxu0 %v38
  %2651 = vmatprep.subr.mxu0 0.0
  %2652 = vmatpush1.msra.mxu0 %v37
  %2653 = vmatprep.subr.mxu0 0.0
  %2654 = vmatpush1.msra.mxu0 %v36
  %2655 = vmatprep.subr.mxu0 0.0
  %2656 = vmatpush1.msra.mxu0 %v35
  %2657 = vmatprep.subr.mxu0 0.0
  %2658 = vmatpush1.msra.mxu0 %v34
  %2659 = vmatprep.subr.mxu0 0.0
  %2660 = vmatpush2.msra.mxu0 0.0
  %2661 = vmatprep.subr.mxu0 0.0
  %2662 = vmatpush2.msra.mxu0 0.0
  %2663 = vmatprep.subr.mxu0 0.0
  %2664 = vmatpush2.msra.mxu0 0.0
  %2665 = vmatprep.subr.mxu0 0.0
  %2666 = vmatpush2.msra.mxu0 0.0
  %2667 = vmatprep.subr.mxu0 0.0
  %2668 = vmatpush2.msra.mxu0 0.0
  %2669 = vmatprep.subr.mxu0 0.0
  %2670 = vmatpush2.msra.mxu0 0.0
  %2671 = vmatprep.subr.mxu0 0.0
  %2672 = vmatpush2.msra.mxu0 0.0
  %2673 = vmatprep.subr.mxu0 0.0
  %2674 = vmatpush2.msra.mxu0 0.0
  %2675 = vmatprep.subr.mxu0 0.0
  %2676 = vmatpush2.msra.mxu0 0.0
  %2677 = vmatprep.subr.mxu0 0.0
  %2678 = vmatpush2.msra.mxu0 0.0
  %2679 = vmatprep.subr.mxu0 0.0
  %2680 = vmatpush2.msra.mxu0 0.0
  %2681 = vmatprep.subr.mxu0 0.0
  %2682 = vmatpush2.msra.mxu0 0.0
  %2683 = vmatprep.subr.mxu0 0.0
  %2684 = vmatpush2.msra.mxu0 0.0
  %2685 = vmatprep.subr.mxu0 0.0
  %2686 = vmatpush2.msra.mxu0 0.0
  %2687 = vmatprep.subr.mxu0 0.0
  %2688 = vmatpush2.msra.mxu0 0.0
  %2689 = vmatprep.subr.mxu0 0.0
  %2690 = vmatpush2.msra.mxu0 0.0
  %2691 = vmatprep.mubr.f32.mxu0 0.0
  %2692 = vmatmul.mubr.f32.gmra.mxu0 %v2625
  %v2693 = vpop.f32.mrf.mxu0
  %v2694 = vadd.f32 %v59, %v2693
  %v2695 = vpop.f32.mrf.mxu0
  %2696 = vdwg.mxu0
  %v2697 = vmax.f32 %v2694, 0.0
  %2699 = vrot.lane.b32.xlu0 %v2616, 32
  %v2700 = vpop.permute.xlu0 %2699
  %v2702 = vsel %vm53, %v2697, %v2700
  %v2704 = vsel %vm61, %v2702, 0
  %2706 = vmatprep.subr.mxu0 0.0
  %2707 = vmatpush1.msra.mxu0 0.0
  %2708 = vmatprep.subr.mxu0 0.0
  %2709 = vmatpush1.msra.mxu0 0.0
  %2710 = vmatprep.subr.mxu0 0.0
  %2711 = vmatpush1.msra.mxu0 0.0
  %2712 = vmatprep.subr.mxu0 0.0
  %2713 = vmatpush1.msra.mxu0 0.0
  %2714 = vmatprep.subr.mxu0 0.0
  %2715 = vmatpush1.msra.mxu0 0.0
  %2716 = vmatprep.subr.mxu0 0.0
  %2717 = vmatpush1.msra.mxu0 0.0
  %2718 = vmatprep.subr.mxu0 0.0
  %2719 = vmatpush1.msra.mxu0 0.0
  %2720 = vmatprep.subr.mxu0 0.0
  %2721 = vmatpush1.msra.mxu0 0.0
  %2722 = vmatprep.subr.mxu0 0.0
  %2723 = vmatpush1.msra.mxu0 %v49
  %2724 = vmatprep.subr.mxu0 0.0
  %2725 = vmatpush1.msra.mxu0 %v48
  %2726 = vmatprep.subr.mxu0 0.0
  %2727 = vmatpush1.msra.mxu0 %v47
  %2728 = vmatprep.subr.mxu0 0.0
  %2729 = vmatpush1.msra.mxu0 %v46
  %2730 = vmatprep.subr.mxu0 0.0
  %2731 = vmatpush1.msra.mxu0 %v45
  %2732 = vmatprep.subr.mxu0 0.0
  %2733 = vmatpush1.msra.mxu0 %v44
  %2734 = vmatprep.subr.mxu0 0.0
  %2735 = vmatpush1.msra.mxu0 %v43
  %2736 = vmatprep.subr.mxu0 0.0
  %2737 = vmatpush1.msra.mxu0 %v42
  %2738 = vmatprep.subr.mxu0 0.0
  %2739 = vmatpush2.msra.mxu0 0.0
  %2740 = vmatprep.subr.mxu0 0.0
  %2741 = vmatpush2.msra.mxu0 0.0
  %2742 = vmatprep.subr.mxu0 0.0
  %2743 = vmatpush2.msra.mxu0 0.0
  %2744 = vmatprep.subr.mxu0 0.0
  %2745 = vmatpush2.msra.mxu0 0.0
  %2746 = vmatprep.subr.mxu0 0.0
  %2747 = vmatpush2.msra.mxu0 0.0
  %2748 = vmatprep.subr.mxu0 0.0
  %2749 = vmatpush2.msra.mxu0 0.0
  %2750 = vmatprep.subr.mxu0 0.0
  %2751 = vmatpush2.msra.mxu0 0.0
  %2752 = vmatprep.subr.mxu0 0.0
  %2753 = vmatpush2.msra.mxu0 0.0
  %2754 = vmatprep.subr.mxu0 0.0
  %2755 = vmatpush2.msra.mxu0 0.0
  %2756 = vmatprep.subr.mxu0 0.0
  %2757 = vmatpush2.msra.mxu0 0.0
  %2758 = vmatprep.subr.mxu0 0.0
  %2759 = vmatpush2.msra.mxu0 0.0
  %2760 = vmatprep.subr.mxu0 0.0
  %2761 = vmatpush2.msra.mxu0 0.0
  %2762 = vmatprep.subr.mxu0 0.0
  %2763 = vmatpush2.msra.mxu0 0.0
  %2764 = vmatprep.subr.mxu0 0.0
  %2765 = vmatpush2.msra.mxu0 0.0
  %2766 = vmatprep.subr.mxu0 0.0
  %2767 = vmatpush2.msra.mxu0 0.0
  %2768 = vmatprep.subr.mxu0 0.0
  %2769 = vmatpush2.msra.mxu0 0.0
  %2770 = vmatprep.mubr.f32.mxu0 0.0
  %2771 = vmatmul.mubr.f32.gmra.mxu0 %v2704
  %v2772 = vpop.f32.mrf.mxu0
  %v2773 = vadd.f32 %v141, %v2772
  %v2774 = vpop.f32.mrf.mxu0
  %2775 = vdwg.mxu0
  %v2776 = vmax.f32 %v2773, 0.0
  %s2777 = scalar_lea.vmem %s0, 136
  %v2778 = vld [vmem:[%s2777] sm:$0xff]
  %2780 = vrot.lane.b32.xlu0 %v2697, 32
  %v2781 = vpop.permute.xlu0 %2780
  %v2783 = vsel %vm53, %v2778, %v2781
  %v2785 = vsel %vm61, %v2783, 0
  %2787 = vmatprep.subr.mxu0 0.0
  %2788 = vmatpush1.msra.mxu0 0.0
  %2789 = vmatprep.subr.mxu0 0.0
  %2790 = vmatpush1.msra.mxu0 0.0
  %2791 = vmatprep.subr.mxu0 0.0
  %2792 = vmatpush1.msra.mxu0 0.0
  %2793 = vmatprep.subr.mxu0 0.0
  %2794 = vmatpush1.msra.mxu0 0.0
  %2795 = vmatprep.subr.mxu0 0.0
  %2796 = vmatpush1.msra.mxu0 0.0
  %2797 = vmatprep.subr.mxu0 0.0
  %2798 = vmatpush1.msra.mxu0 0.0
  %2799 = vmatprep.subr.mxu0 0.0
  %2800 = vmatpush1.msra.mxu0 0.0
  %2801 = vmatprep.subr.mxu0 0.0
  %2802 = vmatpush1.msra.mxu0 0.0
  %2803 = vmatprep.subr.mxu0 0.0
  %2804 = vmatpush1.msra.mxu0 %v41
  %2805 = vmatprep.subr.mxu0 0.0
  %2806 = vmatpush1.msra.mxu0 %v40
  %2807 = vmatprep.subr.mxu0 0.0
  %2808 = vmatpush1.msra.mxu0 %v39
  %2809 = vmatprep.subr.mxu0 0.0
  %2810 = vmatpush1.msra.mxu0 %v38
  %2811 = vmatprep.subr.mxu0 0.0
  %2812 = vmatpush1.msra.mxu0 %v37
  %2813 = vmatprep.subr.mxu0 0.0
  %2814 = vmatpush1.msra.mxu0 %v36
  %2815 = vmatprep.subr.mxu0 0.0
  %2816 = vmatpush1.msra.mxu0 %v35
  %2817 = vmatprep.subr.mxu0 0.0
  %2818 = vmatpush1.msra.mxu0 %v34
  %2819 = vmatprep.subr.mxu0 0.0
  %2820 = vmatpush2.msra.mxu0 0.0
  %2821 = vmatprep.subr.mxu0 0.0
  %2822 = vmatpush2.msra.mxu0 0.0
  %2823 = vmatprep.subr.mxu0 0.0
  %2824 = vmatpush2.msra.mxu0 0.0
  %2825 = vmatprep.subr.mxu0 0.0
  %2826 = vmatpush2.msra.mxu0 0.0
  %2827 = vmatprep.subr.mxu0 0.0
  %2828 = vmatpush2.msra.mxu0 0.0
  %2829 = vmatprep.subr.mxu0 0.0
  %2830 = vmatpush2.msra.mxu0 0.0
  %2831 = vmatprep.subr.mxu0 0.0
  %2832 = vmatpush2.msra.mxu0 0.0
  %2833 = vmatprep.subr.mxu0 0.0
  %2834 = vmatpush2.msra.mxu0 0.0
  %2835 = vmatprep.subr.mxu0 0.0
  %2836 = vmatpush2.msra.mxu0 0.0
  %2837 = vmatprep.subr.mxu0 0.0
  %2838 = vmatpush2.msra.mxu0 0.0
  %2839 = vmatprep.subr.mxu0 0.0
  %2840 = vmatpush2.msra.mxu0 0.0
  %2841 = vmatprep.subr.mxu0 0.0
  %2842 = vmatpush2.msra.mxu0 0.0
  %2843 = vmatprep.subr.mxu0 0.0
  %2844 = vmatpush2.msra.mxu0 0.0
  %2845 = vmatprep.subr.mxu0 0.0
  %2846 = vmatpush2.msra.mxu0 0.0
  %2847 = vmatprep.subr.mxu0 0.0
  %2848 = vmatpush2.msra.mxu0 0.0
  %2849 = vmatprep.subr.mxu0 0.0
  %2850 = vmatpush2.msra.mxu0 0.0
  %2851 = vmatprep.mubr.f32.mxu0 0.0
  %2852 = vmatmul.mubr.f32.gmra.mxu0 %v2785
  %v2853 = vpop.f32.mrf.mxu0
  %v2854 = vadd.f32 %v59, %v2853
  %v2855 = vpop.f32.mrf.mxu0
  %2856 = vdwg.mxu0
  %v2857 = vmax.f32 %v2854, 0.0
  %2859 = vrot.lane.b32.xlu0 %v2776, 32
  %v2860 = vpop.permute.xlu0 %2859
  %v2862 = vsel %vm53, %v2857, %v2860
  %v2864 = vsel %vm61, %v2862, 0
  %2866 = vmatprep.subr.mxu0 0.0
  %2867 = vmatpush1.msra.mxu0 0.0
  %2868 = vmatprep.subr.mxu0 0.0
  %2869 = vmatpush1.msra.mxu0 0.0
  %2870 = vmatprep.subr.mxu0 0.0
  %2871 = vmatpush1.msra.mxu0 0.0
  %2872 = vmatprep.subr.mxu0 0.0
  %2873 = vmatpush1.msra.mxu0 0.0
  %2874 = vmatprep.subr.mxu0 0.0
  %2875 = vmatpush1.msra.mxu0 0.0
  %2876 = vmatprep.subr.mxu0 0.0
  %2877 = vmatpush1.msra.mxu0 0.0
  %2878 = vmatprep.subr.mxu0 0.0
  %2879 = vmatpush1.msra.mxu0 0.0
  %2880 = vmatprep.subr.mxu0 0.0
  %2881 = vmatpush1.msra.mxu0 0.0
  %2882 = vmatprep.subr.mxu0 0.0
  %2883 = vmatpush1.msra.mxu0 %v49
  %2884 = vmatprep.subr.mxu0 0.0
  %2885 = vmatpush1.msra.mxu0 %v48
  %2886 = vmatprep.subr.mxu0 0.0
  %2887 = vmatpush1.msra.mxu0 %v47
  %2888 = vmatprep.subr.mxu0 0.0
  %2889 = vmatpush1.msra.mxu0 %v46
  %2890 = vmatprep.subr.mxu0 0.0
  %2891 = vmatpush1.msra.mxu0 %v45
  %2892 = vmatprep.subr.mxu0 0.0
  %2893 = vmatpush1.msra.mxu0 %v44
  %2894 = vmatprep.subr.mxu0 0.0
  %2895 = vmatpush1.msra.mxu0 %v43
  %2896 = vmatprep.subr.mxu0 0.0
  %2897 = vmatpush1.msra.mxu0 %v42
  %2898 = vmatprep.subr.mxu0 0.0
  %2899 = vmatpush2.msra.mxu0 0.0
  %2900 = vmatprep.subr.mxu0 0.0
  %2901 = vmatpush2.msra.mxu0 0.0
  %2902 = vmatprep.subr.mxu0 0.0
  %2903 = vmatpush2.msra.mxu0 0.0
  %2904 = vmatprep.subr.mxu0 0.0
  %2905 = vmatpush2.msra.mxu0 0.0
  %2906 = vmatprep.subr.mxu0 0.0
  %2907 = vmatpush2.msra.mxu0 0.0
  %2908 = vmatprep.subr.mxu0 0.0
  %2909 = vmatpush2.msra.mxu0 0.0
  %2910 = vmatprep.subr.mxu0 0.0
  %2911 = vmatpush2.msra.mxu0 0.0
  %2912 = vmatprep.subr.mxu0 0.0
  %2913 = vmatpush2.msra.mxu0 0.0
  %2914 = vmatprep.subr.mxu0 0.0
  %2915 = vmatpush2.msra.mxu0 0.0
  %2916 = vmatprep.subr.mxu0 0.0
  %2917 = vmatpush2.msra.mxu0 0.0
  %2918 = vmatprep.subr.mxu0 0.0
  %2919 = vmatpush2.msra.mxu0 0.0
  %2920 = vmatprep.subr.mxu0 0.0
  %2921 = vmatpush2.msra.mxu0 0.0
  %2922 = vmatprep.subr.mxu0 0.0
  %2923 = vmatpush2.msra.mxu0 0.0
  %2924 = vmatprep.subr.mxu0 0.0
  %2925 = vmatpush2.msra.mxu0 0.0
  %2926 = vmatprep.subr.mxu0 0.0
  %2927 = vmatpush2.msra.mxu0 0.0
  %2928 = vmatprep.subr.mxu0 0.0
  %2929 = vmatpush2.msra.mxu0 0.0
  %2930 = vmatprep.mubr.f32.mxu0 0.0
  %2931 = vmatmul.mubr.f32.gmra.mxu0 %v2864
  %v2932 = vpop.f32.mrf.mxu0
  %v2933 = vadd.f32 %v141, %v2932
  %v2934 = vpop.f32.mrf.mxu0
  %2935 = vdwg.mxu0
  %v2936 = vmax.f32 %v2933, 0.0
  %s2937 = scalar_lea.vmem %s0, 144
  %v2938 = vld [vmem:[%s2937] sm:$0xff]
  %2940 = vrot.lane.b32.xlu0 %v2857, 32
  %v2941 = vpop.permute.xlu0 %2940
  %v2943 = vsel %vm53, %v2938, %v2941
  %v2945 = vsel %vm61, %v2943, 0
  %2947 = vmatprep.subr.mxu0 0.0
  %2948 = vmatpush1.msra.mxu0 0.0
  %2949 = vmatprep.subr.mxu0 0.0
  %2950 = vmatpush1.msra.mxu0 0.0
  %2951 = vmatprep.subr.mxu0 0.0
  %2952 = vmatpush1.msra.mxu0 0.0
  %2953 = vmatprep.subr.mxu0 0.0
  %2954 = vmatpush1.msra.mxu0 0.0
  %2955 = vmatprep.subr.mxu0 0.0
  %2956 = vmatpush1.msra.mxu0 0.0
  %2957 = vmatprep.subr.mxu0 0.0
  %2958 = vmatpush1.msra.mxu0 0.0
  %2959 = vmatprep.subr.mxu0 0.0
  %2960 = vmatpush1.msra.mxu0 0.0
  %2961 = vmatprep.subr.mxu0 0.0
  %2962 = vmatpush1.msra.mxu0 0.0
  %2963 = vmatprep.subr.mxu0 0.0
  %2964 = vmatpush1.msra.mxu0 %v41
  %2965 = vmatprep.subr.mxu0 0.0
  %2966 = vmatpush1.msra.mxu0 %v40
  %2967 = vmatprep.subr.mxu0 0.0
  %2968 = vmatpush1.msra.mxu0 %v39
  %2969 = vmatprep.subr.mxu0 0.0
  %2970 = vmatpush1.msra.mxu0 %v38
  %2971 = vmatprep.subr.mxu0 0.0
  %2972 = vmatpush1.msra.mxu0 %v37
  %2973 = vmatprep.subr.mxu0 0.0
  %2974 = vmatpush1.msra.mxu0 %v36
  %2975 = vmatprep.subr.mxu0 0.0
  %2976 = vmatpush1.msra.mxu0 %v35
  %2977 = vmatprep.subr.mxu0 0.0
  %2978 = vmatpush1.msra.mxu0 %v34
  %2979 = vmatprep.subr.mxu0 0.0
  %2980 = vmatpush2.msra.mxu0 0.0
  %2981 = vmatprep.subr.mxu0 0.0
  %2982 = vmatpush2.msra.mxu0 0.0
  %2983 = vmatprep.subr.mxu0 0.0
  %2984 = vmatpush2.msra.mxu0 0.0
  %2985 = vmatprep.subr.mxu0 0.0
  %2986 = vmatpush2.msra.mxu0 0.0
  %2987 = vmatprep.subr.mxu0 0.0
  %2988 = vmatpush2.msra.mxu0 0.0
  %2989 = vmatprep.subr.mxu0 0.0
  %2990 = vmatpush2.msra.mxu0 0.0
  %2991 = vmatprep.subr.mxu0 0.0
  %2992 = vmatpush2.msra.mxu0 0.0
  %2993 = vmatprep.subr.mxu0 0.0
  %2994 = vmatpush2.msra.mxu0 0.0
  %2995 = vmatprep.subr.mxu0 0.0
  %2996 = vmatpush2.msra.mxu0 0.0
  %2997 = vmatprep.subr.mxu0 0.0
  %2998 = vmatpush2.msra.mxu0 0.0
  %2999 = vmatprep.subr.mxu0 0.0
  %3000 = vmatpush2.msra.mxu0 0.0
  %3001 = vmatprep.subr.mxu0 0.0
  %3002 = vmatpush2.msra.mxu0 0.0
  %3003 = vmatprep.subr.mxu0 0.0
  %3004 = vmatpush2.msra.mxu0 0.0
  %3005 = vmatprep.subr.mxu0 0.0
  %3006 = vmatpush2.msra.mxu0 0.0
  %3007 = vmatprep.subr.mxu0 0.0
  %3008 = vmatpush2.msra.mxu0 0.0
  %3009 = vmatprep.subr.mxu0 0.0
  %3010 = vmatpush2.msra.mxu0 0.0
  %3011 = vmatprep.mubr.f32.mxu0 0.0
  %3012 = vmatmul.mubr.f32.gmra.mxu0 %v2945
  %v3013 = vpop.f32.mrf.mxu0
  %v3014 = vadd.f32 %v59, %v3013
  %v3015 = vpop.f32.mrf.mxu0
  %3016 = vdwg.mxu0
  %v3017 = vmax.f32 %v3014, 0.0
  %3019 = vrot.lane.b32.xlu0 %v2936, 32
  %v3020 = vpop.permute.xlu0 %3019
  %v3022 = vsel %vm53, %v3017, %v3020
  %v3024 = vsel %vm61, %v3022, 0
  %3026 = vmatprep.subr.mxu0 0.0
  %3027 = vmatpush1.msra.mxu0 0.0
  %3028 = vmatprep.subr.mxu0 0.0
  %3029 = vmatpush1.msra.mxu0 0.0
  %3030 = vmatprep.subr.mxu0 0.0
  %3031 = vmatpush1.msra.mxu0 0.0
  %3032 = vmatprep.subr.mxu0 0.0
  %3033 = vmatpush1.msra.mxu0 0.0
  %3034 = vmatprep.subr.mxu0 0.0
  %3035 = vmatpush1.msra.mxu0 0.0
  %3036 = vmatprep.subr.mxu0 0.0
  %3037 = vmatpush1.msra.mxu0 0.0
  %3038 = vmatprep.subr.mxu0 0.0
  %3039 = vmatpush1.msra.mxu0 0.0
  %3040 = vmatprep.subr.mxu0 0.0
  %3041 = vmatpush1.msra.mxu0 0.0
  %3042 = vmatprep.subr.mxu0 0.0
  %3043 = vmatpush1.msra.mxu0 %v49
  %3044 = vmatprep.subr.mxu0 0.0
  %3045 = vmatpush1.msra.mxu0 %v48
  %3046 = vmatprep.subr.mxu0 0.0
  %3047 = vmatpush1.msra.mxu0 %v47
  %3048 = vmatprep.subr.mxu0 0.0
  %3049 = vmatpush1.msra.mxu0 %v46
  %3050 = vmatprep.subr.mxu0 0.0
  %3051 = vmatpush1.msra.mxu0 %v45
  %3052 = vmatprep.subr.mxu0 0.0
  %3053 = vmatpush1.msra.mxu0 %v44
  %3054 = vmatprep.subr.mxu0 0.0
  %3055 = vmatpush1.msra.mxu0 %v43
  %3056 = vmatprep.subr.mxu0 0.0
  %3057 = vmatpush1.msra.mxu0 %v42
  %3058 = vmatprep.subr.mxu0 0.0
  %3059 = vmatpush2.msra.mxu0 0.0
  %3060 = vmatprep.subr.mxu0 0.0
  %3061 = vmatpush2.msra.mxu0 0.0
  %3062 = vmatprep.subr.mxu0 0.0
  %3063 = vmatpush2.msra.mxu0 0.0
  %3064 = vmatprep.subr.mxu0 0.0
  %3065 = vmatpush2.msra.mxu0 0.0
  %3066 = vmatprep.subr.mxu0 0.0
  %3067 = vmatpush2.msra.mxu0 0.0
  %3068 = vmatprep.subr.mxu0 0.0
  %3069 = vmatpush2.msra.mxu0 0.0
  %3070 = vmatprep.subr.mxu0 0.0
  %3071 = vmatpush2.msra.mxu0 0.0
  %3072 = vmatprep.subr.mxu0 0.0
  %3073 = vmatpush2.msra.mxu0 0.0
  %3074 = vmatprep.subr.mxu0 0.0
  %3075 = vmatpush2.msra.mxu0 0.0
  %3076 = vmatprep.subr.mxu0 0.0
  %3077 = vmatpush2.msra.mxu0 0.0
  %3078 = vmatprep.subr.mxu0 0.0
  %3079 = vmatpush2.msra.mxu0 0.0
  %3080 = vmatprep.subr.mxu0 0.0
  %3081 = vmatpush2.msra.mxu0 0.0
  %3082 = vmatprep.subr.mxu0 0.0
  %3083 = vmatpush2.msra.mxu0 0.0
  %3084 = vmatprep.subr.mxu0 0.0
  %3085 = vmatpush2.msra.mxu0 0.0
  %3086 = vmatprep.subr.mxu0 0.0
  %3087 = vmatpush2.msra.mxu0 0.0
  %3088 = vmatprep.subr.mxu0 0.0
  %3089 = vmatpush2.msra.mxu0 0.0
  %3090 = vmatprep.mubr.f32.mxu0 0.0
  %3091 = vmatmul.mubr.f32.gmra.mxu0 %v3024
  %v3092 = vpop.f32.mrf.mxu0
  %v3093 = vadd.f32 %v141, %v3092
  %v3094 = vpop.f32.mrf.mxu0
  %3095 = vdwg.mxu0
  %v3096 = vmax.f32 %v3093, 0.0
  %s3097 = scalar_lea.vmem %s0, 152
  %v3098 = vld [vmem:[%s3097] sm:$0xff]
  %3100 = vrot.lane.b32.xlu0 %v3017, 32
  %v3101 = vpop.permute.xlu0 %3100
  %v3103 = vsel %vm53, %v3098, %v3101
  %v3105 = vsel %vm61, %v3103, 0
  %3107 = vmatprep.subr.mxu0 0.0
  %3108 = vmatpush1.msra.mxu0 0.0
  %3109 = vmatprep.subr.mxu0 0.0
  %3110 = vmatpush1.msra.mxu0 0.0
  %3111 = vmatprep.subr.mxu0 0.0
  %3112 = vmatpush1.msra.mxu0 0.0
  %3113 = vmatprep.subr.mxu0 0.0
  %3114 = vmatpush1.msra.mxu0 0.0
  %3115 = vmatprep.subr.mxu0 0.0
  %3116 = vmatpush1.msra.mxu0 0.0
  %3117 = vmatprep.subr.mxu0 0.0
  %3118 = vmatpush1.msra.mxu0 0.0
  %3119 = vmatprep.subr.mxu0 0.0
  %3120 = vmatpush1.msra.mxu0 0.0
  %3121 = vmatprep.subr.mxu0 0.0
  %3122 = vmatpush1.msra.mxu0 0.0
  %3123 = vmatprep.subr.mxu0 0.0
  %3124 = vmatpush1.msra.mxu0 %v41
  %3125 = vmatprep.subr.mxu0 0.0
  %3126 = vmatpush1.msra.mxu0 %v40
  %3127 = vmatprep.subr.mxu0 0.0
  %3128 = vmatpush1.msra.mxu0 %v39
  %3129 = vmatprep.subr.mxu0 0.0
  %3130 = vmatpush1.msra.mxu0 %v38
  %3131 = vmatprep.subr.mxu0 0.0
  %3132 = vmatpush1.msra.mxu0 %v37
  %3133 = vmatprep.subr.mxu0 0.0
  %3134 = vmatpush1.msra.mxu0 %v36
  %3135 = vmatprep.subr.mxu0 0.0
  %3136 = vmatpush1.msra.mxu0 %v35
  %3137 = vmatprep.subr.mxu0 0.0
  %3138 = vmatpush1.msra.mxu0 %v34
  %3139 = vmatprep.subr.mxu0 0.0
  %3140 = vmatpush2.msra.mxu0 0.0
  %3141 = vmatprep.subr.mxu0 0.0
  %3142 = vmatpush2.msra.mxu0 0.0
  %3143 = vmatprep.subr.mxu0 0.0
  %3144 = vmatpush2.msra.mxu0 0.0
  %3145 = vmatprep.subr.mxu0 0.0
  %3146 = vmatpush2.msra.mxu0 0.0
  %3147 = vmatprep.subr.mxu0 0.0
  %3148 = vmatpush2.msra.mxu0 0.0
  %3149 = vmatprep.subr.mxu0 0.0
  %3150 = vmatpush2.msra.mxu0 0.0
  %3151 = vmatprep.subr.mxu0 0.0
  %3152 = vmatpush2.msra.mxu0 0.0
  %3153 = vmatprep.subr.mxu0 0.0
  %3154 = vmatpush2.msra.mxu0 0.0
  %3155 = vmatprep.subr.mxu0 0.0
  %3156 = vmatpush2.msra.mxu0 0.0
  %3157 = vmatprep.subr.mxu0 0.0
  %3158 = vmatpush2.msra.mxu0 0.0
  %3159 = vmatprep.subr.mxu0 0.0
  %3160 = vmatpush2.msra.mxu0 0.0
  %3161 = vmatprep.subr.mxu0 0.0
  %3162 = vmatpush2.msra.mxu0 0.0
  %3163 = vmatprep.subr.mxu0 0.0
  %3164 = vmatpush2.msra.mxu0 0.0
  %3165 = vmatprep.subr.mxu0 0.0
  %3166 = vmatpush2.msra.mxu0 0.0
  %3167 = vmatprep.subr.mxu0 0.0
  %3168 = vmatpush2.msra.mxu0 0.0
  %3169 = vmatprep.subr.mxu0 0.0
  %3170 = vmatpush2.msra.mxu0 0.0
  %3171 = vmatprep.mubr.f32.mxu0 0.0
  %3172 = vmatmul.mubr.f32.gmra.mxu0 %v3105
  %v3173 = vpop.f32.mrf.mxu0
  %v3174 = vadd.f32 %v59, %v3173
  %v3175 = vpop.f32.mrf.mxu0
  %3176 = vdwg.mxu0
  %v3177 = vmax.f32 %v3174, 0.0
  %3179 = vrot.lane.b32.xlu0 %v3096, 32
  %v3180 = vpop.permute.xlu0 %3179
  %v3182 = vsel %vm53, %v3177, %v3180
  %v3184 = vsel %vm61, %v3182, 0
  %3186 = vmatprep.subr.mxu0 0.0
  %3187 = vmatpush1.msra.mxu0 0.0
  %3188 = vmatprep.subr.mxu0 0.0
  %3189 = vmatpush1.msra.mxu0 0.0
  %3190 = vmatprep.subr.mxu0 0.0
  %3191 = vmatpush1.msra.mxu0 0.0
  %3192 = vmatprep.subr.mxu0 0.0
  %3193 = vmatpush1.msra.mxu0 0.0
  %3194 = vmatprep.subr.mxu0 0.0
  %3195 = vmatpush1.msra.mxu0 0.0
  %3196 = vmatprep.subr.mxu0 0.0
  %3197 = vmatpush1.msra.mxu0 0.0
  %3198 = vmatprep.subr.mxu0 0.0
  %3199 = vmatpush1.msra.mxu0 0.0
  %3200 = vmatprep.subr.mxu0 0.0
  %3201 = vmatpush1.msra.mxu0 0.0
  %3202 = vmatprep.subr.mxu0 0.0
  %3203 = vmatpush1.msra.mxu0 %v49
  %3204 = vmatprep.subr.mxu0 0.0
  %3205 = vmatpush1.msra.mxu0 %v48
  %3206 = vmatprep.subr.mxu0 0.0
  %3207 = vmatpush1.msra.mxu0 %v47
  %3208 = vmatprep.subr.mxu0 0.0
  %3209 = vmatpush1.msra.mxu0 %v46
  %3210 = vmatprep.subr.mxu0 0.0
  %3211 = vmatpush1.msra.mxu0 %v45
  %3212 = vmatprep.subr.mxu0 0.0
  %3213 = vmatpush1.msra.mxu0 %v44
  %3214 = vmatprep.subr.mxu0 0.0
  %3215 = vmatpush1.msra.mxu0 %v43
  %3216 = vmatprep.subr.mxu0 0.0
  %3217 = vmatpush1.msra.mxu0 %v42
  %3218 = vmatprep.subr.mxu0 0.0
  %3219 = vmatpush2.msra.mxu0 0.0
  %3220 = vmatprep.subr.mxu0 0.0
  %3221 = vmatpush2.msra.mxu0 0.0
  %3222 = vmatprep.subr.mxu0 0.0
  %3223 = vmatpush2.msra.mxu0 0.0
  %3224 = vmatprep.subr.mxu0 0.0
  %3225 = vmatpush2.msra.mxu0 0.0
  %3226 = vmatprep.subr.mxu0 0.0
  %3227 = vmatpush2.msra.mxu0 0.0
  %3228 = vmatprep.subr.mxu0 0.0
  %3229 = vmatpush2.msra.mxu0 0.0
  %3230 = vmatprep.subr.mxu0 0.0
  %3231 = vmatpush2.msra.mxu0 0.0
  %3232 = vmatprep.subr.mxu0 0.0
  %3233 = vmatpush2.msra.mxu0 0.0
  %3234 = vmatprep.subr.mxu0 0.0
  %3235 = vmatpush2.msra.mxu0 0.0
  %3236 = vmatprep.subr.mxu0 0.0
  %3237 = vmatpush2.msra.mxu0 0.0
  %3238 = vmatprep.subr.mxu0 0.0
  %3239 = vmatpush2.msra.mxu0 0.0
  %3240 = vmatprep.subr.mxu0 0.0
  %3241 = vmatpush2.msra.mxu0 0.0
  %3242 = vmatprep.subr.mxu0 0.0
  %3243 = vmatpush2.msra.mxu0 0.0
  %3244 = vmatprep.subr.mxu0 0.0
  %3245 = vmatpush2.msra.mxu0 0.0
  %3246 = vmatprep.subr.mxu0 0.0
  %3247 = vmatpush2.msra.mxu0 0.0
  %3248 = vmatprep.subr.mxu0 0.0
  %3249 = vmatpush2.msra.mxu0 0.0
  %3250 = vmatprep.mubr.f32.mxu0 0.0
  %3251 = vmatmul.mubr.f32.gmra.mxu0 %v3184
  %v3252 = vpop.f32.mrf.mxu0
  %v3253 = vadd.f32 %v141, %v3252
  %v3254 = vpop.f32.mrf.mxu0
  %3255 = vdwg.mxu0
  %v3256 = vmax.f32 %v3253, 0.0
  %s3257 = scalar_lea.vmem %s0, 160
  %v3258 = vld [vmem:[%s3257] sm:$0xff]
  %3260 = vrot.lane.b32.xlu0 %v3177, 32
  %v3261 = vpop.permute.xlu0 %3260
  %v3263 = vsel %vm53, %v3258, %v3261
  %v3265 = vsel %vm61, %v3263, 0
  %3267 = vmatprep.subr.mxu0 0.0
  %3268 = vmatpush1.msra.mxu0 0.0
  %3269 = vmatprep.subr.mxu0 0.0
  %3270 = vmatpush1.msra.mxu0 0.0
  %3271 = vmatprep.subr.mxu0 0.0
  %3272 = vmatpush1.msra.mxu0 0.0
  %3273 = vmatprep.subr.mxu0 0.0
  %3274 = vmatpush1.msra.mxu0 0.0
  %3275 = vmatprep.subr.mxu0 0.0
  %3276 = vmatpush1.msra.mxu0 0.0
  %3277 = vmatprep.subr.mxu0 0.0
  %3278 = vmatpush1.msra.mxu0 0.0
  %3279 = vmatprep.subr.mxu0 0.0
  %3280 = vmatpush1.msra.mxu0 0.0
  %3281 = vmatprep.subr.mxu0 0.0
  %3282 = vmatpush1.msra.mxu0 0.0
  %3283 = vmatprep.subr.mxu0 0.0
  %3284 = vmatpush1.msra.mxu0 %v41
  %3285 = vmatprep.subr.mxu0 0.0
  %3286 = vmatpush1.msra.mxu0 %v40
  %3287 = vmatprep.subr.mxu0 0.0
  %3288 = vmatpush1.msra.mxu0 %v39
  %3289 = vmatprep.subr.mxu0 0.0
  %3290 = vmatpush1.msra.mxu0 %v38
  %3291 = vmatprep.subr.mxu0 0.0
  %3292 = vmatpush1.msra.mxu0 %v37
  %3293 = vmatprep.subr.mxu0 0.0
  %3294 = vmatpush1.msra.mxu0 %v36
  %3295 = vmatprep.subr.mxu0 0.0
  %3296 = vmatpush1.msra.mxu0 %v35
  %3297 = vmatprep.subr.mxu0 0.0
  %3298 = vmatpush1.msra.mxu0 %v34
  %3299 = vmatprep.subr.mxu0 0.0
  %3300 = vmatpush2.msra.mxu0 0.0
  %3301 = vmatprep.subr.mxu0 0.0
  %3302 = vmatpush2.msra.mxu0 0.0
  %3303 = vmatprep.subr.mxu0 0.0
  %3304 = vmatpush2.msra.mxu0 0.0
  %3305 = vmatprep.subr.mxu0 0.0
  %3306 = vmatpush2.msra.mxu0 0.0
  %3307 = vmatprep.subr.mxu0 0.0
  %3308 = vmatpush2.msra.mxu0 0.0
  %3309 = vmatprep.subr.mxu0 0.0
  %3310 = vmatpush2.msra.mxu0 0.0
  %3311 = vmatprep.subr.mxu0 0.0
  %3312 = vmatpush2.msra.mxu0 0.0
  %3313 = vmatprep.subr.mxu0 0.0
  %3314 = vmatpush2.msra.mxu0 0.0
  %3315 = vmatprep.subr.mxu0 0.0
  %3316 = vmatpush2.msra.mxu0 0.0
  %3317 = vmatprep.subr.mxu0 0.0
  %3318 = vmatpush2.msra.mxu0 0.0
  %3319 = vmatprep.subr.mxu0 0.0
  %3320 = vmatpush2.msra.mxu0 0.0
  %3321 = vmatprep.subr.mxu0 0.0
  %3322 = vmatpush2.msra.mxu0 0.0
  %3323 = vmatprep.subr.mxu0 0.0
  %3324 = vmatpush2.msra.mxu0 0.0
  %3325 = vmatprep.subr.mxu0 0.0
  %3326 = vmatpush2.msra.mxu0 0.0
  %3327 = vmatprep.subr.mxu0 0.0
  %3328 = vmatpush2.msra.mxu0 0.0
  %3329 = vmatprep.subr.mxu0 0.0
  %3330 = vmatpush2.msra.mxu0 0.0
  %3331 = vmatprep.mubr.f32.mxu0 0.0
  %3332 = vmatmul.mubr.f32.gmra.mxu0 %v3265
  %v3333 = vpop.f32.mrf.mxu0
  %v3334 = vadd.f32 %v59, %v3333
  %v3335 = vpop.f32.mrf.mxu0
  %3336 = vdwg.mxu0
  %v3337 = vmax.f32 %v3334, 0.0
  %3339 = vrot.lane.b32.xlu0 %v3256, 32
  %v3340 = vpop.permute.xlu0 %3339
  %v3342 = vsel %vm53, %v3337, %v3340
  %v3344 = vsel %vm61, %v3342, 0
  %3346 = vmatprep.subr.mxu0 0.0
  %3347 = vmatpush1.msra.mxu0 0.0
  %3348 = vmatprep.subr.mxu0 0.0
  %3349 = vmatpush1.msra.mxu0 0.0
  %3350 = vmatprep.subr.mxu0 0.0
  %3351 = vmatpush1.msra.mxu0 0.0
  %3352 = vmatprep.subr.mxu0 0.0
  %3353 = vmatpush1.msra.mxu0 0.0
  %3354 = vmatprep.subr.mxu0 0.0
  %3355 = vmatpush1.msra.mxu0 0.0
  %3356 = vmatprep.subr.mxu0 0.0
  %3357 = vmatpush1.msra.mxu0 0.0
  %3358 = vmatprep.subr.mxu0 0.0
  %3359 = vmatpush1.msra.mxu0 0.0
  %3360 = vmatprep.subr.mxu0 0.0
  %3361 = vmatpush1.msra.mxu0 0.0
  %3362 = vmatprep.subr.mxu0 0.0
  %3363 = vmatpush1.msra.mxu0 %v49
  %3364 = vmatprep.subr.mxu0 0.0
  %3365 = vmatpush1.msra.mxu0 %v48
  %3366 = vmatprep.subr.mxu0 0.0
  %3367 = vmatpush1.msra.mxu0 %v47
  %3368 = vmatprep.subr.mxu0 0.0
  %3369 = vmatpush1.msra.mxu0 %v46
  %3370 = vmatprep.subr.mxu0 0.0
  %3371 = vmatpush1.msra.mxu0 %v45
  %3372 = vmatprep.subr.mxu0 0.0
  %3373 = vmatpush1.msra.mxu0 %v44
  %3374 = vmatprep.subr.mxu0 0.0
  %3375 = vmatpush1.msra.mxu0 %v43
  %3376 = vmatprep.subr.mxu0 0.0
  %3377 = vmatpush1.msra.mxu0 %v42
  %3378 = vmatprep.subr.mxu0 0.0
  %3379 = vmatpush2.msra.mxu0 0.0
  %3380 = vmatprep.subr.mxu0 0.0
  %3381 = vmatpush2.msra.mxu0 0.0
  %3382 = vmatprep.subr.mxu0 0.0
  %3383 = vmatpush2.msra.mxu0 0.0
  %3384 = vmatprep.subr.mxu0 0.0
  %3385 = vmatpush2.msra.mxu0 0.0
  %3386 = vmatprep.subr.mxu0 0.0
  %3387 = vmatpush2.msra.mxu0 0.0
  %3388 = vmatprep.subr.mxu0 0.0
  %3389 = vmatpush2.msra.mxu0 0.0
  %3390 = vmatprep.subr.mxu0 0.0
  %3391 = vmatpush2.msra.mxu0 0.0
  %3392 = vmatprep.subr.mxu0 0.0
  %3393 = vmatpush2.msra.mxu0 0.0
  %3394 = vmatprep.subr.mxu0 0.0
  %3395 = vmatpush2.msra.mxu0 0.0
  %3396 = vmatprep.subr.mxu0 0.0
  %3397 = vmatpush2.msra.mxu0 0.0
  %3398 = vmatprep.subr.mxu0 0.0
  %3399 = vmatpush2.msra.mxu0 0.0
  %3400 = vmatprep.subr.mxu0 0.0
  %3401 = vmatpush2.msra.mxu0 0.0
  %3402 = vmatprep.subr.mxu0 0.0
  %3403 = vmatpush2.msra.mxu0 0.0
  %3404 = vmatprep.subr.mxu0 0.0
  %3405 = vmatpush2.msra.mxu0 0.0
  %3406 = vmatprep.subr.mxu0 0.0
  %3407 = vmatpush2.msra.mxu0 0.0
  %3408 = vmatprep.subr.mxu0 0.0
  %3409 = vmatpush2.msra.mxu0 0.0
  %3410 = vmatprep.mubr.f32.mxu0 0.0
  %3411 = vmatmul.mubr.f32.gmra.mxu0 %v3344
  %v3412 = vpop.f32.mrf.mxu0
  %v3413 = vadd.f32 %v141, %v3412
  %v3414 = vpop.f32.mrf.mxu0
  %3415 = vdwg.mxu0
  %v3416 = vmax.f32 %v3413, 0.0
  %s3417 = scalar_lea.vmem %s0, 168
  %v3418 = vld [vmem:[%s3417] sm:$0xff]
  %3420 = vrot.lane.b32.xlu0 %v3337, 32
  %v3421 = vpop.permute.xlu0 %3420
  %v3423 = vsel %vm53, %v3418, %v3421
  %v3425 = vsel %vm61, %v3423, 0
  %3427 = vmatprep.subr.mxu0 0.0
  %3428 = vmatpush1.msra.mxu0 0.0
  %3429 = vmatprep.subr.mxu0 0.0
  %3430 = vmatpush1.msra.mxu0 0.0
  %3431 = vmatprep.subr.mxu0 0.0
  %3432 = vmatpush1.msra.mxu0 0.0
  %3433 = vmatprep.subr.mxu0 0.0
  %3434 = vmatpush1.msra.mxu0 0.0
  %3435 = vmatprep.subr.mxu0 0.0
  %3436 = vmatpush1.msra.mxu0 0.0
  %3437 = vmatprep.subr.mxu0 0.0
  %3438 = vmatpush1.msra.mxu0 0.0
  %3439 = vmatprep.subr.mxu0 0.0
  %3440 = vmatpush1.msra.mxu0 0.0
  %3441 = vmatprep.subr.mxu0 0.0
  %3442 = vmatpush1.msra.mxu0 0.0
  %3443 = vmatprep.subr.mxu0 0.0
  %3444 = vmatpush1.msra.mxu0 %v41
  %3445 = vmatprep.subr.mxu0 0.0
  %3446 = vmatpush1.msra.mxu0 %v40
  %3447 = vmatprep.subr.mxu0 0.0
  %3448 = vmatpush1.msra.mxu0 %v39
  %3449 = vmatprep.subr.mxu0 0.0
  %3450 = vmatpush1.msra.mxu0 %v38
  %3451 = vmatprep.subr.mxu0 0.0
  %3452 = vmatpush1.msra.mxu0 %v37
  %3453 = vmatprep.subr.mxu0 0.0
  %3454 = vmatpush1.msra.mxu0 %v36
  %3455 = vmatprep.subr.mxu0 0.0
  %3456 = vmatpush1.msra.mxu0 %v35
  %3457 = vmatprep.subr.mxu0 0.0
  %3458 = vmatpush1.msra.mxu0 %v34
  %3459 = vmatprep.subr.mxu0 0.0
  %3460 = vmatpush2.msra.mxu0 0.0
  %3461 = vmatprep.subr.mxu0 0.0
  %3462 = vmatpush2.msra.mxu0 0.0
  %3463 = vmatprep.subr.mxu0 0.0
  %3464 = vmatpush2.msra.mxu0 0.0
  %3465 = vmatprep.subr.mxu0 0.0
  %3466 = vmatpush2.msra.mxu0 0.0
  %3467 = vmatprep.subr.mxu0 0.0
  %3468 = vmatpush2.msra.mxu0 0.0
  %3469 = vmatprep.subr.mxu0 0.0
  %3470 = vmatpush2.msra.mxu0 0.0
  %3471 = vmatprep.subr.mxu0 0.0
  %3472 = vmatpush2.msra.mxu0 0.0
  %3473 = vmatprep.subr.mxu0 0.0
  %3474 = vmatpush2.msra.mxu0 0.0
  %3475 = vmatprep.subr.mxu0 0.0
  %3476 = vmatpush2.msra.mxu0 0.0
  %3477 = vmatprep.subr.mxu0 0.0
  %3478 = vmatpush2.msra.mxu0 0.0
  %3479 = vmatprep.subr.mxu0 0.0
  %3480 = vmatpush2.msra.mxu0 0.0
  %3481 = vmatprep.subr.mxu0 0.0
  %3482 = vmatpush2.msra.mxu0 0.0
  %3483 = vmatprep.subr.mxu0 0.0
  %3484 = vmatpush2.msra.mxu0 0.0
  %3485 = vmatprep.subr.mxu0 0.0
  %3486 = vmatpush2.msra.mxu0 0.0
  %3487 = vmatprep.subr.mxu0 0.0
  %3488 = vmatpush2.msra.mxu0 0.0
  %3489 = vmatprep.subr.mxu0 0.0
  %3490 = vmatpush2.msra.mxu0 0.0
  %3491 = vmatprep.mubr.f32.mxu0 0.0
  %3492 = vmatmul.mubr.f32.gmra.mxu0 %v3425
  %v3493 = vpop.f32.mrf.mxu0
  %v3494 = vadd.f32 %v59, %v3493
  %v3495 = vpop.f32.mrf.mxu0
  %3496 = vdwg.mxu0
  %v3497 = vmax.f32 %v3494, 0.0
  %3499 = vrot.lane.b32.xlu0 %v3416, 32
  %v3500 = vpop.permute.xlu0 %3499
  %v3502 = vsel %vm53, %v3497, %v3500
  %v3504 = vsel %vm61, %v3502, 0
  %3506 = vmatprep.subr.mxu0 0.0
  %3507 = vmatpush1.msra.mxu0 0.0
  %3508 = vmatprep.subr.mxu0 0.0
  %3509 = vmatpush1.msra.mxu0 0.0
  %3510 = vmatprep.subr.mxu0 0.0
  %3511 = vmatpush1.msra.mxu0 0.0
  %3512 = vmatprep.subr.mxu0 0.0
  %3513 = vmatpush1.msra.mxu0 0.0
  %3514 = vmatprep.subr.mxu0 0.0
  %3515 = vmatpush1.msra.mxu0 0.0
  %3516 = vmatprep.subr.mxu0 0.0
  %3517 = vmatpush1.msra.mxu0 0.0
  %3518 = vmatprep.subr.mxu0 0.0
  %3519 = vmatpush1.msra.mxu0 0.0
  %3520 = vmatprep.subr.mxu0 0.0
  %3521 = vmatpush1.msra.mxu0 0.0
  %3522 = vmatprep.subr.mxu0 0.0
  %3523 = vmatpush1.msra.mxu0 %v49
  %3524 = vmatprep.subr.mxu0 0.0
  %3525 = vmatpush1.msra.mxu0 %v48
  %3526 = vmatprep.subr.mxu0 0.0
  %3527 = vmatpush1.msra.mxu0 %v47
  %3528 = vmatprep.subr.mxu0 0.0
  %3529 = vmatpush1.msra.mxu0 %v46
  %3530 = vmatprep.subr.mxu0 0.0
  %3531 = vmatpush1.msra.mxu0 %v45
  %3532 = vmatprep.subr.mxu0 0.0
  %3533 = vmatpush1.msra.mxu0 %v44
  %3534 = vmatprep.subr.mxu0 0.0
  %3535 = vmatpush1.msra.mxu0 %v43
  %3536 = vmatprep.subr.mxu0 0.0
  %3537 = vmatpush1.msra.mxu0 %v42
  %3538 = vmatprep.subr.mxu0 0.0
  %3539 = vmatpush2.msra.mxu0 0.0
  %3540 = vmatprep.subr.mxu0 0.0
  %3541 = vmatpush2.msra.mxu0 0.0
  %3542 = vmatprep.subr.mxu0 0.0
  %3543 = vmatpush2.msra.mxu0 0.0
  %3544 = vmatprep.subr.mxu0 0.0
  %3545 = vmatpush2.msra.mxu0 0.0
  %3546 = vmatprep.subr.mxu0 0.0
  %3547 = vmatpush2.msra.mxu0 0.0
  %3548 = vmatprep.subr.mxu0 0.0
  %3549 = vmatpush2.msra.mxu0 0.0
  %3550 = vmatprep.subr.mxu0 0.0
  %3551 = vmatpush2.msra.mxu0 0.0
  %3552 = vmatprep.subr.mxu0 0.0
  %3553 = vmatpush2.msra.mxu0 0.0
  %3554 = vmatprep.subr.mxu0 0.0
  %3555 = vmatpush2.msra.mxu0 0.0
  %3556 = vmatprep.subr.mxu0 0.0
  %3557 = vmatpush2.msra.mxu0 0.0
  %3558 = vmatprep.subr.mxu0 0.0
  %3559 = vmatpush2.msra.mxu0 0.0
  %3560 = vmatprep.subr.mxu0 0.0
  %3561 = vmatpush2.msra.mxu0 0.0
  %3562 = vmatprep.subr.mxu0 0.0
  %3563 = vmatpush2.msra.mxu0 0.0
  %3564 = vmatprep.subr.mxu0 0.0
  %3565 = vmatpush2.msra.mxu0 0.0
  %3566 = vmatprep.subr.mxu0 0.0
  %3567 = vmatpush2.msra.mxu0 0.0
  %3568 = vmatprep.subr.mxu0 0.0
  %3569 = vmatpush2.msra.mxu0 0.0
  %3570 = vmatprep.mubr.f32.mxu0 0.0
  %3571 = vmatmul.mubr.f32.gmra.mxu0 %v3504
  %v3572 = vpop.f32.mrf.mxu0
  %v3573 = vadd.f32 %v141, %v3572
  %v3574 = vpop.f32.mrf.mxu0
  %3575 = vdwg.mxu0
  %v3576 = vmax.f32 %v3573, 0.0
  %s3577 = scalar_lea.vmem %s0, 176
  %v3578 = vld [vmem:[%s3577] sm:$0xff]
  %3580 = vrot.lane.b32.xlu0 %v3497, 32
  %v3581 = vpop.permute.xlu0 %3580
  %v3583 = vsel %vm53, %v3578, %v3581
  %v3585 = vsel %vm61, %v3583, 0
  %3587 = vmatprep.subr.mxu0 0.0
  %3588 = vmatpush1.msra.mxu0 0.0
  %3589 = vmatprep.subr.mxu0 0.0
  %3590 = vmatpush1.msra.mxu0 0.0
  %3591 = vmatprep.subr.mxu0 0.0
  %3592 = vmatpush1.msra.mxu0 0.0
  %3593 = vmatprep.subr.mxu0 0.0
  %3594 = vmatpush1.msra.mxu0 0.0
  %3595 = vmatprep.subr.mxu0 0.0
  %3596 = vmatpush1.msra.mxu0 0.0
  %3597 = vmatprep.subr.mxu0 0.0
  %3598 = vmatpush1.msra.mxu0 0.0
  %3599 = vmatprep.subr.mxu0 0.0
  %3600 = vmatpush1.msra.mxu0 0.0
  %3601 = vmatprep.subr.mxu0 0.0
  %3602 = vmatpush1.msra.mxu0 0.0
  %3603 = vmatprep.subr.mxu0 0.0
  %3604 = vmatpush1.msra.mxu0 %v41
  %3605 = vmatprep.subr.mxu0 0.0
  %3606 = vmatpush1.msra.mxu0 %v40
  %3607 = vmatprep.subr.mxu0 0.0
  %3608 = vmatpush1.msra.mxu0 %v39
  %3609 = vmatprep.subr.mxu0 0.0
  %3610 = vmatpush1.msra.mxu0 %v38
  %3611 = vmatprep.subr.mxu0 0.0
  %3612 = vmatpush1.msra.mxu0 %v37
  %3613 = vmatprep.subr.mxu0 0.0
  %3614 = vmatpush1.msra.mxu0 %v36
  %3615 = vmatprep.subr.mxu0 0.0
  %3616 = vmatpush1.msra.mxu0 %v35
  %3617 = vmatprep.subr.mxu0 0.0
  %3618 = vmatpush1.msra.mxu0 %v34
  %3619 = vmatprep.subr.mxu0 0.0
  %3620 = vmatpush2.msra.mxu0 0.0
  %3621 = vmatprep.subr.mxu0 0.0
  %3622 = vmatpush2.msra.mxu0 0.0
  %3623 = vmatprep.subr.mxu0 0.0
  %3624 = vmatpush2.msra.mxu0 0.0
  %3625 = vmatprep.subr.mxu0 0.0
  %3626 = vmatpush2.msra.mxu0 0.0
  %3627 = vmatprep.subr.mxu0 0.0
  %3628 = vmatpush2.msra.mxu0 0.0
  %3629 = vmatprep.subr.mxu0 0.0
  %3630 = vmatpush2.msra.mxu0 0.0
  %3631 = vmatprep.subr.mxu0 0.0
  %3632 = vmatpush2.msra.mxu0 0.0
  %3633 = vmatprep.subr.mxu0 0.0
  %3634 = vmatpush2.msra.mxu0 0.0
  %3635 = vmatprep.subr.mxu0 0.0
  %3636 = vmatpush2.msra.mxu0 0.0
  %3637 = vmatprep.subr.mxu0 0.0
  %3638 = vmatpush2.msra.mxu0 0.0
  %3639 = vmatprep.subr.mxu0 0.0
  %3640 = vmatpush2.msra.mxu0 0.0
  %3641 = vmatprep.subr.mxu0 0.0
  %3642 = vmatpush2.msra.mxu0 0.0
  %3643 = vmatprep.subr.mxu0 0.0
  %3644 = vmatpush2.msra.mxu0 0.0
  %3645 = vmatprep.subr.mxu0 0.0
  %3646 = vmatpush2.msra.mxu0 0.0
  %3647 = vmatprep.subr.mxu0 0.0
  %3648 = vmatpush2.msra.mxu0 0.0
  %3649 = vmatprep.subr.mxu0 0.0
  %3650 = vmatpush2.msra.mxu0 0.0
  %3651 = vmatprep.mubr.f32.mxu0 0.0
  %3652 = vmatmul.mubr.f32.gmra.mxu0 %v3585
  %v3653 = vpop.f32.mrf.mxu0
  %v3654 = vadd.f32 %v59, %v3653
  %v3655 = vpop.f32.mrf.mxu0
  %3656 = vdwg.mxu0
  %v3657 = vmax.f32 %v3654, 0.0
  %3659 = vrot.lane.b32.xlu0 %v3576, 32
  %v3660 = vpop.permute.xlu0 %3659
  %v3662 = vsel %vm53, %v3657, %v3660
  %v3664 = vsel %vm61, %v3662, 0
  %3666 = vmatprep.subr.mxu0 0.0
  %3667 = vmatpush1.msra.mxu0 0.0
  %3668 = vmatprep.subr.mxu0 0.0
  %3669 = vmatpush1.msra.mxu0 0.0
  %3670 = vmatprep.subr.mxu0 0.0
  %3671 = vmatpush1.msra.mxu0 0.0
  %3672 = vmatprep.subr.mxu0 0.0
  %3673 = vmatpush1.msra.mxu0 0.0
  %3674 = vmatprep.subr.mxu0 0.0
  %3675 = vmatpush1.msra.mxu0 0.0
  %3676 = vmatprep.subr.mxu0 0.0
  %3677 = vmatpush1.msra.mxu0 0.0
  %3678 = vmatprep.subr.mxu0 0.0
  %3679 = vmatpush1.msra.mxu0 0.0
  %3680 = vmatprep.subr.mxu0 0.0
  %3681 = vmatpush1.msra.mxu0 0.0
  %3682 = vmatprep.subr.mxu0 0.0
  %3683 = vmatpush1.msra.mxu0 %v49
  %3684 = vmatprep.subr.mxu0 0.0
  %3685 = vmatpush1.msra.mxu0 %v48
  %3686 = vmatprep.subr.mxu0 0.0
  %3687 = vmatpush1.msra.mxu0 %v47
  %3688 = vmatprep.subr.mxu0 0.0
  %3689 = vmatpush1.msra.mxu0 %v46
  %3690 = vmatprep.subr.mxu0 0.0
  %3691 = vmatpush1.msra.mxu0 %v45
  %3692 = vmatprep.subr.mxu0 0.0
  %3693 = vmatpush1.msra.mxu0 %v44
  %3694 = vmatprep.subr.mxu0 0.0
  %3695 = vmatpush1.msra.mxu0 %v43
  %3696 = vmatprep.subr.mxu0 0.0
  %3697 = vmatpush1.msra.mxu0 %v42
  %3698 = vmatprep.subr.mxu0 0.0
  %3699 = vmatpush2.msra.mxu0 0.0
  %3700 = vmatprep.subr.mxu0 0.0
  %3701 = vmatpush2.msra.mxu0 0.0
  %3702 = vmatprep.subr.mxu0 0.0
  %3703 = vmatpush2.msra.mxu0 0.0
  %3704 = vmatprep.subr.mxu0 0.0
  %3705 = vmatpush2.msra.mxu0 0.0
  %3706 = vmatprep.subr.mxu0 0.0
  %3707 = vmatpush2.msra.mxu0 0.0
  %3708 = vmatprep.subr.mxu0 0.0
  %3709 = vmatpush2.msra.mxu0 0.0
  %3710 = vmatprep.subr.mxu0 0.0
  %3711 = vmatpush2.msra.mxu0 0.0
  %3712 = vmatprep.subr.mxu0 0.0
  %3713 = vmatpush2.msra.mxu0 0.0
  %3714 = vmatprep.subr.mxu0 0.0
  %3715 = vmatpush2.msra.mxu0 0.0
  %3716 = vmatprep.subr.mxu0 0.0
  %3717 = vmatpush2.msra.mxu0 0.0
  %3718 = vmatprep.subr.mxu0 0.0
  %3719 = vmatpush2.msra.mxu0 0.0
  %3720 = vmatprep.subr.mxu0 0.0
  %3721 = vmatpush2.msra.mxu0 0.0
  %3722 = vmatprep.subr.mxu0 0.0
  %3723 = vmatpush2.msra.mxu0 0.0
  %3724 = vmatprep.subr.mxu0 0.0
  %3725 = vmatpush2.msra.mxu0 0.0
  %3726 = vmatprep.subr.mxu0 0.0
  %3727 = vmatpush2.msra.mxu0 0.0
  %3728 = vmatprep.subr.mxu0 0.0
  %3729 = vmatpush2.msra.mxu0 0.0
  %3730 = vmatprep.mubr.f32.mxu0 0.0
  %3731 = vmatmul.mubr.f32.gmra.mxu0 %v3664
  %v3732 = vpop.f32.mrf.mxu0
  %v3733 = vadd.f32 %v141, %v3732
  %v3734 = vpop.f32.mrf.mxu0
  %3735 = vdwg.mxu0
  %v3736 = vmax.f32 %v3733, 0.0
  %s3737 = scalar_lea.vmem %s0, 184
  %v3738 = vld [vmem:[%s3737] sm:$0xff]
  %3740 = vrot.lane.b32.xlu0 %v3657, 32
  %v3741 = vpop.permute.xlu0 %3740
  %v3743 = vsel %vm53, %v3738, %v3741
  %v3745 = vsel %vm61, %v3743, 0
  %3747 = vmatprep.subr.mxu0 0.0
  %3748 = vmatpush1.msra.mxu0 0.0
  %3749 = vmatprep.subr.mxu0 0.0
  %3750 = vmatpush1.msra.mxu0 0.0
  %3751 = vmatprep.subr.mxu0 0.0
  %3752 = vmatpush1.msra.mxu0 0.0
  %3753 = vmatprep.subr.mxu0 0.0
  %3754 = vmatpush1.msra.mxu0 0.0
  %3755 = vmatprep.subr.mxu0 0.0
  %3756 = vmatpush1.msra.mxu0 0.0
  %3757 = vmatprep.subr.mxu0 0.0
  %3758 = vmatpush1.msra.mxu0 0.0
  %3759 = vmatprep.subr.mxu0 0.0
  %3760 = vmatpush1.msra.mxu0 0.0
  %3761 = vmatprep.subr.mxu0 0.0
  %3762 = vmatpush1.msra.mxu0 0.0
  %3763 = vmatprep.subr.mxu0 0.0
  %3764 = vmatpush1.msra.mxu0 %v41
  %3765 = vmatprep.subr.mxu0 0.0
  %3766 = vmatpush1.msra.mxu0 %v40
  %3767 = vmatprep.subr.mxu0 0.0
  %3768 = vmatpush1.msra.mxu0 %v39
  %3769 = vmatprep.subr.mxu0 0.0
  %3770 = vmatpush1.msra.mxu0 %v38
  %3771 = vmatprep.subr.mxu0 0.0
  %3772 = vmatpush1.msra.mxu0 %v37
  %3773 = vmatprep.subr.mxu0 0.0
  %3774 = vmatpush1.msra.mxu0 %v36
  %3775 = vmatprep.subr.mxu0 0.0
  %3776 = vmatpush1.msra.mxu0 %v35
  %3777 = vmatprep.subr.mxu0 0.0
  %3778 = vmatpush1.msra.mxu0 %v34
  %3779 = vmatprep.subr.mxu0 0.0
  %3780 = vmatpush2.msra.mxu0 0.0
  %3781 = vmatprep.subr.mxu0 0.0
  %3782 = vmatpush2.msra.mxu0 0.0
  %3783 = vmatprep.subr.mxu0 0.0
  %3784 = vmatpush2.msra.mxu0 0.0
  %3785 = vmatprep.subr.mxu0 0.0
  %3786 = vmatpush2.msra.mxu0 0.0
  %3787 = vmatprep.subr.mxu0 0.0
  %3788 = vmatpush2.msra.mxu0 0.0
  %3789 = vmatprep.subr.mxu0 0.0
  %3790 = vmatpush2.msra.mxu0 0.0
  %3791 = vmatprep.subr.mxu0 0.0
  %3792 = vmatpush2.msra.mxu0 0.0
  %3793 = vmatprep.subr.mxu0 0.0
  %3794 = vmatpush2.msra.mxu0 0.0
  %3795 = vmatprep.subr.mxu0 0.0
  %3796 = vmatpush2.msra.mxu0 0.0
  %3797 = vmatprep.subr.mxu0 0.0
  %3798 = vmatpush2.msra.mxu0 0.0
  %3799 = vmatprep.subr.mxu0 0.0
  %3800 = vmatpush2.msra.mxu0 0.0
  %3801 = vmatprep.subr.mxu0 0.0
  %3802 = vmatpush2.msra.mxu0 0.0
  %3803 = vmatprep.subr.mxu0 0.0
  %3804 = vmatpush2.msra.mxu0 0.0
  %3805 = vmatprep.subr.mxu0 0.0
  %3806 = vmatpush2.msra.mxu0 0.0
  %3807 = vmatprep.subr.mxu0 0.0
  %3808 = vmatpush2.msra.mxu0 0.0
  %3809 = vmatprep.subr.mxu0 0.0
  %3810 = vmatpush2.msra.mxu0 0.0
  %3811 = vmatprep.mubr.f32.mxu0 0.0
  %3812 = vmatmul.mubr.f32.gmra.mxu0 %v3745
  %v3813 = vpop.f32.mrf.mxu0
  %v3814 = vadd.f32 %v59, %v3813
  %v3815 = vpop.f32.mrf.mxu0
  %3816 = vdwg.mxu0
  %v3817 = vmax.f32 %v3814, 0.0
  %3819 = vrot.lane.b32.xlu0 %v3736, 32
  %v3820 = vpop.permute.xlu0 %3819
  %v3822 = vsel %vm53, %v3817, %v3820
  %v3824 = vsel %vm61, %v3822, 0
  %3826 = vmatprep.subr.mxu0 0.0
  %3827 = vmatpush1.msra.mxu0 0.0
  %3828 = vmatprep.subr.mxu0 0.0
  %3829 = vmatpush1.msra.mxu0 0.0
  %3830 = vmatprep.subr.mxu0 0.0
  %3831 = vmatpush1.msra.mxu0 0.0
  %3832 = vmatprep.subr.mxu0 0.0
  %3833 = vmatpush1.msra.mxu0 0.0
  %3834 = vmatprep.subr.mxu0 0.0
  %3835 = vmatpush1.msra.mxu0 0.0
  %3836 = vmatprep.subr.mxu0 0.0
  %3837 = vmatpush1.msra.mxu0 0.0
  %3838 = vmatprep.subr.mxu0 0.0
  %3839 = vmatpush1.msra.mxu0 0.0
  %3840 = vmatprep.subr.mxu0 0.0
  %3841 = vmatpush1.msra.mxu0 0.0
  %3842 = vmatprep.subr.mxu0 0.0
  %3843 = vmatpush1.msra.mxu0 %v49
  %3844 = vmatprep.subr.mxu0 0.0
  %3845 = vmatpush1.msra.mxu0 %v48
  %3846 = vmatprep.subr.mxu0 0.0
  %3847 = vmatpush1.msra.mxu0 %v47
  %3848 = vmatprep.subr.mxu0 0.0
  %3849 = vmatpush1.msra.mxu0 %v46
  %3850 = vmatprep.subr.mxu0 0.0
  %3851 = vmatpush1.msra.mxu0 %v45
  %3852 = vmatprep.subr.mxu0 0.0
  %3853 = vmatpush1.msra.mxu0 %v44
  %3854 = vmatprep.subr.mxu0 0.0
  %3855 = vmatpush1.msra.mxu0 %v43
  %3856 = vmatprep.subr.mxu0 0.0
  %3857 = vmatpush1.msra.mxu0 %v42
  %3858 = vmatprep.subr.mxu0 0.0
  %3859 = vmatpush2.msra.mxu0 0.0
  %3860 = vmatprep.subr.mxu0 0.0
  %3861 = vmatpush2.msra.mxu0 0.0
  %3862 = vmatprep.subr.mxu0 0.0
  %3863 = vmatpush2.msra.mxu0 0.0
  %3864 = vmatprep.subr.mxu0 0.0
  %3865 = vmatpush2.msra.mxu0 0.0
  %3866 = vmatprep.subr.mxu0 0.0
  %3867 = vmatpush2.msra.mxu0 0.0
  %3868 = vmatprep.subr.mxu0 0.0
  %3869 = vmatpush2.msra.mxu0 0.0
  %3870 = vmatprep.subr.mxu0 0.0
  %3871 = vmatpush2.msra.mxu0 0.0
  %3872 = vmatprep.subr.mxu0 0.0
  %3873 = vmatpush2.msra.mxu0 0.0
  %3874 = vmatprep.subr.mxu0 0.0
  %3875 = vmatpush2.msra.mxu0 0.0
  %3876 = vmatprep.subr.mxu0 0.0
  %3877 = vmatpush2.msra.mxu0 0.0
  %3878 = vmatprep.subr.mxu0 0.0
  %3879 = vmatpush2.msra.mxu0 0.0
  %3880 = vmatprep.subr.mxu0 0.0
  %3881 = vmatpush2.msra.mxu0 0.0
  %3882 = vmatprep.subr.mxu0 0.0
  %3883 = vmatpush2.msra.mxu0 0.0
  %3884 = vmatprep.subr.mxu0 0.0
  %3885 = vmatpush2.msra.mxu0 0.0
  %3886 = vmatprep.subr.mxu0 0.0
  %3887 = vmatpush2.msra.mxu0 0.0
  %3888 = vmatprep.subr.mxu0 0.0
  %3889 = vmatpush2.msra.mxu0 0.0
  %3890 = vmatprep.mubr.f32.mxu0 0.0
  %3891 = vmatmul.mubr.f32.gmra.mxu0 %v3824
  %v3892 = vpop.f32.mrf.mxu0
  %v3893 = vadd.f32 %v141, %v3892
  %v3894 = vpop.f32.mrf.mxu0
  %3895 = vdwg.mxu0
  %v3896 = vmax.f32 %v3893, 0.0
  %s3897 = scalar_lea.vmem %s0, 192
  %v3898 = vld [vmem:[%s3897] sm:$0xff]
  %3900 = vrot.lane.b32.xlu0 %v3817, 32
  %v3901 = vpop.permute.xlu0 %3900
  %v3903 = vsel %vm53, %v3898, %v3901
  %v3905 = vsel %vm61, %v3903, 0
  %3907 = vmatprep.subr.mxu0 0.0
  %3908 = vmatpush1.msra.mxu0 0.0
  %3909 = vmatprep.subr.mxu0 0.0
  %3910 = vmatpush1.msra.mxu0 0.0
  %3911 = vmatprep.subr.mxu0 0.0
  %3912 = vmatpush1.msra.mxu0 0.0
  %3913 = vmatprep.subr.mxu0 0.0
  %3914 = vmatpush1.msra.mxu0 0.0
  %3915 = vmatprep.subr.mxu0 0.0
  %3916 = vmatpush1.msra.mxu0 0.0
  %3917 = vmatprep.subr.mxu0 0.0
  %3918 = vmatpush1.msra.mxu0 0.0
  %3919 = vmatprep.subr.mxu0 0.0
  %3920 = vmatpush1.msra.mxu0 0.0
  %3921 = vmatprep.subr.mxu0 0.0
  %3922 = vmatpush1.msra.mxu0 0.0
  %3923 = vmatprep.subr.mxu0 0.0
  %3924 = vmatpush1.msra.mxu0 %v41
  %3925 = vmatprep.subr.mxu0 0.0
  %3926 = vmatpush1.msra.mxu0 %v40
  %3927 = vmatprep.subr.mxu0 0.0
  %3928 = vmatpush1.msra.mxu0 %v39
  %3929 = vmatprep.subr.mxu0 0.0
  %3930 = vmatpush1.msra.mxu0 %v38
  %3931 = vmatprep.subr.mxu0 0.0
  %3932 = vmatpush1.msra.mxu0 %v37
  %3933 = vmatprep.subr.mxu0 0.0
  %3934 = vmatpush1.msra.mxu0 %v36
  %3935 = vmatprep.subr.mxu0 0.0
  %3936 = vmatpush1.msra.mxu0 %v35
  %3937 = vmatprep.subr.mxu0 0.0
  %3938 = vmatpush1.msra.mxu0 %v34
  %3939 = vmatprep.subr.mxu0 0.0
  %3940 = vmatpush2.msra.mxu0 0.0
  %3941 = vmatprep.subr.mxu0 0.0
  %3942 = vmatpush2.msra.mxu0 0.0
  %3943 = vmatprep.subr.mxu0 0.0
  %3944 = vmatpush2.msra.mxu0 0.0
  %3945 = vmatprep.subr.mxu0 0.0
  %3946 = vmatpush2.msra.mxu0 0.0
  %3947 = vmatprep.subr.mxu0 0.0
  %3948 = vmatpush2.msra.mxu0 0.0
  %3949 = vmatprep.subr.mxu0 0.0
  %3950 = vmatpush2.msra.mxu0 0.0
  %3951 = vmatprep.subr.mxu0 0.0
  %3952 = vmatpush2.msra.mxu0 0.0
  %3953 = vmatprep.subr.mxu0 0.0
  %3954 = vmatpush2.msra.mxu0 0.0
  %3955 = vmatprep.subr.mxu0 0.0
  %3956 = vmatpush2.msra.mxu0 0.0
  %3957 = vmatprep.subr.mxu0 0.0
  %3958 = vmatpush2.msra.mxu0 0.0
  %3959 = vmatprep.subr.mxu0 0.0
  %3960 = vmatpush2.msra.mxu0 0.0
  %3961 = vmatprep.subr.mxu0 0.0
  %3962 = vmatpush2.msra.mxu0 0.0
  %3963 = vmatprep.subr.mxu0 0.0
  %3964 = vmatpush2.msra.mxu0 0.0
  %3965 = vmatprep.subr.mxu0 0.0
  %3966 = vmatpush2.msra.mxu0 0.0
  %3967 = vmatprep.subr.mxu0 0.0
  %3968 = vmatpush2.msra.mxu0 0.0
  %3969 = vmatprep.subr.mxu0 0.0
  %3970 = vmatpush2.msra.mxu0 0.0
  %3971 = vmatprep.mubr.f32.mxu0 0.0
  %3972 = vmatmul.mubr.f32.gmra.mxu0 %v3905
  %v3973 = vpop.f32.mrf.mxu0
  %v3974 = vadd.f32 %v59, %v3973
  %v3975 = vpop.f32.mrf.mxu0
  %3976 = vdwg.mxu0
  %v3977 = vmax.f32 %v3974, 0.0
  %3979 = vrot.lane.b32.xlu0 %v3896, 32
  %v3980 = vpop.permute.xlu0 %3979
  %v3982 = vsel %vm53, %v3977, %v3980
  %v3984 = vsel %vm61, %v3982, 0
  %3986 = vmatprep.subr.mxu0 0.0
  %3987 = vmatpush1.msra.mxu0 0.0
  %3988 = vmatprep.subr.mxu0 0.0
  %3989 = vmatpush1.msra.mxu0 0.0
  %3990 = vmatprep.subr.mxu0 0.0
  %3991 = vmatpush1.msra.mxu0 0.0
  %3992 = vmatprep.subr.mxu0 0.0
  %3993 = vmatpush1.msra.mxu0 0.0
  %3994 = vmatprep.subr.mxu0 0.0
  %3995 = vmatpush1.msra.mxu0 0.0
  %3996 = vmatprep.subr.mxu0 0.0
  %3997 = vmatpush1.msra.mxu0 0.0
  %3998 = vmatprep.subr.mxu0 0.0
  %3999 = vmatpush1.msra.mxu0 0.0
  %4000 = vmatprep.subr.mxu0 0.0
  %4001 = vmatpush1.msra.mxu0 0.0
  %4002 = vmatprep.subr.mxu0 0.0
  %4003 = vmatpush1.msra.mxu0 %v49
  %4004 = vmatprep.subr.mxu0 0.0
  %4005 = vmatpush1.msra.mxu0 %v48
  %4006 = vmatprep.subr.mxu0 0.0
  %4007 = vmatpush1.msra.mxu0 %v47
  %4008 = vmatprep.subr.mxu0 0.0
  %4009 = vmatpush1.msra.mxu0 %v46
  %4010 = vmatprep.subr.mxu0 0.0
  %4011 = vmatpush1.msra.mxu0 %v45
  %4012 = vmatprep.subr.mxu0 0.0
  %4013 = vmatpush1.msra.mxu0 %v44
  %4014 = vmatprep.subr.mxu0 0.0
  %4015 = vmatpush1.msra.mxu0 %v43
  %4016 = vmatprep.subr.mxu0 0.0
  %4017 = vmatpush1.msra.mxu0 %v42
  %4018 = vmatprep.subr.mxu0 0.0
  %4019 = vmatpush2.msra.mxu0 0.0
  %4020 = vmatprep.subr.mxu0 0.0
  %4021 = vmatpush2.msra.mxu0 0.0
  %4022 = vmatprep.subr.mxu0 0.0
  %4023 = vmatpush2.msra.mxu0 0.0
  %4024 = vmatprep.subr.mxu0 0.0
  %4025 = vmatpush2.msra.mxu0 0.0
  %4026 = vmatprep.subr.mxu0 0.0
  %4027 = vmatpush2.msra.mxu0 0.0
  %4028 = vmatprep.subr.mxu0 0.0
  %4029 = vmatpush2.msra.mxu0 0.0
  %4030 = vmatprep.subr.mxu0 0.0
  %4031 = vmatpush2.msra.mxu0 0.0
  %4032 = vmatprep.subr.mxu0 0.0
  %4033 = vmatpush2.msra.mxu0 0.0
  %4034 = vmatprep.subr.mxu0 0.0
  %4035 = vmatpush2.msra.mxu0 0.0
  %4036 = vmatprep.subr.mxu0 0.0
  %4037 = vmatpush2.msra.mxu0 0.0
  %4038 = vmatprep.subr.mxu0 0.0
  %4039 = vmatpush2.msra.mxu0 0.0
  %4040 = vmatprep.subr.mxu0 0.0
  %4041 = vmatpush2.msra.mxu0 0.0
  %4042 = vmatprep.subr.mxu0 0.0
  %4043 = vmatpush2.msra.mxu0 0.0
  %4044 = vmatprep.subr.mxu0 0.0
  %4045 = vmatpush2.msra.mxu0 0.0
  %4046 = vmatprep.subr.mxu0 0.0
  %4047 = vmatpush2.msra.mxu0 0.0
  %4048 = vmatprep.subr.mxu0 0.0
  %4049 = vmatpush2.msra.mxu0 0.0
  %4050 = vmatprep.mubr.f32.mxu0 0.0
  %4051 = vmatmul.mubr.f32.gmra.mxu0 %v3984
  %v4052 = vpop.f32.mrf.mxu0
  %v4053 = vadd.f32 %v141, %v4052
  %v4054 = vpop.f32.mrf.mxu0
  %4055 = vdwg.mxu0
  %v4056 = vmax.f32 %v4053, 0.0
  %s4057 = scalar_lea.vmem %s0, 200
  %v4058 = vld [vmem:[%s4057] sm:$0xff]
  %4060 = vrot.lane.b32.xlu0 %v3977, 32
  %v4061 = vpop.permute.xlu0 %4060
  %v4063 = vsel %vm53, %v4058, %v4061
  %v4065 = vsel %vm61, %v4063, 0
  %4067 = vmatprep.subr.mxu0 0.0
  %4068 = vmatpush1.msra.mxu0 0.0
  %4069 = vmatprep.subr.mxu0 0.0
  %4070 = vmatpush1.msra.mxu0 0.0
  %4071 = vmatprep.subr.mxu0 0.0
  %4072 = vmatpush1.msra.mxu0 0.0
  %4073 = vmatprep.subr.mxu0 0.0
  %4074 = vmatpush1.msra.mxu0 0.0
  %4075 = vmatprep.subr.mxu0 0.0
  %4076 = vmatpush1.msra.mxu0 0.0
  %4077 = vmatprep.subr.mxu0 0.0
  %4078 = vmatpush1.msra.mxu0 0.0
  %4079 = vmatprep.subr.mxu0 0.0
  %4080 = vmatpush1.msra.mxu0 0.0
  %4081 = vmatprep.subr.mxu0 0.0
  %4082 = vmatpush1.msra.mxu0 0.0
  %4083 = vmatprep.subr.mxu0 0.0
  %4084 = vmatpush1.msra.mxu0 %v41
  %4085 = vmatprep.subr.mxu0 0.0
  %4086 = vmatpush1.msra.mxu0 %v40
  %4087 = vmatprep.subr.mxu0 0.0
  %4088 = vmatpush1.msra.mxu0 %v39
  %4089 = vmatprep.subr.mxu0 0.0
  %4090 = vmatpush1.msra.mxu0 %v38
  %4091 = vmatprep.subr.mxu0 0.0
  %4092 = vmatpush1.msra.mxu0 %v37
  %4093 = vmatprep.subr.mxu0 0.0
  %4094 = vmatpush1.msra.mxu0 %v36
  %4095 = vmatprep.subr.mxu0 0.0
  %4096 = vmatpush1.msra.mxu0 %v35
  %4097 = vmatprep.subr.mxu0 0.0
  %4098 = vmatpush1.msra.mxu0 %v34
  %4099 = vmatprep.subr.mxu0 0.0
  %4100 = vmatpush2.msra.mxu0 0.0
  %4101 = vmatprep.subr.mxu0 0.0
  %4102 = vmatpush2.msra.mxu0 0.0
  %4103 = vmatprep.subr.mxu0 0.0
  %4104 = vmatpush2.msra.mxu0 0.0
  %4105 = vmatprep.subr.mxu0 0.0
  %4106 = vmatpush2.msra.mxu0 0.0
  %4107 = vmatprep.subr.mxu0 0.0
  %4108 = vmatpush2.msra.mxu0 0.0
  %4109 = vmatprep.subr.mxu0 0.0
  %4110 = vmatpush2.msra.mxu0 0.0
  %4111 = vmatprep.subr.mxu0 0.0
  %4112 = vmatpush2.msra.mxu0 0.0
  %4113 = vmatprep.subr.mxu0 0.0
  %4114 = vmatpush2.msra.mxu0 0.0
  %4115 = vmatprep.subr.mxu0 0.0
  %4116 = vmatpush2.msra.mxu0 0.0
  %4117 = vmatprep.subr.mxu0 0.0
  %4118 = vmatpush2.msra.mxu0 0.0
  %4119 = vmatprep.subr.mxu0 0.0
  %4120 = vmatpush2.msra.mxu0 0.0
  %4121 = vmatprep.subr.mxu0 0.0
  %4122 = vmatpush2.msra.mxu0 0.0
  %4123 = vmatprep.subr.mxu0 0.0
  %4124 = vmatpush2.msra.mxu0 0.0
  %4125 = vmatprep.subr.mxu0 0.0
  %4126 = vmatpush2.msra.mxu0 0.0
  %4127 = vmatprep.subr.mxu0 0.0
  %4128 = vmatpush2.msra.mxu0 0.0
  %4129 = vmatprep.subr.mxu0 0.0
  %4130 = vmatpush2.msra.mxu0 0.0
  %4131 = vmatprep.mubr.f32.mxu0 0.0
  %4132 = vmatmul.mubr.f32.gmra.mxu0 %v4065
  %v4133 = vpop.f32.mrf.mxu0
  %v4134 = vadd.f32 %v59, %v4133
  %v4135 = vpop.f32.mrf.mxu0
  %4136 = vdwg.mxu0
  %v4137 = vmax.f32 %v4134, 0.0
  %4139 = vrot.lane.b32.xlu0 %v4056, 32
  %v4140 = vpop.permute.xlu0 %4139
  %v4142 = vsel %vm53, %v4137, %v4140
  %v4144 = vsel %vm61, %v4142, 0
  %4146 = vmatprep.subr.mxu0 0.0
  %4147 = vmatpush1.msra.mxu0 0.0
  %4148 = vmatprep.subr.mxu0 0.0
  %4149 = vmatpush1.msra.mxu0 0.0
  %4150 = vmatprep.subr.mxu0 0.0
  %4151 = vmatpush1.msra.mxu0 0.0
  %4152 = vmatprep.subr.mxu0 0.0
  %4153 = vmatpush1.msra.mxu0 0.0
  %4154 = vmatprep.subr.mxu0 0.0
  %4155 = vmatpush1.msra.mxu0 0.0
  %4156 = vmatprep.subr.mxu0 0.0
  %4157 = vmatpush1.msra.mxu0 0.0
  %4158 = vmatprep.subr.mxu0 0.0
  %4159 = vmatpush1.msra.mxu0 0.0
  %4160 = vmatprep.subr.mxu0 0.0
  %4161 = vmatpush1.msra.mxu0 0.0
  %4162 = vmatprep.subr.mxu0 0.0
  %4163 = vmatpush1.msra.mxu0 %v49
  %4164 = vmatprep.subr.mxu0 0.0
  %4165 = vmatpush1.msra.mxu0 %v48
  %4166 = vmatprep.subr.mxu0 0.0
  %4167 = vmatpush1.msra.mxu0 %v47
  %4168 = vmatprep.subr.mxu0 0.0
  %4169 = vmatpush1.msra.mxu0 %v46
  %4170 = vmatprep.subr.mxu0 0.0
  %4171 = vmatpush1.msra.mxu0 %v45
  %4172 = vmatprep.subr.mxu0 0.0
  %4173 = vmatpush1.msra.mxu0 %v44
  %4174 = vmatprep.subr.mxu0 0.0
  %4175 = vmatpush1.msra.mxu0 %v43
  %4176 = vmatprep.subr.mxu0 0.0
  %4177 = vmatpush1.msra.mxu0 %v42
  %4178 = vmatprep.subr.mxu0 0.0
  %4179 = vmatpush2.msra.mxu0 0.0
  %4180 = vmatprep.subr.mxu0 0.0
  %4181 = vmatpush2.msra.mxu0 0.0
  %4182 = vmatprep.subr.mxu0 0.0
  %4183 = vmatpush2.msra.mxu0 0.0
  %4184 = vmatprep.subr.mxu0 0.0
  %4185 = vmatpush2.msra.mxu0 0.0
  %4186 = vmatprep.subr.mxu0 0.0
  %4187 = vmatpush2.msra.mxu0 0.0
  %4188 = vmatprep.subr.mxu0 0.0
  %4189 = vmatpush2.msra.mxu0 0.0
  %4190 = vmatprep.subr.mxu0 0.0
  %4191 = vmatpush2.msra.mxu0 0.0
  %4192 = vmatprep.subr.mxu0 0.0
  %4193 = vmatpush2.msra.mxu0 0.0
  %4194 = vmatprep.subr.mxu0 0.0
  %4195 = vmatpush2.msra.mxu0 0.0
  %4196 = vmatprep.subr.mxu0 0.0
  %4197 = vmatpush2.msra.mxu0 0.0
  %4198 = vmatprep.subr.mxu0 0.0
  %4199 = vmatpush2.msra.mxu0 0.0
  %4200 = vmatprep.subr.mxu0 0.0
  %4201 = vmatpush2.msra.mxu0 0.0
  %4202 = vmatprep.subr.mxu0 0.0
  %4203 = vmatpush2.msra.mxu0 0.0
  %4204 = vmatprep.subr.mxu0 0.0
  %4205 = vmatpush2.msra.mxu0 0.0
  %4206 = vmatprep.subr.mxu0 0.0
  %4207 = vmatpush2.msra.mxu0 0.0
  %4208 = vmatprep.subr.mxu0 0.0
  %4209 = vmatpush2.msra.mxu0 0.0
  %4210 = vmatprep.mubr.f32.mxu0 0.0
  %4211 = vmatmul.mubr.f32.gmra.mxu0 %v4144
  %v4212 = vpop.f32.mrf.mxu0
  %v4213 = vadd.f32 %v141, %v4212
  %v4214 = vpop.f32.mrf.mxu0
  %4215 = vdwg.mxu0
  %v4216 = vmax.f32 %v4213, 0.0
  %s4217 = scalar_lea.vmem %s0, 208
  %v4218 = vld [vmem:[%s4217] sm:$0xff]
  %4220 = vrot.lane.b32.xlu0 %v4137, 32
  %v4221 = vpop.permute.xlu0 %4220
  %v4223 = vsel %vm53, %v4218, %v4221
  %v4225 = vsel %vm61, %v4223, 0
  %4227 = vmatprep.subr.mxu0 0.0
  %4228 = vmatpush1.msra.mxu0 0.0
  %4229 = vmatprep.subr.mxu0 0.0
  %4230 = vmatpush1.msra.mxu0 0.0
  %4231 = vmatprep.subr.mxu0 0.0
  %4232 = vmatpush1.msra.mxu0 0.0
  %4233 = vmatprep.subr.mxu0 0.0
  %4234 = vmatpush1.msra.mxu0 0.0
  %4235 = vmatprep.subr.mxu0 0.0
  %4236 = vmatpush1.msra.mxu0 0.0
  %4237 = vmatprep.subr.mxu0 0.0
  %4238 = vmatpush1.msra.mxu0 0.0
  %4239 = vmatprep.subr.mxu0 0.0
  %4240 = vmatpush1.msra.mxu0 0.0
  %4241 = vmatprep.subr.mxu0 0.0
  %4242 = vmatpush1.msra.mxu0 0.0
  %4243 = vmatprep.subr.mxu0 0.0
  %4244 = vmatpush1.msra.mxu0 %v41
  %4245 = vmatprep.subr.mxu0 0.0
  %4246 = vmatpush1.msra.mxu0 %v40
  %4247 = vmatprep.subr.mxu0 0.0
  %4248 = vmatpush1.msra.mxu0 %v39
  %4249 = vmatprep.subr.mxu0 0.0
  %4250 = vmatpush1.msra.mxu0 %v38
  %4251 = vmatprep.subr.mxu0 0.0
  %4252 = vmatpush1.msra.mxu0 %v37
  %4253 = vmatprep.subr.mxu0 0.0
  %4254 = vmatpush1.msra.mxu0 %v36
  %4255 = vmatprep.subr.mxu0 0.0
  %4256 = vmatpush1.msra.mxu0 %v35
  %4257 = vmatprep.subr.mxu0 0.0
  %4258 = vmatpush1.msra.mxu0 %v34
  %4259 = vmatprep.subr.mxu0 0.0
  %4260 = vmatpush2.msra.mxu0 0.0
  %4261 = vmatprep.subr.mxu0 0.0
  %4262 = vmatpush2.msra.mxu0 0.0
  %4263 = vmatprep.subr.mxu0 0.0
  %4264 = vmatpush2.msra.mxu0 0.0
  %4265 = vmatprep.subr.mxu0 0.0
  %4266 = vmatpush2.msra.mxu0 0.0
  %4267 = vmatprep.subr.mxu0 0.0
  %4268 = vmatpush2.msra.mxu0 0.0
  %4269 = vmatprep.subr.mxu0 0.0
  %4270 = vmatpush2.msra.mxu0 0.0
  %4271 = vmatprep.subr.mxu0 0.0
  %4272 = vmatpush2.msra.mxu0 0.0
  %4273 = vmatprep.subr.mxu0 0.0
  %4274 = vmatpush2.msra.mxu0 0.0
  %4275 = vmatprep.subr.mxu0 0.0
  %4276 = vmatpush2.msra.mxu0 0.0
  %4277 = vmatprep.subr.mxu0 0.0
  %4278 = vmatpush2.msra.mxu0 0.0
  %4279 = vmatprep.subr.mxu0 0.0
  %4280 = vmatpush2.msra.mxu0 0.0
  %4281 = vmatprep.subr.mxu0 0.0
  %4282 = vmatpush2.msra.mxu0 0.0
  %4283 = vmatprep.subr.mxu0 0.0
  %4284 = vmatpush2.msra.mxu0 0.0
  %4285 = vmatprep.subr.mxu0 0.0
  %4286 = vmatpush2.msra.mxu0 0.0
  %4287 = vmatprep.subr.mxu0 0.0
  %4288 = vmatpush2.msra.mxu0 0.0
  %4289 = vmatprep.subr.mxu0 0.0
  %4290 = vmatpush2.msra.mxu0 0.0
  %4291 = vmatprep.mubr.f32.mxu0 0.0
  %4292 = vmatmul.mubr.f32.gmra.mxu0 %v4225
  %v4293 = vpop.f32.mrf.mxu0
  %v4294 = vadd.f32 %v59, %v4293
  %v4295 = vpop.f32.mrf.mxu0
  %4296 = vdwg.mxu0
  %v4297 = vmax.f32 %v4294, 0.0
  %4299 = vrot.lane.b32.xlu0 %v4216, 32
  %v4300 = vpop.permute.xlu0 %4299
  %v4302 = vsel %vm53, %v4297, %v4300
  %v4304 = vsel %vm61, %v4302, 0
  %4306 = vmatprep.subr.mxu0 0.0
  %4307 = vmatpush1.msra.mxu0 0.0
  %4308 = vmatprep.subr.mxu0 0.0
  %4309 = vmatpush1.msra.mxu0 0.0
  %4310 = vmatprep.subr.mxu0 0.0
  %4311 = vmatpush1.msra.mxu0 0.0
  %4312 = vmatprep.subr.mxu0 0.0
  %4313 = vmatpush1.msra.mxu0 0.0
  %4314 = vmatprep.subr.mxu0 0.0
  %4315 = vmatpush1.msra.mxu0 0.0
  %4316 = vmatprep.subr.mxu0 0.0
  %4317 = vmatpush1.msra.mxu0 0.0
  %4318 = vmatprep.subr.mxu0 0.0
  %4319 = vmatpush1.msra.mxu0 0.0
  %4320 = vmatprep.subr.mxu0 0.0
  %4321 = vmatpush1.msra.mxu0 0.0
  %4322 = vmatprep.subr.mxu0 0.0
  %4323 = vmatpush1.msra.mxu0 %v49
  %4324 = vmatprep.subr.mxu0 0.0
  %4325 = vmatpush1.msra.mxu0 %v48
  %4326 = vmatprep.subr.mxu0 0.0
  %4327 = vmatpush1.msra.mxu0 %v47
  %4328 = vmatprep.subr.mxu0 0.0
  %4329 = vmatpush1.msra.mxu0 %v46
  %4330 = vmatprep.subr.mxu0 0.0
  %4331 = vmatpush1.msra.mxu0 %v45
  %4332 = vmatprep.subr.mxu0 0.0
  %4333 = vmatpush1.msra.mxu0 %v44
  %4334 = vmatprep.subr.mxu0 0.0
  %4335 = vmatpush1.msra.mxu0 %v43
  %4336 = vmatprep.subr.mxu0 0.0
  %4337 = vmatpush1.msra.mxu0 %v42
  %4338 = vmatprep.subr.mxu0 0.0
  %4339 = vmatpush2.msra.mxu0 0.0
  %4340 = vmatprep.subr.mxu0 0.0
  %4341 = vmatpush2.msra.mxu0 0.0
  %4342 = vmatprep.subr.mxu0 0.0
  %4343 = vmatpush2.msra.mxu0 0.0
  %4344 = vmatprep.subr.mxu0 0.0
  %4345 = vmatpush2.msra.mxu0 0.0
  %4346 = vmatprep.subr.mxu0 0.0
  %4347 = vmatpush2.msra.mxu0 0.0
  %4348 = vmatprep.subr.mxu0 0.0
  %4349 = vmatpush2.msra.mxu0 0.0
  %4350 = vmatprep.subr.mxu0 0.0
  %4351 = vmatpush2.msra.mxu0 0.0
  %4352 = vmatprep.subr.mxu0 0.0
  %4353 = vmatpush2.msra.mxu0 0.0
  %4354 = vmatprep.subr.mxu0 0.0
  %4355 = vmatpush2.msra.mxu0 0.0
  %4356 = vmatprep.subr.mxu0 0.0
  %4357 = vmatpush2.msra.mxu0 0.0
  %4358 = vmatprep.subr.mxu0 0.0
  %4359 = vmatpush2.msra.mxu0 0.0
  %4360 = vmatprep.subr.mxu0 0.0
  %4361 = vmatpush2.msra.mxu0 0.0
  %4362 = vmatprep.subr.mxu0 0.0
  %4363 = vmatpush2.msra.mxu0 0.0
  %4364 = vmatprep.subr.mxu0 0.0
  %4365 = vmatpush2.msra.mxu0 0.0
  %4366 = vmatprep.subr.mxu0 0.0
  %4367 = vmatpush2.msra.mxu0 0.0
  %4368 = vmatprep.subr.mxu0 0.0
  %4369 = vmatpush2.msra.mxu0 0.0
  %4370 = vmatprep.mubr.f32.mxu0 0.0
  %4371 = vmatmul.mubr.f32.gmra.mxu0 %v4304
  %v4372 = vpop.f32.mrf.mxu0
  %v4373 = vadd.f32 %v141, %v4372
  %v4374 = vpop.f32.mrf.mxu0
  %4375 = vdwg.mxu0
  %v4376 = vmax.f32 %v4373, 0.0
  %s4377 = scalar_lea.vmem %s0, 216
  %v4378 = vld [vmem:[%s4377] sm:$0xff]
  %4380 = vrot.lane.b32.xlu0 %v4297, 32
  %v4381 = vpop.permute.xlu0 %4380
  %v4383 = vsel %vm53, %v4378, %v4381
  %v4385 = vsel %vm61, %v4383, 0
  %4387 = vmatprep.subr.mxu0 0.0
  %4388 = vmatpush1.msra.mxu0 0.0
  %4389 = vmatprep.subr.mxu0 0.0
  %4390 = vmatpush1.msra.mxu0 0.0
  %4391 = vmatprep.subr.mxu0 0.0
  %4392 = vmatpush1.msra.mxu0 0.0
  %4393 = vmatprep.subr.mxu0 0.0
  %4394 = vmatpush1.msra.mxu0 0.0
  %4395 = vmatprep.subr.mxu0 0.0
  %4396 = vmatpush1.msra.mxu0 0.0
  %4397 = vmatprep.subr.mxu0 0.0
  %4398 = vmatpush1.msra.mxu0 0.0
  %4399 = vmatprep.subr.mxu0 0.0
  %4400 = vmatpush1.msra.mxu0 0.0
  %4401 = vmatprep.subr.mxu0 0.0
  %4402 = vmatpush1.msra.mxu0 0.0
  %4403 = vmatprep.subr.mxu0 0.0
  %4404 = vmatpush1.msra.mxu0 %v41
  %4405 = vmatprep.subr.mxu0 0.0
  %4406 = vmatpush1.msra.mxu0 %v40
  %4407 = vmatprep.subr.mxu0 0.0
  %4408 = vmatpush1.msra.mxu0 %v39
  %4409 = vmatprep.subr.mxu0 0.0
  %4410 = vmatpush1.msra.mxu0 %v38
  %4411 = vmatprep.subr.mxu0 0.0
  %4412 = vmatpush1.msra.mxu0 %v37
  %4413 = vmatprep.subr.mxu0 0.0
  %4414 = vmatpush1.msra.mxu0 %v36
  %4415 = vmatprep.subr.mxu0 0.0
  %4416 = vmatpush1.msra.mxu0 %v35
  %4417 = vmatprep.subr.mxu0 0.0
  %4418 = vmatpush1.msra.mxu0 %v34
  %4419 = vmatprep.subr.mxu0 0.0
  %4420 = vmatpush2.msra.mxu0 0.0
  %4421 = vmatprep.subr.mxu0 0.0
  %4422 = vmatpush2.msra.mxu0 0.0
  %4423 = vmatprep.subr.mxu0 0.0
  %4424 = vmatpush2.msra.mxu0 0.0
  %4425 = vmatprep.subr.mxu0 0.0
  %4426 = vmatpush2.msra.mxu0 0.0
  %4427 = vmatprep.subr.mxu0 0.0
  %4428 = vmatpush2.msra.mxu0 0.0
  %4429 = vmatprep.subr.mxu0 0.0
  %4430 = vmatpush2.msra.mxu0 0.0
  %4431 = vmatprep.subr.mxu0 0.0
  %4432 = vmatpush2.msra.mxu0 0.0
  %4433 = vmatprep.subr.mxu0 0.0
  %4434 = vmatpush2.msra.mxu0 0.0
  %4435 = vmatprep.subr.mxu0 0.0
  %4436 = vmatpush2.msra.mxu0 0.0
  %4437 = vmatprep.subr.mxu0 0.0
  %4438 = vmatpush2.msra.mxu0 0.0
  %4439 = vmatprep.subr.mxu0 0.0
  %4440 = vmatpush2.msra.mxu0 0.0
  %4441 = vmatprep.subr.mxu0 0.0
  %4442 = vmatpush2.msra.mxu0 0.0
  %4443 = vmatprep.subr.mxu0 0.0
  %4444 = vmatpush2.msra.mxu0 0.0
  %4445 = vmatprep.subr.mxu0 0.0
  %4446 = vmatpush2.msra.mxu0 0.0
  %4447 = vmatprep.subr.mxu0 0.0
  %4448 = vmatpush2.msra.mxu0 0.0
  %4449 = vmatprep.subr.mxu0 0.0
  %4450 = vmatpush2.msra.mxu0 0.0
  %4451 = vmatprep.mubr.f32.mxu0 0.0
  %4452 = vmatmul.mubr.f32.gmra.mxu0 %v4385
  %v4453 = vpop.f32.mrf.mxu0
  %v4454 = vadd.f32 %v59, %v4453
  %v4455 = vpop.f32.mrf.mxu0
  %4456 = vdwg.mxu0
  %v4457 = vmax.f32 %v4454, 0.0
  %4459 = vrot.lane.b32.xlu0 %v4376, 32
  %v4460 = vpop.permute.xlu0 %4459
  %v4462 = vsel %vm53, %v4457, %v4460
  %v4464 = vsel %vm61, %v4462, 0
  %4466 = vmatprep.subr.mxu0 0.0
  %4467 = vmatpush1.msra.mxu0 0.0
  %4468 = vmatprep.subr.mxu0 0.0
  %4469 = vmatpush1.msra.mxu0 0.0
  %4470 = vmatprep.subr.mxu0 0.0
  %4471 = vmatpush1.msra.mxu0 0.0
  %4472 = vmatprep.subr.mxu0 0.0
  %4473 = vmatpush1.msra.mxu0 0.0
  %4474 = vmatprep.subr.mxu0 0.0
  %4475 = vmatpush1.msra.mxu0 0.0
  %4476 = vmatprep.subr.mxu0 0.0
  %4477 = vmatpush1.msra.mxu0 0.0
  %4478 = vmatprep.subr.mxu0 0.0
  %4479 = vmatpush1.msra.mxu0 0.0
  %4480 = vmatprep.subr.mxu0 0.0
  %4481 = vmatpush1.msra.mxu0 0.0
  %4482 = vmatprep.subr.mxu0 0.0
  %4483 = vmatpush1.msra.mxu0 %v49
  %4484 = vmatprep.subr.mxu0 0.0
  %4485 = vmatpush1.msra.mxu0 %v48
  %4486 = vmatprep.subr.mxu0 0.0
  %4487 = vmatpush1.msra.mxu0 %v47
  %4488 = vmatprep.subr.mxu0 0.0
  %4489 = vmatpush1.msra.mxu0 %v46
  %4490 = vmatprep.subr.mxu0 0.0
  %4491 = vmatpush1.msra.mxu0 %v45
  %4492 = vmatprep.subr.mxu0 0.0
  %4493 = vmatpush1.msra.mxu0 %v44
  %4494 = vmatprep.subr.mxu0 0.0
  %4495 = vmatpush1.msra.mxu0 %v43
  %4496 = vmatprep.subr.mxu0 0.0
  %4497 = vmatpush1.msra.mxu0 %v42
  %4498 = vmatprep.subr.mxu0 0.0
  %4499 = vmatpush2.msra.mxu0 0.0
  %4500 = vmatprep.subr.mxu0 0.0
  %4501 = vmatpush2.msra.mxu0 0.0
  %4502 = vmatprep.subr.mxu0 0.0
  %4503 = vmatpush2.msra.mxu0 0.0
  %4504 = vmatprep.subr.mxu0 0.0
  %4505 = vmatpush2.msra.mxu0 0.0
  %4506 = vmatprep.subr.mxu0 0.0
  %4507 = vmatpush2.msra.mxu0 0.0
  %4508 = vmatprep.subr.mxu0 0.0
  %4509 = vmatpush2.msra.mxu0 0.0
  %4510 = vmatprep.subr.mxu0 0.0
  %4511 = vmatpush2.msra.mxu0 0.0
  %4512 = vmatprep.subr.mxu0 0.0
  %4513 = vmatpush2.msra.mxu0 0.0
  %4514 = vmatprep.subr.mxu0 0.0
  %4515 = vmatpush2.msra.mxu0 0.0
  %4516 = vmatprep.subr.mxu0 0.0
  %4517 = vmatpush2.msra.mxu0 0.0
  %4518 = vmatprep.subr.mxu0 0.0
  %4519 = vmatpush2.msra.mxu0 0.0
  %4520 = vmatprep.subr.mxu0 0.0
  %4521 = vmatpush2.msra.mxu0 0.0
  %4522 = vmatprep.subr.mxu0 0.0
  %4523 = vmatpush2.msra.mxu0 0.0
  %4524 = vmatprep.subr.mxu0 0.0
  %4525 = vmatpush2.msra.mxu0 0.0
  %4526 = vmatprep.subr.mxu0 0.0
  %4527 = vmatpush2.msra.mxu0 0.0
  %4528 = vmatprep.subr.mxu0 0.0
  %4529 = vmatpush2.msra.mxu0 0.0
  %4530 = vmatprep.mubr.f32.mxu0 0.0
  %4531 = vmatmul.mubr.f32.gmra.mxu0 %v4464
  %v4532 = vpop.f32.mrf.mxu0
  %v4533 = vadd.f32 %v141, %v4532
  %v4534 = vpop.f32.mrf.mxu0
  %4535 = vdwg.mxu0
  %v4536 = vmax.f32 %v4533, 0.0
  %s4537 = scalar_lea.vmem %s0, 224
  %v4538 = vld [vmem:[%s4537] sm:$0xff]
  %4540 = vrot.lane.b32.xlu0 %v4457, 32
  %v4541 = vpop.permute.xlu0 %4540
  %v4543 = vsel %vm53, %v4538, %v4541
  %v4545 = vsel %vm61, %v4543, 0
  %4547 = vmatprep.subr.mxu0 0.0
  %4548 = vmatpush1.msra.mxu0 0.0
  %4549 = vmatprep.subr.mxu0 0.0
  %4550 = vmatpush1.msra.mxu0 0.0
  %4551 = vmatprep.subr.mxu0 0.0
  %4552 = vmatpush1.msra.mxu0 0.0
  %4553 = vmatprep.subr.mxu0 0.0
  %4554 = vmatpush1.msra.mxu0 0.0
  %4555 = vmatprep.subr.mxu0 0.0
  %4556 = vmatpush1.msra.mxu0 0.0
  %4557 = vmatprep.subr.mxu0 0.0
  %4558 = vmatpush1.msra.mxu0 0.0
  %4559 = vmatprep.subr.mxu0 0.0
  %4560 = vmatpush1.msra.mxu0 0.0
  %4561 = vmatprep.subr.mxu0 0.0
  %4562 = vmatpush1.msra.mxu0 0.0
  %4563 = vmatprep.subr.mxu0 0.0
  %4564 = vmatpush1.msra.mxu0 %v41
  %4565 = vmatprep.subr.mxu0 0.0
  %4566 = vmatpush1.msra.mxu0 %v40
  %4567 = vmatprep.subr.mxu0 0.0
  %4568 = vmatpush1.msra.mxu0 %v39
  %4569 = vmatprep.subr.mxu0 0.0
  %4570 = vmatpush1.msra.mxu0 %v38
  %4571 = vmatprep.subr.mxu0 0.0
  %4572 = vmatpush1.msra.mxu0 %v37
  %4573 = vmatprep.subr.mxu0 0.0
  %4574 = vmatpush1.msra.mxu0 %v36
  %4575 = vmatprep.subr.mxu0 0.0
  %4576 = vmatpush1.msra.mxu0 %v35
  %4577 = vmatprep.subr.mxu0 0.0
  %4578 = vmatpush1.msra.mxu0 %v34
  %4579 = vmatprep.subr.mxu0 0.0
  %4580 = vmatpush2.msra.mxu0 0.0
  %4581 = vmatprep.subr.mxu0 0.0
  %4582 = vmatpush2.msra.mxu0 0.0
  %4583 = vmatprep.subr.mxu0 0.0
  %4584 = vmatpush2.msra.mxu0 0.0
  %4585 = vmatprep.subr.mxu0 0.0
  %4586 = vmatpush2.msra.mxu0 0.0
  %4587 = vmatprep.subr.mxu0 0.0
  %4588 = vmatpush2.msra.mxu0 0.0
  %4589 = vmatprep.subr.mxu0 0.0
  %4590 = vmatpush2.msra.mxu0 0.0
  %4591 = vmatprep.subr.mxu0 0.0
  %4592 = vmatpush2.msra.mxu0 0.0
  %4593 = vmatprep.subr.mxu0 0.0
  %4594 = vmatpush2.msra.mxu0 0.0
  %4595 = vmatprep.subr.mxu0 0.0
  %4596 = vmatpush2.msra.mxu0 0.0
  %4597 = vmatprep.subr.mxu0 0.0
  %4598 = vmatpush2.msra.mxu0 0.0
  %4599 = vmatprep.subr.mxu0 0.0
  %4600 = vmatpush2.msra.mxu0 0.0
  %4601 = vmatprep.subr.mxu0 0.0
  %4602 = vmatpush2.msra.mxu0 0.0
  %4603 = vmatprep.subr.mxu0 0.0
  %4604 = vmatpush2.msra.mxu0 0.0
  %4605 = vmatprep.subr.mxu0 0.0
  %4606 = vmatpush2.msra.mxu0 0.0
  %4607 = vmatprep.subr.mxu0 0.0
  %4608 = vmatpush2.msra.mxu0 0.0
  %4609 = vmatprep.subr.mxu0 0.0
  %4610 = vmatpush2.msra.mxu0 0.0
  %4611 = vmatprep.mubr.f32.mxu0 0.0
  %4612 = vmatmul.mubr.f32.gmra.mxu0 %v4545
  %v4613 = vpop.f32.mrf.mxu0
  %v4614 = vadd.f32 %v59, %v4613
  %v4615 = vpop.f32.mrf.mxu0
  %4616 = vdwg.mxu0
  %v4617 = vmax.f32 %v4614, 0.0
  %4619 = vrot.lane.b32.xlu0 %v4536, 32
  %v4620 = vpop.permute.xlu0 %4619
  %v4622 = vsel %vm53, %v4617, %v4620
  %v4624 = vsel %vm61, %v4622, 0
  %4626 = vmatprep.subr.mxu0 0.0
  %4627 = vmatpush1.msra.mxu0 0.0
  %4628 = vmatprep.subr.mxu0 0.0
  %4629 = vmatpush1.msra.mxu0 0.0
  %4630 = vmatprep.subr.mxu0 0.0
  %4631 = vmatpush1.msra.mxu0 0.0
  %4632 = vmatprep.subr.mxu0 0.0
  %4633 = vmatpush1.msra.mxu0 0.0
  %4634 = vmatprep.subr.mxu0 0.0
  %4635 = vmatpush1.msra.mxu0 0.0
  %4636 = vmatprep.subr.mxu0 0.0
  %4637 = vmatpush1.msra.mxu0 0.0
  %4638 = vmatprep.subr.mxu0 0.0
  %4639 = vmatpush1.msra.mxu0 0.0
  %4640 = vmatprep.subr.mxu0 0.0
  %4641 = vmatpush1.msra.mxu0 0.0
  %4642 = vmatprep.subr.mxu0 0.0
  %4643 = vmatpush1.msra.mxu0 %v49
  %4644 = vmatprep.subr.mxu0 0.0
  %4645 = vmatpush1.msra.mxu0 %v48
  %4646 = vmatprep.subr.mxu0 0.0
  %4647 = vmatpush1.msra.mxu0 %v47
  %4648 = vmatprep.subr.mxu0 0.0
  %4649 = vmatpush1.msra.mxu0 %v46
  %4650 = vmatprep.subr.mxu0 0.0
  %4651 = vmatpush1.msra.mxu0 %v45
  %4652 = vmatprep.subr.mxu0 0.0
  %4653 = vmatpush1.msra.mxu0 %v44
  %4654 = vmatprep.subr.mxu0 0.0
  %4655 = vmatpush1.msra.mxu0 %v43
  %4656 = vmatprep.subr.mxu0 0.0
  %4657 = vmatpush1.msra.mxu0 %v42
  %4658 = vmatprep.subr.mxu0 0.0
  %4659 = vmatpush2.msra.mxu0 0.0
  %4660 = vmatprep.subr.mxu0 0.0
  %4661 = vmatpush2.msra.mxu0 0.0
  %4662 = vmatprep.subr.mxu0 0.0
  %4663 = vmatpush2.msra.mxu0 0.0
  %4664 = vmatprep.subr.mxu0 0.0
  %4665 = vmatpush2.msra.mxu0 0.0
  %4666 = vmatprep.subr.mxu0 0.0
  %4667 = vmatpush2.msra.mxu0 0.0
  %4668 = vmatprep.subr.mxu0 0.0
  %4669 = vmatpush2.msra.mxu0 0.0
  %4670 = vmatprep.subr.mxu0 0.0
  %4671 = vmatpush2.msra.mxu0 0.0
  %4672 = vmatprep.subr.mxu0 0.0
  %4673 = vmatpush2.msra.mxu0 0.0
  %4674 = vmatprep.subr.mxu0 0.0
  %4675 = vmatpush2.msra.mxu0 0.0
  %4676 = vmatprep.subr.mxu0 0.0
  %4677 = vmatpush2.msra.mxu0 0.0
  %4678 = vmatprep.subr.mxu0 0.0
  %4679 = vmatpush2.msra.mxu0 0.0
  %4680 = vmatprep.subr.mxu0 0.0
  %4681 = vmatpush2.msra.mxu0 0.0
  %4682 = vmatprep.subr.mxu0 0.0
  %4683 = vmatpush2.msra.mxu0 0.0
  %4684 = vmatprep.subr.mxu0 0.0
  %4685 = vmatpush2.msra.mxu0 0.0
  %4686 = vmatprep.subr.mxu0 0.0
  %4687 = vmatpush2.msra.mxu0 0.0
  %4688 = vmatprep.subr.mxu0 0.0
  %4689 = vmatpush2.msra.mxu0 0.0
  %4690 = vmatprep.mubr.f32.mxu0 0.0
  %4691 = vmatmul.mubr.f32.gmra.mxu0 %v4624
  %v4692 = vpop.f32.mrf.mxu0
  %v4693 = vadd.f32 %v141, %v4692
  %v4694 = vpop.f32.mrf.mxu0
  %4695 = vdwg.mxu0
  %v4696 = vmax.f32 %v4693, 0.0
  %s4697 = scalar_lea.vmem %s0, 232
  %v4698 = vld [vmem:[%s4697] sm:$0xff]
  %4700 = vrot.lane.b32.xlu0 %v4617, 32
  %v4701 = vpop.permute.xlu0 %4700
  %v4703 = vsel %vm53, %v4698, %v4701
  %v4705 = vsel %vm61, %v4703, 0
  %4707 = vmatprep.subr.mxu0 0.0
  %4708 = vmatpush1.msra.mxu0 0.0
  %4709 = vmatprep.subr.mxu0 0.0
  %4710 = vmatpush1.msra.mxu0 0.0
  %4711 = vmatprep.subr.mxu0 0.0
  %4712 = vmatpush1.msra.mxu0 0.0
  %4713 = vmatprep.subr.mxu0 0.0
  %4714 = vmatpush1.msra.mxu0 0.0
  %4715 = vmatprep.subr.mxu0 0.0
  %4716 = vmatpush1.msra.mxu0 0.0
  %4717 = vmatprep.subr.mxu0 0.0
  %4718 = vmatpush1.msra.mxu0 0.0
  %4719 = vmatprep.subr.mxu0 0.0
  %4720 = vmatpush1.msra.mxu0 0.0
  %4721 = vmatprep.subr.mxu0 0.0
  %4722 = vmatpush1.msra.mxu0 0.0
  %4723 = vmatprep.subr.mxu0 0.0
  %4724 = vmatpush1.msra.mxu0 %v41
  %4725 = vmatprep.subr.mxu0 0.0
  %4726 = vmatpush1.msra.mxu0 %v40
  %4727 = vmatprep.subr.mxu0 0.0
  %4728 = vmatpush1.msra.mxu0 %v39
  %4729 = vmatprep.subr.mxu0 0.0
  %4730 = vmatpush1.msra.mxu0 %v38
  %4731 = vmatprep.subr.mxu0 0.0
  %4732 = vmatpush1.msra.mxu0 %v37
  %4733 = vmatprep.subr.mxu0 0.0
  %4734 = vmatpush1.msra.mxu0 %v36
  %4735 = vmatprep.subr.mxu0 0.0
  %4736 = vmatpush1.msra.mxu0 %v35
  %4737 = vmatprep.subr.mxu0 0.0
  %4738 = vmatpush1.msra.mxu0 %v34
  %4739 = vmatprep.subr.mxu0 0.0
  %4740 = vmatpush2.msra.mxu0 0.0
  %4741 = vmatprep.subr.mxu0 0.0
  %4742 = vmatpush2.msra.mxu0 0.0
  %4743 = vmatprep.subr.mxu0 0.0
  %4744 = vmatpush2.msra.mxu0 0.0
  %4745 = vmatprep.subr.mxu0 0.0
  %4746 = vmatpush2.msra.mxu0 0.0
  %4747 = vmatprep.subr.mxu0 0.0
  %4748 = vmatpush2.msra.mxu0 0.0
  %4749 = vmatprep.subr.mxu0 0.0
  %4750 = vmatpush2.msra.mxu0 0.0
  %4751 = vmatprep.subr.mxu0 0.0
  %4752 = vmatpush2.msra.mxu0 0.0
  %4753 = vmatprep.subr.mxu0 0.0
  %4754 = vmatpush2.msra.mxu0 0.0
  %4755 = vmatprep.subr.mxu0 0.0
  %4756 = vmatpush2.msra.mxu0 0.0
  %4757 = vmatprep.subr.mxu0 0.0
  %4758 = vmatpush2.msra.mxu0 0.0
  %4759 = vmatprep.subr.mxu0 0.0
  %4760 = vmatpush2.msra.mxu0 0.0
  %4761 = vmatprep.subr.mxu0 0.0
  %4762 = vmatpush2.msra.mxu0 0.0
  %4763 = vmatprep.subr.mxu0 0.0
  %4764 = vmatpush2.msra.mxu0 0.0
  %4765 = vmatprep.subr.mxu0 0.0
  %4766 = vmatpush2.msra.mxu0 0.0
  %4767 = vmatprep.subr.mxu0 0.0
  %4768 = vmatpush2.msra.mxu0 0.0
  %4769 = vmatprep.subr.mxu0 0.0
  %4770 = vmatpush2.msra.mxu0 0.0
  %4771 = vmatprep.mubr.f32.mxu0 0.0
  %4772 = vmatmul.mubr.f32.gmra.mxu0 %v4705
  %v4773 = vpop.f32.mrf.mxu0
  %v4774 = vadd.f32 %v59, %v4773
  %v4775 = vpop.f32.mrf.mxu0
  %4776 = vdwg.mxu0
  %v4777 = vmax.f32 %v4774, 0.0
  %4779 = vrot.lane.b32.xlu0 %v4696, 32
  %v4780 = vpop.permute.xlu0 %4779
  %v4782 = vsel %vm53, %v4777, %v4780
  %v4784 = vsel %vm61, %v4782, 0
  %4786 = vmatprep.subr.mxu0 0.0
  %4787 = vmatpush1.msra.mxu0 0.0
  %4788 = vmatprep.subr.mxu0 0.0
  %4789 = vmatpush1.msra.mxu0 0.0
  %4790 = vmatprep.subr.mxu0 0.0
  %4791 = vmatpush1.msra.mxu0 0.0
  %4792 = vmatprep.subr.mxu0 0.0
  %4793 = vmatpush1.msra.mxu0 0.0
  %4794 = vmatprep.subr.mxu0 0.0
  %4795 = vmatpush1.msra.mxu0 0.0
  %4796 = vmatprep.subr.mxu0 0.0
  %4797 = vmatpush1.msra.mxu0 0.0
  %4798 = vmatprep.subr.mxu0 0.0
  %4799 = vmatpush1.msra.mxu0 0.0
  %4800 = vmatprep.subr.mxu0 0.0
  %4801 = vmatpush1.msra.mxu0 0.0
  %4802 = vmatprep.subr.mxu0 0.0
  %4803 = vmatpush1.msra.mxu0 %v49
  %4804 = vmatprep.subr.mxu0 0.0
  %4805 = vmatpush1.msra.mxu0 %v48
  %4806 = vmatprep.subr.mxu0 0.0
  %4807 = vmatpush1.msra.mxu0 %v47
  %4808 = vmatprep.subr.mxu0 0.0
  %4809 = vmatpush1.msra.mxu0 %v46
  %4810 = vmatprep.subr.mxu0 0.0
  %4811 = vmatpush1.msra.mxu0 %v45
  %4812 = vmatprep.subr.mxu0 0.0
  %4813 = vmatpush1.msra.mxu0 %v44
  %4814 = vmatprep.subr.mxu0 0.0
  %4815 = vmatpush1.msra.mxu0 %v43
  %4816 = vmatprep.subr.mxu0 0.0
  %4817 = vmatpush1.msra.mxu0 %v42
  %4818 = vmatprep.subr.mxu0 0.0
  %4819 = vmatpush2.msra.mxu0 0.0
  %4820 = vmatprep.subr.mxu0 0.0
  %4821 = vmatpush2.msra.mxu0 0.0
  %4822 = vmatprep.subr.mxu0 0.0
  %4823 = vmatpush2.msra.mxu0 0.0
  %4824 = vmatprep.subr.mxu0 0.0
  %4825 = vmatpush2.msra.mxu0 0.0
  %4826 = vmatprep.subr.mxu0 0.0
  %4827 = vmatpush2.msra.mxu0 0.0
  %4828 = vmatprep.subr.mxu0 0.0
  %4829 = vmatpush2.msra.mxu0 0.0
  %4830 = vmatprep.subr.mxu0 0.0
  %4831 = vmatpush2.msra.mxu0 0.0
  %4832 = vmatprep.subr.mxu0 0.0
  %4833 = vmatpush2.msra.mxu0 0.0
  %4834 = vmatprep.subr.mxu0 0.0
  %4835 = vmatpush2.msra.mxu0 0.0
  %4836 = vmatprep.subr.mxu0 0.0
  %4837 = vmatpush2.msra.mxu0 0.0
  %4838 = vmatprep.subr.mxu0 0.0
  %4839 = vmatpush2.msra.mxu0 0.0
  %4840 = vmatprep.subr.mxu0 0.0
  %4841 = vmatpush2.msra.mxu0 0.0
  %4842 = vmatprep.subr.mxu0 0.0
  %4843 = vmatpush2.msra.mxu0 0.0
  %4844 = vmatprep.subr.mxu0 0.0
  %4845 = vmatpush2.msra.mxu0 0.0
  %4846 = vmatprep.subr.mxu0 0.0
  %4847 = vmatpush2.msra.mxu0 0.0
  %4848 = vmatprep.subr.mxu0 0.0
  %4849 = vmatpush2.msra.mxu0 0.0
  %4850 = vmatprep.mubr.f32.mxu0 0.0
  %4851 = vmatmul.mubr.f32.gmra.mxu0 %v4784
  %v4852 = vpop.f32.mrf.mxu0
  %v4853 = vadd.f32 %v141, %v4852
  %v4854 = vpop.f32.mrf.mxu0
  %4855 = vdwg.mxu0
  %v4856 = vmax.f32 %v4853, 0.0
  %s4857 = scalar_lea.vmem %s0, 240
  %v4858 = vld [vmem:[%s4857] sm:$0xff]
  %4860 = vrot.lane.b32.xlu0 %v4777, 32
  %v4861 = vpop.permute.xlu0 %4860
  %v4863 = vsel %vm53, %v4858, %v4861
  %v4865 = vsel %vm61, %v4863, 0
  %4867 = vmatprep.subr.mxu0 0.0
  %4868 = vmatpush1.msra.mxu0 0.0
  %4869 = vmatprep.subr.mxu0 0.0
  %4870 = vmatpush1.msra.mxu0 0.0
  %4871 = vmatprep.subr.mxu0 0.0
  %4872 = vmatpush1.msra.mxu0 0.0
  %4873 = vmatprep.subr.mxu0 0.0
  %4874 = vmatpush1.msra.mxu0 0.0
  %4875 = vmatprep.subr.mxu0 0.0
  %4876 = vmatpush1.msra.mxu0 0.0
  %4877 = vmatprep.subr.mxu0 0.0
  %4878 = vmatpush1.msra.mxu0 0.0
  %4879 = vmatprep.subr.mxu0 0.0
  %4880 = vmatpush1.msra.mxu0 0.0
  %4881 = vmatprep.subr.mxu0 0.0
  %4882 = vmatpush1.msra.mxu0 0.0
  %4883 = vmatprep.subr.mxu0 0.0
  %4884 = vmatpush1.msra.mxu0 %v41
  %4885 = vmatprep.subr.mxu0 0.0
  %4886 = vmatpush1.msra.mxu0 %v40
  %4887 = vmatprep.subr.mxu0 0.0
  %4888 = vmatpush1.msra.mxu0 %v39
  %4889 = vmatprep.subr.mxu0 0.0
  %4890 = vmatpush1.msra.mxu0 %v38
  %4891 = vmatprep.subr.mxu0 0.0
  %4892 = vmatpush1.msra.mxu0 %v37
  %4893 = vmatprep.subr.mxu0 0.0
  %4894 = vmatpush1.msra.mxu0 %v36
  %4895 = vmatprep.subr.mxu0 0.0
  %4896 = vmatpush1.msra.mxu0 %v35
  %4897 = vmatprep.subr.mxu0 0.0
  %4898 = vmatpush1.msra.mxu0 %v34
  %4899 = vmatprep.subr.mxu0 0.0
  %4900 = vmatpush2.msra.mxu0 0.0
  %4901 = vmatprep.subr.mxu0 0.0
  %4902 = vmatpush2.msra.mxu0 0.0
  %4903 = vmatprep.subr.mxu0 0.0
  %4904 = vmatpush2.msra.mxu0 0.0
  %4905 = vmatprep.subr.mxu0 0.0
  %4906 = vmatpush2.msra.mxu0 0.0
  %4907 = vmatprep.subr.mxu0 0.0
  %4908 = vmatpush2.msra.mxu0 0.0
  %4909 = vmatprep.subr.mxu0 0.0
  %4910 = vmatpush2.msra.mxu0 0.0
  %4911 = vmatprep.subr.mxu0 0.0
  %4912 = vmatpush2.msra.mxu0 0.0
  %4913 = vmatprep.subr.mxu0 0.0
  %4914 = vmatpush2.msra.mxu0 0.0
  %4915 = vmatprep.subr.mxu0 0.0
  %4916 = vmatpush2.msra.mxu0 0.0
  %4917 = vmatprep.subr.mxu0 0.0
  %4918 = vmatpush2.msra.mxu0 0.0
  %4919 = vmatprep.subr.mxu0 0.0
  %4920 = vmatpush2.msra.mxu0 0.0
  %4921 = vmatprep.subr.mxu0 0.0
  %4922 = vmatpush2.msra.mxu0 0.0
  %4923 = vmatprep.subr.mxu0 0.0
  %4924 = vmatpush2.msra.mxu0 0.0
  %4925 = vmatprep.subr.mxu0 0.0
  %4926 = vmatpush2.msra.mxu0 0.0
  %4927 = vmatprep.subr.mxu0 0.0
  %4928 = vmatpush2.msra.mxu0 0.0
  %4929 = vmatprep.subr.mxu0 0.0
  %4930 = vmatpush2.msra.mxu0 0.0
  %4931 = vmatprep.mubr.f32.mxu0 0.0
  %4932 = vmatmul.mubr.f32.gmra.mxu0 %v4865
  %v4933 = vpop.f32.mrf.mxu0
  %v4934 = vadd.f32 %v59, %v4933
  %v4935 = vpop.f32.mrf.mxu0
  %4936 = vdwg.mxu0
  %v4937 = vmax.f32 %v4934, 0.0
  %4939 = vrot.lane.b32.xlu0 %v4856, 32
  %v4940 = vpop.permute.xlu0 %4939
  %v4942 = vsel %vm53, %v4937, %v4940
  %v4944 = vsel %vm61, %v4942, 0
  %4946 = vmatprep.subr.mxu0 0.0
  %4947 = vmatpush1.msra.mxu0 0.0
  %4948 = vmatprep.subr.mxu0 0.0
  %4949 = vmatpush1.msra.mxu0 0.0
  %4950 = vmatprep.subr.mxu0 0.0
  %4951 = vmatpush1.msra.mxu0 0.0
  %4952 = vmatprep.subr.mxu0 0.0
  %4953 = vmatpush1.msra.mxu0 0.0
  %4954 = vmatprep.subr.mxu0 0.0
  %4955 = vmatpush1.msra.mxu0 0.0
  %4956 = vmatprep.subr.mxu0 0.0
  %4957 = vmatpush1.msra.mxu0 0.0
  %4958 = vmatprep.subr.mxu0 0.0
  %4959 = vmatpush1.msra.mxu0 0.0
  %4960 = vmatprep.subr.mxu0 0.0
  %4961 = vmatpush1.msra.mxu0 0.0
  %4962 = vmatprep.subr.mxu0 0.0
  %4963 = vmatpush1.msra.mxu0 %v49
  %4964 = vmatprep.subr.mxu0 0.0
  %4965 = vmatpush1.msra.mxu0 %v48
  %4966 = vmatprep.subr.mxu0 0.0
  %4967 = vmatpush1.msra.mxu0 %v47
  %4968 = vmatprep.subr.mxu0 0.0
  %4969 = vmatpush1.msra.mxu0 %v46
  %4970 = vmatprep.subr.mxu0 0.0
  %4971 = vmatpush1.msra.mxu0 %v45
  %4972 = vmatprep.subr.mxu0 0.0
  %4973 = vmatpush1.msra.mxu0 %v44
  %4974 = vmatprep.subr.mxu0 0.0
  %4975 = vmatpush1.msra.mxu0 %v43
  %4976 = vmatprep.subr.mxu0 0.0
  %4977 = vmatpush1.msra.mxu0 %v42
  %4978 = vmatprep.subr.mxu0 0.0
  %4979 = vmatpush2.msra.mxu0 0.0
  %4980 = vmatprep.subr.mxu0 0.0
  %4981 = vmatpush2.msra.mxu0 0.0
  %4982 = vmatprep.subr.mxu0 0.0
  %4983 = vmatpush2.msra.mxu0 0.0
  %4984 = vmatprep.subr.mxu0 0.0
  %4985 = vmatpush2.msra.mxu0 0.0
  %4986 = vmatprep.subr.mxu0 0.0
  %4987 = vmatpush2.msra.mxu0 0.0
  %4988 = vmatprep.subr.mxu0 0.0
  %4989 = vmatpush2.msra.mxu0 0.0
  %4990 = vmatprep.subr.mxu0 0.0
  %4991 = vmatpush2.msra.mxu0 0.0
  %4992 = vmatprep.subr.mxu0 0.0
  %4993 = vmatpush2.msra.mxu0 0.0
  %4994 = vmatprep.subr.mxu0 0.0
  %4995 = vmatpush2.msra.mxu0 0.0
  %4996 = vmatprep.subr.mxu0 0.0
  %4997 = vmatpush2.msra.mxu0 0.0
  %4998 = vmatprep.subr.mxu0 0.0
  %4999 = vmatpush2.msra.mxu0 0.0
  %5000 = vmatprep.subr.mxu0 0.0
  %5001 = vmatpush2.msra.mxu0 0.0
  %5002 = vmatprep.subr.mxu0 0.0
  %5003 = vmatpush2.msra.mxu0 0.0
  %5004 = vmatprep.subr.mxu0 0.0
  %5005 = vmatpush2.msra.mxu0 0.0
  %5006 = vmatprep.subr.mxu0 0.0
  %5007 = vmatpush2.msra.mxu0 0.0
  %5008 = vmatprep.subr.mxu0 0.0
  %5009 = vmatpush2.msra.mxu0 0.0
  %5010 = vmatprep.mubr.f32.mxu0 0.0
  %5011 = vmatmul.mubr.f32.gmra.mxu0 %v4944
  %v5012 = vpop.f32.mrf.mxu0
  %v5013 = vadd.f32 %v141, %v5012
  %v5014 = vpop.f32.mrf.mxu0
  %5015 = vdwg.mxu0
  %v5016 = vmax.f32 %v5013, 0.0
  %s5017 = scalar_lea.vmem %s0, 248
  %v5018 = vld [vmem:[%s5017] sm:$0xff]
  %5020 = vrot.lane.b32.xlu0 %v4937, 32
  %v5021 = vpop.permute.xlu0 %5020
  %v5023 = vsel %vm53, %v5018, %v5021
  %v5025 = vsel %vm61, %v5023, 0
  %5027 = vmatprep.subr.mxu0 0.0
  %5028 = vmatpush1.msra.mxu0 0.0
  %5029 = vmatprep.subr.mxu0 0.0
  %5030 = vmatpush1.msra.mxu0 0.0
  %5031 = vmatprep.subr.mxu0 0.0
  %5032 = vmatpush1.msra.mxu0 0.0
  %5033 = vmatprep.subr.mxu0 0.0
  %5034 = vmatpush1.msra.mxu0 0.0
  %5035 = vmatprep.subr.mxu0 0.0
  %5036 = vmatpush1.msra.mxu0 0.0
  %5037 = vmatprep.subr.mxu0 0.0
  %5038 = vmatpush1.msra.mxu0 0.0
  %5039 = vmatprep.subr.mxu0 0.0
  %5040 = vmatpush1.msra.mxu0 0.0
  %5041 = vmatprep.subr.mxu0 0.0
  %5042 = vmatpush1.msra.mxu0 0.0
  %5043 = vmatprep.subr.mxu0 0.0
  %5044 = vmatpush1.msra.mxu0 %v41
  %5045 = vmatprep.subr.mxu0 0.0
  %5046 = vmatpush1.msra.mxu0 %v40
  %5047 = vmatprep.subr.mxu0 0.0
  %5048 = vmatpush1.msra.mxu0 %v39
  %5049 = vmatprep.subr.mxu0 0.0
  %5050 = vmatpush1.msra.mxu0 %v38
  %5051 = vmatprep.subr.mxu0 0.0
  %5052 = vmatpush1.msra.mxu0 %v37
  %5053 = vmatprep.subr.mxu0 0.0
  %5054 = vmatpush1.msra.mxu0 %v36
  %5055 = vmatprep.subr.mxu0 0.0
  %5056 = vmatpush1.msra.mxu0 %v35
  %5057 = vmatprep.subr.mxu0 0.0
  %5058 = vmatpush1.msra.mxu0 %v34
  %5059 = vmatprep.subr.mxu0 0.0
  %5060 = vmatpush2.msra.mxu0 0.0
  %5061 = vmatprep.subr.mxu0 0.0
  %5062 = vmatpush2.msra.mxu0 0.0
  %5063 = vmatprep.subr.mxu0 0.0
  %5064 = vmatpush2.msra.mxu0 0.0
  %5065 = vmatprep.subr.mxu0 0.0
  %5066 = vmatpush2.msra.mxu0 0.0
  %5067 = vmatprep.subr.mxu0 0.0
  %5068 = vmatpush2.msra.mxu0 0.0
  %5069 = vmatprep.subr.mxu0 0.0
  %5070 = vmatpush2.msra.mxu0 0.0
  %5071 = vmatprep.subr.mxu0 0.0
  %5072 = vmatpush2.msra.mxu0 0.0
  %5073 = vmatprep.subr.mxu0 0.0
  %5074 = vmatpush2.msra.mxu0 0.0
  %5075 = vmatprep.subr.mxu0 0.0
  %5076 = vmatpush2.msra.mxu0 0.0
  %5077 = vmatprep.subr.mxu0 0.0
  %5078 = vmatpush2.msra.mxu0 0.0
  %5079 = vmatprep.subr.mxu0 0.0
  %5080 = vmatpush2.msra.mxu0 0.0
  %5081 = vmatprep.subr.mxu0 0.0
  %5082 = vmatpush2.msra.mxu0 0.0
  %5083 = vmatprep.subr.mxu0 0.0
  %5084 = vmatpush2.msra.mxu0 0.0
  %5085 = vmatprep.subr.mxu0 0.0
  %5086 = vmatpush2.msra.mxu0 0.0
  %5087 = vmatprep.subr.mxu0 0.0
  %5088 = vmatpush2.msra.mxu0 0.0
  %5089 = vmatprep.subr.mxu0 0.0
  %5090 = vmatpush2.msra.mxu0 0.0
  %5091 = vmatprep.mubr.f32.mxu0 0.0
  %5092 = vmatmul.mubr.f32.gmra.mxu0 %v5025
  %v5093 = vpop.f32.mrf.mxu0
  %v5094 = vadd.f32 %v59, %v5093
  %v5095 = vpop.f32.mrf.mxu0
  %5096 = vdwg.mxu0
  %v5097 = vmax.f32 %v5094, 0.0
  %5099 = vrot.lane.b32.xlu0 %v5016, 32
  %v5100 = vpop.permute.xlu0 %5099
  %v5102 = vsel %vm53, %v5097, %v5100
  %v5104 = vsel %vm61, %v5102, 0
  %5106 = vmatprep.subr.mxu0 0.0
  %5107 = vmatpush1.msra.mxu0 0.0
  %5108 = vmatprep.subr.mxu0 0.0
  %5109 = vmatpush1.msra.mxu0 0.0
  %5110 = vmatprep.subr.mxu0 0.0
  %5111 = vmatpush1.msra.mxu0 0.0
  %5112 = vmatprep.subr.mxu0 0.0
  %5113 = vmatpush1.msra.mxu0 0.0
  %5114 = vmatprep.subr.mxu0 0.0
  %5115 = vmatpush1.msra.mxu0 0.0
  %5116 = vmatprep.subr.mxu0 0.0
  %5117 = vmatpush1.msra.mxu0 0.0
  %5118 = vmatprep.subr.mxu0 0.0
  %5119 = vmatpush1.msra.mxu0 0.0
  %5120 = vmatprep.subr.mxu0 0.0
  %5121 = vmatpush1.msra.mxu0 0.0
  %5122 = vmatprep.subr.mxu0 0.0
  %5123 = vmatpush1.msra.mxu0 %v49
  %5124 = vmatprep.subr.mxu0 0.0
  %5125 = vmatpush1.msra.mxu0 %v48
  %5126 = vmatprep.subr.mxu0 0.0
  %5127 = vmatpush1.msra.mxu0 %v47
  %5128 = vmatprep.subr.mxu0 0.0
  %5129 = vmatpush1.msra.mxu0 %v46
  %5130 = vmatprep.subr.mxu0 0.0
  %5131 = vmatpush1.msra.mxu0 %v45
  %5132 = vmatprep.subr.mxu0 0.0
  %5133 = vmatpush1.msra.mxu0 %v44
  %5134 = vmatprep.subr.mxu0 0.0
  %5135 = vmatpush1.msra.mxu0 %v43
  %5136 = vmatprep.subr.mxu0 0.0
  %5137 = vmatpush1.msra.mxu0 %v42
  %5138 = vmatprep.subr.mxu0 0.0
  %5139 = vmatpush2.msra.mxu0 0.0
  %5140 = vmatprep.subr.mxu0 0.0
  %5141 = vmatpush2.msra.mxu0 0.0
  %5142 = vmatprep.subr.mxu0 0.0
  %5143 = vmatpush2.msra.mxu0 0.0
  %5144 = vmatprep.subr.mxu0 0.0
  %5145 = vmatpush2.msra.mxu0 0.0
  %5146 = vmatprep.subr.mxu0 0.0
  %5147 = vmatpush2.msra.mxu0 0.0
  %5148 = vmatprep.subr.mxu0 0.0
  %5149 = vmatpush2.msra.mxu0 0.0
  %5150 = vmatprep.subr.mxu0 0.0
  %5151 = vmatpush2.msra.mxu0 0.0
  %5152 = vmatprep.subr.mxu0 0.0
  %5153 = vmatpush2.msra.mxu0 0.0
  %5154 = vmatprep.subr.mxu0 0.0
  %5155 = vmatpush2.msra.mxu0 0.0
  %5156 = vmatprep.subr.mxu0 0.0
  %5157 = vmatpush2.msra.mxu0 0.0
  %5158 = vmatprep.subr.mxu0 0.0
  %5159 = vmatpush2.msra.mxu0 0.0
  %5160 = vmatprep.subr.mxu0 0.0
  %5161 = vmatpush2.msra.mxu0 0.0
  %5162 = vmatprep.subr.mxu0 0.0
  %5163 = vmatpush2.msra.mxu0 0.0
  %5164 = vmatprep.subr.mxu0 0.0
  %5165 = vmatpush2.msra.mxu0 0.0
  %5166 = vmatprep.subr.mxu0 0.0
  %5167 = vmatpush2.msra.mxu0 0.0
  %5168 = vmatprep.subr.mxu0 0.0
  %5169 = vmatpush2.msra.mxu0 0.0
  %5170 = vmatprep.mubr.f32.mxu0 0.0
  %5171 = vmatmul.mubr.f32.gmra.mxu0 %v5104
  %v5172 = vpop.f32.mrf.mxu0
  %v5173 = vadd.f32 %v141, %v5172
  %v5174 = vpop.f32.mrf.mxu0
  %5175 = vdwg.mxu0
  %v5176 = vmax.f32 %v5173, 0.0
  %s5177 = scalar_lea.vmem %s0, 256
  %v5178 = vld [vmem:[%s5177] sm:$0xff]
  %5180 = vrot.lane.b32.xlu0 %v5097, 32
  %v5181 = vpop.permute.xlu0 %5180
  %v5183 = vsel %vm53, %v5178, %v5181
  %v5185 = vsel %vm61, %v5183, 0
  %5187 = vmatprep.subr.mxu0 0.0
  %5188 = vmatpush1.msra.mxu0 0.0
  %5189 = vmatprep.subr.mxu0 0.0
  %5190 = vmatpush1.msra.mxu0 0.0
  %5191 = vmatprep.subr.mxu0 0.0
  %5192 = vmatpush1.msra.mxu0 0.0
  %5193 = vmatprep.subr.mxu0 0.0
  %5194 = vmatpush1.msra.mxu0 0.0
  %5195 = vmatprep.subr.mxu0 0.0
  %5196 = vmatpush1.msra.mxu0 0.0
  %5197 = vmatprep.subr.mxu0 0.0
  %5198 = vmatpush1.msra.mxu0 0.0
  %5199 = vmatprep.subr.mxu0 0.0
  %5200 = vmatpush1.msra.mxu0 0.0
  %5201 = vmatprep.subr.mxu0 0.0
  %5202 = vmatpush1.msra.mxu0 0.0
  %5203 = vmatprep.subr.mxu0 0.0
  %5204 = vmatpush1.msra.mxu0 %v41
  %5205 = vmatprep.subr.mxu0 0.0
  %5206 = vmatpush1.msra.mxu0 %v40
  %5207 = vmatprep.subr.mxu0 0.0
  %5208 = vmatpush1.msra.mxu0 %v39
  %5209 = vmatprep.subr.mxu0 0.0
  %5210 = vmatpush1.msra.mxu0 %v38
  %5211 = vmatprep.subr.mxu0 0.0
  %5212 = vmatpush1.msra.mxu0 %v37
  %5213 = vmatprep.subr.mxu0 0.0
  %5214 = vmatpush1.msra.mxu0 %v36
  %5215 = vmatprep.subr.mxu0 0.0
  %5216 = vmatpush1.msra.mxu0 %v35
  %5217 = vmatprep.subr.mxu0 0.0
  %5218 = vmatpush1.msra.mxu0 %v34
  %5219 = vmatprep.subr.mxu0 0.0
  %5220 = vmatpush2.msra.mxu0 0.0
  %5221 = vmatprep.subr.mxu0 0.0
  %5222 = vmatpush2.msra.mxu0 0.0
  %5223 = vmatprep.subr.mxu0 0.0
  %5224 = vmatpush2.msra.mxu0 0.0
  %5225 = vmatprep.subr.mxu0 0.0
  %5226 = vmatpush2.msra.mxu0 0.0
  %5227 = vmatprep.subr.mxu0 0.0
  %5228 = vmatpush2.msra.mxu0 0.0
  %5229 = vmatprep.subr.mxu0 0.0
  %5230 = vmatpush2.msra.mxu0 0.0
  %5231 = vmatprep.subr.mxu0 0.0
  %5232 = vmatpush2.msra.mxu0 0.0
  %5233 = vmatprep.subr.mxu0 0.0
  %5234 = vmatpush2.msra.mxu0 0.0
  %5235 = vmatprep.subr.mxu0 0.0
  %5236 = vmatpush2.msra.mxu0 0.0
  %5237 = vmatprep.subr.mxu0 0.0
  %5238 = vmatpush2.msra.mxu0 0.0
  %5239 = vmatprep.subr.mxu0 0.0
  %5240 = vmatpush2.msra.mxu0 0.0
  %5241 = vmatprep.subr.mxu0 0.0
  %5242 = vmatpush2.msra.mxu0 0.0
  %5243 = vmatprep.subr.mxu0 0.0
  %5244 = vmatpush2.msra.mxu0 0.0
  %5245 = vmatprep.subr.mxu0 0.0
  %5246 = vmatpush2.msra.mxu0 0.0
  %5247 = vmatprep.subr.mxu0 0.0
  %5248 = vmatpush2.msra.mxu0 0.0
  %5249 = vmatprep.subr.mxu0 0.0
  %5250 = vmatpush2.msra.mxu0 0.0
  %5251 = vmatprep.mubr.f32.mxu0 0.0
  %5252 = vmatmul.mubr.f32.gmra.mxu0 %v5185
  %v5253 = vpop.f32.mrf.mxu0
  %v5254 = vadd.f32 %v59, %v5253
  %v5255 = vpop.f32.mrf.mxu0
  %5256 = vdwg.mxu0
  %v5257 = vmax.f32 %v5254, 0.0
  %5259 = vrot.lane.b32.xlu0 %v5176, 32
  %v5260 = vpop.permute.xlu0 %5259
  %v5262 = vsel %vm53, %v5257, %v5260
  %v5264 = vsel %vm61, %v5262, 0
  %5266 = vmatprep.subr.mxu0 0.0
  %5267 = vmatpush1.msra.mxu0 0.0
  %5268 = vmatprep.subr.mxu0 0.0
  %5269 = vmatpush1.msra.mxu0 0.0
  %5270 = vmatprep.subr.mxu0 0.0
  %5271 = vmatpush1.msra.mxu0 0.0
  %5272 = vmatprep.subr.mxu0 0.0
  %5273 = vmatpush1.msra.mxu0 0.0
  %5274 = vmatprep.subr.mxu0 0.0
  %5275 = vmatpush1.msra.mxu0 0.0
  %5276 = vmatprep.subr.mxu0 0.0
  %5277 = vmatpush1.msra.mxu0 0.0
  %5278 = vmatprep.subr.mxu0 0.0
  %5279 = vmatpush1.msra.mxu0 0.0
  %5280 = vmatprep.subr.mxu0 0.0
  %5281 = vmatpush1.msra.mxu0 0.0
  %5282 = vmatprep.subr.mxu0 0.0
  %5283 = vmatpush1.msra.mxu0 %v49
  %5284 = vmatprep.subr.mxu0 0.0
  %5285 = vmatpush1.msra.mxu0 %v48
  %5286 = vmatprep.subr.mxu0 0.0
  %5287 = vmatpush1.msra.mxu0 %v47
  %5288 = vmatprep.subr.mxu0 0.0
  %5289 = vmatpush1.msra.mxu0 %v46
  %5290 = vmatprep.subr.mxu0 0.0
  %5291 = vmatpush1.msra.mxu0 %v45
  %5292 = vmatprep.subr.mxu0 0.0
  %5293 = vmatpush1.msra.mxu0 %v44
  %5294 = vmatprep.subr.mxu0 0.0
  %5295 = vmatpush1.msra.mxu0 %v43
  %5296 = vmatprep.subr.mxu0 0.0
  %5297 = vmatpush1.msra.mxu0 %v42
  %5298 = vmatprep.subr.mxu0 0.0
  %5299 = vmatpush2.msra.mxu0 0.0
  %5300 = vmatprep.subr.mxu0 0.0
  %5301 = vmatpush2.msra.mxu0 0.0
  %5302 = vmatprep.subr.mxu0 0.0
  %5303 = vmatpush2.msra.mxu0 0.0
  %5304 = vmatprep.subr.mxu0 0.0
  %5305 = vmatpush2.msra.mxu0 0.0
  %5306 = vmatprep.subr.mxu0 0.0
  %5307 = vmatpush2.msra.mxu0 0.0
  %5308 = vmatprep.subr.mxu0 0.0
  %5309 = vmatpush2.msra.mxu0 0.0
  %5310 = vmatprep.subr.mxu0 0.0
  %5311 = vmatpush2.msra.mxu0 0.0
  %5312 = vmatprep.subr.mxu0 0.0
  %5313 = vmatpush2.msra.mxu0 0.0
  %5314 = vmatprep.subr.mxu0 0.0
  %5315 = vmatpush2.msra.mxu0 0.0
  %5316 = vmatprep.subr.mxu0 0.0
  %5317 = vmatpush2.msra.mxu0 0.0
  %5318 = vmatprep.subr.mxu0 0.0
  %5319 = vmatpush2.msra.mxu0 0.0
  %5320 = vmatprep.subr.mxu0 0.0
  %5321 = vmatpush2.msra.mxu0 0.0
  %5322 = vmatprep.subr.mxu0 0.0
  %5323 = vmatpush2.msra.mxu0 0.0
  %5324 = vmatprep.subr.mxu0 0.0
  %5325 = vmatpush2.msra.mxu0 0.0
  %5326 = vmatprep.subr.mxu0 0.0
  %5327 = vmatpush2.msra.mxu0 0.0
  %5328 = vmatprep.subr.mxu0 0.0
  %5329 = vmatpush2.msra.mxu0 0.0
  %5330 = vmatprep.mubr.f32.mxu0 0.0
  %5331 = vmatmul.mubr.f32.gmra.mxu0 %v5264
  %v5332 = vpop.f32.mrf.mxu0
  %v5333 = vadd.f32 %v141, %v5332
  %v5334 = vpop.f32.mrf.mxu0
  %5335 = vdwg.mxu0
  %v5336 = vmax.f32 %v5333, 0.0
  %s5337 = scalar_lea.vmem %s0, 264
  %v5338 = vld [vmem:[%s5337] sm:$0xff]
  %5340 = vrot.lane.b32.xlu0 %v5257, 32
  %v5341 = vpop.permute.xlu0 %5340
  %v5343 = vsel %vm53, %v5338, %v5341
  %v5345 = vsel %vm61, %v5343, 0
  %5347 = vmatprep.subr.mxu0 0.0
  %5348 = vmatpush1.msra.mxu0 0.0
  %5349 = vmatprep.subr.mxu0 0.0
  %5350 = vmatpush1.msra.mxu0 0.0
  %5351 = vmatprep.subr.mxu0 0.0
  %5352 = vmatpush1.msra.mxu0 0.0
  %5353 = vmatprep.subr.mxu0 0.0
  %5354 = vmatpush1.msra.mxu0 0.0
  %5355 = vmatprep.subr.mxu0 0.0
  %5356 = vmatpush1.msra.mxu0 0.0
  %5357 = vmatprep.subr.mxu0 0.0
  %5358 = vmatpush1.msra.mxu0 0.0
  %5359 = vmatprep.subr.mxu0 0.0
  %5360 = vmatpush1.msra.mxu0 0.0
  %5361 = vmatprep.subr.mxu0 0.0
  %5362 = vmatpush1.msra.mxu0 0.0
  %5363 = vmatprep.subr.mxu0 0.0
  %5364 = vmatpush1.msra.mxu0 %v41
  %5365 = vmatprep.subr.mxu0 0.0
  %5366 = vmatpush1.msra.mxu0 %v40
  %5367 = vmatprep.subr.mxu0 0.0
  %5368 = vmatpush1.msra.mxu0 %v39
  %5369 = vmatprep.subr.mxu0 0.0
  %5370 = vmatpush1.msra.mxu0 %v38
  %5371 = vmatprep.subr.mxu0 0.0
  %5372 = vmatpush1.msra.mxu0 %v37
  %5373 = vmatprep.subr.mxu0 0.0
  %5374 = vmatpush1.msra.mxu0 %v36
  %5375 = vmatprep.subr.mxu0 0.0
  %5376 = vmatpush1.msra.mxu0 %v35
  %5377 = vmatprep.subr.mxu0 0.0
  %5378 = vmatpush1.msra.mxu0 %v34
  %5379 = vmatprep.subr.mxu0 0.0
  %5380 = vmatpush2.msra.mxu0 0.0
  %5381 = vmatprep.subr.mxu0 0.0
  %5382 = vmatpush2.msra.mxu0 0.0
  %5383 = vmatprep.subr.mxu0 0.0
  %5384 = vmatpush2.msra.mxu0 0.0
  %5385 = vmatprep.subr.mxu0 0.0
  %5386 = vmatpush2.msra.mxu0 0.0
  %5387 = vmatprep.subr.mxu0 0.0
  %5388 = vmatpush2.msra.mxu0 0.0
  %5389 = vmatprep.subr.mxu0 0.0
  %5390 = vmatpush2.msra.mxu0 0.0
  %5391 = vmatprep.subr.mxu0 0.0
  %5392 = vmatpush2.msra.mxu0 0.0
  %5393 = vmatprep.subr.mxu0 0.0
  %5394 = vmatpush2.msra.mxu0 0.0
  %5395 = vmatprep.subr.mxu0 0.0
  %5396 = vmatpush2.msra.mxu0 0.0
  %5397 = vmatprep.subr.mxu0 0.0
  %5398 = vmatpush2.msra.mxu0 0.0
  %5399 = vmatprep.subr.mxu0 0.0
  %5400 = vmatpush2.msra.mxu0 0.0
  %5401 = vmatprep.subr.mxu0 0.0
  %5402 = vmatpush2.msra.mxu0 0.0
  %5403 = vmatprep.subr.mxu0 0.0
  %5404 = vmatpush2.msra.mxu0 0.0
  %5405 = vmatprep.subr.mxu0 0.0
  %5406 = vmatpush2.msra.mxu0 0.0
  %5407 = vmatprep.subr.mxu0 0.0
  %5408 = vmatpush2.msra.mxu0 0.0
  %5409 = vmatprep.subr.mxu0 0.0
  %5410 = vmatpush2.msra.mxu0 0.0
  %5411 = vmatprep.mubr.f32.mxu0 0.0
  %5412 = vmatmul.mubr.f32.gmra.mxu0 %v5345
  %v5413 = vpop.f32.mrf.mxu0
  %v5414 = vadd.f32 %v59, %v5413
  %v5415 = vpop.f32.mrf.mxu0
  %5416 = vdwg.mxu0
  %v5417 = vmax.f32 %v5414, 0.0
  %5419 = vrot.lane.b32.xlu0 %v5336, 32
  %v5420 = vpop.permute.xlu0 %5419
  %v5422 = vsel %vm53, %v5417, %v5420
  %v5424 = vsel %vm61, %v5422, 0
  %5426 = vmatprep.subr.mxu0 0.0
  %5427 = vmatpush1.msra.mxu0 0.0
  %5428 = vmatprep.subr.mxu0 0.0
  %5429 = vmatpush1.msra.mxu0 0.0
  %5430 = vmatprep.subr.mxu0 0.0
  %5431 = vmatpush1.msra.mxu0 0.0
  %5432 = vmatprep.subr.mxu0 0.0
  %5433 = vmatpush1.msra.mxu0 0.0
  %5434 = vmatprep.subr.mxu0 0.0
  %5435 = vmatpush1.msra.mxu0 0.0
  %5436 = vmatprep.subr.mxu0 0.0
  %5437 = vmatpush1.msra.mxu0 0.0
  %5438 = vmatprep.subr.mxu0 0.0
  %5439 = vmatpush1.msra.mxu0 0.0
  %5440 = vmatprep.subr.mxu0 0.0
  %5441 = vmatpush1.msra.mxu0 0.0
  %5442 = vmatprep.subr.mxu0 0.0
  %5443 = vmatpush1.msra.mxu0 %v49
  %5444 = vmatprep.subr.mxu0 0.0
  %5445 = vmatpush1.msra.mxu0 %v48
  %5446 = vmatprep.subr.mxu0 0.0
  %5447 = vmatpush1.msra.mxu0 %v47
  %5448 = vmatprep.subr.mxu0 0.0
  %5449 = vmatpush1.msra.mxu0 %v46
  %5450 = vmatprep.subr.mxu0 0.0
  %5451 = vmatpush1.msra.mxu0 %v45
  %5452 = vmatprep.subr.mxu0 0.0
  %5453 = vmatpush1.msra.mxu0 %v44
  %5454 = vmatprep.subr.mxu0 0.0
  %5455 = vmatpush1.msra.mxu0 %v43
  %5456 = vmatprep.subr.mxu0 0.0
  %5457 = vmatpush1.msra.mxu0 %v42
  %5458 = vmatprep.subr.mxu0 0.0
  %5459 = vmatpush2.msra.mxu0 0.0
  %5460 = vmatprep.subr.mxu0 0.0
  %5461 = vmatpush2.msra.mxu0 0.0
  %5462 = vmatprep.subr.mxu0 0.0
  %5463 = vmatpush2.msra.mxu0 0.0
  %5464 = vmatprep.subr.mxu0 0.0
  %5465 = vmatpush2.msra.mxu0 0.0
  %5466 = vmatprep.subr.mxu0 0.0
  %5467 = vmatpush2.msra.mxu0 0.0
  %5468 = vmatprep.subr.mxu0 0.0
  %5469 = vmatpush2.msra.mxu0 0.0
  %5470 = vmatprep.subr.mxu0 0.0
  %5471 = vmatpush2.msra.mxu0 0.0
  %5472 = vmatprep.subr.mxu0 0.0
  %5473 = vmatpush2.msra.mxu0 0.0
  %5474 = vmatprep.subr.mxu0 0.0
  %5475 = vmatpush2.msra.mxu0 0.0
  %5476 = vmatprep.subr.mxu0 0.0
  %5477 = vmatpush2.msra.mxu0 0.0
  %5478 = vmatprep.subr.mxu0 0.0
  %5479 = vmatpush2.msra.mxu0 0.0
  %5480 = vmatprep.subr.mxu0 0.0
  %5481 = vmatpush2.msra.mxu0 0.0
  %5482 = vmatprep.subr.mxu0 0.0
  %5483 = vmatpush2.msra.mxu0 0.0
  %5484 = vmatprep.subr.mxu0 0.0
  %5485 = vmatpush2.msra.mxu0 0.0
  %5486 = vmatprep.subr.mxu0 0.0
  %5487 = vmatpush2.msra.mxu0 0.0
  %5488 = vmatprep.subr.mxu0 0.0
  %5489 = vmatpush2.msra.mxu0 0.0
  %5490 = vmatprep.mubr.f32.mxu0 0.0
  %5491 = vmatmul.mubr.f32.gmra.mxu0 %v5424
  %v5492 = vpop.f32.mrf.mxu0
  %v5493 = vadd.f32 %v141, %v5492
  %v5494 = vpop.f32.mrf.mxu0
  %5495 = vdwg.mxu0
  %v5496 = vmax.f32 %v5493, 0.0
  %s5497 = scalar_lea.vmem %s0, 272
  %v5498 = vld [vmem:[%s5497] sm:$0xff]
  %5500 = vrot.lane.b32.xlu0 %v5417, 32
  %v5501 = vpop.permute.xlu0 %5500
  %v5503 = vsel %vm53, %v5498, %v5501
  %v5505 = vsel %vm61, %v5503, 0
  %5507 = vmatprep.subr.mxu0 0.0
  %5508 = vmatpush1.msra.mxu0 0.0
  %5509 = vmatprep.subr.mxu0 0.0
  %5510 = vmatpush1.msra.mxu0 0.0
  %5511 = vmatprep.subr.mxu0 0.0
  %5512 = vmatpush1.msra.mxu0 0.0
  %5513 = vmatprep.subr.mxu0 0.0
  %5514 = vmatpush1.msra.mxu0 0.0
  %5515 = vmatprep.subr.mxu0 0.0
  %5516 = vmatpush1.msra.mxu0 0.0
  %5517 = vmatprep.subr.mxu0 0.0
  %5518 = vmatpush1.msra.mxu0 0.0
  %5519 = vmatprep.subr.mxu0 0.0
  %5520 = vmatpush1.msra.mxu0 0.0
  %5521 = vmatprep.subr.mxu0 0.0
  %5522 = vmatpush1.msra.mxu0 0.0
  %5523 = vmatprep.subr.mxu0 0.0
  %5524 = vmatpush1.msra.mxu0 %v41
  %5525 = vmatprep.subr.mxu0 0.0
  %5526 = vmatpush1.msra.mxu0 %v40
  %5527 = vmatprep.subr.mxu0 0.0
  %5528 = vmatpush1.msra.mxu0 %v39
  %5529 = vmatprep.subr.mxu0 0.0
  %5530 = vmatpush1.msra.mxu0 %v38
  %5531 = vmatprep.subr.mxu0 0.0
  %5532 = vmatpush1.msra.mxu0 %v37
  %5533 = vmatprep.subr.mxu0 0.0
  %5534 = vmatpush1.msra.mxu0 %v36
  %5535 = vmatprep.subr.mxu0 0.0
  %5536 = vmatpush1.msra.mxu0 %v35
  %5537 = vmatprep.subr.mxu0 0.0
  %5538 = vmatpush1.msra.mxu0 %v34
  %5539 = vmatprep.subr.mxu0 0.0
  %5540 = vmatpush2.msra.mxu0 0.0
  %5541 = vmatprep.subr.mxu0 0.0
  %5542 = vmatpush2.msra.mxu0 0.0
  %5543 = vmatprep.subr.mxu0 0.0
  %5544 = vmatpush2.msra.mxu0 0.0
  %5545 = vmatprep.subr.mxu0 0.0
  %5546 = vmatpush2.msra.mxu0 0.0
  %5547 = vmatprep.subr.mxu0 0.0
  %5548 = vmatpush2.msra.mxu0 0.0
  %5549 = vmatprep.subr.mxu0 0.0
  %5550 = vmatpush2.msra.mxu0 0.0
  %5551 = vmatprep.subr.mxu0 0.0
  %5552 = vmatpush2.msra.mxu0 0.0
  %5553 = vmatprep.subr.mxu0 0.0
  %5554 = vmatpush2.msra.mxu0 0.0
  %5555 = vmatprep.subr.mxu0 0.0
  %5556 = vmatpush2.msra.mxu0 0.0
  %5557 = vmatprep.subr.mxu0 0.0
  %5558 = vmatpush2.msra.mxu0 0.0
  %5559 = vmatprep.subr.mxu0 0.0
  %5560 = vmatpush2.msra.mxu0 0.0
  %5561 = vmatprep.subr.mxu0 0.0
  %5562 = vmatpush2.msra.mxu0 0.0
  %5563 = vmatprep.subr.mxu0 0.0
  %5564 = vmatpush2.msra.mxu0 0.0
  %5565 = vmatprep.subr.mxu0 0.0
  %5566 = vmatpush2.msra.mxu0 0.0
  %5567 = vmatprep.subr.mxu0 0.0
  %5568 = vmatpush2.msra.mxu0 0.0
  %5569 = vmatprep.subr.mxu0 0.0
  %5570 = vmatpush2.msra.mxu0 0.0
  %5571 = vmatprep.mubr.f32.mxu0 0.0
  %5572 = vmatmul.mubr.f32.gmra.mxu0 %v5505
  %v5573 = vpop.f32.mrf.mxu0
  %v5574 = vadd.f32 %v59, %v5573
  %v5575 = vpop.f32.mrf.mxu0
  %5576 = vdwg.mxu0
  %v5577 = vmax.f32 %v5574, 0.0
  %5579 = vrot.lane.b32.xlu0 %v5496, 32
  %v5580 = vpop.permute.xlu0 %5579
  %v5582 = vsel %vm53, %v5577, %v5580
  %v5584 = vsel %vm61, %v5582, 0
  %5586 = vmatprep.subr.mxu0 0.0
  %5587 = vmatpush1.msra.mxu0 0.0
  %5588 = vmatprep.subr.mxu0 0.0
  %5589 = vmatpush1.msra.mxu0 0.0
  %5590 = vmatprep.subr.mxu0 0.0
  %5591 = vmatpush1.msra.mxu0 0.0
  %5592 = vmatprep.subr.mxu0 0.0
  %5593 = vmatpush1.msra.mxu0 0.0
  %5594 = vmatprep.subr.mxu0 0.0
  %5595 = vmatpush1.msra.mxu0 0.0
  %5596 = vmatprep.subr.mxu0 0.0
  %5597 = vmatpush1.msra.mxu0 0.0
  %5598 = vmatprep.subr.mxu0 0.0
  %5599 = vmatpush1.msra.mxu0 0.0
  %5600 = vmatprep.subr.mxu0 0.0
  %5601 = vmatpush1.msra.mxu0 0.0
  %5602 = vmatprep.subr.mxu0 0.0
  %5603 = vmatpush1.msra.mxu0 %v49
  %5604 = vmatprep.subr.mxu0 0.0
  %5605 = vmatpush1.msra.mxu0 %v48
  %5606 = vmatprep.subr.mxu0 0.0
  %5607 = vmatpush1.msra.mxu0 %v47
  %5608 = vmatprep.subr.mxu0 0.0
  %5609 = vmatpush1.msra.mxu0 %v46
  %5610 = vmatprep.subr.mxu0 0.0
  %5611 = vmatpush1.msra.mxu0 %v45
  %5612 = vmatprep.subr.mxu0 0.0
  %5613 = vmatpush1.msra.mxu0 %v44
  %5614 = vmatprep.subr.mxu0 0.0
  %5615 = vmatpush1.msra.mxu0 %v43
  %5616 = vmatprep.subr.mxu0 0.0
  %5617 = vmatpush1.msra.mxu0 %v42
  %5618 = vmatprep.subr.mxu0 0.0
  %5619 = vmatpush2.msra.mxu0 0.0
  %5620 = vmatprep.subr.mxu0 0.0
  %5621 = vmatpush2.msra.mxu0 0.0
  %5622 = vmatprep.subr.mxu0 0.0
  %5623 = vmatpush2.msra.mxu0 0.0
  %5624 = vmatprep.subr.mxu0 0.0
  %5625 = vmatpush2.msra.mxu0 0.0
  %5626 = vmatprep.subr.mxu0 0.0
  %5627 = vmatpush2.msra.mxu0 0.0
  %5628 = vmatprep.subr.mxu0 0.0
  %5629 = vmatpush2.msra.mxu0 0.0
  %5630 = vmatprep.subr.mxu0 0.0
  %5631 = vmatpush2.msra.mxu0 0.0
  %5632 = vmatprep.subr.mxu0 0.0
  %5633 = vmatpush2.msra.mxu0 0.0
  %5634 = vmatprep.subr.mxu0 0.0
  %5635 = vmatpush2.msra.mxu0 0.0
  %5636 = vmatprep.subr.mxu0 0.0
  %5637 = vmatpush2.msra.mxu0 0.0
  %5638 = vmatprep.subr.mxu0 0.0
  %5639 = vmatpush2.msra.mxu0 0.0
  %5640 = vmatprep.subr.mxu0 0.0
  %5641 = vmatpush2.msra.mxu0 0.0
  %5642 = vmatprep.subr.mxu0 0.0
  %5643 = vmatpush2.msra.mxu0 0.0
  %5644 = vmatprep.subr.mxu0 0.0
  %5645 = vmatpush2.msra.mxu0 0.0
  %5646 = vmatprep.subr.mxu0 0.0
  %5647 = vmatpush2.msra.mxu0 0.0
  %5648 = vmatprep.subr.mxu0 0.0
  %5649 = vmatpush2.msra.mxu0 0.0
  %5650 = vmatprep.mubr.f32.mxu0 0.0
  %5651 = vmatmul.mubr.f32.gmra.mxu0 %v5584
  %v5652 = vpop.f32.mrf.mxu0
  %v5653 = vadd.f32 %v141, %v5652
  %v5654 = vpop.f32.mrf.mxu0
  %5655 = vdwg.mxu0
  %v5656 = vmax.f32 %v5653, 0.0
  %s5657 = scalar_lea.vmem %s0, 280
  %v5658 = vld [vmem:[%s5657] sm:$0xff]
  %5660 = vrot.lane.b32.xlu0 %v5577, 32
  %v5661 = vpop.permute.xlu0 %5660
  %v5663 = vsel %vm53, %v5658, %v5661
  %v5665 = vsel %vm61, %v5663, 0
  %5667 = vmatprep.subr.mxu0 0.0
  %5668 = vmatpush1.msra.mxu0 0.0
  %5669 = vmatprep.subr.mxu0 0.0
  %5670 = vmatpush1.msra.mxu0 0.0
  %5671 = vmatprep.subr.mxu0 0.0
  %5672 = vmatpush1.msra.mxu0 0.0
  %5673 = vmatprep.subr.mxu0 0.0
  %5674 = vmatpush1.msra.mxu0 0.0
  %5675 = vmatprep.subr.mxu0 0.0
  %5676 = vmatpush1.msra.mxu0 0.0
  %5677 = vmatprep.subr.mxu0 0.0
  %5678 = vmatpush1.msra.mxu0 0.0
  %5679 = vmatprep.subr.mxu0 0.0
  %5680 = vmatpush1.msra.mxu0 0.0
  %5681 = vmatprep.subr.mxu0 0.0
  %5682 = vmatpush1.msra.mxu0 0.0
  %5683 = vmatprep.subr.mxu0 0.0
  %5684 = vmatpush1.msra.mxu0 %v41
  %5685 = vmatprep.subr.mxu0 0.0
  %5686 = vmatpush1.msra.mxu0 %v40
  %5687 = vmatprep.subr.mxu0 0.0
  %5688 = vmatpush1.msra.mxu0 %v39
  %5689 = vmatprep.subr.mxu0 0.0
  %5690 = vmatpush1.msra.mxu0 %v38
  %5691 = vmatprep.subr.mxu0 0.0
  %5692 = vmatpush1.msra.mxu0 %v37
  %5693 = vmatprep.subr.mxu0 0.0
  %5694 = vmatpush1.msra.mxu0 %v36
  %5695 = vmatprep.subr.mxu0 0.0
  %5696 = vmatpush1.msra.mxu0 %v35
  %5697 = vmatprep.subr.mxu0 0.0
  %5698 = vmatpush1.msra.mxu0 %v34
  %5699 = vmatprep.subr.mxu0 0.0
  %5700 = vmatpush2.msra.mxu0 0.0
  %5701 = vmatprep.subr.mxu0 0.0
  %5702 = vmatpush2.msra.mxu0 0.0
  %5703 = vmatprep.subr.mxu0 0.0
  %5704 = vmatpush2.msra.mxu0 0.0
  %5705 = vmatprep.subr.mxu0 0.0
  %5706 = vmatpush2.msra.mxu0 0.0
  %5707 = vmatprep.subr.mxu0 0.0
  %5708 = vmatpush2.msra.mxu0 0.0
  %5709 = vmatprep.subr.mxu0 0.0
  %5710 = vmatpush2.msra.mxu0 0.0
  %5711 = vmatprep.subr.mxu0 0.0
  %5712 = vmatpush2.msra.mxu0 0.0
  %5713 = vmatprep.subr.mxu0 0.0
  %5714 = vmatpush2.msra.mxu0 0.0
  %5715 = vmatprep.subr.mxu0 0.0
  %5716 = vmatpush2.msra.mxu0 0.0
  %5717 = vmatprep.subr.mxu0 0.0
  %5718 = vmatpush2.msra.mxu0 0.0
  %5719 = vmatprep.subr.mxu0 0.0
  %5720 = vmatpush2.msra.mxu0 0.0
  %5721 = vmatprep.subr.mxu0 0.0
  %5722 = vmatpush2.msra.mxu0 0.0
  %5723 = vmatprep.subr.mxu0 0.0
  %5724 = vmatpush2.msra.mxu0 0.0
  %5725 = vmatprep.subr.mxu0 0.0
  %5726 = vmatpush2.msra.mxu0 0.0
  %5727 = vmatprep.subr.mxu0 0.0
  %5728 = vmatpush2.msra.mxu0 0.0
  %5729 = vmatprep.subr.mxu0 0.0
  %5730 = vmatpush2.msra.mxu0 0.0
  %5731 = vmatprep.mubr.f32.mxu0 0.0
  %5732 = vmatmul.mubr.f32.gmra.mxu0 %v5665
  %v5733 = vpop.f32.mrf.mxu0
  %v5734 = vadd.f32 %v59, %v5733
  %v5735 = vpop.f32.mrf.mxu0
  %5736 = vdwg.mxu0
  %v5737 = vmax.f32 %v5734, 0.0
  %5739 = vrot.lane.b32.xlu0 %v5656, 32
  %v5740 = vpop.permute.xlu0 %5739
  %v5742 = vsel %vm53, %v5737, %v5740
  %v5744 = vsel %vm61, %v5742, 0
  %5746 = vmatprep.subr.mxu0 0.0
  %5747 = vmatpush1.msra.mxu0 0.0
  %5748 = vmatprep.subr.mxu0 0.0
  %5749 = vmatpush1.msra.mxu0 0.0
  %5750 = vmatprep.subr.mxu0 0.0
  %5751 = vmatpush1.msra.mxu0 0.0
  %5752 = vmatprep.subr.mxu0 0.0
  %5753 = vmatpush1.msra.mxu0 0.0
  %5754 = vmatprep.subr.mxu0 0.0
  %5755 = vmatpush1.msra.mxu0 0.0
  %5756 = vmatprep.subr.mxu0 0.0
  %5757 = vmatpush1.msra.mxu0 0.0
  %5758 = vmatprep.subr.mxu0 0.0
  %5759 = vmatpush1.msra.mxu0 0.0
  %5760 = vmatprep.subr.mxu0 0.0
  %5761 = vmatpush1.msra.mxu0 0.0
  %5762 = vmatprep.subr.mxu0 0.0
  %5763 = vmatpush1.msra.mxu0 %v49
  %5764 = vmatprep.subr.mxu0 0.0
  %5765 = vmatpush1.msra.mxu0 %v48
  %5766 = vmatprep.subr.mxu0 0.0
  %5767 = vmatpush1.msra.mxu0 %v47
  %5768 = vmatprep.subr.mxu0 0.0
  %5769 = vmatpush1.msra.mxu0 %v46
  %5770 = vmatprep.subr.mxu0 0.0
  %5771 = vmatpush1.msra.mxu0 %v45
  %5772 = vmatprep.subr.mxu0 0.0
  %5773 = vmatpush1.msra.mxu0 %v44
  %5774 = vmatprep.subr.mxu0 0.0
  %5775 = vmatpush1.msra.mxu0 %v43
  %5776 = vmatprep.subr.mxu0 0.0
  %5777 = vmatpush1.msra.mxu0 %v42
  %5778 = vmatprep.subr.mxu0 0.0
  %5779 = vmatpush2.msra.mxu0 0.0
  %5780 = vmatprep.subr.mxu0 0.0
  %5781 = vmatpush2.msra.mxu0 0.0
  %5782 = vmatprep.subr.mxu0 0.0
  %5783 = vmatpush2.msra.mxu0 0.0
  %5784 = vmatprep.subr.mxu0 0.0
  %5785 = vmatpush2.msra.mxu0 0.0
  %5786 = vmatprep.subr.mxu0 0.0
  %5787 = vmatpush2.msra.mxu0 0.0
  %5788 = vmatprep.subr.mxu0 0.0
  %5789 = vmatpush2.msra.mxu0 0.0
  %5790 = vmatprep.subr.mxu0 0.0
  %5791 = vmatpush2.msra.mxu0 0.0
  %5792 = vmatprep.subr.mxu0 0.0
  %5793 = vmatpush2.msra.mxu0 0.0
  %5794 = vmatprep.subr.mxu0 0.0
  %5795 = vmatpush2.msra.mxu0 0.0
  %5796 = vmatprep.subr.mxu0 0.0
  %5797 = vmatpush2.msra.mxu0 0.0
  %5798 = vmatprep.subr.mxu0 0.0
  %5799 = vmatpush2.msra.mxu0 0.0
  %5800 = vmatprep.subr.mxu0 0.0
  %5801 = vmatpush2.msra.mxu0 0.0
  %5802 = vmatprep.subr.mxu0 0.0
  %5803 = vmatpush2.msra.mxu0 0.0
  %5804 = vmatprep.subr.mxu0 0.0
  %5805 = vmatpush2.msra.mxu0 0.0
  %5806 = vmatprep.subr.mxu0 0.0
  %5807 = vmatpush2.msra.mxu0 0.0
  %5808 = vmatprep.subr.mxu0 0.0
  %5809 = vmatpush2.msra.mxu0 0.0
  %5810 = vmatprep.mubr.f32.mxu0 0.0
  %5811 = vmatmul.mubr.f32.gmra.mxu0 %v5744
  %v5812 = vpop.f32.mrf.mxu0
  %v5813 = vadd.f32 %v141, %v5812
  %v5814 = vpop.f32.mrf.mxu0
  %5815 = vdwg.mxu0
  %v5816 = vmax.f32 %v5813, 0.0
  %s5817 = scalar_lea.vmem %s0, 288
  %v5818 = vld [vmem:[%s5817] sm:$0xff]
  %5820 = vrot.lane.b32.xlu0 %v5737, 32
  %v5821 = vpop.permute.xlu0 %5820
  %v5823 = vsel %vm53, %v5818, %v5821
  %v5825 = vsel %vm61, %v5823, 0
  %5827 = vmatprep.subr.mxu0 0.0
  %5828 = vmatpush1.msra.mxu0 0.0
  %5829 = vmatprep.subr.mxu0 0.0
  %5830 = vmatpush1.msra.mxu0 0.0
  %5831 = vmatprep.subr.mxu0 0.0
  %5832 = vmatpush1.msra.mxu0 0.0
  %5833 = vmatprep.subr.mxu0 0.0
  %5834 = vmatpush1.msra.mxu0 0.0
  %5835 = vmatprep.subr.mxu0 0.0
  %5836 = vmatpush1.msra.mxu0 0.0
  %5837 = vmatprep.subr.mxu0 0.0
  %5838 = vmatpush1.msra.mxu0 0.0
  %5839 = vmatprep.subr.mxu0 0.0
  %5840 = vmatpush1.msra.mxu0 0.0
  %5841 = vmatprep.subr.mxu0 0.0
  %5842 = vmatpush1.msra.mxu0 0.0
  %5843 = vmatprep.subr.mxu0 0.0
  %5844 = vmatpush1.msra.mxu0 %v41
  %5845 = vmatprep.subr.mxu0 0.0
  %5846 = vmatpush1.msra.mxu0 %v40
  %5847 = vmatprep.subr.mxu0 0.0
  %5848 = vmatpush1.msra.mxu0 %v39
  %5849 = vmatprep.subr.mxu0 0.0
  %5850 = vmatpush1.msra.mxu0 %v38
  %5851 = vmatprep.subr.mxu0 0.0
  %5852 = vmatpush1.msra.mxu0 %v37
  %5853 = vmatprep.subr.mxu0 0.0
  %5854 = vmatpush1.msra.mxu0 %v36
  %5855 = vmatprep.subr.mxu0 0.0
  %5856 = vmatpush1.msra.mxu0 %v35
  %5857 = vmatprep.subr.mxu0 0.0
  %5858 = vmatpush1.msra.mxu0 %v34
  %5859 = vmatprep.subr.mxu0 0.0
  %5860 = vmatpush2.msra.mxu0 0.0
  %5861 = vmatprep.subr.mxu0 0.0
  %5862 = vmatpush2.msra.mxu0 0.0
  %5863 = vmatprep.subr.mxu0 0.0
  %5864 = vmatpush2.msra.mxu0 0.0
  %5865 = vmatprep.subr.mxu0 0.0
  %5866 = vmatpush2.msra.mxu0 0.0
  %5867 = vmatprep.subr.mxu0 0.0
  %5868 = vmatpush2.msra.mxu0 0.0
  %5869 = vmatprep.subr.mxu0 0.0
  %5870 = vmatpush2.msra.mxu0 0.0
  %5871 = vmatprep.subr.mxu0 0.0
  %5872 = vmatpush2.msra.mxu0 0.0
  %5873 = vmatprep.subr.mxu0 0.0
  %5874 = vmatpush2.msra.mxu0 0.0
  %5875 = vmatprep.subr.mxu0 0.0
  %5876 = vmatpush2.msra.mxu0 0.0
  %5877 = vmatprep.subr.mxu0 0.0
  %5878 = vmatpush2.msra.mxu0 0.0
  %5879 = vmatprep.subr.mxu0 0.0
  %5880 = vmatpush2.msra.mxu0 0.0
  %5881 = vmatprep.subr.mxu0 0.0
  %5882 = vmatpush2.msra.mxu0 0.0
  %5883 = vmatprep.subr.mxu0 0.0
  %5884 = vmatpush2.msra.mxu0 0.0
  %5885 = vmatprep.subr.mxu0 0.0
  %5886 = vmatpush2.msra.mxu0 0.0
  %5887 = vmatprep.subr.mxu0 0.0
  %5888 = vmatpush2.msra.mxu0 0.0
  %5889 = vmatprep.subr.mxu0 0.0
  %5890 = vmatpush2.msra.mxu0 0.0
  %5891 = vmatprep.mubr.f32.mxu0 0.0
  %5892 = vmatmul.mubr.f32.gmra.mxu0 %v5825
  %v5893 = vpop.f32.mrf.mxu0
  %v5894 = vadd.f32 %v59, %v5893
  %v5895 = vpop.f32.mrf.mxu0
  %5896 = vdwg.mxu0
  %v5897 = vmax.f32 %v5894, 0.0
  %5899 = vrot.lane.b32.xlu0 %v5816, 32
  %v5900 = vpop.permute.xlu0 %5899
  %v5902 = vsel %vm53, %v5897, %v5900
  %v5904 = vsel %vm61, %v5902, 0
  %5906 = vmatprep.subr.mxu0 0.0
  %5907 = vmatpush1.msra.mxu0 0.0
  %5908 = vmatprep.subr.mxu0 0.0
  %5909 = vmatpush1.msra.mxu0 0.0
  %5910 = vmatprep.subr.mxu0 0.0
  %5911 = vmatpush1.msra.mxu0 0.0
  %5912 = vmatprep.subr.mxu0 0.0
  %5913 = vmatpush1.msra.mxu0 0.0
  %5914 = vmatprep.subr.mxu0 0.0
  %5915 = vmatpush1.msra.mxu0 0.0
  %5916 = vmatprep.subr.mxu0 0.0
  %5917 = vmatpush1.msra.mxu0 0.0
  %5918 = vmatprep.subr.mxu0 0.0
  %5919 = vmatpush1.msra.mxu0 0.0
  %5920 = vmatprep.subr.mxu0 0.0
  %5921 = vmatpush1.msra.mxu0 0.0
  %5922 = vmatprep.subr.mxu0 0.0
  %5923 = vmatpush1.msra.mxu0 %v49
  %5924 = vmatprep.subr.mxu0 0.0
  %5925 = vmatpush1.msra.mxu0 %v48
  %5926 = vmatprep.subr.mxu0 0.0
  %5927 = vmatpush1.msra.mxu0 %v47
  %5928 = vmatprep.subr.mxu0 0.0
  %5929 = vmatpush1.msra.mxu0 %v46
  %5930 = vmatprep.subr.mxu0 0.0
  %5931 = vmatpush1.msra.mxu0 %v45
  %5932 = vmatprep.subr.mxu0 0.0
  %5933 = vmatpush1.msra.mxu0 %v44
  %5934 = vmatprep.subr.mxu0 0.0
  %5935 = vmatpush1.msra.mxu0 %v43
  %5936 = vmatprep.subr.mxu0 0.0
  %5937 = vmatpush1.msra.mxu0 %v42
  %5938 = vmatprep.subr.mxu0 0.0
  %5939 = vmatpush2.msra.mxu0 0.0
  %5940 = vmatprep.subr.mxu0 0.0
  %5941 = vmatpush2.msra.mxu0 0.0
  %5942 = vmatprep.subr.mxu0 0.0
  %5943 = vmatpush2.msra.mxu0 0.0
  %5944 = vmatprep.subr.mxu0 0.0
  %5945 = vmatpush2.msra.mxu0 0.0
  %5946 = vmatprep.subr.mxu0 0.0
  %5947 = vmatpush2.msra.mxu0 0.0
  %5948 = vmatprep.subr.mxu0 0.0
  %5949 = vmatpush2.msra.mxu0 0.0
  %5950 = vmatprep.subr.mxu0 0.0
  %5951 = vmatpush2.msra.mxu0 0.0
  %5952 = vmatprep.subr.mxu0 0.0
  %5953 = vmatpush2.msra.mxu0 0.0
  %5954 = vmatprep.subr.mxu0 0.0
  %5955 = vmatpush2.msra.mxu0 0.0
  %5956 = vmatprep.subr.mxu0 0.0
  %5957 = vmatpush2.msra.mxu0 0.0
  %5958 = vmatprep.subr.mxu0 0.0
  %5959 = vmatpush2.msra.mxu0 0.0
  %5960 = vmatprep.subr.mxu0 0.0
  %5961 = vmatpush2.msra.mxu0 0.0
  %5962 = vmatprep.subr.mxu0 0.0
  %5963 = vmatpush2.msra.mxu0 0.0
  %5964 = vmatprep.subr.mxu0 0.0
  %5965 = vmatpush2.msra.mxu0 0.0
  %5966 = vmatprep.subr.mxu0 0.0
  %5967 = vmatpush2.msra.mxu0 0.0
  %5968 = vmatprep.subr.mxu0 0.0
  %5969 = vmatpush2.msra.mxu0 0.0
  %5970 = vmatprep.mubr.f32.mxu0 0.0
  %5971 = vmatmul.mubr.f32.gmra.mxu0 %v5904
  %v5972 = vpop.f32.mrf.mxu0
  %v5973 = vadd.f32 %v141, %v5972
  %v5974 = vpop.f32.mrf.mxu0
  %5975 = vdwg.mxu0
  %v5976 = vmax.f32 %v5973, 0.0
  %s5977 = scalar_lea.vmem %s0, 296
  %v5978 = vld [vmem:[%s5977] sm:$0xff]
  %5980 = vrot.lane.b32.xlu0 %v5897, 32
  %v5981 = vpop.permute.xlu0 %5980
  %v5983 = vsel %vm53, %v5978, %v5981
  %v5985 = vsel %vm61, %v5983, 0
  %5987 = vmatprep.subr.mxu0 0.0
  %5988 = vmatpush1.msra.mxu0 0.0
  %5989 = vmatprep.subr.mxu0 0.0
  %5990 = vmatpush1.msra.mxu0 0.0
  %5991 = vmatprep.subr.mxu0 0.0
  %5992 = vmatpush1.msra.mxu0 0.0
  %5993 = vmatprep.subr.mxu0 0.0
  %5994 = vmatpush1.msra.mxu0 0.0
  %5995 = vmatprep.subr.mxu0 0.0
  %5996 = vmatpush1.msra.mxu0 0.0
  %5997 = vmatprep.subr.mxu0 0.0
  %5998 = vmatpush1.msra.mxu0 0.0
  %5999 = vmatprep.subr.mxu0 0.0
  %6000 = vmatpush1.msra.mxu0 0.0
  %6001 = vmatprep.subr.mxu0 0.0
  %6002 = vmatpush1.msra.mxu0 0.0
  %6003 = vmatprep.subr.mxu0 0.0
  %6004 = vmatpush1.msra.mxu0 %v41
  %6005 = vmatprep.subr.mxu0 0.0
  %6006 = vmatpush1.msra.mxu0 %v40
  %6007 = vmatprep.subr.mxu0 0.0
  %6008 = vmatpush1.msra.mxu0 %v39
  %6009 = vmatprep.subr.mxu0 0.0
  %6010 = vmatpush1.msra.mxu0 %v38
  %6011 = vmatprep.subr.mxu0 0.0
  %6012 = vmatpush1.msra.mxu0 %v37
  %6013 = vmatprep.subr.mxu0 0.0
  %6014 = vmatpush1.msra.mxu0 %v36
  %6015 = vmatprep.subr.mxu0 0.0
  %6016 = vmatpush1.msra.mxu0 %v35
  %6017 = vmatprep.subr.mxu0 0.0
  %6018 = vmatpush1.msra.mxu0 %v34
  %6019 = vmatprep.subr.mxu0 0.0
  %6020 = vmatpush2.msra.mxu0 0.0
  %6021 = vmatprep.subr.mxu0 0.0
  %6022 = vmatpush2.msra.mxu0 0.0
  %6023 = vmatprep.subr.mxu0 0.0
  %6024 = vmatpush2.msra.mxu0 0.0
  %6025 = vmatprep.subr.mxu0 0.0
  %6026 = vmatpush2.msra.mxu0 0.0
  %6027 = vmatprep.subr.mxu0 0.0
  %6028 = vmatpush2.msra.mxu0 0.0
  %6029 = vmatprep.subr.mxu0 0.0
  %6030 = vmatpush2.msra.mxu0 0.0
  %6031 = vmatprep.subr.mxu0 0.0
  %6032 = vmatpush2.msra.mxu0 0.0
  %6033 = vmatprep.subr.mxu0 0.0
  %6034 = vmatpush2.msra.mxu0 0.0
  %6035 = vmatprep.subr.mxu0 0.0
  %6036 = vmatpush2.msra.mxu0 0.0
  %6037 = vmatprep.subr.mxu0 0.0
  %6038 = vmatpush2.msra.mxu0 0.0
  %6039 = vmatprep.subr.mxu0 0.0
  %6040 = vmatpush2.msra.mxu0 0.0
  %6041 = vmatprep.subr.mxu0 0.0
  %6042 = vmatpush2.msra.mxu0 0.0
  %6043 = vmatprep.subr.mxu0 0.0
  %6044 = vmatpush2.msra.mxu0 0.0
  %6045 = vmatprep.subr.mxu0 0.0
  %6046 = vmatpush2.msra.mxu0 0.0
  %6047 = vmatprep.subr.mxu0 0.0
  %6048 = vmatpush2.msra.mxu0 0.0
  %6049 = vmatprep.subr.mxu0 0.0
  %6050 = vmatpush2.msra.mxu0 0.0
  %6051 = vmatprep.mubr.f32.mxu0 0.0
  %6052 = vmatmul.mubr.f32.gmra.mxu0 %v5985
  %v6053 = vpop.f32.mrf.mxu0
  %v6054 = vadd.f32 %v59, %v6053
  %v6055 = vpop.f32.mrf.mxu0
  %6056 = vdwg.mxu0
  %v6057 = vmax.f32 %v6054, 0.0
  %6059 = vrot.lane.b32.xlu0 %v5976, 32
  %v6060 = vpop.permute.xlu0 %6059
  %v6062 = vsel %vm53, %v6057, %v6060
  %v6064 = vsel %vm61, %v6062, 0
  %6066 = vmatprep.subr.mxu0 0.0
  %6067 = vmatpush1.msra.mxu0 0.0
  %6068 = vmatprep.subr.mxu0 0.0
  %6069 = vmatpush1.msra.mxu0 0.0
  %6070 = vmatprep.subr.mxu0 0.0
  %6071 = vmatpush1.msra.mxu0 0.0
  %6072 = vmatprep.subr.mxu0 0.0
  %6073 = vmatpush1.msra.mxu0 0.0
  %6074 = vmatprep.subr.mxu0 0.0
  %6075 = vmatpush1.msra.mxu0 0.0
  %6076 = vmatprep.subr.mxu0 0.0
  %6077 = vmatpush1.msra.mxu0 0.0
  %6078 = vmatprep.subr.mxu0 0.0
  %6079 = vmatpush1.msra.mxu0 0.0
  %6080 = vmatprep.subr.mxu0 0.0
  %6081 = vmatpush1.msra.mxu0 0.0
  %6082 = vmatprep.subr.mxu0 0.0
  %6083 = vmatpush1.msra.mxu0 %v49
  %6084 = vmatprep.subr.mxu0 0.0
  %6085 = vmatpush1.msra.mxu0 %v48
  %6086 = vmatprep.subr.mxu0 0.0
  %6087 = vmatpush1.msra.mxu0 %v47
  %6088 = vmatprep.subr.mxu0 0.0
  %6089 = vmatpush1.msra.mxu0 %v46
  %6090 = vmatprep.subr.mxu0 0.0
  %6091 = vmatpush1.msra.mxu0 %v45
  %6092 = vmatprep.subr.mxu0 0.0
  %6093 = vmatpush1.msra.mxu0 %v44
  %6094 = vmatprep.subr.mxu0 0.0
  %6095 = vmatpush1.msra.mxu0 %v43
  %6096 = vmatprep.subr.mxu0 0.0
  %6097 = vmatpush1.msra.mxu0 %v42
  %6098 = vmatprep.subr.mxu0 0.0
  %6099 = vmatpush2.msra.mxu0 0.0
  %6100 = vmatprep.subr.mxu0 0.0
  %6101 = vmatpush2.msra.mxu0 0.0
  %6102 = vmatprep.subr.mxu0 0.0
  %6103 = vmatpush2.msra.mxu0 0.0
  %6104 = vmatprep.subr.mxu0 0.0
  %6105 = vmatpush2.msra.mxu0 0.0
  %6106 = vmatprep.subr.mxu0 0.0
  %6107 = vmatpush2.msra.mxu0 0.0
  %6108 = vmatprep.subr.mxu0 0.0
  %6109 = vmatpush2.msra.mxu0 0.0
  %6110 = vmatprep.subr.mxu0 0.0
  %6111 = vmatpush2.msra.mxu0 0.0
  %6112 = vmatprep.subr.mxu0 0.0
  %6113 = vmatpush2.msra.mxu0 0.0
  %6114 = vmatprep.subr.mxu0 0.0
  %6115 = vmatpush2.msra.mxu0 0.0
  %6116 = vmatprep.subr.mxu0 0.0
  %6117 = vmatpush2.msra.mxu0 0.0
  %6118 = vmatprep.subr.mxu0 0.0
  %6119 = vmatpush2.msra.mxu0 0.0
  %6120 = vmatprep.subr.mxu0 0.0
  %6121 = vmatpush2.msra.mxu0 0.0
  %6122 = vmatprep.subr.mxu0 0.0
  %6123 = vmatpush2.msra.mxu0 0.0
  %6124 = vmatprep.subr.mxu0 0.0
  %6125 = vmatpush2.msra.mxu0 0.0
  %6126 = vmatprep.subr.mxu0 0.0
  %6127 = vmatpush2.msra.mxu0 0.0
  %6128 = vmatprep.subr.mxu0 0.0
  %6129 = vmatpush2.msra.mxu0 0.0
  %6130 = vmatprep.mubr.f32.mxu0 0.0
  %6131 = vmatmul.mubr.f32.gmra.mxu0 %v6064
  %v6132 = vpop.f32.mrf.mxu0
  %v6133 = vadd.f32 %v141, %v6132
  %v6134 = vpop.f32.mrf.mxu0
  %6135 = vdwg.mxu0
  %v6136 = vmax.f32 %v6133, 0.0
  %s6137 = scalar_lea.vmem %s0, 304
  %v6138 = vld [vmem:[%s6137] sm:$0xff]
  %6140 = vrot.lane.b32.xlu0 %v6057, 32
  %v6141 = vpop.permute.xlu0 %6140
  %v6143 = vsel %vm53, %v6138, %v6141
  %v6145 = vsel %vm61, %v6143, 0
  %6147 = vmatprep.subr.mxu0 0.0
  %6148 = vmatpush1.msra.mxu0 0.0
  %6149 = vmatprep.subr.mxu0 0.0
  %6150 = vmatpush1.msra.mxu0 0.0
  %6151 = vmatprep.subr.mxu0 0.0
  %6152 = vmatpush1.msra.mxu0 0.0
  %6153 = vmatprep.subr.mxu0 0.0
  %6154 = vmatpush1.msra.mxu0 0.0
  %6155 = vmatprep.subr.mxu0 0.0
  %6156 = vmatpush1.msra.mxu0 0.0
  %6157 = vmatprep.subr.mxu0 0.0
  %6158 = vmatpush1.msra.mxu0 0.0
  %6159 = vmatprep.subr.mxu0 0.0
  %6160 = vmatpush1.msra.mxu0 0.0
  %6161 = vmatprep.subr.mxu0 0.0
  %6162 = vmatpush1.msra.mxu0 0.0
  %6163 = vmatprep.subr.mxu0 0.0
  %6164 = vmatpush1.msra.mxu0 %v41
  %6165 = vmatprep.subr.mxu0 0.0
  %6166 = vmatpush1.msra.mxu0 %v40
  %6167 = vmatprep.subr.mxu0 0.0
  %6168 = vmatpush1.msra.mxu0 %v39
  %6169 = vmatprep.subr.mxu0 0.0
  %6170 = vmatpush1.msra.mxu0 %v38
  %6171 = vmatprep.subr.mxu0 0.0
  %6172 = vmatpush1.msra.mxu0 %v37
  %6173 = vmatprep.subr.mxu0 0.0
  %6174 = vmatpush1.msra.mxu0 %v36
  %6175 = vmatprep.subr.mxu0 0.0
  %6176 = vmatpush1.msra.mxu0 %v35
  %6177 = vmatprep.subr.mxu0 0.0
  %6178 = vmatpush1.msra.mxu0 %v34
  %6179 = vmatprep.subr.mxu0 0.0
  %6180 = vmatpush2.msra.mxu0 0.0
  %6181 = vmatprep.subr.mxu0 0.0
  %6182 = vmatpush2.msra.mxu0 0.0
  %6183 = vmatprep.subr.mxu0 0.0
  %6184 = vmatpush2.msra.mxu0 0.0
  %6185 = vmatprep.subr.mxu0 0.0
  %6186 = vmatpush2.msra.mxu0 0.0
  %6187 = vmatprep.subr.mxu0 0.0
  %6188 = vmatpush2.msra.mxu0 0.0
  %6189 = vmatprep.subr.mxu0 0.0
  %6190 = vmatpush2.msra.mxu0 0.0
  %6191 = vmatprep.subr.mxu0 0.0
  %6192 = vmatpush2.msra.mxu0 0.0
  %6193 = vmatprep.subr.mxu0 0.0
  %6194 = vmatpush2.msra.mxu0 0.0
  %6195 = vmatprep.subr.mxu0 0.0
  %6196 = vmatpush2.msra.mxu0 0.0
  %6197 = vmatprep.subr.mxu0 0.0
  %6198 = vmatpush2.msra.mxu0 0.0
  %6199 = vmatprep.subr.mxu0 0.0
  %6200 = vmatpush2.msra.mxu0 0.0
  %6201 = vmatprep.subr.mxu0 0.0
  %6202 = vmatpush2.msra.mxu0 0.0
  %6203 = vmatprep.subr.mxu0 0.0
  %6204 = vmatpush2.msra.mxu0 0.0
  %6205 = vmatprep.subr.mxu0 0.0
  %6206 = vmatpush2.msra.mxu0 0.0
  %6207 = vmatprep.subr.mxu0 0.0
  %6208 = vmatpush2.msra.mxu0 0.0
  %6209 = vmatprep.subr.mxu0 0.0
  %6210 = vmatpush2.msra.mxu0 0.0
  %6211 = vmatprep.mubr.f32.mxu0 0.0
  %6212 = vmatmul.mubr.f32.gmra.mxu0 %v6145
  %v6213 = vpop.f32.mrf.mxu0
  %v6214 = vadd.f32 %v59, %v6213
  %v6215 = vpop.f32.mrf.mxu0
  %6216 = vdwg.mxu0
  %v6217 = vmax.f32 %v6214, 0.0
  %6219 = vrot.lane.b32.xlu0 %v6136, 32
  %v6220 = vpop.permute.xlu0 %6219
  %v6222 = vsel %vm53, %v6217, %v6220
  %v6224 = vsel %vm61, %v6222, 0
  %6226 = vmatprep.subr.mxu0 0.0
  %6227 = vmatpush1.msra.mxu0 0.0
  %6228 = vmatprep.subr.mxu0 0.0
  %6229 = vmatpush1.msra.mxu0 0.0
  %6230 = vmatprep.subr.mxu0 0.0
  %6231 = vmatpush1.msra.mxu0 0.0
  %6232 = vmatprep.subr.mxu0 0.0
  %6233 = vmatpush1.msra.mxu0 0.0
  %6234 = vmatprep.subr.mxu0 0.0
  %6235 = vmatpush1.msra.mxu0 0.0
  %6236 = vmatprep.subr.mxu0 0.0
  %6237 = vmatpush1.msra.mxu0 0.0
  %6238 = vmatprep.subr.mxu0 0.0
  %6239 = vmatpush1.msra.mxu0 0.0
  %6240 = vmatprep.subr.mxu0 0.0
  %6241 = vmatpush1.msra.mxu0 0.0
  %6242 = vmatprep.subr.mxu0 0.0
  %6243 = vmatpush1.msra.mxu0 %v49
  %6244 = vmatprep.subr.mxu0 0.0
  %6245 = vmatpush1.msra.mxu0 %v48
  %6246 = vmatprep.subr.mxu0 0.0
  %6247 = vmatpush1.msra.mxu0 %v47
  %6248 = vmatprep.subr.mxu0 0.0
  %6249 = vmatpush1.msra.mxu0 %v46
  %6250 = vmatprep.subr.mxu0 0.0
  %6251 = vmatpush1.msra.mxu0 %v45
  %6252 = vmatprep.subr.mxu0 0.0
  %6253 = vmatpush1.msra.mxu0 %v44
  %6254 = vmatprep.subr.mxu0 0.0
  %6255 = vmatpush1.msra.mxu0 %v43
  %6256 = vmatprep.subr.mxu0 0.0
  %6257 = vmatpush1.msra.mxu0 %v42
  %6258 = vmatprep.subr.mxu0 0.0
  %6259 = vmatpush2.msra.mxu0 0.0
  %6260 = vmatprep.subr.mxu0 0.0
  %6261 = vmatpush2.msra.mxu0 0.0
  %6262 = vmatprep.subr.mxu0 0.0
  %6263 = vmatpush2.msra.mxu0 0.0
  %6264 = vmatprep.subr.mxu0 0.0
  %6265 = vmatpush2.msra.mxu0 0.0
  %6266 = vmatprep.subr.mxu0 0.0
  %6267 = vmatpush2.msra.mxu0 0.0
  %6268 = vmatprep.subr.mxu0 0.0
  %6269 = vmatpush2.msra.mxu0 0.0
  %6270 = vmatprep.subr.mxu0 0.0
  %6271 = vmatpush2.msra.mxu0 0.0
  %6272 = vmatprep.subr.mxu0 0.0
  %6273 = vmatpush2.msra.mxu0 0.0
  %6274 = vmatprep.subr.mxu0 0.0
  %6275 = vmatpush2.msra.mxu0 0.0
  %6276 = vmatprep.subr.mxu0 0.0
  %6277 = vmatpush2.msra.mxu0 0.0
  %6278 = vmatprep.subr.mxu0 0.0
  %6279 = vmatpush2.msra.mxu0 0.0
  %6280 = vmatprep.subr.mxu0 0.0
  %6281 = vmatpush2.msra.mxu0 0.0
  %6282 = vmatprep.subr.mxu0 0.0
  %6283 = vmatpush2.msra.mxu0 0.0
  %6284 = vmatprep.subr.mxu0 0.0
  %6285 = vmatpush2.msra.mxu0 0.0
  %6286 = vmatprep.subr.mxu0 0.0
  %6287 = vmatpush2.msra.mxu0 0.0
  %6288 = vmatprep.subr.mxu0 0.0
  %6289 = vmatpush2.msra.mxu0 0.0
  %6290 = vmatprep.mubr.f32.mxu0 0.0
  %6291 = vmatmul.mubr.f32.gmra.mxu0 %v6224
  %v6292 = vpop.f32.mrf.mxu0
  %v6293 = vadd.f32 %v141, %v6292
  %v6294 = vpop.f32.mrf.mxu0
  %6295 = vdwg.mxu0
  %v6296 = vmax.f32 %v6293, 0.0
  %s6297 = scalar_lea.vmem %s0, 312
  %v6298 = vld [vmem:[%s6297] sm:$0xff]
  %6300 = vrot.lane.b32.xlu0 %v6217, 32
  %v6301 = vpop.permute.xlu0 %6300
  %v6303 = vsel %vm53, %v6298, %v6301
  %v6305 = vsel %vm61, %v6303, 0
  %6307 = vmatprep.subr.mxu0 0.0
  %6308 = vmatpush1.msra.mxu0 0.0
  %6309 = vmatprep.subr.mxu0 0.0
  %6310 = vmatpush1.msra.mxu0 0.0
  %6311 = vmatprep.subr.mxu0 0.0
  %6312 = vmatpush1.msra.mxu0 0.0
  %6313 = vmatprep.subr.mxu0 0.0
  %6314 = vmatpush1.msra.mxu0 0.0
  %6315 = vmatprep.subr.mxu0 0.0
  %6316 = vmatpush1.msra.mxu0 0.0
  %6317 = vmatprep.subr.mxu0 0.0
  %6318 = vmatpush1.msra.mxu0 0.0
  %6319 = vmatprep.subr.mxu0 0.0
  %6320 = vmatpush1.msra.mxu0 0.0
  %6321 = vmatprep.subr.mxu0 0.0
  %6322 = vmatpush1.msra.mxu0 0.0
  %6323 = vmatprep.subr.mxu0 0.0
  %6324 = vmatpush1.msra.mxu0 %v41
  %6325 = vmatprep.subr.mxu0 0.0
  %6326 = vmatpush1.msra.mxu0 %v40
  %6327 = vmatprep.subr.mxu0 0.0
  %6328 = vmatpush1.msra.mxu0 %v39
  %6329 = vmatprep.subr.mxu0 0.0
  %6330 = vmatpush1.msra.mxu0 %v38
  %6331 = vmatprep.subr.mxu0 0.0
  %6332 = vmatpush1.msra.mxu0 %v37
  %6333 = vmatprep.subr.mxu0 0.0
  %6334 = vmatpush1.msra.mxu0 %v36
  %6335 = vmatprep.subr.mxu0 0.0
  %6336 = vmatpush1.msra.mxu0 %v35
  %6337 = vmatprep.subr.mxu0 0.0
  %6338 = vmatpush1.msra.mxu0 %v34
  %6339 = vmatprep.subr.mxu0 0.0
  %6340 = vmatpush2.msra.mxu0 0.0
  %6341 = vmatprep.subr.mxu0 0.0
  %6342 = vmatpush2.msra.mxu0 0.0
  %6343 = vmatprep.subr.mxu0 0.0
  %6344 = vmatpush2.msra.mxu0 0.0
  %6345 = vmatprep.subr.mxu0 0.0
  %6346 = vmatpush2.msra.mxu0 0.0
  %6347 = vmatprep.subr.mxu0 0.0
  %6348 = vmatpush2.msra.mxu0 0.0
  %6349 = vmatprep.subr.mxu0 0.0
  %6350 = vmatpush2.msra.mxu0 0.0
  %6351 = vmatprep.subr.mxu0 0.0
  %6352 = vmatpush2.msra.mxu0 0.0
  %6353 = vmatprep.subr.mxu0 0.0
  %6354 = vmatpush2.msra.mxu0 0.0
  %6355 = vmatprep.subr.mxu0 0.0
  %6356 = vmatpush2.msra.mxu0 0.0
  %6357 = vmatprep.subr.mxu0 0.0
  %6358 = vmatpush2.msra.mxu0 0.0
  %6359 = vmatprep.subr.mxu0 0.0
  %6360 = vmatpush2.msra.mxu0 0.0
  %6361 = vmatprep.subr.mxu0 0.0
  %6362 = vmatpush2.msra.mxu0 0.0
  %6363 = vmatprep.subr.mxu0 0.0
  %6364 = vmatpush2.msra.mxu0 0.0
  %6365 = vmatprep.subr.mxu0 0.0
  %6366 = vmatpush2.msra.mxu0 0.0
  %6367 = vmatprep.subr.mxu0 0.0
  %6368 = vmatpush2.msra.mxu0 0.0
  %6369 = vmatprep.subr.mxu0 0.0
  %6370 = vmatpush2.msra.mxu0 0.0
  %6371 = vmatprep.mubr.f32.mxu0 0.0
  %6372 = vmatmul.mubr.f32.gmra.mxu0 %v6305
  %v6373 = vpop.f32.mrf.mxu0
  %v6374 = vadd.f32 %v59, %v6373
  %v6375 = vpop.f32.mrf.mxu0
  %6376 = vdwg.mxu0
  %v6377 = vmax.f32 %v6374, 0.0
  %6379 = vrot.lane.b32.xlu0 %v6296, 32
  %v6380 = vpop.permute.xlu0 %6379
  %v6382 = vsel %vm53, %v6377, %v6380
  %v6384 = vsel %vm61, %v6382, 0
  %6386 = vmatprep.subr.mxu0 0.0
  %6387 = vmatpush1.msra.mxu0 0.0
  %6388 = vmatprep.subr.mxu0 0.0
  %6389 = vmatpush1.msra.mxu0 0.0
  %6390 = vmatprep.subr.mxu0 0.0
  %6391 = vmatpush1.msra.mxu0 0.0
  %6392 = vmatprep.subr.mxu0 0.0
  %6393 = vmatpush1.msra.mxu0 0.0
  %6394 = vmatprep.subr.mxu0 0.0
  %6395 = vmatpush1.msra.mxu0 0.0
  %6396 = vmatprep.subr.mxu0 0.0
  %6397 = vmatpush1.msra.mxu0 0.0
  %6398 = vmatprep.subr.mxu0 0.0
  %6399 = vmatpush1.msra.mxu0 0.0
  %6400 = vmatprep.subr.mxu0 0.0
  %6401 = vmatpush1.msra.mxu0 0.0
  %6402 = vmatprep.subr.mxu0 0.0
  %6403 = vmatpush1.msra.mxu0 %v49
  %6404 = vmatprep.subr.mxu0 0.0
  %6405 = vmatpush1.msra.mxu0 %v48
  %6406 = vmatprep.subr.mxu0 0.0
  %6407 = vmatpush1.msra.mxu0 %v47
  %6408 = vmatprep.subr.mxu0 0.0
  %6409 = vmatpush1.msra.mxu0 %v46
  %6410 = vmatprep.subr.mxu0 0.0
  %6411 = vmatpush1.msra.mxu0 %v45
  %6412 = vmatprep.subr.mxu0 0.0
  %6413 = vmatpush1.msra.mxu0 %v44
  %6414 = vmatprep.subr.mxu0 0.0
  %6415 = vmatpush1.msra.mxu0 %v43
  %6416 = vmatprep.subr.mxu0 0.0
  %6417 = vmatpush1.msra.mxu0 %v42
  %6418 = vmatprep.subr.mxu0 0.0
  %6419 = vmatpush2.msra.mxu0 0.0
  %6420 = vmatprep.subr.mxu0 0.0
  %6421 = vmatpush2.msra.mxu0 0.0
  %6422 = vmatprep.subr.mxu0 0.0
  %6423 = vmatpush2.msra.mxu0 0.0
  %6424 = vmatprep.subr.mxu0 0.0
  %6425 = vmatpush2.msra.mxu0 0.0
  %6426 = vmatprep.subr.mxu0 0.0
  %6427 = vmatpush2.msra.mxu0 0.0
  %6428 = vmatprep.subr.mxu0 0.0
  %6429 = vmatpush2.msra.mxu0 0.0
  %6430 = vmatprep.subr.mxu0 0.0
  %6431 = vmatpush2.msra.mxu0 0.0
  %6432 = vmatprep.subr.mxu0 0.0
  %6433 = vmatpush2.msra.mxu0 0.0
  %6434 = vmatprep.subr.mxu0 0.0
  %6435 = vmatpush2.msra.mxu0 0.0
  %6436 = vmatprep.subr.mxu0 0.0
  %6437 = vmatpush2.msra.mxu0 0.0
  %6438 = vmatprep.subr.mxu0 0.0
  %6439 = vmatpush2.msra.mxu0 0.0
  %6440 = vmatprep.subr.mxu0 0.0
  %6441 = vmatpush2.msra.mxu0 0.0
  %6442 = vmatprep.subr.mxu0 0.0
  %6443 = vmatpush2.msra.mxu0 0.0
  %6444 = vmatprep.subr.mxu0 0.0
  %6445 = vmatpush2.msra.mxu0 0.0
  %6446 = vmatprep.subr.mxu0 0.0
  %6447 = vmatpush2.msra.mxu0 0.0
  %6448 = vmatprep.subr.mxu0 0.0
  %6449 = vmatpush2.msra.mxu0 0.0
  %6450 = vmatprep.mubr.f32.mxu0 0.0
  %6451 = vmatmul.mubr.f32.gmra.mxu0 %v6384
  %v6452 = vpop.f32.mrf.mxu0
  %v6453 = vadd.f32 %v141, %v6452
  %v6454 = vpop.f32.mrf.mxu0
  %6455 = vdwg.mxu0
  %v6456 = vmax.f32 %v6453, 0.0
  %s6457 = scalar_lea.vmem %s0, 320
  %v6458 = vld [vmem:[%s6457] sm:$0xff]
  %6460 = vrot.lane.b32.xlu0 %v6377, 32
  %v6461 = vpop.permute.xlu0 %6460
  %v6463 = vsel %vm53, %v6458, %v6461
  %v6465 = vsel %vm61, %v6463, 0
  %6467 = vmatprep.subr.mxu0 0.0
  %6468 = vmatpush1.msra.mxu0 0.0
  %6469 = vmatprep.subr.mxu0 0.0
  %6470 = vmatpush1.msra.mxu0 0.0
  %6471 = vmatprep.subr.mxu0 0.0
  %6472 = vmatpush1.msra.mxu0 0.0
  %6473 = vmatprep.subr.mxu0 0.0
  %6474 = vmatpush1.msra.mxu0 0.0
  %6475 = vmatprep.subr.mxu0 0.0
  %6476 = vmatpush1.msra.mxu0 0.0
  %6477 = vmatprep.subr.mxu0 0.0
  %6478 = vmatpush1.msra.mxu0 0.0
  %6479 = vmatprep.subr.mxu0 0.0
  %6480 = vmatpush1.msra.mxu0 0.0
  %6481 = vmatprep.subr.mxu0 0.0
  %6482 = vmatpush1.msra.mxu0 0.0
  %6483 = vmatprep.subr.mxu0 0.0
  %6484 = vmatpush1.msra.mxu0 %v41
  %6485 = vmatprep.subr.mxu0 0.0
  %6486 = vmatpush1.msra.mxu0 %v40
  %6487 = vmatprep.subr.mxu0 0.0
  %6488 = vmatpush1.msra.mxu0 %v39
  %6489 = vmatprep.subr.mxu0 0.0
  %6490 = vmatpush1.msra.mxu0 %v38
  %6491 = vmatprep.subr.mxu0 0.0
  %6492 = vmatpush1.msra.mxu0 %v37
  %6493 = vmatprep.subr.mxu0 0.0
  %6494 = vmatpush1.msra.mxu0 %v36
  %6495 = vmatprep.subr.mxu0 0.0
  %6496 = vmatpush1.msra.mxu0 %v35
  %6497 = vmatprep.subr.mxu0 0.0
  %6498 = vmatpush1.msra.mxu0 %v34
  %6499 = vmatprep.subr.mxu0 0.0
  %6500 = vmatpush2.msra.mxu0 0.0
  %6501 = vmatprep.subr.mxu0 0.0
  %6502 = vmatpush2.msra.mxu0 0.0
  %6503 = vmatprep.subr.mxu0 0.0
  %6504 = vmatpush2.msra.mxu0 0.0
  %6505 = vmatprep.subr.mxu0 0.0
  %6506 = vmatpush2.msra.mxu0 0.0
  %6507 = vmatprep.subr.mxu0 0.0
  %6508 = vmatpush2.msra.mxu0 0.0
  %6509 = vmatprep.subr.mxu0 0.0
  %6510 = vmatpush2.msra.mxu0 0.0
  %6511 = vmatprep.subr.mxu0 0.0
  %6512 = vmatpush2.msra.mxu0 0.0
  %6513 = vmatprep.subr.mxu0 0.0
  %6514 = vmatpush2.msra.mxu0 0.0
  %6515 = vmatprep.subr.mxu0 0.0
  %6516 = vmatpush2.msra.mxu0 0.0
  %6517 = vmatprep.subr.mxu0 0.0
  %6518 = vmatpush2.msra.mxu0 0.0
  %6519 = vmatprep.subr.mxu0 0.0
  %6520 = vmatpush2.msra.mxu0 0.0
  %6521 = vmatprep.subr.mxu0 0.0
  %6522 = vmatpush2.msra.mxu0 0.0
  %6523 = vmatprep.subr.mxu0 0.0
  %6524 = vmatpush2.msra.mxu0 0.0
  %6525 = vmatprep.subr.mxu0 0.0
  %6526 = vmatpush2.msra.mxu0 0.0
  %6527 = vmatprep.subr.mxu0 0.0
  %6528 = vmatpush2.msra.mxu0 0.0
  %6529 = vmatprep.subr.mxu0 0.0
  %6530 = vmatpush2.msra.mxu0 0.0
  %6531 = vmatprep.mubr.f32.mxu0 0.0
  %6532 = vmatmul.mubr.f32.gmra.mxu0 %v6465
  %v6533 = vpop.f32.mrf.mxu0
  %v6534 = vadd.f32 %v59, %v6533
  %v6535 = vpop.f32.mrf.mxu0
  %6536 = vdwg.mxu0
  %v6537 = vmax.f32 %v6534, 0.0
  %6539 = vrot.lane.b32.xlu0 %v6456, 32
  %v6540 = vpop.permute.xlu0 %6539
  %v6542 = vsel %vm53, %v6537, %v6540
  %v6544 = vsel %vm61, %v6542, 0
  %6546 = vmatprep.subr.mxu0 0.0
  %6547 = vmatpush1.msra.mxu0 0.0
  %6548 = vmatprep.subr.mxu0 0.0
  %6549 = vmatpush1.msra.mxu0 0.0
  %6550 = vmatprep.subr.mxu0 0.0
  %6551 = vmatpush1.msra.mxu0 0.0
  %6552 = vmatprep.subr.mxu0 0.0
  %6553 = vmatpush1.msra.mxu0 0.0
  %6554 = vmatprep.subr.mxu0 0.0
  %6555 = vmatpush1.msra.mxu0 0.0
  %6556 = vmatprep.subr.mxu0 0.0
  %6557 = vmatpush1.msra.mxu0 0.0
  %6558 = vmatprep.subr.mxu0 0.0
  %6559 = vmatpush1.msra.mxu0 0.0
  %6560 = vmatprep.subr.mxu0 0.0
  %6561 = vmatpush1.msra.mxu0 0.0
  %6562 = vmatprep.subr.mxu0 0.0
  %6563 = vmatpush1.msra.mxu0 %v49
  %6564 = vmatprep.subr.mxu0 0.0
  %6565 = vmatpush1.msra.mxu0 %v48
  %6566 = vmatprep.subr.mxu0 0.0
  %6567 = vmatpush1.msra.mxu0 %v47
  %6568 = vmatprep.subr.mxu0 0.0
  %6569 = vmatpush1.msra.mxu0 %v46
  %6570 = vmatprep.subr.mxu0 0.0
  %6571 = vmatpush1.msra.mxu0 %v45
  %6572 = vmatprep.subr.mxu0 0.0
  %6573 = vmatpush1.msra.mxu0 %v44
  %6574 = vmatprep.subr.mxu0 0.0
  %6575 = vmatpush1.msra.mxu0 %v43
  %6576 = vmatprep.subr.mxu0 0.0
  %6577 = vmatpush1.msra.mxu0 %v42
  %6578 = vmatprep.subr.mxu0 0.0
  %6579 = vmatpush2.msra.mxu0 0.0
  %6580 = vmatprep.subr.mxu0 0.0
  %6581 = vmatpush2.msra.mxu0 0.0
  %6582 = vmatprep.subr.mxu0 0.0
  %6583 = vmatpush2.msra.mxu0 0.0
  %6584 = vmatprep.subr.mxu0 0.0
  %6585 = vmatpush2.msra.mxu0 0.0
  %6586 = vmatprep.subr.mxu0 0.0
  %6587 = vmatpush2.msra.mxu0 0.0
  %6588 = vmatprep.subr.mxu0 0.0
  %6589 = vmatpush2.msra.mxu0 0.0
  %6590 = vmatprep.subr.mxu0 0.0
  %6591 = vmatpush2.msra.mxu0 0.0
  %6592 = vmatprep.subr.mxu0 0.0
  %6593 = vmatpush2.msra.mxu0 0.0
  %6594 = vmatprep.subr.mxu0 0.0
  %6595 = vmatpush2.msra.mxu0 0.0
  %6596 = vmatprep.subr.mxu0 0.0
  %6597 = vmatpush2.msra.mxu0 0.0
  %6598 = vmatprep.subr.mxu0 0.0
  %6599 = vmatpush2.msra.mxu0 0.0
  %6600 = vmatprep.subr.mxu0 0.0
  %6601 = vmatpush2.msra.mxu0 0.0
  %6602 = vmatprep.subr.mxu0 0.0
  %6603 = vmatpush2.msra.mxu0 0.0
  %6604 = vmatprep.subr.mxu0 0.0
  %6605 = vmatpush2.msra.mxu0 0.0
  %6606 = vmatprep.subr.mxu0 0.0
  %6607 = vmatpush2.msra.mxu0 0.0
  %6608 = vmatprep.subr.mxu0 0.0
  %6609 = vmatpush2.msra.mxu0 0.0
  %6610 = vmatprep.mubr.f32.mxu0 0.0
  %6611 = vmatmul.mubr.f32.gmra.mxu0 %v6544
  %v6612 = vpop.f32.mrf.mxu0
  %v6613 = vadd.f32 %v141, %v6612
  %v6614 = vpop.f32.mrf.mxu0
  %6615 = vdwg.mxu0
  %v6616 = vmax.f32 %v6613, 0.0
  %s6617 = scalar_lea.vmem %s0, 328
  %v6618 = vld [vmem:[%s6617] sm:$0xff]
  %6620 = vrot.lane.b32.xlu0 %v6537, 32
  %v6621 = vpop.permute.xlu0 %6620
  %v6623 = vsel %vm53, %v6618, %v6621
  %v6625 = vsel %vm61, %v6623, 0
  %6627 = vmatprep.subr.mxu0 0.0
  %6628 = vmatpush1.msra.mxu0 0.0
  %6629 = vmatprep.subr.mxu0 0.0
  %6630 = vmatpush1.msra.mxu0 0.0
  %6631 = vmatprep.subr.mxu0 0.0
  %6632 = vmatpush1.msra.mxu0 0.0
  %6633 = vmatprep.subr.mxu0 0.0
  %6634 = vmatpush1.msra.mxu0 0.0
  %6635 = vmatprep.subr.mxu0 0.0
  %6636 = vmatpush1.msra.mxu0 0.0
  %6637 = vmatprep.subr.mxu0 0.0
  %6638 = vmatpush1.msra.mxu0 0.0
  %6639 = vmatprep.subr.mxu0 0.0
  %6640 = vmatpush1.msra.mxu0 0.0
  %6641 = vmatprep.subr.mxu0 0.0
  %6642 = vmatpush1.msra.mxu0 0.0
  %6643 = vmatprep.subr.mxu0 0.0
  %6644 = vmatpush1.msra.mxu0 %v41
  %6645 = vmatprep.subr.mxu0 0.0
  %6646 = vmatpush1.msra.mxu0 %v40
  %6647 = vmatprep.subr.mxu0 0.0
  %6648 = vmatpush1.msra.mxu0 %v39
  %6649 = vmatprep.subr.mxu0 0.0
  %6650 = vmatpush1.msra.mxu0 %v38
  %6651 = vmatprep.subr.mxu0 0.0
  %6652 = vmatpush1.msra.mxu0 %v37
  %6653 = vmatprep.subr.mxu0 0.0
  %6654 = vmatpush1.msra.mxu0 %v36
  %6655 = vmatprep.subr.mxu0 0.0
  %6656 = vmatpush1.msra.mxu0 %v35
  %6657 = vmatprep.subr.mxu0 0.0
  %6658 = vmatpush1.msra.mxu0 %v34
  %6659 = vmatprep.subr.mxu0 0.0
  %6660 = vmatpush2.msra.mxu0 0.0
  %6661 = vmatprep.subr.mxu0 0.0
  %6662 = vmatpush2.msra.mxu0 0.0
  %6663 = vmatprep.subr.mxu0 0.0
  %6664 = vmatpush2.msra.mxu0 0.0
  %6665 = vmatprep.subr.mxu0 0.0
  %6666 = vmatpush2.msra.mxu0 0.0
  %6667 = vmatprep.subr.mxu0 0.0
  %6668 = vmatpush2.msra.mxu0 0.0
  %6669 = vmatprep.subr.mxu0 0.0
  %6670 = vmatpush2.msra.mxu0 0.0
  %6671 = vmatprep.subr.mxu0 0.0
  %6672 = vmatpush2.msra.mxu0 0.0
  %6673 = vmatprep.subr.mxu0 0.0
  %6674 = vmatpush2.msra.mxu0 0.0
  %6675 = vmatprep.subr.mxu0 0.0
  %6676 = vmatpush2.msra.mxu0 0.0
  %6677 = vmatprep.subr.mxu0 0.0
  %6678 = vmatpush2.msra.mxu0 0.0
  %6679 = vmatprep.subr.mxu0 0.0
  %6680 = vmatpush2.msra.mxu0 0.0
  %6681 = vmatprep.subr.mxu0 0.0
  %6682 = vmatpush2.msra.mxu0 0.0
  %6683 = vmatprep.subr.mxu0 0.0
  %6684 = vmatpush2.msra.mxu0 0.0
  %6685 = vmatprep.subr.mxu0 0.0
  %6686 = vmatpush2.msra.mxu0 0.0
  %6687 = vmatprep.subr.mxu0 0.0
  %6688 = vmatpush2.msra.mxu0 0.0
  %6689 = vmatprep.subr.mxu0 0.0
  %6690 = vmatpush2.msra.mxu0 0.0
  %6691 = vmatprep.mubr.f32.mxu0 0.0
  %6692 = vmatmul.mubr.f32.gmra.mxu0 %v6625
  %v6693 = vpop.f32.mrf.mxu0
  %v6694 = vadd.f32 %v59, %v6693
  %v6695 = vpop.f32.mrf.mxu0
  %6696 = vdwg.mxu0
  %v6697 = vmax.f32 %v6694, 0.0
  %6699 = vrot.lane.b32.xlu0 %v6616, 32
  %v6700 = vpop.permute.xlu0 %6699
  %v6702 = vsel %vm53, %v6697, %v6700
  %v6704 = vsel %vm61, %v6702, 0
  %6706 = vmatprep.subr.mxu0 0.0
  %6707 = vmatpush1.msra.mxu0 0.0
  %6708 = vmatprep.subr.mxu0 0.0
  %6709 = vmatpush1.msra.mxu0 0.0
  %6710 = vmatprep.subr.mxu0 0.0
  %6711 = vmatpush1.msra.mxu0 0.0
  %6712 = vmatprep.subr.mxu0 0.0
  %6713 = vmatpush1.msra.mxu0 0.0
  %6714 = vmatprep.subr.mxu0 0.0
  %6715 = vmatpush1.msra.mxu0 0.0
  %6716 = vmatprep.subr.mxu0 0.0
  %6717 = vmatpush1.msra.mxu0 0.0
  %6718 = vmatprep.subr.mxu0 0.0
  %6719 = vmatpush1.msra.mxu0 0.0
  %6720 = vmatprep.subr.mxu0 0.0
  %6721 = vmatpush1.msra.mxu0 0.0
  %6722 = vmatprep.subr.mxu0 0.0
  %6723 = vmatpush1.msra.mxu0 %v49
  %6724 = vmatprep.subr.mxu0 0.0
  %6725 = vmatpush1.msra.mxu0 %v48
  %6726 = vmatprep.subr.mxu0 0.0
  %6727 = vmatpush1.msra.mxu0 %v47
  %6728 = vmatprep.subr.mxu0 0.0
  %6729 = vmatpush1.msra.mxu0 %v46
  %6730 = vmatprep.subr.mxu0 0.0
  %6731 = vmatpush1.msra.mxu0 %v45
  %6732 = vmatprep.subr.mxu0 0.0
  %6733 = vmatpush1.msra.mxu0 %v44
  %6734 = vmatprep.subr.mxu0 0.0
  %6735 = vmatpush1.msra.mxu0 %v43
  %6736 = vmatprep.subr.mxu0 0.0
  %6737 = vmatpush1.msra.mxu0 %v42
  %6738 = vmatprep.subr.mxu0 0.0
  %6739 = vmatpush2.msra.mxu0 0.0
  %6740 = vmatprep.subr.mxu0 0.0
  %6741 = vmatpush2.msra.mxu0 0.0
  %6742 = vmatprep.subr.mxu0 0.0
  %6743 = vmatpush2.msra.mxu0 0.0
  %6744 = vmatprep.subr.mxu0 0.0
  %6745 = vmatpush2.msra.mxu0 0.0
  %6746 = vmatprep.subr.mxu0 0.0
  %6747 = vmatpush2.msra.mxu0 0.0
  %6748 = vmatprep.subr.mxu0 0.0
  %6749 = vmatpush2.msra.mxu0 0.0
  %6750 = vmatprep.subr.mxu0 0.0
  %6751 = vmatpush2.msra.mxu0 0.0
  %6752 = vmatprep.subr.mxu0 0.0
  %6753 = vmatpush2.msra.mxu0 0.0
  %6754 = vmatprep.subr.mxu0 0.0
  %6755 = vmatpush2.msra.mxu0 0.0
  %6756 = vmatprep.subr.mxu0 0.0
  %6757 = vmatpush2.msra.mxu0 0.0
  %6758 = vmatprep.subr.mxu0 0.0
  %6759 = vmatpush2.msra.mxu0 0.0
  %6760 = vmatprep.subr.mxu0 0.0
  %6761 = vmatpush2.msra.mxu0 0.0
  %6762 = vmatprep.subr.mxu0 0.0
  %6763 = vmatpush2.msra.mxu0 0.0
  %6764 = vmatprep.subr.mxu0 0.0
  %6765 = vmatpush2.msra.mxu0 0.0
  %6766 = vmatprep.subr.mxu0 0.0
  %6767 = vmatpush2.msra.mxu0 0.0
  %6768 = vmatprep.subr.mxu0 0.0
  %6769 = vmatpush2.msra.mxu0 0.0
  %6770 = vmatprep.mubr.f32.mxu0 0.0
  %6771 = vmatmul.mubr.f32.gmra.mxu0 %v6704
  %v6772 = vpop.f32.mrf.mxu0
  %v6773 = vadd.f32 %v141, %v6772
  %v6774 = vpop.f32.mrf.mxu0
  %6775 = vdwg.mxu0
  %v6776 = vmax.f32 %v6773, 0.0
  %s6777 = scalar_lea.vmem %s0, 336
  %v6778 = vld [vmem:[%s6777] sm:$0xff]
  %6780 = vrot.lane.b32.xlu0 %v6697, 32
  %v6781 = vpop.permute.xlu0 %6780
  %v6783 = vsel %vm53, %v6778, %v6781
  %v6785 = vsel %vm61, %v6783, 0
  %6787 = vmatprep.subr.mxu0 0.0
  %6788 = vmatpush1.msra.mxu0 0.0
  %6789 = vmatprep.subr.mxu0 0.0
  %6790 = vmatpush1.msra.mxu0 0.0
  %6791 = vmatprep.subr.mxu0 0.0
  %6792 = vmatpush1.msra.mxu0 0.0
  %6793 = vmatprep.subr.mxu0 0.0
  %6794 = vmatpush1.msra.mxu0 0.0
  %6795 = vmatprep.subr.mxu0 0.0
  %6796 = vmatpush1.msra.mxu0 0.0
  %6797 = vmatprep.subr.mxu0 0.0
  %6798 = vmatpush1.msra.mxu0 0.0
  %6799 = vmatprep.subr.mxu0 0.0
  %6800 = vmatpush1.msra.mxu0 0.0
  %6801 = vmatprep.subr.mxu0 0.0
  %6802 = vmatpush1.msra.mxu0 0.0
  %6803 = vmatprep.subr.mxu0 0.0
  %6804 = vmatpush1.msra.mxu0 %v41
  %6805 = vmatprep.subr.mxu0 0.0
  %6806 = vmatpush1.msra.mxu0 %v40
  %6807 = vmatprep.subr.mxu0 0.0
  %6808 = vmatpush1.msra.mxu0 %v39
  %6809 = vmatprep.subr.mxu0 0.0
  %6810 = vmatpush1.msra.mxu0 %v38
  %6811 = vmatprep.subr.mxu0 0.0
  %6812 = vmatpush1.msra.mxu0 %v37
  %6813 = vmatprep.subr.mxu0 0.0
  %6814 = vmatpush1.msra.mxu0 %v36
  %6815 = vmatprep.subr.mxu0 0.0
  %6816 = vmatpush1.msra.mxu0 %v35
  %6817 = vmatprep.subr.mxu0 0.0
  %6818 = vmatpush1.msra.mxu0 %v34
  %6819 = vmatprep.subr.mxu0 0.0
  %6820 = vmatpush2.msra.mxu0 0.0
  %6821 = vmatprep.subr.mxu0 0.0
  %6822 = vmatpush2.msra.mxu0 0.0
  %6823 = vmatprep.subr.mxu0 0.0
  %6824 = vmatpush2.msra.mxu0 0.0
  %6825 = vmatprep.subr.mxu0 0.0
  %6826 = vmatpush2.msra.mxu0 0.0
  %6827 = vmatprep.subr.mxu0 0.0
  %6828 = vmatpush2.msra.mxu0 0.0
  %6829 = vmatprep.subr.mxu0 0.0
  %6830 = vmatpush2.msra.mxu0 0.0
  %6831 = vmatprep.subr.mxu0 0.0
  %6832 = vmatpush2.msra.mxu0 0.0
  %6833 = vmatprep.subr.mxu0 0.0
  %6834 = vmatpush2.msra.mxu0 0.0
  %6835 = vmatprep.subr.mxu0 0.0
  %6836 = vmatpush2.msra.mxu0 0.0
  %6837 = vmatprep.subr.mxu0 0.0
  %6838 = vmatpush2.msra.mxu0 0.0
  %6839 = vmatprep.subr.mxu0 0.0
  %6840 = vmatpush2.msra.mxu0 0.0
  %6841 = vmatprep.subr.mxu0 0.0
  %6842 = vmatpush2.msra.mxu0 0.0
  %6843 = vmatprep.subr.mxu0 0.0
  %6844 = vmatpush2.msra.mxu0 0.0
  %6845 = vmatprep.subr.mxu0 0.0
  %6846 = vmatpush2.msra.mxu0 0.0
  %6847 = vmatprep.subr.mxu0 0.0
  %6848 = vmatpush2.msra.mxu0 0.0
  %6849 = vmatprep.subr.mxu0 0.0
  %6850 = vmatpush2.msra.mxu0 0.0
  %6851 = vmatprep.mubr.f32.mxu0 0.0
  %6852 = vmatmul.mubr.f32.gmra.mxu0 %v6785
  %v6853 = vpop.f32.mrf.mxu0
  %v6854 = vadd.f32 %v59, %v6853
  %v6855 = vpop.f32.mrf.mxu0
  %6856 = vdwg.mxu0
  %v6857 = vmax.f32 %v6854, 0.0
  %6859 = vrot.lane.b32.xlu0 %v6776, 32
  %v6860 = vpop.permute.xlu0 %6859
  %v6862 = vsel %vm53, %v6857, %v6860
  %v6864 = vsel %vm61, %v6862, 0
  %6866 = vmatprep.subr.mxu0 0.0
  %6867 = vmatpush1.msra.mxu0 0.0
  %6868 = vmatprep.subr.mxu0 0.0
  %6869 = vmatpush1.msra.mxu0 0.0
  %6870 = vmatprep.subr.mxu0 0.0
  %6871 = vmatpush1.msra.mxu0 0.0
  %6872 = vmatprep.subr.mxu0 0.0
  %6873 = vmatpush1.msra.mxu0 0.0
  %6874 = vmatprep.subr.mxu0 0.0
  %6875 = vmatpush1.msra.mxu0 0.0
  %6876 = vmatprep.subr.mxu0 0.0
  %6877 = vmatpush1.msra.mxu0 0.0
  %6878 = vmatprep.subr.mxu0 0.0
  %6879 = vmatpush1.msra.mxu0 0.0
  %6880 = vmatprep.subr.mxu0 0.0
  %6881 = vmatpush1.msra.mxu0 0.0
  %6882 = vmatprep.subr.mxu0 0.0
  %6883 = vmatpush1.msra.mxu0 %v49
  %6884 = vmatprep.subr.mxu0 0.0
  %6885 = vmatpush1.msra.mxu0 %v48
  %6886 = vmatprep.subr.mxu0 0.0
  %6887 = vmatpush1.msra.mxu0 %v47
  %6888 = vmatprep.subr.mxu0 0.0
  %6889 = vmatpush1.msra.mxu0 %v46
  %6890 = vmatprep.subr.mxu0 0.0
  %6891 = vmatpush1.msra.mxu0 %v45
  %6892 = vmatprep.subr.mxu0 0.0
  %6893 = vmatpush1.msra.mxu0 %v44
  %6894 = vmatprep.subr.mxu0 0.0
  %6895 = vmatpush1.msra.mxu0 %v43
  %6896 = vmatprep.subr.mxu0 0.0
  %6897 = vmatpush1.msra.mxu0 %v42
  %6898 = vmatprep.subr.mxu0 0.0
  %6899 = vmatpush2.msra.mxu0 0.0
  %6900 = vmatprep.subr.mxu0 0.0
  %6901 = vmatpush2.msra.mxu0 0.0
  %6902 = vmatprep.subr.mxu0 0.0
  %6903 = vmatpush2.msra.mxu0 0.0
  %6904 = vmatprep.subr.mxu0 0.0
  %6905 = vmatpush2.msra.mxu0 0.0
  %6906 = vmatprep.subr.mxu0 0.0
  %6907 = vmatpush2.msra.mxu0 0.0
  %6908 = vmatprep.subr.mxu0 0.0
  %6909 = vmatpush2.msra.mxu0 0.0
  %6910 = vmatprep.subr.mxu0 0.0
  %6911 = vmatpush2.msra.mxu0 0.0
  %6912 = vmatprep.subr.mxu0 0.0
  %6913 = vmatpush2.msra.mxu0 0.0
  %6914 = vmatprep.subr.mxu0 0.0
  %6915 = vmatpush2.msra.mxu0 0.0
  %6916 = vmatprep.subr.mxu0 0.0
  %6917 = vmatpush2.msra.mxu0 0.0
  %6918 = vmatprep.subr.mxu0 0.0
  %6919 = vmatpush2.msra.mxu0 0.0
  %6920 = vmatprep.subr.mxu0 0.0
  %6921 = vmatpush2.msra.mxu0 0.0
  %6922 = vmatprep.subr.mxu0 0.0
  %6923 = vmatpush2.msra.mxu0 0.0
  %6924 = vmatprep.subr.mxu0 0.0
  %6925 = vmatpush2.msra.mxu0 0.0
  %6926 = vmatprep.subr.mxu0 0.0
  %6927 = vmatpush2.msra.mxu0 0.0
  %6928 = vmatprep.subr.mxu0 0.0
  %6929 = vmatpush2.msra.mxu0 0.0
  %6930 = vmatprep.mubr.f32.mxu0 0.0
  %6931 = vmatmul.mubr.f32.gmra.mxu0 %v6864
  %v6932 = vpop.f32.mrf.mxu0
  %v6933 = vadd.f32 %v141, %v6932
  %v6934 = vpop.f32.mrf.mxu0
  %6935 = vdwg.mxu0
  %v6936 = vmax.f32 %v6933, 0.0
  %s6937 = scalar_lea.vmem %s0, 344
  %v6938 = vld [vmem:[%s6937] sm:$0xff]
  %6940 = vrot.lane.b32.xlu0 %v6857, 32
  %v6941 = vpop.permute.xlu0 %6940
  %v6943 = vsel %vm53, %v6938, %v6941
  %v6945 = vsel %vm61, %v6943, 0
  %6947 = vmatprep.subr.mxu0 0.0
  %6948 = vmatpush1.msra.mxu0 0.0
  %6949 = vmatprep.subr.mxu0 0.0
  %6950 = vmatpush1.msra.mxu0 0.0
  %6951 = vmatprep.subr.mxu0 0.0
  %6952 = vmatpush1.msra.mxu0 0.0
  %6953 = vmatprep.subr.mxu0 0.0
  %6954 = vmatpush1.msra.mxu0 0.0
  %6955 = vmatprep.subr.mxu0 0.0
  %6956 = vmatpush1.msra.mxu0 0.0
  %6957 = vmatprep.subr.mxu0 0.0
  %6958 = vmatpush1.msra.mxu0 0.0
  %6959 = vmatprep.subr.mxu0 0.0
  %6960 = vmatpush1.msra.mxu0 0.0
  %6961 = vmatprep.subr.mxu0 0.0
  %6962 = vmatpush1.msra.mxu0 0.0
  %6963 = vmatprep.subr.mxu0 0.0
  %6964 = vmatpush1.msra.mxu0 %v41
  %6965 = vmatprep.subr.mxu0 0.0
  %6966 = vmatpush1.msra.mxu0 %v40
  %6967 = vmatprep.subr.mxu0 0.0
  %6968 = vmatpush1.msra.mxu0 %v39
  %6969 = vmatprep.subr.mxu0 0.0
  %6970 = vmatpush1.msra.mxu0 %v38
  %6971 = vmatprep.subr.mxu0 0.0
  %6972 = vmatpush1.msra.mxu0 %v37
  %6973 = vmatprep.subr.mxu0 0.0
  %6974 = vmatpush1.msra.mxu0 %v36
  %6975 = vmatprep.subr.mxu0 0.0
  %6976 = vmatpush1.msra.mxu0 %v35
  %6977 = vmatprep.subr.mxu0 0.0
  %6978 = vmatpush1.msra.mxu0 %v34
  %6979 = vmatprep.subr.mxu0 0.0
  %6980 = vmatpush2.msra.mxu0 0.0
  %6981 = vmatprep.subr.mxu0 0.0
  %6982 = vmatpush2.msra.mxu0 0.0
  %6983 = vmatprep.subr.mxu0 0.0
  %6984 = vmatpush2.msra.mxu0 0.0
  %6985 = vmatprep.subr.mxu0 0.0
  %6986 = vmatpush2.msra.mxu0 0.0
  %6987 = vmatprep.subr.mxu0 0.0
  %6988 = vmatpush2.msra.mxu0 0.0
  %6989 = vmatprep.subr.mxu0 0.0
  %6990 = vmatpush2.msra.mxu0 0.0
  %6991 = vmatprep.subr.mxu0 0.0
  %6992 = vmatpush2.msra.mxu0 0.0
  %6993 = vmatprep.subr.mxu0 0.0
  %6994 = vmatpush2.msra.mxu0 0.0
  %6995 = vmatprep.subr.mxu0 0.0
  %6996 = vmatpush2.msra.mxu0 0.0
  %6997 = vmatprep.subr.mxu0 0.0
  %6998 = vmatpush2.msra.mxu0 0.0
  %6999 = vmatprep.subr.mxu0 0.0
  %7000 = vmatpush2.msra.mxu0 0.0
  %7001 = vmatprep.subr.mxu0 0.0
  %7002 = vmatpush2.msra.mxu0 0.0
  %7003 = vmatprep.subr.mxu0 0.0
  %7004 = vmatpush2.msra.mxu0 0.0
  %7005 = vmatprep.subr.mxu0 0.0
  %7006 = vmatpush2.msra.mxu0 0.0
  %7007 = vmatprep.subr.mxu0 0.0
  %7008 = vmatpush2.msra.mxu0 0.0
  %7009 = vmatprep.subr.mxu0 0.0
  %7010 = vmatpush2.msra.mxu0 0.0
  %7011 = vmatprep.mubr.f32.mxu0 0.0
  %7012 = vmatmul.mubr.f32.gmra.mxu0 %v6945
  %v7013 = vpop.f32.mrf.mxu0
  %v7014 = vadd.f32 %v59, %v7013
  %v7015 = vpop.f32.mrf.mxu0
  %7016 = vdwg.mxu0
  %v7017 = vmax.f32 %v7014, 0.0
  %7019 = vrot.lane.b32.xlu0 %v6936, 32
  %v7020 = vpop.permute.xlu0 %7019
  %v7022 = vsel %vm53, %v7017, %v7020
  %v7024 = vsel %vm61, %v7022, 0
  %7026 = vmatprep.subr.mxu0 0.0
  %7027 = vmatpush1.msra.mxu0 0.0
  %7028 = vmatprep.subr.mxu0 0.0
  %7029 = vmatpush1.msra.mxu0 0.0
  %7030 = vmatprep.subr.mxu0 0.0
  %7031 = vmatpush1.msra.mxu0 0.0
  %7032 = vmatprep.subr.mxu0 0.0
  %7033 = vmatpush1.msra.mxu0 0.0
  %7034 = vmatprep.subr.mxu0 0.0
  %7035 = vmatpush1.msra.mxu0 0.0
  %7036 = vmatprep.subr.mxu0 0.0
  %7037 = vmatpush1.msra.mxu0 0.0
  %7038 = vmatprep.subr.mxu0 0.0
  %7039 = vmatpush1.msra.mxu0 0.0
  %7040 = vmatprep.subr.mxu0 0.0
  %7041 = vmatpush1.msra.mxu0 0.0
  %7042 = vmatprep.subr.mxu0 0.0
  %7043 = vmatpush1.msra.mxu0 %v49
  %7044 = vmatprep.subr.mxu0 0.0
  %7045 = vmatpush1.msra.mxu0 %v48
  %7046 = vmatprep.subr.mxu0 0.0
  %7047 = vmatpush1.msra.mxu0 %v47
  %7048 = vmatprep.subr.mxu0 0.0
  %7049 = vmatpush1.msra.mxu0 %v46
  %7050 = vmatprep.subr.mxu0 0.0
  %7051 = vmatpush1.msra.mxu0 %v45
  %7052 = vmatprep.subr.mxu0 0.0
  %7053 = vmatpush1.msra.mxu0 %v44
  %7054 = vmatprep.subr.mxu0 0.0
  %7055 = vmatpush1.msra.mxu0 %v43
  %7056 = vmatprep.subr.mxu0 0.0
  %7057 = vmatpush1.msra.mxu0 %v42
  %7058 = vmatprep.subr.mxu0 0.0
  %7059 = vmatpush2.msra.mxu0 0.0
  %7060 = vmatprep.subr.mxu0 0.0
  %7061 = vmatpush2.msra.mxu0 0.0
  %7062 = vmatprep.subr.mxu0 0.0
  %7063 = vmatpush2.msra.mxu0 0.0
  %7064 = vmatprep.subr.mxu0 0.0
  %7065 = vmatpush2.msra.mxu0 0.0
  %7066 = vmatprep.subr.mxu0 0.0
  %7067 = vmatpush2.msra.mxu0 0.0
  %7068 = vmatprep.subr.mxu0 0.0
  %7069 = vmatpush2.msra.mxu0 0.0
  %7070 = vmatprep.subr.mxu0 0.0
  %7071 = vmatpush2.msra.mxu0 0.0
  %7072 = vmatprep.subr.mxu0 0.0
  %7073 = vmatpush2.msra.mxu0 0.0
  %7074 = vmatprep.subr.mxu0 0.0
  %7075 = vmatpush2.msra.mxu0 0.0
  %7076 = vmatprep.subr.mxu0 0.0
  %7077 = vmatpush2.msra.mxu0 0.0
  %7078 = vmatprep.subr.mxu0 0.0
  %7079 = vmatpush2.msra.mxu0 0.0
  %7080 = vmatprep.subr.mxu0 0.0
  %7081 = vmatpush2.msra.mxu0 0.0
  %7082 = vmatprep.subr.mxu0 0.0
  %7083 = vmatpush2.msra.mxu0 0.0
  %7084 = vmatprep.subr.mxu0 0.0
  %7085 = vmatpush2.msra.mxu0 0.0
  %7086 = vmatprep.subr.mxu0 0.0
  %7087 = vmatpush2.msra.mxu0 0.0
  %7088 = vmatprep.subr.mxu0 0.0
  %7089 = vmatpush2.msra.mxu0 0.0
  %7090 = vmatprep.mubr.f32.mxu0 0.0
  %7091 = vmatmul.mubr.f32.gmra.mxu0 %v7024
  %v7092 = vpop.f32.mrf.mxu0
  %v7093 = vadd.f32 %v141, %v7092
  %v7094 = vpop.f32.mrf.mxu0
  %7095 = vdwg.mxu0
  %v7096 = vmax.f32 %v7093, 0.0
  %s7097 = scalar_lea.vmem %s0, 352
  %v7098 = vld [vmem:[%s7097] sm:$0xff]
  %7100 = vrot.lane.b32.xlu0 %v7017, 32
  %v7101 = vpop.permute.xlu0 %7100
  %v7103 = vsel %vm53, %v7098, %v7101
  %v7105 = vsel %vm61, %v7103, 0
  %7107 = vmatprep.subr.mxu0 0.0
  %7108 = vmatpush1.msra.mxu0 0.0
  %7109 = vmatprep.subr.mxu0 0.0
  %7110 = vmatpush1.msra.mxu0 0.0
  %7111 = vmatprep.subr.mxu0 0.0
  %7112 = vmatpush1.msra.mxu0 0.0
  %7113 = vmatprep.subr.mxu0 0.0
  %7114 = vmatpush1.msra.mxu0 0.0
  %7115 = vmatprep.subr.mxu0 0.0
  %7116 = vmatpush1.msra.mxu0 0.0
  %7117 = vmatprep.subr.mxu0 0.0
  %7118 = vmatpush1.msra.mxu0 0.0
  %7119 = vmatprep.subr.mxu0 0.0
  %7120 = vmatpush1.msra.mxu0 0.0
  %7121 = vmatprep.subr.mxu0 0.0
  %7122 = vmatpush1.msra.mxu0 0.0
  %7123 = vmatprep.subr.mxu0 0.0
  %7124 = vmatpush1.msra.mxu0 %v41
  %7125 = vmatprep.subr.mxu0 0.0
  %7126 = vmatpush1.msra.mxu0 %v40
  %7127 = vmatprep.subr.mxu0 0.0
  %7128 = vmatpush1.msra.mxu0 %v39
  %7129 = vmatprep.subr.mxu0 0.0
  %7130 = vmatpush1.msra.mxu0 %v38
  %7131 = vmatprep.subr.mxu0 0.0
  %7132 = vmatpush1.msra.mxu0 %v37
  %7133 = vmatprep.subr.mxu0 0.0
  %7134 = vmatpush1.msra.mxu0 %v36
  %7135 = vmatprep.subr.mxu0 0.0
  %7136 = vmatpush1.msra.mxu0 %v35
  %7137 = vmatprep.subr.mxu0 0.0
  %7138 = vmatpush1.msra.mxu0 %v34
  %7139 = vmatprep.subr.mxu0 0.0
  %7140 = vmatpush2.msra.mxu0 0.0
  %7141 = vmatprep.subr.mxu0 0.0
  %7142 = vmatpush2.msra.mxu0 0.0
  %7143 = vmatprep.subr.mxu0 0.0
  %7144 = vmatpush2.msra.mxu0 0.0
  %7145 = vmatprep.subr.mxu0 0.0
  %7146 = vmatpush2.msra.mxu0 0.0
  %7147 = vmatprep.subr.mxu0 0.0
  %7148 = vmatpush2.msra.mxu0 0.0
  %7149 = vmatprep.subr.mxu0 0.0
  %7150 = vmatpush2.msra.mxu0 0.0
  %7151 = vmatprep.subr.mxu0 0.0
  %7152 = vmatpush2.msra.mxu0 0.0
  %7153 = vmatprep.subr.mxu0 0.0
  %7154 = vmatpush2.msra.mxu0 0.0
  %7155 = vmatprep.subr.mxu0 0.0
  %7156 = vmatpush2.msra.mxu0 0.0
  %7157 = vmatprep.subr.mxu0 0.0
  %7158 = vmatpush2.msra.mxu0 0.0
  %7159 = vmatprep.subr.mxu0 0.0
  %7160 = vmatpush2.msra.mxu0 0.0
  %7161 = vmatprep.subr.mxu0 0.0
  %7162 = vmatpush2.msra.mxu0 0.0
  %7163 = vmatprep.subr.mxu0 0.0
  %7164 = vmatpush2.msra.mxu0 0.0
  %7165 = vmatprep.subr.mxu0 0.0
  %7166 = vmatpush2.msra.mxu0 0.0
  %7167 = vmatprep.subr.mxu0 0.0
  %7168 = vmatpush2.msra.mxu0 0.0
  %7169 = vmatprep.subr.mxu0 0.0
  %7170 = vmatpush2.msra.mxu0 0.0
  %7171 = vmatprep.mubr.f32.mxu0 0.0
  %7172 = vmatmul.mubr.f32.gmra.mxu0 %v7105
  %v7173 = vpop.f32.mrf.mxu0
  %v7174 = vadd.f32 %v59, %v7173
  %v7175 = vpop.f32.mrf.mxu0
  %7176 = vdwg.mxu0
  %v7177 = vmax.f32 %v7174, 0.0
  %7179 = vrot.lane.b32.xlu0 %v7096, 32
  %v7180 = vpop.permute.xlu0 %7179
  %v7182 = vsel %vm53, %v7177, %v7180
  %v7184 = vsel %vm61, %v7182, 0
  %7186 = vmatprep.subr.mxu0 0.0
  %7187 = vmatpush1.msra.mxu0 0.0
  %7188 = vmatprep.subr.mxu0 0.0
  %7189 = vmatpush1.msra.mxu0 0.0
  %7190 = vmatprep.subr.mxu0 0.0
  %7191 = vmatpush1.msra.mxu0 0.0
  %7192 = vmatprep.subr.mxu0 0.0
  %7193 = vmatpush1.msra.mxu0 0.0
  %7194 = vmatprep.subr.mxu0 0.0
  %7195 = vmatpush1.msra.mxu0 0.0
  %7196 = vmatprep.subr.mxu0 0.0
  %7197 = vmatpush1.msra.mxu0 0.0
  %7198 = vmatprep.subr.mxu0 0.0
  %7199 = vmatpush1.msra.mxu0 0.0
  %7200 = vmatprep.subr.mxu0 0.0
  %7201 = vmatpush1.msra.mxu0 0.0
  %7202 = vmatprep.subr.mxu0 0.0
  %7203 = vmatpush1.msra.mxu0 %v49
  %7204 = vmatprep.subr.mxu0 0.0
  %7205 = vmatpush1.msra.mxu0 %v48
  %7206 = vmatprep.subr.mxu0 0.0
  %7207 = vmatpush1.msra.mxu0 %v47
  %7208 = vmatprep.subr.mxu0 0.0
  %7209 = vmatpush1.msra.mxu0 %v46
  %7210 = vmatprep.subr.mxu0 0.0
  %7211 = vmatpush1.msra.mxu0 %v45
  %7212 = vmatprep.subr.mxu0 0.0
  %7213 = vmatpush1.msra.mxu0 %v44
  %7214 = vmatprep.subr.mxu0 0.0
  %7215 = vmatpush1.msra.mxu0 %v43
  %7216 = vmatprep.subr.mxu0 0.0
  %7217 = vmatpush1.msra.mxu0 %v42
  %7218 = vmatprep.subr.mxu0 0.0
  %7219 = vmatpush2.msra.mxu0 0.0
  %7220 = vmatprep.subr.mxu0 0.0
  %7221 = vmatpush2.msra.mxu0 0.0
  %7222 = vmatprep.subr.mxu0 0.0
  %7223 = vmatpush2.msra.mxu0 0.0
  %7224 = vmatprep.subr.mxu0 0.0
  %7225 = vmatpush2.msra.mxu0 0.0
  %7226 = vmatprep.subr.mxu0 0.0
  %7227 = vmatpush2.msra.mxu0 0.0
  %7228 = vmatprep.subr.mxu0 0.0
  %7229 = vmatpush2.msra.mxu0 0.0
  %7230 = vmatprep.subr.mxu0 0.0
  %7231 = vmatpush2.msra.mxu0 0.0
  %7232 = vmatprep.subr.mxu0 0.0
  %7233 = vmatpush2.msra.mxu0 0.0
  %7234 = vmatprep.subr.mxu0 0.0
  %7235 = vmatpush2.msra.mxu0 0.0
  %7236 = vmatprep.subr.mxu0 0.0
  %7237 = vmatpush2.msra.mxu0 0.0
  %7238 = vmatprep.subr.mxu0 0.0
  %7239 = vmatpush2.msra.mxu0 0.0
  %7240 = vmatprep.subr.mxu0 0.0
  %7241 = vmatpush2.msra.mxu0 0.0
  %7242 = vmatprep.subr.mxu0 0.0
  %7243 = vmatpush2.msra.mxu0 0.0
  %7244 = vmatprep.subr.mxu0 0.0
  %7245 = vmatpush2.msra.mxu0 0.0
  %7246 = vmatprep.subr.mxu0 0.0
  %7247 = vmatpush2.msra.mxu0 0.0
  %7248 = vmatprep.subr.mxu0 0.0
  %7249 = vmatpush2.msra.mxu0 0.0
  %7250 = vmatprep.mubr.f32.mxu0 0.0
  %7251 = vmatmul.mubr.f32.gmra.mxu0 %v7184
  %v7252 = vpop.f32.mrf.mxu0
  %v7253 = vadd.f32 %v141, %v7252
  %v7254 = vpop.f32.mrf.mxu0
  %7255 = vdwg.mxu0
  %v7256 = vmax.f32 %v7253, 0.0
  %s7257 = scalar_lea.vmem %s0, 360
  %v7258 = vld [vmem:[%s7257] sm:$0xff]
  %7260 = vrot.lane.b32.xlu0 %v7177, 32
  %v7261 = vpop.permute.xlu0 %7260
  %v7263 = vsel %vm53, %v7258, %v7261
  %v7265 = vsel %vm61, %v7263, 0
  %7267 = vmatprep.subr.mxu0 0.0
  %7268 = vmatpush1.msra.mxu0 0.0
  %7269 = vmatprep.subr.mxu0 0.0
  %7270 = vmatpush1.msra.mxu0 0.0
  %7271 = vmatprep.subr.mxu0 0.0
  %7272 = vmatpush1.msra.mxu0 0.0
  %7273 = vmatprep.subr.mxu0 0.0
  %7274 = vmatpush1.msra.mxu0 0.0
  %7275 = vmatprep.subr.mxu0 0.0
  %7276 = vmatpush1.msra.mxu0 0.0
  %7277 = vmatprep.subr.mxu0 0.0
  %7278 = vmatpush1.msra.mxu0 0.0
  %7279 = vmatprep.subr.mxu0 0.0
  %7280 = vmatpush1.msra.mxu0 0.0
  %7281 = vmatprep.subr.mxu0 0.0
  %7282 = vmatpush1.msra.mxu0 0.0
  %7283 = vmatprep.subr.mxu0 0.0
  %7284 = vmatpush1.msra.mxu0 %v41
  %7285 = vmatprep.subr.mxu0 0.0
  %7286 = vmatpush1.msra.mxu0 %v40
  %7287 = vmatprep.subr.mxu0 0.0
  %7288 = vmatpush1.msra.mxu0 %v39
  %7289 = vmatprep.subr.mxu0 0.0
  %7290 = vmatpush1.msra.mxu0 %v38
  %7291 = vmatprep.subr.mxu0 0.0
  %7292 = vmatpush1.msra.mxu0 %v37
  %7293 = vmatprep.subr.mxu0 0.0
  %7294 = vmatpush1.msra.mxu0 %v36
  %7295 = vmatprep.subr.mxu0 0.0
  %7296 = vmatpush1.msra.mxu0 %v35
  %7297 = vmatprep.subr.mxu0 0.0
  %7298 = vmatpush1.msra.mxu0 %v34
  %7299 = vmatprep.subr.mxu0 0.0
  %7300 = vmatpush2.msra.mxu0 0.0
  %7301 = vmatprep.subr.mxu0 0.0
  %7302 = vmatpush2.msra.mxu0 0.0
  %7303 = vmatprep.subr.mxu0 0.0
  %7304 = vmatpush2.msra.mxu0 0.0
  %7305 = vmatprep.subr.mxu0 0.0
  %7306 = vmatpush2.msra.mxu0 0.0
  %7307 = vmatprep.subr.mxu0 0.0
  %7308 = vmatpush2.msra.mxu0 0.0
  %7309 = vmatprep.subr.mxu0 0.0
  %7310 = vmatpush2.msra.mxu0 0.0
  %7311 = vmatprep.subr.mxu0 0.0
  %7312 = vmatpush2.msra.mxu0 0.0
  %7313 = vmatprep.subr.mxu0 0.0
  %7314 = vmatpush2.msra.mxu0 0.0
  %7315 = vmatprep.subr.mxu0 0.0
  %7316 = vmatpush2.msra.mxu0 0.0
  %7317 = vmatprep.subr.mxu0 0.0
  %7318 = vmatpush2.msra.mxu0 0.0
  %7319 = vmatprep.subr.mxu0 0.0
  %7320 = vmatpush2.msra.mxu0 0.0
  %7321 = vmatprep.subr.mxu0 0.0
  %7322 = vmatpush2.msra.mxu0 0.0
  %7323 = vmatprep.subr.mxu0 0.0
  %7324 = vmatpush2.msra.mxu0 0.0
  %7325 = vmatprep.subr.mxu0 0.0
  %7326 = vmatpush2.msra.mxu0 0.0
  %7327 = vmatprep.subr.mxu0 0.0
  %7328 = vmatpush2.msra.mxu0 0.0
  %7329 = vmatprep.subr.mxu0 0.0
  %7330 = vmatpush2.msra.mxu0 0.0
  %7331 = vmatprep.mubr.f32.mxu0 0.0
  %7332 = vmatmul.mubr.f32.gmra.mxu0 %v7265
  %v7333 = vpop.f32.mrf.mxu0
  %v7334 = vadd.f32 %v59, %v7333
  %v7335 = vpop.f32.mrf.mxu0
  %7336 = vdwg.mxu0
  %v7337 = vmax.f32 %v7334, 0.0
  %7339 = vrot.lane.b32.xlu0 %v7256, 32
  %v7340 = vpop.permute.xlu0 %7339
  %v7342 = vsel %vm53, %v7337, %v7340
  %v7344 = vsel %vm61, %v7342, 0
  %7346 = vmatprep.subr.mxu0 0.0
  %7347 = vmatpush1.msra.mxu0 0.0
  %7348 = vmatprep.subr.mxu0 0.0
  %7349 = vmatpush1.msra.mxu0 0.0
  %7350 = vmatprep.subr.mxu0 0.0
  %7351 = vmatpush1.msra.mxu0 0.0
  %7352 = vmatprep.subr.mxu0 0.0
  %7353 = vmatpush1.msra.mxu0 0.0
  %7354 = vmatprep.subr.mxu0 0.0
  %7355 = vmatpush1.msra.mxu0 0.0
  %7356 = vmatprep.subr.mxu0 0.0
  %7357 = vmatpush1.msra.mxu0 0.0
  %7358 = vmatprep.subr.mxu0 0.0
  %7359 = vmatpush1.msra.mxu0 0.0
  %7360 = vmatprep.subr.mxu0 0.0
  %7361 = vmatpush1.msra.mxu0 0.0
  %7362 = vmatprep.subr.mxu0 0.0
  %7363 = vmatpush1.msra.mxu0 %v49
  %7364 = vmatprep.subr.mxu0 0.0
  %7365 = vmatpush1.msra.mxu0 %v48
  %7366 = vmatprep.subr.mxu0 0.0
  %7367 = vmatpush1.msra.mxu0 %v47
  %7368 = vmatprep.subr.mxu0 0.0
  %7369 = vmatpush1.msra.mxu0 %v46
  %7370 = vmatprep.subr.mxu0 0.0
  %7371 = vmatpush1.msra.mxu0 %v45
  %7372 = vmatprep.subr.mxu0 0.0
  %7373 = vmatpush1.msra.mxu0 %v44
  %7374 = vmatprep.subr.mxu0 0.0
  %7375 = vmatpush1.msra.mxu0 %v43
  %7376 = vmatprep.subr.mxu0 0.0
  %7377 = vmatpush1.msra.mxu0 %v42
  %7378 = vmatprep.subr.mxu0 0.0
  %7379 = vmatpush2.msra.mxu0 0.0
  %7380 = vmatprep.subr.mxu0 0.0
  %7381 = vmatpush2.msra.mxu0 0.0
  %7382 = vmatprep.subr.mxu0 0.0
  %7383 = vmatpush2.msra.mxu0 0.0
  %7384 = vmatprep.subr.mxu0 0.0
  %7385 = vmatpush2.msra.mxu0 0.0
  %7386 = vmatprep.subr.mxu0 0.0
  %7387 = vmatpush2.msra.mxu0 0.0
  %7388 = vmatprep.subr.mxu0 0.0
  %7389 = vmatpush2.msra.mxu0 0.0
  %7390 = vmatprep.subr.mxu0 0.0
  %7391 = vmatpush2.msra.mxu0 0.0
  %7392 = vmatprep.subr.mxu0 0.0
  %7393 = vmatpush2.msra.mxu0 0.0
  %7394 = vmatprep.subr.mxu0 0.0
  %7395 = vmatpush2.msra.mxu0 0.0
  %7396 = vmatprep.subr.mxu0 0.0
  %7397 = vmatpush2.msra.mxu0 0.0
  %7398 = vmatprep.subr.mxu0 0.0
  %7399 = vmatpush2.msra.mxu0 0.0
  %7400 = vmatprep.subr.mxu0 0.0
  %7401 = vmatpush2.msra.mxu0 0.0
  %7402 = vmatprep.subr.mxu0 0.0
  %7403 = vmatpush2.msra.mxu0 0.0
  %7404 = vmatprep.subr.mxu0 0.0
  %7405 = vmatpush2.msra.mxu0 0.0
  %7406 = vmatprep.subr.mxu0 0.0
  %7407 = vmatpush2.msra.mxu0 0.0
  %7408 = vmatprep.subr.mxu0 0.0
  %7409 = vmatpush2.msra.mxu0 0.0
  %7410 = vmatprep.mubr.f32.mxu0 0.0
  %7411 = vmatmul.mubr.f32.gmra.mxu0 %v7344
  %v7412 = vpop.f32.mrf.mxu0
  %v7413 = vadd.f32 %v141, %v7412
  %v7414 = vpop.f32.mrf.mxu0
  %7415 = vdwg.mxu0
  %v7416 = vmax.f32 %v7413, 0.0
  %s7417 = scalar_lea.vmem %s0, 368
  %v7418 = vld [vmem:[%s7417] sm:$0xff]
  %7420 = vrot.lane.b32.xlu0 %v7337, 32
  %v7421 = vpop.permute.xlu0 %7420
  %v7423 = vsel %vm53, %v7418, %v7421
  %v7425 = vsel %vm61, %v7423, 0
  %7427 = vmatprep.subr.mxu0 0.0
  %7428 = vmatpush1.msra.mxu0 0.0
  %7429 = vmatprep.subr.mxu0 0.0
  %7430 = vmatpush1.msra.mxu0 0.0
  %7431 = vmatprep.subr.mxu0 0.0
  %7432 = vmatpush1.msra.mxu0 0.0
  %7433 = vmatprep.subr.mxu0 0.0
  %7434 = vmatpush1.msra.mxu0 0.0
  %7435 = vmatprep.subr.mxu0 0.0
  %7436 = vmatpush1.msra.mxu0 0.0
  %7437 = vmatprep.subr.mxu0 0.0
  %7438 = vmatpush1.msra.mxu0 0.0
  %7439 = vmatprep.subr.mxu0 0.0
  %7440 = vmatpush1.msra.mxu0 0.0
  %7441 = vmatprep.subr.mxu0 0.0
  %7442 = vmatpush1.msra.mxu0 0.0
  %7443 = vmatprep.subr.mxu0 0.0
  %7444 = vmatpush1.msra.mxu0 %v41
  %7445 = vmatprep.subr.mxu0 0.0
  %7446 = vmatpush1.msra.mxu0 %v40
  %7447 = vmatprep.subr.mxu0 0.0
  %7448 = vmatpush1.msra.mxu0 %v39
  %7449 = vmatprep.subr.mxu0 0.0
  %7450 = vmatpush1.msra.mxu0 %v38
  %7451 = vmatprep.subr.mxu0 0.0
  %7452 = vmatpush1.msra.mxu0 %v37
  %7453 = vmatprep.subr.mxu0 0.0
  %7454 = vmatpush1.msra.mxu0 %v36
  %7455 = vmatprep.subr.mxu0 0.0
  %7456 = vmatpush1.msra.mxu0 %v35
  %7457 = vmatprep.subr.mxu0 0.0
  %7458 = vmatpush1.msra.mxu0 %v34
  %7459 = vmatprep.subr.mxu0 0.0
  %7460 = vmatpush2.msra.mxu0 0.0
  %7461 = vmatprep.subr.mxu0 0.0
  %7462 = vmatpush2.msra.mxu0 0.0
  %7463 = vmatprep.subr.mxu0 0.0
  %7464 = vmatpush2.msra.mxu0 0.0
  %7465 = vmatprep.subr.mxu0 0.0
  %7466 = vmatpush2.msra.mxu0 0.0
  %7467 = vmatprep.subr.mxu0 0.0
  %7468 = vmatpush2.msra.mxu0 0.0
  %7469 = vmatprep.subr.mxu0 0.0
  %7470 = vmatpush2.msra.mxu0 0.0
  %7471 = vmatprep.subr.mxu0 0.0
  %7472 = vmatpush2.msra.mxu0 0.0
  %7473 = vmatprep.subr.mxu0 0.0
  %7474 = vmatpush2.msra.mxu0 0.0
  %7475 = vmatprep.subr.mxu0 0.0
  %7476 = vmatpush2.msra.mxu0 0.0
  %7477 = vmatprep.subr.mxu0 0.0
  %7478 = vmatpush2.msra.mxu0 0.0
  %7479 = vmatprep.subr.mxu0 0.0
  %7480 = vmatpush2.msra.mxu0 0.0
  %7481 = vmatprep.subr.mxu0 0.0
  %7482 = vmatpush2.msra.mxu0 0.0
  %7483 = vmatprep.subr.mxu0 0.0
  %7484 = vmatpush2.msra.mxu0 0.0
  %7485 = vmatprep.subr.mxu0 0.0
  %7486 = vmatpush2.msra.mxu0 0.0
  %7487 = vmatprep.subr.mxu0 0.0
  %7488 = vmatpush2.msra.mxu0 0.0
  %7489 = vmatprep.subr.mxu0 0.0
  %7490 = vmatpush2.msra.mxu0 0.0
  %7491 = vmatprep.mubr.f32.mxu0 0.0
  %7492 = vmatmul.mubr.f32.gmra.mxu0 %v7425
  %v7493 = vpop.f32.mrf.mxu0
  %v7494 = vadd.f32 %v59, %v7493
  %v7495 = vpop.f32.mrf.mxu0
  %7496 = vdwg.mxu0
  %v7497 = vmax.f32 %v7494, 0.0
  %7499 = vrot.lane.b32.xlu0 %v7416, 32
  %v7500 = vpop.permute.xlu0 %7499
  %v7502 = vsel %vm53, %v7497, %v7500
  %v7504 = vsel %vm61, %v7502, 0
  %7506 = vmatprep.subr.mxu0 0.0
  %7507 = vmatpush1.msra.mxu0 0.0
  %7508 = vmatprep.subr.mxu0 0.0
  %7509 = vmatpush1.msra.mxu0 0.0
  %7510 = vmatprep.subr.mxu0 0.0
  %7511 = vmatpush1.msra.mxu0 0.0
  %7512 = vmatprep.subr.mxu0 0.0
  %7513 = vmatpush1.msra.mxu0 0.0
  %7514 = vmatprep.subr.mxu0 0.0
  %7515 = vmatpush1.msra.mxu0 0.0
  %7516 = vmatprep.subr.mxu0 0.0
  %7517 = vmatpush1.msra.mxu0 0.0
  %7518 = vmatprep.subr.mxu0 0.0
  %7519 = vmatpush1.msra.mxu0 0.0
  %7520 = vmatprep.subr.mxu0 0.0
  %7521 = vmatpush1.msra.mxu0 0.0
  %7522 = vmatprep.subr.mxu0 0.0
  %7523 = vmatpush1.msra.mxu0 %v49
  %7524 = vmatprep.subr.mxu0 0.0
  %7525 = vmatpush1.msra.mxu0 %v48
  %7526 = vmatprep.subr.mxu0 0.0
  %7527 = vmatpush1.msra.mxu0 %v47
  %7528 = vmatprep.subr.mxu0 0.0
  %7529 = vmatpush1.msra.mxu0 %v46
  %7530 = vmatprep.subr.mxu0 0.0
  %7531 = vmatpush1.msra.mxu0 %v45
  %7532 = vmatprep.subr.mxu0 0.0
  %7533 = vmatpush1.msra.mxu0 %v44
  %7534 = vmatprep.subr.mxu0 0.0
  %7535 = vmatpush1.msra.mxu0 %v43
  %7536 = vmatprep.subr.mxu0 0.0
  %7537 = vmatpush1.msra.mxu0 %v42
  %7538 = vmatprep.subr.mxu0 0.0
  %7539 = vmatpush2.msra.mxu0 0.0
  %7540 = vmatprep.subr.mxu0 0.0
  %7541 = vmatpush2.msra.mxu0 0.0
  %7542 = vmatprep.subr.mxu0 0.0
  %7543 = vmatpush2.msra.mxu0 0.0
  %7544 = vmatprep.subr.mxu0 0.0
  %7545 = vmatpush2.msra.mxu0 0.0
  %7546 = vmatprep.subr.mxu0 0.0
  %7547 = vmatpush2.msra.mxu0 0.0
  %7548 = vmatprep.subr.mxu0 0.0
  %7549 = vmatpush2.msra.mxu0 0.0
  %7550 = vmatprep.subr.mxu0 0.0
  %7551 = vmatpush2.msra.mxu0 0.0
  %7552 = vmatprep.subr.mxu0 0.0
  %7553 = vmatpush2.msra.mxu0 0.0
  %7554 = vmatprep.subr.mxu0 0.0
  %7555 = vmatpush2.msra.mxu0 0.0
  %7556 = vmatprep.subr.mxu0 0.0
  %7557 = vmatpush2.msra.mxu0 0.0
  %7558 = vmatprep.subr.mxu0 0.0
  %7559 = vmatpush2.msra.mxu0 0.0
  %7560 = vmatprep.subr.mxu0 0.0
  %7561 = vmatpush2.msra.mxu0 0.0
  %7562 = vmatprep.subr.mxu0 0.0
  %7563 = vmatpush2.msra.mxu0 0.0
  %7564 = vmatprep.subr.mxu0 0.0
  %7565 = vmatpush2.msra.mxu0 0.0
  %7566 = vmatprep.subr.mxu0 0.0
  %7567 = vmatpush2.msra.mxu0 0.0
  %7568 = vmatprep.subr.mxu0 0.0
  %7569 = vmatpush2.msra.mxu0 0.0
  %7570 = vmatprep.mubr.f32.mxu0 0.0
  %7571 = vmatmul.mubr.f32.gmra.mxu0 %v7504
  %v7572 = vpop.f32.mrf.mxu0
  %v7573 = vadd.f32 %v141, %v7572
  %v7574 = vpop.f32.mrf.mxu0
  %7575 = vdwg.mxu0
  %v7576 = vmax.f32 %v7573, 0.0
  %v7577 = vld [vmem:[%s5] sm:$0xff]
  %v7578 = vld [vmem:[%s5 + $0x8] sm:$0xff]
  %v7579 = vld [vmem:[%s5 + $0x10] sm:$0xff]
  %v7580 = vld [vmem:[%s5 + $0x18] sm:$0xff]
  %v7581 = vld [vmem:[%s6] sm:$0x1]
  %v7583 = vlaneseq
  %v7584 = vshrl.u32 %v7583, 7
  %v7585 = vsub.s32 0, %v7584
  %v7586 = vrot.slane %v7581, %v7585
  %v7589 = vsel %vm53, %v7576, 0
  %7591 = vmatprep.subr.mxu0 0.0
  %7592 = vmatpush1.msra.mxu0 0.0
  %7593 = vmatprep.subr.mxu0 0.0
  %7594 = vmatpush1.msra.mxu0 0.0
  %7595 = vmatprep.subr.mxu0 0.0
  %7596 = vmatpush1.msra.mxu0 0.0
  %7597 = vmatprep.subr.mxu0 0.0
  %7598 = vmatpush1.msra.mxu0 0.0
  %7599 = vmatprep.subr.mxu0 0.0
  %7600 = vmatpush1.msra.mxu0 0.0
  %7601 = vmatprep.subr.mxu0 0.0
  %7602 = vmatpush1.msra.mxu0 0.0
  %7603 = vmatprep.subr.mxu0 0.0
  %7604 = vmatpush1.msra.mxu0 0.0
  %7605 = vmatprep.subr.mxu0 0.0
  %7606 = vmatpush1.msra.mxu0 0.0
  %7607 = vmatprep.subr.mxu0 0.0
  %7608 = vmatpush1.msra.mxu0 0.0
  %7609 = vmatprep.subr.mxu0 0.0
  %7610 = vmatpush1.msra.mxu0 0.0
  %7611 = vmatprep.subr.mxu0 0.0
  %7612 = vmatpush1.msra.mxu0 0.0
  %7613 = vmatprep.subr.mxu0 0.0
  %7614 = vmatpush1.msra.mxu0 0.0
  %7615 = vmatprep.subr.mxu0 0.0
  %7616 = vmatpush1.msra.mxu0 %v7580
  %7617 = vmatprep.subr.mxu0 0.0
  %7618 = vmatpush1.msra.mxu0 %v7579
  %7619 = vmatprep.subr.mxu0 0.0
  %7620 = vmatpush1.msra.mxu0 %v7578
  %7621 = vmatprep.subr.mxu0 0.0
  %7622 = vmatpush1.msra.mxu0 %v7577
  %7623 = vmatprep.subr.mxu0 0.0
  %7624 = vmatpush2.msra.mxu0 0.0
  %7625 = vmatprep.subr.mxu0 0.0
  %7626 = vmatpush2.msra.mxu0 0.0
  %7627 = vmatprep.subr.mxu0 0.0
  %7628 = vmatpush2.msra.mxu0 0.0
  %7629 = vmatprep.subr.mxu0 0.0
  %7630 = vmatpush2.msra.mxu0 0.0
  %7631 = vmatprep.subr.mxu0 0.0
  %7632 = vmatpush2.msra.mxu0 0.0
  %7633 = vmatprep.subr.mxu0 0.0
  %7634 = vmatpush2.msra.mxu0 0.0
  %7635 = vmatprep.subr.mxu0 0.0
  %7636 = vmatpush2.msra.mxu0 0.0
  %7637 = vmatprep.subr.mxu0 0.0
  %7638 = vmatpush2.msra.mxu0 0.0
  %7639 = vmatprep.subr.mxu0 0.0
  %7640 = vmatpush2.msra.mxu0 0.0
  %7641 = vmatprep.subr.mxu0 0.0
  %7642 = vmatpush2.msra.mxu0 0.0
  %7643 = vmatprep.subr.mxu0 0.0
  %7644 = vmatpush2.msra.mxu0 0.0
  %7645 = vmatprep.subr.mxu0 0.0
  %7646 = vmatpush2.msra.mxu0 0.0
  %7647 = vmatprep.subr.mxu0 0.0
  %7648 = vmatpush2.msra.mxu0 0.0
  %7649 = vmatprep.subr.mxu0 0.0
  %7650 = vmatpush2.msra.mxu0 0.0
  %7651 = vmatprep.subr.mxu0 0.0
  %7652 = vmatpush2.msra.mxu0 0.0
  %7653 = vmatprep.subr.mxu0 0.0
  %7654 = vmatpush2.msra.mxu0 0.0
  %7655 = vmatprep.mubr.f32.mxu0 0.0
  %7656 = vmatmul.mubr.f32.gmra.mxu0 %v7589
  %v7657 = vpop.f32.mrf.mxu0
  %v7658 = vadd.f32 %v7586, %v7657
  %v7659 = vpop.f32.mrf.mxu0
  %7660 = vdwg.mxu0
  %v7661 = vmax.f32 %v7658, 0.0
  %v7662 = vld [vmem:[%s7] sm:$0x1]
  %v7664 = vlaneseq
  %v7665 = vshrl.u32 %v7664, 7
  %v7666 = vsub.s32 0, %v7665
  %v7667 = vrot.slane %v7662, %v7666
  %v7669 = vmul.f32 %v7661, %v7667
  %v7670 = vsel %vm53, %v7669, 0.0
  %7671 = vadd.xlane.f32.xlu0 %v7670
  %v7672 = vpop.xlane.xlu0 %7671
  %v7673 = vld [vmem:[#allocation2] sm:$0x1]
  %v7675 = vlaneseq
  %v7676 = vshrl.u32 %v7675, 7
  %v7677 = vsub.s32 0, %v7676
  %v7678 = vrot.slane %v7673, %v7677
  %v7680 = vadd.f32 %v7672, %v7678
  %vm7681 = vcmask 7168
  %7682 = vst.msk [vmem:[%s9] sm:$0xff] %vm7681, %v7680
  // Predicated region
  $region38: #{tpu_custom_call.1} parent=0 // pred_check
    _
  $region39: #{tpu_custom_call.1} parent=0 // pred_check_branch
    %7684 = sbr.rel (0) target = $region41
  $region40: #{tpu_custom_call.1} parent=0 // pred_region
    _
  $region41: #{tpu_custom_call.1} parent=0 // pred_fallthru
    _
  // Predicated region
  $region42: #{tpu_custom_call.1} parent=0 // pred_check
    _
  $region43: #{tpu_custom_call.1} parent=0 // pred_check_branch
    %7686 = sbr.rel (0) target = $region45
  $region44: #{tpu_custom_call.1} parent=0 // pred_region
    _
  $region45: #{tpu_custom_call.1} parent=0 // pred_fallthru
    _

</llo_original>
